<compile_context>
chip_gen: v7x
topology: tpu7x:2x2x1
jax: 0.10.0
libtpu: 0.0.40
codegen_flags: <defaults>
</compile_context>

<pallas_src>
import functools
import math

import jax
import jax.numpy as jnp
from jax.experimental import pallas as pl
from jax.experimental.pallas import tpu as pltpu


def _mha_fwd_kernel(kvc_ref,                                   # SMEM [b, n_q] int32
                    q_ref, kh_ref, vh_ref,
                    wq_ref, bq_ref, wo_ref, bo_ref,
                    ma_ref, mp_ref,
                    out_ref,
                    qh_scr, m_scr, l_scr, acc_scr,
                    *, num_heads, dim_keys, compute_dtype):
    """Grid = (batch, q_tile, kv_tile).  One call == one (b, q-tile, kv-tile)."""
    nh, dk = num_heads, dim_keys
    cdt = compute_dtype
    b_idx = pl.program_id(0)
    q_idx = pl.program_id(1)
    kv_idx = pl.program_id(2)
    kv_count = kvc_ref[b_idx, q_idx]          # contributing kv tiles for this row block
    scale = 1.0 / math.sqrt(dk)

    # ---- per-(b, q-tile) init: project + pre-scale Q once, reset softmax state.
    @pl.when(kv_idx == 0)
    def _init():
        qp = jnp.dot(q_ref[0], wq_ref[...],
                     preferred_element_type=jnp.float32) + bq_ref[...]   # f32 [TQ, d]
        qp = qp * scale
        # Head split via static lane slices.  Runs once per (b, q-tile), so the
        # dk<128 relayout cost is amortized over all kv steps.
        qh_scr[...] = jnp.stack(
            [qp[:, h * dk:(h + 1) * dk] for h in range(nh)], axis=0).astype(cdt)
        m_scr[...] = jnp.full(m_scr.shape, -jnp.inf, jnp.float32)
        l_scr[...] = jnp.zeros(l_scr.shape, jnp.float32)
        acc_scr[...] = jnp.zeros(acc_scr.shape, jnp.float32)

    # ---- one flash step for this kv tile; skipped entirely when the tile is
    #      fully masked (causal / key-padding), per the prefetched kv_count.
    @pl.when(kv_idx < kv_count)
    def _step():
        kh = kh_ref[0]                                                   # [nh, TK, dk]
        vh = vh_ref[0]
        qh = qh_scr[...]
        # Scores for all heads at once (batched dot_general): [nh, TQ, TK].
        s = jax.lax.dot_general(qh, kh, (((2,), (2,)), ((0,), (0,))),
                                preferred_element_type=jnp.float32)
        # Combined additive mask (attention + key padding), shared across heads.
        mask = ma_ref[...] + mp_ref[0]                                   # [TQ, TK]
        s = s + mask[None, :, :]

        # Online (flash) softmax over kv tiles, f32 state.
        m_prev = m_scr[...]
        m_new = jnp.maximum(m_prev, jnp.max(s, axis=-1, keepdims=True))
        alpha = jnp.exp(m_prev - m_new)
        p = jnp.exp(s - m_new)                                           # [nh, TQ, TK]
        l_scr[...] = alpha * l_scr[...] + jnp.sum(p, axis=-1, keepdims=True)
        pv = jax.lax.dot_general(p.astype(cdt), vh, (((2,), (1,)), ((0,), (0,))),
                                 preferred_element_type=jnp.float32)     # [nh, TQ, dk]
        acc_scr[...] = alpha * acc_scr[...] + pv
        m_scr[...] = m_new

    # ---- finalize: normalize, merge heads, ONE wide output projection.
    @pl.when(kv_idx == pl.num_programs(2) - 1)
    def _finalize():
        o = acc_scr[...] * pl.reciprocal(l_scr[...], approx=True)        # [nh, TQ, dk]
        o = jnp.concatenate([o[h] for h in range(nh)], axis=-1)          # [TQ, nh*dk]
        out = jnp.dot(o.astype(cdt), wo_ref[...],
                      preferred_element_type=jnp.float32) + bo_ref[...]
        out_ref[0] = out.astype(out_ref.dtype)


def multihead_attention(params, K, V, Q, mask_attn=None, mask_pad=None, *,
                        num_heads, block_q=256, block_kv=256,
                        compute_dtype=jnp.bfloat16):
    """Fused MHA forward.  params = (wq, bq, wk, bk, wv, bv, wo, bo), weights
    stored as [in_features, out_features].  Defaults (256 tiles) target
    v6e/v7x; pass block_q=block_kv=128 on v5e."""
    b, L, d = K.shape
    Lp = Q.shape[1]
    assert K.shape == (b, L, d) and V.shape == (b, L, d) and Q.shape == (b, Lp, d)
    assert d % num_heads == 0, "model_dimension must be divisible by num_heads"
    nh = num_heads
    dk = d // nh
    cdt = compute_dtype
    f32 = jnp.float32

    block_q = min(block_q, Lp)
    block_kv = min(block_kv, L)
    assert Lp % block_q == 0, f"Lp={Lp} must be divisible by block_q={block_q}"
    assert L % block_kv == 0, f"L={L} must be divisible by block_kv={block_kv}"
    n_q, n_kv = Lp // block_q, L // block_kv

    # Additive masks (large-negative finite values, not -inf).
    if mask_attn is None:
        mask_attn = jnp.zeros((Lp, L), f32)
    if mask_pad is None:
        mask_pad = jnp.zeros((b, L), f32)
    mask_attn = mask_attn.astype(f32)
    mask_pad = mask_pad.astype(f32)
    mask_pad3 = mask_pad.reshape(b, 1, L)

    wq, bq, wk, bk, wv, bv, wo, bo = params

    # --- Hoisted K/V projections (review item 1): computed ONCE with a plain
    #     XLA matmul instead of being recomputed for every q-tile in-kernel.
    #     Output is head-major bf16 [b, nh, L, dk], ready for the batched dots.
    def proj_heads(x, w, bias):
        y = jnp.einsum("bld,df->blf", x.astype(cdt), w.astype(cdt),
                       preferred_element_type=f32) + bias.astype(f32)
        return y.reshape(b, -1, nh, dk).transpose(0, 2, 1, 3).astype(cdt)

    kh = proj_heads(K, wk, bk)                                           # [b, nh, L, dk]
    vh = proj_heads(V, wv, bv)                                           # [b, nh, L, dk]

    # Pre-cast in-kernel weights and the Q input to the compute dtype (halves
    # VMEM residency / DMA bytes, removes per-step casts).
    Qc = Q.astype(cdt)
    wq_c = wq.astype(cdt)
    wo_c = wo.astype(cdt)
    bq2 = bq.reshape(1, d).astype(f32)
    bo2 = bo.reshape(1, d).astype(f32)

    # --- kv-tile skip counts (review item 2): number of kv tiles (prefix) that
    #     can contribute for each (batch, q-tile); tiles past that are entirely
    #     <= -1e8 and contribute exactly 0 after the softmax shift.
    NEG_THRESH = -1e8
    ma_cmax = mask_attn.reshape(n_q, block_q, L).max(axis=1)             # [n_q, L]
    comb = ma_cmax[None, :, :] + mask_pad[:, None, :]                    # [b, n_q, L]
    tile_any = (comb.reshape(b, n_q, n_kv, block_kv) > NEG_THRESH).any(axis=-1)
    last = jnp.where(tile_any,
                     jnp.arange(n_kv, dtype=jnp.int32)[None, None, :],
                     jnp.int32(-1)).max(axis=-1)                         # [b, n_q]
    kv_counts = jnp.maximum(last + 1, 1).astype(jnp.int32)               # >= 1

    out_dtype = Q.dtype
    kernel = functools.partial(_mha_fwd_kernel, num_heads=nh, dim_keys=dk,
                               compute_dtype=cdt)

    # Grid-invariant operands live whole in VMEM (single copy, not pipelined).
    vmem_whole = pl.BlockSpec(memory_space=pltpu.MemorySpace.VMEM)

    def kv_block(ki, i, qi, kvc):
        # Clamp so skipped steps re-present the previous block index (no DMA).
        return jnp.minimum(ki, kvc[i, qi] - 1)

    in_specs = [
        pl.BlockSpec((1, block_q, d), lambda i, qi, ki, kvc: (i, qi, 0)),      # Q
        pl.BlockSpec((1, nh, block_kv, dk),
                     lambda i, qi, ki, kvc: (i, 0, kv_block(ki, i, qi, kvc), 0)),  # Kp
        pl.BlockSpec((1, nh, block_kv, dk),
                     lambda i, qi, ki, kvc: (i, 0, kv_block(ki, i, qi, kvc), 0)),  # Vp
        vmem_whole, vmem_whole,                                                # wq, bq
        vmem_whole, vmem_whole,                                                # wo, bo
        pl.BlockSpec((block_q, block_kv),
                     lambda i, qi, ki, kvc: (qi, kv_block(ki, i, qi, kvc))),   # mask_attn
        pl.BlockSpec((1, 1, block_kv),
                     lambda i, qi, ki, kvc: (i, 0, kv_block(ki, i, qi, kvc))), # mask_pad
    ]
    out_specs = pl.BlockSpec((1, block_q, d), lambda i, qi, ki, kvc: (i, qi, 0))

    scratch_shapes = [
        pltpu.VMEM((nh, block_q, dk), cdt),        # cached scaled Q heads
        pltpu.VMEM((nh, block_q, 1), jnp.float32), # running max m
        pltpu.VMEM((nh, block_q, 1), jnp.float32), # running sum l
        pltpu.VMEM((nh, block_q, dk), jnp.float32) # unnormalized accumulator
    ]

    # Explicit VMEM budget: weights single-buffered, pipelined tiles
    # double-buffered, plus scratch; clamped to ~87% of the queried chip VMEM
    # capacity so the limit is always valid on v7x (64 MiB per TensorCore).
    cb = jnp.dtype(cdt).itemsize
    weight_bytes = 2 * d * d * cb + 2 * d * 4
    in_tile = (block_q * d * cb                       # Q tile (bf16)
               + 2 * nh * block_kv * dk * cb          # Kp, Vp tiles (bf16)
               + block_q * block_kv * 4               # mask_attn tile (f32)
               + block_kv * 4)                        # mask_pad tile (f32)
    out_tile = block_q * d * jnp.dtype(out_dtype).itemsize
    scratch_bytes = nh * block_q * (dk * cb + dk * 4 + 2 * 4)
    est = weight_bytes + 2 * (in_tile + out_tile) + scratch_bytes
    try:
        vmem_cap = int(pltpu.get_tpu_info().vmem_capacity_bytes)
    except Exception:
        vmem_cap = 64 << 20   # conservative fallback (v7x per-TC VMEM)
    vmem_limit = int(min(max(2 * est + (8 << 20), 32 << 20), (vmem_cap * 7) // 8))

    return pl.pallas_call(
        kernel,
        out_shape=jax.ShapeDtypeStruct((b, Lp, d), out_dtype),
        grid_spec=pltpu.PrefetchScalarGridSpec(
            num_scalar_prefetch=1,
            grid=(b, n_q, n_kv),
            in_specs=in_specs,
            out_specs=out_specs,
            scratch_shapes=scratch_shapes,
        ),
        compiler_params=pltpu.CompilerParams(
            dimension_semantics=("parallel", "parallel", "arbitrary"),
            vmem_limit_bytes=vmem_limit,
        ),
    )(kv_counts, Qc, kh, vh, wq_c, bq2, wo_c, bo2, mask_attn, mask_pad3)


def init_params(key, model_dimension, num_heads):
    """Deterministic synthetic init (PyTorch nn.Linear-style uniform bounds).
    Weights are stored as [in_features, out_features]."""
    d = model_dimension
    dk = d // num_heads
    keys = jax.random.split(key, 8)

    def linear(kw, kb, fan_in, fan_out):
        bound = 1.0 / math.sqrt(fan_in)
        w = jax.random.uniform(kw, (fan_in, fan_out), jnp.float32, -bound, bound)
        b_ = jax.random.uniform(kb, (fan_out,), jnp.float32, -bound, bound)
        return w, b_

    wq, bq = linear(keys[0], keys[1], d, num_heads * dk)
    wk, bk = linear(keys[2], keys[3], d, num_heads * dk)
    wv, bv = linear(keys[4], keys[5], d, num_heads * dk)
    wo, bo = linear(keys[6], keys[7], num_heads * dk, d)
    return (wq, bq, wk, bk, wv, bv, wo, bo)


def ref_mha(params, K, V, Q, mask_attn, mask_pad, num_heads,
            compute_dtype=jnp.bfloat16):
    """Pure-JAX transcription of the PyTorch forward, with MXU-operand casts
    placed exactly where the kernel places them (bf16 in, f32 accumulate)."""
    wq, bq, wk, bk, wv, bv, wo, bo = params
    b, L, d = K.shape
    Lp = Q.shape[1]
    nh = num_heads
    dk = d // nh
    cd = compute_dtype
    f32 = jnp.float32

    def proj(x, w, bias):
        return (jnp.einsum("bld,df->blf", x.astype(cd), w.astype(cd),
                           preferred_element_type=f32) + bias.astype(f32))

    Qp = proj(Q, wq, bq) * (1.0 / math.sqrt(dk))
    Kp = proj(K, wk, bk)
    Vp = proj(V, wv, bv)

    Qh = Qp.reshape(b, Lp, nh, dk).transpose(0, 2, 1, 3).astype(cd)
    Kh = Kp.reshape(b, L, nh, dk).transpose(0, 2, 1, 3).astype(cd)
    Vh = Vp.reshape(b, L, nh, dk).transpose(0, 2, 1, 3).astype(cd)

    s = jnp.einsum("bhqd,bhkd->bhqk", Qh, Kh, preferred_element_type=f32)
    s = s + mask_pad[:, None, None, :]          # key padding mask
    s = s + mask_attn[None, None, :, :]         # [Lp, L] attention mask
    p = jax.nn.softmax(s, axis=-1)              # softmax over keys
    O = jnp.einsum("bhqk,bhkd->bhqd", p.astype(cd), Vh, preferred_element_type=f32)
    O = O.transpose(0, 2, 1, 3).reshape(b, Lp, nh * dk)
    return jnp.einsum("bqf,fd->bqd", O.astype(cd), wo.astype(cd),
                      preferred_element_type=f32) + bo.astype(f32)


if __name__ == "__main__":
    # Lp == L so the causal mask makes kv-tile 1 fully masked for q-tile 0 at
    # 128-wide tiles -> exercises the kv-tile skip path; the second sequence is
    # key-padded to exercise mask_pad.
    b, L, Lp, d, nh = 2, 256, 256, 128, 4

    key = jax.random.PRNGKey(0)
    kp_, kK, kV, kQ = jax.random.split(key, 4)
    params = init_params(kp_, d, nh)

    K = jax.random.normal(kK, (b, L, d), jnp.float32)
    V = jax.random.normal(kV, (b, L, d), jnp.float32)
    Q = jax.random.normal(kQ, (b, Lp, d), jnp.float32)

    # Additive masks (same convention as the PyTorch module: added pre-softmax).
    mask_attn = jnp.where(jnp.arange(L)[None, :] <= jnp.arange(Lp)[:, None],
                          0.0, -1e9).astype(jnp.float32)                 # [Lp, L] causal
    valid_lens = jnp.array([[L], [L - 64]], dtype=jnp.int32)             # 2nd seq padded
    mask_pad = jnp.where(jnp.arange(L)[None, :] < valid_lens,
                         0.0, -1e9).astype(jnp.float32)                  # [b, L]

    ref = ref_mha(params, K, V, Q, mask_attn, mask_pad, nh)

    # Multi-tile flash path (online softmax across kv tiles + kv-tile skipping).
    out1 = multihead_attention(params, K, V, Q, mask_attn, mask_pad,
                               num_heads=nh, block_q=128, block_kv=128)
    out1 = jax.block_until_ready(out1)
    assert out1.shape == (b, Lp, d)
    err1 = float(jnp.max(jnp.abs(out1 - ref)))
    assert jnp.allclose(out1, ref, atol=2e-2, rtol=2e-2), err1

    # Default (256-wide, v6e/v7x-style) tile path.
    out2 = multihead_attention(params, K, V, Q, mask_attn, mask_pad, num_heads=nh)
    out2 = jax.block_until_ready(out2)
    err2 = float(jnp.max(jnp.abs(out2 - ref)))
    assert jnp.allclose(out2, ref, atol=2e-2, rtol=2e-2), err2

    print("KERNEL_OK")
</pallas_src>

<mosaic_0001>
module attributes {stable_mosaic.version = 11 : i64} {
  func.func @_mha_fwd_kernel(%arg0: i32, %arg1: i32, %arg2: i32, %arg3: memref<2x2xi32, #tpu.memory_space<smem>>, %arg4: memref<1x128x128xbf16, #tpu.memory_space<vmem>>, %arg5: memref<1x4x128x32xbf16, #tpu.memory_space<vmem>>, %arg6: memref<1x4x128x32xbf16, #tpu.memory_space<vmem>>, %arg7: memref<128x128xbf16, #tpu.memory_space<vmem>>, %arg8: memref<1x128xf32, #tpu.memory_space<vmem>>, %arg9: memref<128x128xbf16, #tpu.memory_space<vmem>>, %arg10: memref<1x128xf32, #tpu.memory_space<vmem>>, %arg11: memref<128x128xf32, #tpu.memory_space<vmem>>, %arg12: memref<1x1x128xf32, #tpu.memory_space<vmem>>, %arg13: memref<1x128x128xf32, #tpu.memory_space<vmem>>, %arg14: memref<4x128x32xbf16, #tpu.memory_space<vmem>>, %arg15: memref<4x128x1xf32, #tpu.memory_space<vmem>>, %arg16: memref<4x128x1xf32, #tpu.memory_space<vmem>>, %arg17: memref<4x128x32xf32, #tpu.memory_space<vmem>>) attributes {dimension_semantics = [#tpu.dimension_semantics<parallel>, #tpu.dimension_semantics<parallel>, #tpu.dimension_semantics<arbitrary>], iteration_bounds = array<i64: 2, 2, 2>, scalar_prefetch = 1 : i64, scratch_operands = 4 : i64, tpu.core_type = #tpu.core_type<tc>, window_params = [{transform_indices = @transform_0, window_bounds = array<i64: 1, 128, 128>}, {transform_indices = @transform_1, window_bounds = array<i64: 1, 4, 128, 32>}, {transform_indices = @transform_2, window_bounds = array<i64: 1, 4, 128, 32>}, {pipeline_mode = #tpu.pipeline_mode<synchronous>, transform_indices = @transform_3, window_bounds = array<i64: 128, 128>}, {pipeline_mode = #tpu.pipeline_mode<synchronous>, transform_indices = @transform_4, window_bounds = array<i64: 1, 128>}, {pipeline_mode = #tpu.pipeline_mode<synchronous>, transform_indices = @transform_5, window_bounds = array<i64: 128, 128>}, {pipeline_mode = #tpu.pipeline_mode<synchronous>, transform_indices = @transform_6, window_bounds = array<i64: 1, 128>}, {transform_indices = @transform_7, window_bounds = array<i64: 128, 128>}, {transform_indices = @transform_8, window_bounds = array<i64: 1, 1, 128>}, {transform_indices = @transform_9, window_bounds = array<i64: 1, 128, 128>}]} {
    %0 = arith.index_cast %arg0 : i32 to index
    %1 = arith.index_cast %arg1 : i32 to index
    %2 = memref.load %arg3[%0, %1] : memref<2x2xi32, #tpu.memory_space<smem>>
    %c0_i32 = arith.constant 0 : i32
    %3 = arith.cmpi eq, %arg2, %c0_i32 : i32
    %4 = arith.extui %3 : i1 to i32
    %c0_i32_0 = arith.constant 0 : i32
    %5 = arith.cmpi ne, %4, %c0_i32_0 : i32
    scf.if %5 {
      %c0 = arith.constant 0 : index
      %c0_3 = arith.constant 0 : index
      %c0_4 = arith.constant 0 : index
      %12 = vector.load %arg4[%c0, %c0_3, %c0_4] : memref<1x128x128xbf16, #tpu.memory_space<vmem>>, vector<1x128x128xbf16>
      %13 = vector.shape_cast %12 : vector<1x128x128xbf16> to vector<128x128xbf16>
      %c0_5 = arith.constant 0 : index
      %c0_6 = arith.constant 0 : index
      %14 = vector.load %arg7[%c0_5, %c0_6] : memref<128x128xbf16, #tpu.memory_space<vmem>>, vector<128x128xbf16>
      %cst = arith.constant dense<0.000000e+00> : vector<128x128xf32>
      %15 = tpu.matmul %13, %14, %cst {dimension_numbers = #tpu.dot_dimension_numbers<[1], [0], [0], [1], [0, 0, 1, 1], [], []>} : vector<128x128xbf16>, vector<128x128xbf16>, vector<128x128xf32> -> vector<128x128xf32>
      %c0_7 = arith.constant 0 : index
      %c0_8 = arith.constant 0 : index
      %16 = vector.load %arg8[%c0_7, %c0_8] : memref<1x128xf32, #tpu.memory_space<vmem>>, vector<1x128xf32>
      %17 = vector.broadcast %16 : vector<1x128xf32> to vector<128x128xf32>
      %18 = arith.addf %15, %17 : vector<128x128xf32>
      %cst_9 = arith.constant 0.176776692 : f32
      %19 = vector.broadcast %cst_9 : f32 to vector<128x128xf32>
      %20 = arith.mulf %18, %19 : vector<128x128xf32>
      %21 = vector.extract_strided_slice %20 {offsets = [0, 0], sizes = [128, 32], strides = [1, 1]} : vector<128x128xf32> to vector<128x32xf32>
      %22 = vector.extract_strided_slice %20 {offsets = [0, 32], sizes = [128, 32], strides = [1, 1]} : vector<128x128xf32> to vector<128x32xf32>
      %23 = vector.extract_strided_slice %20 {offsets = [0, 64], sizes = [128, 32], strides = [1, 1]} : vector<128x128xf32> to vector<128x32xf32>
      %24 = vector.extract_strided_slice %20 {offsets = [0, 96], sizes = [128, 32], strides = [1, 1]} : vector<128x128xf32> to vector<128x32xf32>
      %25 = vector.shape_cast %21 : vector<128x32xf32> to vector<1x128x32xf32>
      %26 = vector.shape_cast %22 : vector<128x32xf32> to vector<1x128x32xf32>
      %27 = vector.shape_cast %23 : vector<128x32xf32> to vector<1x128x32xf32>
      %28 = vector.shape_cast %24 : vector<128x32xf32> to vector<1x128x32xf32>
      %29 = tpu.concatenate %25, %26, %27, %28 in 0 : vector<1x128x32xf32>, vector<1x128x32xf32>, vector<1x128x32xf32>, vector<1x128x32xf32> -> vector<4x128x32xf32>
      %30 = arith.truncf %29 : vector<4x128x32xf32> to vector<4x128x32xbf16>
      %c0_10 = arith.constant 0 : index
      %c0_11 = arith.constant 0 : index
      %c0_12 = arith.constant 0 : index
      %31 = vector.load %arg14[%c0_10, %c0_11, %c0_12] : memref<4x128x32xbf16, #tpu.memory_space<vmem>>, vector<4x128x32xbf16>
      tpu.vector_store %arg14[%c0_10, %c0_11, %c0_12], %30 {strides = array<i32>} : memref<4x128x32xbf16, #tpu.memory_space<vmem>>, vector<4x128x32xbf16>,
      %cst_13 = arith.constant 0xFF800000 : f32
      %32 = vector.broadcast %cst_13 : f32 to vector<4x128x1xf32>
      %c0_14 = arith.constant 0 : index
      %c0_15 = arith.constant 0 : index
      %c0_16 = arith.constant 0 : index
      %33 = vector.load %arg15[%c0_14, %c0_15, %c0_16] : memref<4x128x1xf32, #tpu.memory_space<vmem>>, vector<4x128x1xf32>
      tpu.vector_store %arg15[%c0_14, %c0_15, %c0_16], %32 {strides = array<i32>} : memref<4x128x1xf32, #tpu.memory_space<vmem>>, vector<4x128x1xf32>,
      %cst_17 = arith.constant 0.000000e+00 : f32
      %34 = vector.broadcast %cst_17 : f32 to vector<4x128x1xf32>
      %c0_18 = arith.constant 0 : index
      %c0_19 = arith.constant 0 : index
      %c0_20 = arith.constant 0 : index
      %35 = vector.load %arg16[%c0_18, %c0_19, %c0_20] : memref<4x128x1xf32, #tpu.memory_space<vmem>>, vector<4x128x1xf32>
      tpu.vector_store %arg16[%c0_18, %c0_19, %c0_20], %34 {strides = array<i32>} : memref<4x128x1xf32, #tpu.memory_space<vmem>>, vector<4x128x1xf32>,
      %cst_21 = arith.constant 0.000000e+00 : f32
      %36 = vector.broadcast %cst_21 : f32 to vector<4x128x32xf32>
      %c0_22 = arith.constant 0 : index
      %c0_23 = arith.constant 0 : index
      %c0_24 = arith.constant 0 : index
      %37 = vector.load %arg17[%c0_22, %c0_23, %c0_24] : memref<4x128x32xf32, #tpu.memory_space<vmem>>, vector<4x128x32xf32>
      tpu.vector_store %arg17[%c0_22, %c0_23, %c0_24], %36 {strides = array<i32>} : memref<4x128x32xf32, #tpu.memory_space<vmem>>, vector<4x128x32xf32>,
    } else {
    }
    %6 = arith.cmpi slt, %arg2, %2 : i32
    %7 = arith.extui %6 : i1 to i32
    %c0_i32_1 = arith.constant 0 : i32
    %8 = arith.cmpi ne, %7, %c0_i32_1 : i32
    scf.if %8 {
      %c0 = arith.constant 0 : index
      %c0_3 = arith.constant 0 : index
      %c0_4 = arith.constant 0 : index
      %c0_5 = arith.constant 0 : index
      %12 = vector.load %arg5[%c0, %c0_3, %c0_4, %c0_5] : memref<1x4x128x32xbf16, #tpu.memory_space<vmem>>, vector<1x4x128x32xbf16>
      %13 = vector.shape_cast %12 : vector<1x4x128x32xbf16> to vector<4x128x32xbf16>
      %c0_6 = arith.constant 0 : index
      %c0_7 = arith.constant 0 : index
      %c0_8 = arith.constant 0 : index
      %c0_9 = arith.constant 0 : index
      %14 = vector.load %arg6[%c0_6, %c0_7, %c0_8, %c0_9] : memref<1x4x128x32xbf16, #tpu.memory_space<vmem>>, vector<1x4x128x32xbf16>
      %15 = vector.shape_cast %14 : vector<1x4x128x32xbf16> to vector<4x128x32xbf16>
      %c0_10 = arith.constant 0 : index
      %c0_11 = arith.constant 0 : index
      %c0_12 = arith.constant 0 : index
      %16 = vector.load %arg14[%c0_10, %c0_11, %c0_12] : memref<4x128x32xbf16, #tpu.memory_space<vmem>>, vector<4x128x32xbf16>
      %cst = arith.constant dense<0.000000e+00> : vector<4x128x128xf32>
      %17 = tpu.matmul %16, %13, %cst {dimension_numbers = #tpu.dot_dimension_numbers<[2], [2], [1], [1], [0, 0, 0, 1, 1, 1], [0], [0]>} : vector<4x128x32xbf16>, vector<4x128x32xbf16>, vector<4x128x128xf32> -> vector<4x128x128xf32>
      %c0_13 = arith.constant 0 : index
      %c0_14 = arith.constant 0 : index
      %18 = vector.load %arg11[%c0_13, %c0_14] : memref<128x128xf32, #tpu.memory_space<vmem>>, vector<128x128xf32>
      %c0_15 = arith.constant 0 : index
      %c0_16 = arith.constant 0 : index
      %c0_17 = arith.constant 0 : index
      %19 = vector.load %arg12[%c0_15, %c0_16, %c0_17] : memref<1x1x128xf32, #tpu.memory_space<vmem>>, vector<1x1x128xf32>
      %20 = vector.shape_cast %19 : vector<1x1x128xf32> to vector<1x128xf32>
      %21 = vector.broadcast %20 : vector<1x128xf32> to vector<128x128xf32>
      %22 = arith.addf %18, %21 : vector<128x128xf32>
      %23 = vector.shape_cast %22 : vector<128x128xf32> to vector<1x128x128xf32>
      %24 = vector.broadcast %23 : vector<1x128x128xf32> to vector<4x128x128xf32>
      %25 = arith.addf %17, %24 : vector<4x128x128xf32>
      %c0_18 = arith.constant 0 : index
      %c0_19 = arith.constant 0 : index
      %c0_20 = arith.constant 0 : index
      %26 = vector.load %arg15[%c0_18, %c0_19, %c0_20] : memref<4x128x1xf32, #tpu.memory_space<vmem>>, vector<4x128x1xf32>
      %cst_21 = arith.constant dense<0xFF800000> : vector<4x128xf32>
      %27 = vector.multi_reduction <maximumf>, %25, %cst_21 [2] : vector<4x128x128xf32> to vector<4x128xf32>
      %28 = vector.shape_cast %27 : vector<4x128xf32> to vector<4x128x1xf32>
      %29 = arith.maximumf %26, %28 : vector<4x128x1xf32>
      %30 = arith.subf %26, %29 : vector<4x128x1xf32>
      %31 = math.exp %30 : vector<4x128x1xf32>
      %32 = vector.broadcast %29 : vector<4x128x1xf32> to vector<4x128x128xf32>
      %33 = arith.subf %25, %32 : vector<4x128x128xf32>
      %34 = math.exp %33 : vector<4x128x128xf32>
      %c0_22 = arith.constant 0 : index
      %c0_23 = arith.constant 0 : index
      %c0_24 = arith.constant 0 : index
      %35 = vector.load %arg16[%c0_22, %c0_23, %c0_24] : memref<4x128x1xf32, #tpu.memory_space<vmem>>, vector<4x128x1xf32>
      %36 = arith.mulf %31, %35 : vector<4x128x1xf32>
      %cst_25 = arith.constant dense<0.000000e+00> : vector<4x128xf32>
      %37 = vector.multi_reduction <add>, %34, %cst_25 [2] : vector<4x128x128xf32> to vector<4x128xf32>
      %38 = vector.shape_cast %37 : vector<4x128xf32> to vector<4x128x1xf32>
      %39 = arith.addf %36, %38 : vector<4x128x1xf32>
      %c0_26 = arith.constant 0 : index
      %c0_27 = arith.constant 0 : index
      %c0_28 = arith.constant 0 : index
      %40 = vector.load %arg16[%c0_26, %c0_27, %c0_28] : memref<4x128x1xf32, #tpu.memory_space<vmem>>, vector<4x128x1xf32>
      tpu.vector_store %arg16[%c0_26, %c0_27, %c0_28], %39 {strides = array<i32>} : memref<4x128x1xf32, #tpu.memory_space<vmem>>, vector<4x128x1xf32>,
      %41 = arith.truncf %34 : vector<4x128x128xf32> to vector<4x128x128xbf16>
      %cst_29 = arith.constant dense<0.000000e+00> : vector<4x128x32xf32>
      %42 = tpu.matmul %41, %15, %cst_29 {dimension_numbers = #tpu.dot_dimension_numbers<[2], [1], [1], [2], [0, 0, 0, 1, 1, 2], [0], [0]>} : vector<4x128x128xbf16>, vector<4x128x32xbf16>, vector<4x128x32xf32> -> vector<4x128x32xf32>
      %c0_30 = arith.constant 0 : index
      %c0_31 = arith.constant 0 : index
      %c0_32 = arith.constant 0 : index
      %43 = vector.load %arg17[%c0_30, %c0_31, %c0_32] : memref<4x128x32xf32, #tpu.memory_space<vmem>>, vector<4x128x32xf32>
      %44 = vector.broadcast %31 : vector<4x128x1xf32> to vector<4x128x32xf32>
      %45 = arith.mulf %44, %43 : vector<4x128x32xf32>
      %46 = arith.addf %45, %42 : vector<4x128x32xf32>
      %c0_33 = arith.constant 0 : index
      %c0_34 = arith.constant 0 : index
      %c0_35 = arith.constant 0 : index
      %47 = vector.load %arg17[%c0_33, %c0_34, %c0_35] : memref<4x128x32xf32, #tpu.memory_space<vmem>>, vector<4x128x32xf32>
      tpu.vector_store %arg17[%c0_33, %c0_34, %c0_35], %46 {strides = array<i32>} : memref<4x128x32xf32, #tpu.memory_space<vmem>>, vector<4x128x32xf32>,
      %c0_36 = arith.constant 0 : index
      %c0_37 = arith.constant 0 : index
      %c0_38 = arith.constant 0 : index
      %48 = vector.load %arg15[%c0_36, %c0_37, %c0_38] : memref<4x128x1xf32, #tpu.memory_space<vmem>>, vector<4x128x1xf32>
      tpu.vector_store %arg15[%c0_36, %c0_37, %c0_38], %29 {strides = array<i32>} : memref<4x128x1xf32, #tpu.memory_space<vmem>>, vector<4x128x1xf32>,
    } else {
    }
    %c1_i32 = arith.constant 1 : i32
    %9 = arith.cmpi eq, %arg2, %c1_i32 : i32
    %10 = arith.extui %9 : i1 to i32
    %c0_i32_2 = arith.constant 0 : i32
    %11 = arith.cmpi ne, %10, %c0_i32_2 : i32
    scf.if %11 {
      %c0 = arith.constant 0 : index
      %c0_3 = arith.constant 0 : index
      %c0_4 = arith.constant 0 : index
      %12 = vector.load %arg17[%c0, %c0_3, %c0_4] : memref<4x128x32xf32, #tpu.memory_space<vmem>>, vector<4x128x32xf32>
      %c0_5 = arith.constant 0 : index
      %c0_6 = arith.constant 0 : index
      %c0_7 = arith.constant 0 : index
      %13 = vector.load %arg16[%c0_5, %c0_6, %c0_7] : memref<4x128x1xf32, #tpu.memory_space<vmem>>, vector<4x128x1xf32>
      %14 = tpu.reciprocal %13 {approx = true} : vector<4x128x1xf32> -> vector<4x128x1xf32>
      %15 = vector.broadcast %14 : vector<4x128x1xf32> to vector<4x128x32xf32>
      %16 = arith.mulf %12, %15 : vector<4x128x32xf32>
      %17 = vector.extract_strided_slice %16 {offsets = [0, 0, 0], sizes = [1, 128, 32], strides = [1, 1, 1]} : vector<4x128x32xf32> to vector<1x128x32xf32>
      %18 = vector.shape_cast %17 : vector<1x128x32xf32> to vector<128x32xf32>
      %19 = vector.extract_strided_slice %16 {offsets = [1, 0, 0], sizes = [1, 128, 32], strides = [1, 1, 1]} : vector<4x128x32xf32> to vector<1x128x32xf32>
      %20 = vector.shape_cast %19 : vector<1x128x32xf32> to vector<128x32xf32>
      %21 = vector.extract_strided_slice %16 {offsets = [2, 0, 0], sizes = [1, 128, 32], strides = [1, 1, 1]} : vector<4x128x32xf32> to vector<1x128x32xf32>
      %22 = vector.shape_cast %21 : vector<1x128x32xf32> to vector<128x32xf32>
      %23 = vector.extract_strided_slice %16 {offsets = [3, 0, 0], sizes = [1, 128, 32], strides = [1, 1, 1]} : vector<4x128x32xf32> to vector<1x128x32xf32>
      %24 = vector.shape_cast %23 : vector<1x128x32xf32> to vector<128x32xf32>
      %25 = tpu.concatenate %18, %20, %22, %24 in 1 : vector<128x32xf32>, vector<128x32xf32>, vector<128x32xf32>, vector<128x32xf32> -> vector<128x128xf32>
      %26 = arith.truncf %25 : vector<128x128xf32> to vector<128x128xbf16>
      %c0_8 = arith.constant 0 : index
      %c0_9 = arith.constant 0 : index
      %27 = vector.load %arg9[%c0_8, %c0_9] : memref<128x128xbf16, #tpu.memory_space<vmem>>, vector<128x128xbf16>
      %cst = arith.constant dense<0.000000e+00> : vector<128x128xf32>
      %28 = tpu.matmul %26, %27, %cst {dimension_numbers = #tpu.dot_dimension_numbers<[1], [0], [0], [1], [0, 0, 1, 1], [], []>} : vector<128x128xbf16>, vector<128x128xbf16>, vector<128x128xf32> -> vector<128x128xf32>
      %c0_10 = arith.constant 0 : index
      %c0_11 = arith.constant 0 : index
      %29 = vector.load %arg10[%c0_10, %c0_11] : memref<1x128xf32, #tpu.memory_space<vmem>>, vector<1x128xf32>
      %30 = vector.broadcast %29 : vector<1x128xf32> to vector<128x128xf32>
      %31 = arith.addf %28, %30 : vector<128x128xf32>
      %c0_12 = arith.constant 0 : index
      %c0_13 = arith.constant 0 : index
      %c0_14 = arith.constant 0 : index
      %32 = vector.load %arg13[%c0_12, %c0_13, %c0_14] : memref<1x128x128xf32, #tpu.memory_space<vmem>>, vector<1x128x128xf32>
      %33 = vector.shape_cast %32 : vector<1x128x128xf32> to vector<128x128xf32>
      %34 = vector.shape_cast %31 : vector<128x128xf32> to vector<1x128x128xf32>
      tpu.vector_store %arg13[%c0_12, %c0_13, %c0_14], %34 {strides = array<i32>} : memref<1x128x128xf32, #tpu.memory_space<vmem>>, vector<1x128x128xf32>,
    } else {
    }
    return
  }
  func.func @transform_0(%arg0: i32, %arg1: i32, %arg2: i32, %arg3: memref<2x2xi32, #tpu.memory_space<smem>>) -> (i32, i32, i32) {
    %c0_i32 = arith.constant 0 : i32
    %c0_i32_0 = arith.constant 0 : i32
    return %arg0, %arg1, %c0_i32 : i32, i32, i32
  }
  func.func @transform_1(%arg0: i32, %arg1: i32, %arg2: i32, %arg3: memref<2x2xi32, #tpu.memory_space<smem>>) -> (i32, i32, i32, i32) {
    %0 = arith.index_cast %arg0 : i32 to index
    %1 = arith.index_cast %arg1 : i32 to index
    %2 = memref.load %arg3[%0, %1] : memref<2x2xi32, #tpu.memory_space<smem>>
    %c1_i32 = arith.constant 1 : i32
    %3 = arith.subi %2, %c1_i32 : i32
    %4 = arith.minsi %arg2, %3 : i32
    %c0_i32 = arith.constant 0 : i32
    %c0_i32_0 = arith.constant 0 : i32
    %c0_i32_1 = arith.constant 0 : i32
    return %arg0, %c0_i32, %4, %c0_i32_0 : i32, i32, i32, i32
  }
  func.func @transform_2(%arg0: i32, %arg1: i32, %arg2: i32, %arg3: memref<2x2xi32, #tpu.memory_space<smem>>) -> (i32, i32, i32, i32) {
    %0 = arith.index_cast %arg0 : i32 to index
    %1 = arith.index_cast %arg1 : i32 to index
    %2 = memref.load %arg3[%0, %1] : memref<2x2xi32, #tpu.memory_space<smem>>
    %c1_i32 = arith.constant 1 : i32
    %3 = arith.subi %2, %c1_i32 : i32
    %4 = arith.minsi %arg2, %3 : i32
    %c0_i32 = arith.constant 0 : i32
    %c0_i32_0 = arith.constant 0 : i32
    %c0_i32_1 = arith.constant 0 : i32
    return %arg0, %c0_i32, %4, %c0_i32_0 : i32, i32, i32, i32
  }
  func.func @transform_3(%arg0: i32, %arg1: i32, %arg2: i32, %arg3: memref<2x2xi32, #tpu.memory_space<smem>>) -> (i32, i32) {
    %c0_i32 = arith.constant 0 : i32
    %c0_i32_0 = arith.constant 0 : i32
    %c0_i32_1 = arith.constant 0 : i32
    return %c0_i32, %c0_i32_0 : i32, i32
  }
  func.func @transform_4(%arg0: i32, %arg1: i32, %arg2: i32, %arg3: memref<2x2xi32, #tpu.memory_space<smem>>) -> (i32, i32) {
    %c0_i32 = arith.constant 0 : i32
    %c0_i32_0 = arith.constant 0 : i32
    %c0_i32_1 = arith.constant 0 : i32
    return %c0_i32, %c0_i32_0 : i32, i32
  }
  func.func @transform_5(%arg0: i32, %arg1: i32, %arg2: i32, %arg3: memref<2x2xi32, #tpu.memory_space<smem>>) -> (i32, i32) {
    %c0_i32 = arith.constant 0 : i32
    %c0_i32_0 = arith.constant 0 : i32
    %c0_i32_1 = arith.constant 0 : i32
    return %c0_i32, %c0_i32_0 : i32, i32
  }
  func.func @transform_6(%arg0: i32, %arg1: i32, %arg2: i32, %arg3: memref<2x2xi32, #tpu.memory_space<smem>>) -> (i32, i32) {
    %c0_i32 = arith.constant 0 : i32
    %c0_i32_0 = arith.constant 0 : i32
    %c0_i32_1 = arith.constant 0 : i32
    return %c0_i32, %c0_i32_0 : i32, i32
  }
  func.func @transform_7(%arg0: i32, %arg1: i32, %arg2: i32, %arg3: memref<2x2xi32, #tpu.memory_space<smem>>) -> (i32, i32) {
    %0 = arith.index_cast %arg0 : i32 to index
    %1 = arith.index_cast %arg1 : i32 to index
    %2 = memref.load %arg3[%0, %1] : memref<2x2xi32, #tpu.memory_space<smem>>
    %c1_i32 = arith.constant 1 : i32
    %3 = arith.subi %2, %c1_i32 : i32
    %4 = arith.minsi %arg2, %3 : i32
    %c0_i32 = arith.constant 0 : i32
    return %arg1, %4 : i32, i32
  }
  func.func @transform_8(%arg0: i32, %arg1: i32, %arg2: i32, %arg3: memref<2x2xi32, #tpu.memory_space<smem>>) -> (i32, i32, i32) {
    %0 = arith.index_cast %arg0 : i32 to index
    %1 = arith.index_cast %arg1 : i32 to index
    %2 = memref.load %arg3[%0, %1] : memref<2x2xi32, #tpu.memory_space<smem>>
    %c1_i32 = arith.constant 1 : i32
    %3 = arith.subi %2, %c1_i32 : i32
    %4 = arith.minsi %arg2, %3 : i32
    %c0_i32 = arith.constant 0 : i32
    %c0_i32_0 = arith.constant 0 : i32
    return %arg0, %c0_i32, %4 : i32, i32, i32
  }
  func.func @transform_9(%arg0: i32, %arg1: i32, %arg2: i32, %arg3: memref<2x2xi32, #tpu.memory_space<smem>>) -> (i32, i32, i32) {
    %c0_i32 = arith.constant 0 : i32
    %c0_i32_0 = arith.constant 0 : i32
    return %arg0, %arg1, %c0_i32 : i32, i32, i32
  }
}

</mosaic_0001>

<llo_original>
// kernel: tpu_custom_call.1
$region0: #{tpu_custom_call.1}
  #allocation0 [shape = 'u32[]', space=smem, size = 0x4, offset = 0x4, fixed_abs, tag = 'smem constant byte address 0x4 - core index']
  #allocation1 [shape = 'u32[144,128]{1,0:T(1,128)}', space=vmem, size = 0x12000, scoped, tag = 'internal scratch']
  #allocation2 [shape = 'bf16[4,128,32]{2,1,0:T(16,128)(2,1)}', space=vmem, size = 0x20000, scoped, tag = 'scratch operand']
  #allocation3 [shape = 'f32[4,128,1]{2,1,0:T(8,128)}', space=vmem, size = 0x40000, scoped, tag = 'scratch operand']
  #allocation4 [shape = 'f32[4,128,1]{2,1,0:T(8,128)}', space=vmem, size = 0x40000, scoped, tag = 'scratch operand']
  #allocation5 [shape = 'f32[4,128,32]{2,1,0:T(8,128)}', space=vmem, size = 0x40000, scoped, tag = 'scratch operand']
  #allocation6 [shape = 's32[1]{0}', space=sflag, size = 0x4, scoped, tag = 'scoped memory for tpu_custom_call.1']
  #allocation7 [shape = 'u8[1024]{0}', space=smem, size = 0x400, scoped, tag = 'prefetched SMEM operand 0']
  %s0 = inlined_call_operand.vmem [shape: s32[2,2], index: 0, kind: input, shape index: {}]
  %s1 = inlined_call_operand.vmem [shape: bf16[2,256,128], index: 1, kind: input, shape index: {}]
  %s2 = inlined_call_operand.vmem [shape: bf16[2,4,256,32], index: 2, kind: input, shape index: {}]
  %s3 = inlined_call_operand.vmem [shape: bf16[2,4,256,32], index: 3, kind: input, shape index: {}]
  %s4 = inlined_call_operand.vmem [shape: bf16[128,128], index: 4, kind: input, shape index: {}]
  %s5 = inlined_call_operand.vmem [shape: f32[1,128], index: 5, kind: input, shape index: {}]
  %s6 = inlined_call_operand.vmem [shape: bf16[128,128], index: 6, kind: input, shape index: {}]
  %s7 = inlined_call_operand.vmem [shape: f32[1,128], index: 7, kind: input, shape index: {}]
  %s8 = inlined_call_operand.vmem [shape: f32[256,256], index: 8, kind: input, shape index: {}]
  %s9 = inlined_call_operand.vmem [shape: f32[2,1,256], index: 9, kind: input, shape index: {}]
  %s10 = inlined_call_operand.hbm [shape: f32[2,256,128], index: 10, kind: output, shape index: {}]
  %s11 = sld [smem:[#allocation0]]
  $region201: #{tpu_custom_call.1} parent=0
    _
  %s13 = ssub.s32 1, %s11
  %s14 = scalar_select 0, %s13, %s11
  %s15 = sshll.u32 %s0, 4
  %s16 = int_to_ptr.vmem [resolvable:$true] %s15
  %18 = dma.vmem_to_smem %s16, 32, [#allocation7], [#allocation6]
  %19 = dma.done [#allocation6], 32
  %20 = sfence
  $region1: #{tpu_custom_call.1} parent=0
    #allocation8 [shape = 'u8[262144]{0}', space=vmem, size = 0x40000, scoped, tag = 'input window, operand 2']
    #allocation9 [shape = 'u8[262144]{0}', space=vmem, size = 0x40000, scoped, tag = 'input window, operand 3']
    #allocation10 [shape = 'u8[131072]{0}', space=vmem, size = 0x20000, scoped, tag = 'input window, operand 8']
    #allocation11 [shape = 'u8[131072]{0}', space=vmem, size = 0x20000, scoped, tag = 'output window, operand 0']
    #allocation12 [shape = 's32[2]{0}', space=sflag, size = 0x8, scoped, tag = 'scoped memory for tpu_custom_call.1']
    %21 = vsyncpa [#allocation12], 0
    %s22 = scalar_lea.sflag [#allocation12], 1
    %23 = vsyncpa %s22, 0
    loop: start=0, step=1, limit=10
    $region2: #{tpu_custom_call.1} parent=1 // loop_pre_header
      _
    $region3: #{tpu_custom_call.1} parent=1 // loop_header
      %s25 = sphi 0, %s29
      %p26 = scmp.ge.s32.totalorder %s25, 10
      %s32 = sphi 0, %s51
      %s33 = sphi 0, %s47
      %s34 = sphi 0, %s43
      %s35 = sphi 0, %s32
      %s36 = sphi 0, %s33
      %s37 = sphi 0, %s34
      %s38 = sphi 0, %s35
      %s39 = sphi 0, %s36
      %s40 = sphi 0, %s37
      %s56 = sphi 0, %s58
      %s59 = sphi 0, %s56
      %s60 = sphi 0, %s59
      %s76 = sphi 0, %s60
      %s106 = sphi 0, %s108
      %s109 = sphi 0, %s106
      %s110 = sphi 0, %s109
      %s126 = sphi 0, %s110
      %s156 = sphi 0, %s158
      %s159 = sphi 0, %s156
      %s160 = sphi 0, %s159
      %s176 = sphi 0, %s160
      %s180 = sphi 0, %s180
      %s182 = sphi 0, %s180
      %s183 = sphi 0, %s182
      %s197 = sphi 0, %s183
      %s201 = sphi 0, %s201
      %s203 = sphi 0, %s201
      %s204 = sphi 0, %s203
      %s218 = sphi 0, %s204
      %s222 = sphi 0, %s222
      %s224 = sphi 0, %s222
      %s225 = sphi 0, %s224
      %s239 = sphi 0, %s225
      %s243 = sphi 0, %s243
      %s245 = sphi 0, %s243
      %s246 = sphi 0, %s245
      %s260 = sphi 0, %s246
      %s290 = sphi 0, %s292
      %s293 = sphi 0, %s290
      %s294 = sphi 0, %s293
      %s310 = sphi 0, %s294
      %s340 = sphi 0, %s342
      %s343 = sphi 0, %s340
      %s344 = sphi 0, %s343
      %s360 = sphi 0, %s344
      %s368 = sphi 0, %s370
      %s371 = sphi 0, %s368
      %s372 = sphi 0, %s371
      %s388 = sphi 0, %s372
    $region4: #{tpu_custom_call.1} parent=1 // loop_header_branch
      %28 = sbr.rel (%p26) target = $region8
    $region5: #{tpu_custom_call.1} parent=1 // loop_body
      %s30 = ssub.s32 %s25, 1
      %s31 = ssub.s32 %s25, 2
      %s41 = sadd.s32 1, %s34
      %p42 = scmp.ge.s32.totalorder %s41, 2
      %s43 = scalar_select %p42, 0, %s41
      %s44 = sadd.s32 1, %s33
      %s45 = scalar_select %p42, %s44, %s33
      %p46 = scmp.ge.s32.totalorder %s45, 2
      %s47 = scalar_select %p46, 0, %s45
      %s48 = sadd.s32 1, %s32
      %s49 = scalar_select %p46, %s48, %s32
      %p50 = scmp.ge.s32.totalorder %s49, 2
      %s51 = scalar_select %p50, 0, %s49
      %s52 = ssub.s32 %s32, %s51
      %s53 = ssub.s32 %s33, %s47
      %s54 = sor.u32 %s52, %s53
      %p55 = scmp.eq.s32.totalorder %s54, 0
      %s57 = sadd.s32 %s56, 1
      %s58 = scalar_select %p55, %s56, %s57
      %p61 = pneg %p55
      %p62 = scmp.eq.s32.totalorder %s25, 7
      %p63 = por %p61, %p62
      %p64 = scmp.ne.s32.totalorder %s56, %s59
      %p65 = scmp.eq.s32.totalorder %s25, 0
      %p66 = por %p64, %p65
      %p67 = scmp.ne.s32.totalorder %s56, %s59
      %p68 = scmp.eq.s32.totalorder %s30, 7
      %p69 = por %p67, %p68
      %p70 = scmp.ne.s32.totalorder %s59, %s60
      %p71 = scmp.eq.s32.totalorder %s30, 0
      %p72 = por %p70, %p71
      %p73 = scmp.ne.s32.totalorder %s59, %s60
      %p74 = scmp.eq.s32.totalorder %s31, 7
      %p75 = por %p73, %p74
      %p77 = scmp.ne.s32.totalorder %s60, %s76
      %p78 = scmp.eq.s32.totalorder %s31, 0
      %p79 = por %p77, %p78
      %s80 = sshra.s32 %s33, 7
      %s81 = sand.u32 %s33, 127
      %s82 = sadd.s32 %s80, %s32
      %s83 = smul.u32 %s82, 128
      %s84 = sshra.s32 %s33, 7
      %s85 = sand.u32 %s33, 127
      %s86 = sadd.s32 %s83, %s85
      %s87 = sld [smem:[#allocation7 + %s86]]
      %s88 = ssub.s32 %s87, 1
      %p89 = scmp.lt.s32.totalorder %s34, %s88
      %s90 = scalar_select %p89, %s34, %s88
      %s91 = sshra.s32 %s47, 7
      %s92 = sand.u32 %s47, 127
      %s93 = sadd.s32 %s91, %s51
      %s94 = smul.u32 %s93, 128
      %s95 = sshra.s32 %s47, 7
      %s96 = sand.u32 %s47, 127
      %s97 = sadd.s32 %s94, %s96
      %s98 = sld [smem:[#allocation7 + %s97]]
      %s99 = ssub.s32 %s98, 1
      %p100 = scmp.lt.s32.totalorder %s43, %s99
      %s101 = scalar_select %p100, %s43, %s99
      %s102 = ssub.s32 %s32, %s51
      %s103 = ssub.s32 %s90, %s101
      %s104 = sor.u32 %s102, %s103
      %p105 = scmp.eq.s32.totalorder %s104, 0
      %s107 = sadd.s32 %s106, 1
      %s108 = scalar_select %p105, %s106, %s107
      %p111 = pneg %p105
      %p112 = scmp.eq.s32.totalorder %s25, 7
      %p113 = por %p111, %p112
      %p114 = scmp.ne.s32.totalorder %s106, %s109
      %p115 = scmp.eq.s32.totalorder %s25, 0
      %p116 = por %p114, %p115
      %p117 = scmp.ne.s32.totalorder %s106, %s109
      %p118 = scmp.eq.s32.totalorder %s30, 7
      %p119 = por %p117, %p118
      %p120 = scmp.ne.s32.totalorder %s109, %s110
      %p121 = scmp.eq.s32.totalorder %s30, 0
      %p122 = por %p120, %p121
      %p123 = scmp.ne.s32.totalorder %s109, %s110
      %p124 = scmp.eq.s32.totalorder %s31, 7
      %p125 = por %p123, %p124
      %p127 = scmp.ne.s32.totalorder %s110, %s126
      %p128 = scmp.eq.s32.totalorder %s31, 0
      %p129 = por %p127, %p128
      %s130 = sshra.s32 %s33, 7
      %s131 = sand.u32 %s33, 127
      %s132 = sadd.s32 %s130, %s32
      %s133 = smul.u32 %s132, 128
      %s134 = sshra.s32 %s33, 7
      %s135 = sand.u32 %s33, 127
      %s136 = sadd.s32 %s133, %s135
      %s137 = sld [smem:[#allocation7 + %s136]]
      %s138 = ssub.s32 %s137, 1
      %p139 = scmp.lt.s32.totalorder %s34, %s138
      %s140 = scalar_select %p139, %s34, %s138
      %s141 = sshra.s32 %s47, 7
      %s142 = sand.u32 %s47, 127
      %s143 = sadd.s32 %s141, %s51
      %s144 = smul.u32 %s143, 128
      %s145 = sshra.s32 %s47, 7
      %s146 = sand.u32 %s47, 127
      %s147 = sadd.s32 %s144, %s146
      %s148 = sld [smem:[#allocation7 + %s147]]
      %s149 = ssub.s32 %s148, 1
      %p150 = scmp.lt.s32.totalorder %s43, %s149
      %s151 = scalar_select %p150, %s43, %s149
      %s152 = ssub.s32 %s32, %s51
      %s153 = ssub.s32 %s140, %s151
      %s154 = sor.u32 %s152, %s153
      %p155 = scmp.eq.s32.totalorder %s154, 0
      %s157 = sadd.s32 %s156, 1
      %s158 = scalar_select %p155, %s156, %s157
      %p161 = pneg %p155
      %p162 = scmp.eq.s32.totalorder %s25, 7
      %p163 = por %p161, %p162
      %p164 = scmp.ne.s32.totalorder %s156, %s159
      %p165 = scmp.eq.s32.totalorder %s25, 0
      %p166 = por %p164, %p165
      %p167 = scmp.ne.s32.totalorder %s156, %s159
      %p168 = scmp.eq.s32.totalorder %s30, 7
      %p169 = por %p167, %p168
      %p170 = scmp.ne.s32.totalorder %s159, %s160
      %p171 = scmp.eq.s32.totalorder %s30, 0
      %p172 = por %p170, %p171
      %p173 = scmp.ne.s32.totalorder %s159, %s160
      %p174 = scmp.eq.s32.totalorder %s31, 7
      %p175 = por %p173, %p174
      %p177 = scmp.ne.s32.totalorder %s160, %s176
      %p178 = scmp.eq.s32.totalorder %s31, 0
      %p179 = por %p177, %p178
      %s181 = sadd.s32 %s180, 1
      %p184 = scmp.eq.s32.totalorder %s25, 7
      %p185 = scmp.ne.s32.totalorder %s180, %s182
      %p186 = scmp.eq.s32.totalorder %s25, 0
      %p187 = por %p185, %p186
      %p188 = scmp.ne.s32.totalorder %s180, %s182
      %p189 = scmp.eq.s32.totalorder %s30, 7
      %p190 = por %p188, %p189
      %p191 = scmp.ne.s32.totalorder %s182, %s183
      %p192 = scmp.eq.s32.totalorder %s30, 0
      %p193 = por %p191, %p192
      %p194 = scmp.ne.s32.totalorder %s182, %s183
      %p195 = scmp.eq.s32.totalorder %s31, 7
      %p196 = por %p194, %p195
      %p198 = scmp.ne.s32.totalorder %s183, %s197
      %p199 = scmp.eq.s32.totalorder %s31, 0
      %p200 = por %p198, %p199
      %s202 = sadd.s32 %s201, 1
      %p205 = scmp.eq.s32.totalorder %s25, 7
      %p206 = scmp.ne.s32.totalorder %s201, %s203
      %p207 = scmp.eq.s32.totalorder %s25, 0
      %p208 = por %p206, %p207
      %p209 = scmp.ne.s32.totalorder %s201, %s203
      %p210 = scmp.eq.s32.totalorder %s30, 7
      %p211 = por %p209, %p210
      %p212 = scmp.ne.s32.totalorder %s203, %s204
      %p213 = scmp.eq.s32.totalorder %s30, 0
      %p214 = por %p212, %p213
      %p215 = scmp.ne.s32.totalorder %s203, %s204
      %p216 = scmp.eq.s32.totalorder %s31, 7
      %p217 = por %p215, %p216
      %p219 = scmp.ne.s32.totalorder %s204, %s218
      %p220 = scmp.eq.s32.totalorder %s31, 0
      %p221 = por %p219, %p220
      %s223 = sadd.s32 %s222, 1
      %p226 = scmp.eq.s32.totalorder %s25, 7
      %p227 = scmp.ne.s32.totalorder %s222, %s224
      %p228 = scmp.eq.s32.totalorder %s25, 0
      %p229 = por %p227, %p228
      %p230 = scmp.ne.s32.totalorder %s222, %s224
      %p231 = scmp.eq.s32.totalorder %s30, 7
      %p232 = por %p230, %p231
      %p233 = scmp.ne.s32.totalorder %s224, %s225
      %p234 = scmp.eq.s32.totalorder %s30, 0
      %p235 = por %p233, %p234
      %p236 = scmp.ne.s32.totalorder %s224, %s225
      %p237 = scmp.eq.s32.totalorder %s31, 7
      %p238 = por %p236, %p237
      %p240 = scmp.ne.s32.totalorder %s225, %s239
      %p241 = scmp.eq.s32.totalorder %s31, 0
      %p242 = por %p240, %p241
      %s244 = sadd.s32 %s243, 1
      %p247 = scmp.eq.s32.totalorder %s25, 7
      %p248 = scmp.ne.s32.totalorder %s243, %s245
      %p249 = scmp.eq.s32.totalorder %s25, 0
      %p250 = por %p248, %p249
      %p251 = scmp.ne.s32.totalorder %s243, %s245
      %p252 = scmp.eq.s32.totalorder %s30, 7
      %p253 = por %p251, %p252
      %p254 = scmp.ne.s32.totalorder %s245, %s246
      %p255 = scmp.eq.s32.totalorder %s30, 0
      %p256 = por %p254, %p255
      %p257 = scmp.ne.s32.totalorder %s245, %s246
      %p258 = scmp.eq.s32.totalorder %s31, 7
      %p259 = por %p257, %p258
      %p261 = scmp.ne.s32.totalorder %s246, %s260
      %p262 = scmp.eq.s32.totalorder %s31, 0
      %p263 = por %p261, %p262
      %s264 = sshra.s32 %s33, 7
      %s265 = sand.u32 %s33, 127
      %s266 = sadd.s32 %s264, %s32
      %s267 = smul.u32 %s266, 128
      %s268 = sshra.s32 %s33, 7
      %s269 = sand.u32 %s33, 127
      %s270 = sadd.s32 %s267, %s269
      %s271 = sld [smem:[#allocation7 + %s270]]
      %s272 = ssub.s32 %s271, 1
      %p273 = scmp.lt.s32.totalorder %s34, %s272
      %s274 = scalar_select %p273, %s34, %s272
      %s275 = sshra.s32 %s47, 7
      %s276 = sand.u32 %s47, 127
      %s277 = sadd.s32 %s275, %s51
      %s278 = smul.u32 %s277, 128
      %s279 = sshra.s32 %s47, 7
      %s280 = sand.u32 %s47, 127
      %s281 = sadd.s32 %s278, %s280
      %s282 = sld [smem:[#allocation7 + %s281]]
      %s283 = ssub.s32 %s282, 1
      %p284 = scmp.lt.s32.totalorder %s43, %s283
      %s285 = scalar_select %p284, %s43, %s283
      %s286 = ssub.s32 %s33, %s47
      %s287 = ssub.s32 %s274, %s285
      %s288 = sor.u32 %s286, %s287
      %p289 = scmp.eq.s32.totalorder %s288, 0
      %s291 = sadd.s32 %s290, 1
      %s292 = scalar_select %p289, %s290, %s291
      %p295 = pneg %p289
      %p296 = scmp.eq.s32.totalorder %s25, 7
      %p297 = por %p295, %p296
      %p298 = scmp.ne.s32.totalorder %s290, %s293
      %p299 = scmp.eq.s32.totalorder %s25, 0
      %p300 = por %p298, %p299
      %p301 = scmp.ne.s32.totalorder %s290, %s293
      %p302 = scmp.eq.s32.totalorder %s30, 7
      %p303 = por %p301, %p302
      %p304 = scmp.ne.s32.totalorder %s293, %s294
      %p305 = scmp.eq.s32.totalorder %s30, 0
      %p306 = por %p304, %p305
      %p307 = scmp.ne.s32.totalorder %s293, %s294
      %p308 = scmp.eq.s32.totalorder %s31, 7
      %p309 = por %p307, %p308
      %p311 = scmp.ne.s32.totalorder %s294, %s310
      %p312 = scmp.eq.s32.totalorder %s31, 0
      %p313 = por %p311, %p312
      %s314 = sshra.s32 %s33, 7
      %s315 = sand.u32 %s33, 127
      %s316 = sadd.s32 %s314, %s32
      %s317 = smul.u32 %s316, 128
      %s318 = sshra.s32 %s33, 7
      %s319 = sand.u32 %s33, 127
      %s320 = sadd.s32 %s317, %s319
      %s321 = sld [smem:[#allocation7 + %s320]]
      %s322 = ssub.s32 %s321, 1
      %p323 = scmp.lt.s32.totalorder %s34, %s322
      %s324 = scalar_select %p323, %s34, %s322
      %s325 = sshra.s32 %s47, 7
      %s326 = sand.u32 %s47, 127
      %s327 = sadd.s32 %s325, %s51
      %s328 = smul.u32 %s327, 128
      %s329 = sshra.s32 %s47, 7
      %s330 = sand.u32 %s47, 127
      %s331 = sadd.s32 %s328, %s330
      %s332 = sld [smem:[#allocation7 + %s331]]
      %s333 = ssub.s32 %s332, 1
      %p334 = scmp.lt.s32.totalorder %s43, %s333
      %s335 = scalar_select %p334, %s43, %s333
      %s336 = ssub.s32 %s32, %s51
      %s337 = ssub.s32 %s324, %s335
      %s338 = sor.u32 %s336, %s337
      %p339 = scmp.eq.s32.totalorder %s338, 0
      %s341 = sadd.s32 %s340, 1
      %s342 = scalar_select %p339, %s340, %s341
      %p345 = pneg %p339
      %p346 = scmp.eq.s32.totalorder %s25, 7
      %p347 = por %p345, %p346
      %p348 = scmp.ne.s32.totalorder %s340, %s343
      %p349 = scmp.eq.s32.totalorder %s25, 0
      %p350 = por %p348, %p349
      %p351 = scmp.ne.s32.totalorder %s340, %s343
      %p352 = scmp.eq.s32.totalorder %s30, 7
      %p353 = por %p351, %p352
      %p354 = scmp.ne.s32.totalorder %s343, %s344
      %p355 = scmp.eq.s32.totalorder %s30, 0
      %p356 = por %p354, %p355
      %p357 = scmp.ne.s32.totalorder %s343, %s344
      %p358 = scmp.eq.s32.totalorder %s31, 7
      %p359 = por %p357, %p358
      %p361 = scmp.ne.s32.totalorder %s344, %s360
      %p362 = scmp.eq.s32.totalorder %s31, 0
      %p363 = por %p361, %p362
      %s364 = ssub.s32 %s32, %s51
      %s365 = ssub.s32 %s33, %s47
      %s366 = sor.u32 %s364, %s365
      %p367 = scmp.eq.s32.totalorder %s366, 0
      %s369 = sadd.s32 %s368, 1
      %s370 = scalar_select %p367, %s368, %s369
      %p373 = pneg %p367
      %p374 = scmp.eq.s32.totalorder %s25, 7
      %p375 = por %p373, %p374
      %p376 = scmp.ne.s32.totalorder %s368, %s371
      %p377 = scmp.eq.s32.totalorder %s25, 0
      %p378 = por %p376, %p377
      %p379 = scmp.ne.s32.totalorder %s368, %s371
      %p380 = scmp.eq.s32.totalorder %s30, 7
      %p381 = por %p379, %p380
      %p382 = scmp.ne.s32.totalorder %s371, %s372
      %p383 = scmp.eq.s32.totalorder %s30, 0
      %p384 = por %p382, %p383
      %p385 = scmp.ne.s32.totalorder %s371, %s372
      %p386 = scmp.eq.s32.totalorder %s31, 7
      %p387 = por %p385, %p386
      %p389 = scmp.ne.s32.totalorder %s372, %s388
      %p390 = scmp.eq.s32.totalorder %s31, 0
      %p391 = por %p389, %p390
      %p392 = scmp.le.s32.totalorder 1, %s25
      %p393 = scmp.lt.s32.totalorder %s25, 9
      %p394 = pnand %p392, %p393
      %p395 = pneg %p394
      // Predicated region
      $region9: #{tpu_custom_call.1} parent=5 // pred_check
        _
      $region10: #{tpu_custom_call.1} parent=5 // pred_check_branch
        %397 = sbr.rel (%p394) target = $region12
      $region11: #{tpu_custom_call.1} parent=5 // pred_region
        %s398 = ssub.s32 %s25, 1
        // Predicated region
        $region13: #{tpu_custom_call.1} parent=11 // pred_check
          %p399 = pneg %p193
        $region14: #{tpu_custom_call.1} parent=11 // pred_check_branch
          %401 = sbr.rel (%p399) target = $region16
        $region15: #{tpu_custom_call.1} parent=11 // pred_region
          _
        $region16: #{tpu_custom_call.1} parent=11 // pred_fallthru
          _
        // Predicated region
        $region17: #{tpu_custom_call.1} parent=11 // pred_check
          %p402 = pneg %p214
        $region18: #{tpu_custom_call.1} parent=11 // pred_check_branch
          %404 = sbr.rel (%p402) target = $region20
        $region19: #{tpu_custom_call.1} parent=11 // pred_region
          _
        $region20: #{tpu_custom_call.1} parent=11 // pred_fallthru
          _
        // Predicated region
        $region21: #{tpu_custom_call.1} parent=11 // pred_check
          %p405 = pneg %p235
        $region22: #{tpu_custom_call.1} parent=11 // pred_check_branch
          %407 = sbr.rel (%p405) target = $region24
        $region23: #{tpu_custom_call.1} parent=11 // pred_region
          _
        $region24: #{tpu_custom_call.1} parent=11 // pred_fallthru
          _
        // Predicated region
        $region25: #{tpu_custom_call.1} parent=11 // pred_check
          %p408 = pneg %p256
        $region26: #{tpu_custom_call.1} parent=11 // pred_check_branch
          %410 = sbr.rel (%p408) target = $region28
        $region27: #{tpu_custom_call.1} parent=11 // pred_region
          _
        $region28: #{tpu_custom_call.1} parent=11 // pred_fallthru
          _
      $region12: #{tpu_custom_call.1} parent=5 // pred_fallthru
        _
      %p411 = scmp.lt.s32.totalorder %s25, 8
      // Predicated region
      $region29: #{tpu_custom_call.1} parent=5 // pred_check
        %p412 = pneg %p411
      $region30: #{tpu_custom_call.1} parent=5 // pred_check_branch
        %414 = sbr.rel (%p412) target = $region32
      $region31: #{tpu_custom_call.1} parent=5 // pred_region
        // Predicated region
        $region33: #{tpu_custom_call.1} parent=31 // pred_check
          %p415 = pneg %p66
        $region34: #{tpu_custom_call.1} parent=31 // pred_check_branch
          %417 = sbr.rel (%p415) target = $region36
        $region35: #{tpu_custom_call.1} parent=31 // pred_region
          %s418 = smul.u32 16, %s33
          %p419 = scmp.lt.s32.totalorder %s32, 1
          %s420 = scalar_select %p419, %s32, 1
          %p421 = scmp.lt.s32.totalorder %s418, 31
          %s422 = scalar_select %p421, %s418, 31
          %s423 = smul.addr %s420, 32
          %s424 = sadd.s32 %s422, %s423
          %s425 = smul.addr %s424, 4
          %s426 = scalar_lea.vmem %s1, %s425
          %s427 = smul.u32 16, %s33
        $region36: #{tpu_custom_call.1} parent=31 // pred_fallthru
          _
        // Predicated region
        $region37: #{tpu_custom_call.1} parent=31 // pred_check
          %p428 = pneg %p116
        $region38: #{tpu_custom_call.1} parent=31 // pred_check_branch
          %430 = sbr.rel (%p428) target = $region40
        $region39: #{tpu_custom_call.1} parent=31 // pred_region
          %s431 = sand.u32 %s106, 1
          %s432 = sand.u32 %s106, 1
          %s433 = smul.addr %s432, 256
          %s434 = scalar_lea.vmem [#allocation8], %s433
          %s435 = sshra.s32 %s33, 7
          %s436 = sand.u32 %s33, 127
          %s437 = sadd.s32 %s435, %s32
          %s438 = smul.u32 %s437, 128
          %s439 = sshra.s32 %s33, 7
          %s440 = sand.u32 %s33, 127
          %s441 = sadd.s32 %s438, %s440
          %s442 = sld [smem:[#allocation7 + %s441]]
          %s443 = ssub.s32 %s442, 1
          %p444 = scmp.lt.s32.totalorder %s34, %s443
          %s445 = scalar_select %p444, %s34, %s443
          %s446 = smul.u32 16, %s445
          %s447 = smul.addr %s32, 128
          %s448 = sadd.s32 %s446, %s447
          %s449 = smul.addr %s448, 4
          %s450 = scalar_lea.vmem %s2, %s449
          // Predicated region
          $region41: #{tpu_custom_call.1} parent=39 // pred_check
            _
          $region42: #{tpu_custom_call.1} parent=39 // pred_check_branch
            %452 = sbr.rel (0) target = $region44
          $region43: #{tpu_custom_call.1} parent=39 // pred_region
            // Predicated region
            $region45: #{tpu_custom_call.1} parent=43 // pred_check
              _
            $region46: #{tpu_custom_call.1} parent=43 // pred_check_branch
              %454 = sbr.rel target = $region48
            $region47: #{tpu_custom_call.1} parent=43 // pred_region
              // Predicated region
              $region60: #{tpu_custom_call.1} parent=47 // pred_check
                _
              $region61: #{tpu_custom_call.1} parent=47 // pred_check_branch
                %595 = sbr.rel (0) target = $region63
              $region62: #{tpu_custom_call.1} parent=47 // pred_region
                loop: start=0, step=1, limit=1
                $region64: #{tpu_custom_call.1} parent=62 // loop_pre_header
                  _
                $region65: #{tpu_custom_call.1} parent=62 // loop_header
                  %s597 = sphi 0, %s601
                  %p598 = scmp.ge.s32.totalorder %s597, 1
                  %s602 = sphi %s450, %s450
                  %s603 = sphi %s434, %s434
                $region66: #{tpu_custom_call.1} parent=62 // loop_header_branch
                  %600 = sbr.rel (%p598) target = $region70
                $region67: #{tpu_custom_call.1} parent=62 // loop_body
                  _
                $region68: #{tpu_custom_call.1} parent=62 // loop_footer
                  %s601 = sadd.s32 1, %s597
                $region69: #{tpu_custom_call.1} parent=62 // loop_footer_branch
                  %596 = sbr.rel target = $region65
                $region70: #{tpu_custom_call.1} parent=62 // loop_exit
                  _
                loop: start=0, step=1, limit=1
                $region71: #{tpu_custom_call.1} parent=62 // loop_pre_header
                  _
                $region72: #{tpu_custom_call.1} parent=62 // loop_header
                  %s606 = sphi 0, %s610
                  %p607 = scmp.ge.s32.totalorder %s606, 1
                  %s611 = sphi %s450, %s450
                  %s612 = sphi %s434, %s434
                $region73: #{tpu_custom_call.1} parent=62 // loop_header_branch
                  %609 = sbr.rel (%p607) target = $region77
                $region74: #{tpu_custom_call.1} parent=62 // loop_body
                  %v613 = vld [vmem:[%s611] sm:$0xf]
                  %614 = vst [vmem:[%s612] sm:$0xf] %v613
                  %v615 = vld [vmem:[%s611 + $0x4] sm:$0xf]
                  %616 = vst [vmem:[%s612 + $0x4] sm:$0xf] %v615
                  %v617 = vld [vmem:[%s611 + $0x8] sm:$0xf]
                  %618 = vst [vmem:[%s612 + $0x8] sm:$0xf] %v617
                  %v619 = vld [vmem:[%s611 + $0xc] sm:$0xf]
                  %620 = vst [vmem:[%s612 + $0xc] sm:$0xf] %v619
                  %v621 = vld [vmem:[%s611 + $0x10] sm:$0xf]
                  %622 = vst [vmem:[%s612 + $0x10] sm:$0xf] %v621
                  %v623 = vld [vmem:[%s611 + $0x14] sm:$0xf]
                  %624 = vst [vmem:[%s612 + $0x14] sm:$0xf] %v623
                  %v625 = vld [vmem:[%s611 + $0x18] sm:$0xf]
                  %626 = vst [vmem:[%s612 + $0x18] sm:$0xf] %v625
                  %v627 = vld [vmem:[%s611 + $0x1c] sm:$0xf]
                  %628 = vst [vmem:[%s612 + $0x1c] sm:$0xf] %v627
                  %v629 = vld [vmem:[%s611 + $0x20] sm:$0xf]
                  %630 = vst [vmem:[%s612 + $0x20] sm:$0xf] %v629
                  %v631 = vld [vmem:[%s611 + $0x24] sm:$0xf]
                  %632 = vst [vmem:[%s612 + $0x24] sm:$0xf] %v631
                  %v633 = vld [vmem:[%s611 + $0x28] sm:$0xf]
                  %634 = vst [vmem:[%s612 + $0x28] sm:$0xf] %v633
                  %v635 = vld [vmem:[%s611 + $0x2c] sm:$0xf]
                  %636 = vst [vmem:[%s612 + $0x2c] sm:$0xf] %v635
                  %v637 = vld [vmem:[%s611 + $0x30] sm:$0xf]
                  %638 = vst [vmem:[%s612 + $0x30] sm:$0xf] %v637
                  %v639 = vld [vmem:[%s611 + $0x34] sm:$0xf]
                  %640 = vst [vmem:[%s612 + $0x34] sm:$0xf] %v639
                  %v641 = vld [vmem:[%s611 + $0x38] sm:$0xf]
                  %642 = vst [vmem:[%s612 + $0x38] sm:$0xf] %v641
                  %v643 = vld [vmem:[%s611 + $0x3c] sm:$0xf]
                  %644 = vst [vmem:[%s612 + $0x3c] sm:$0xf] %v643
                  %v645 = vld [vmem:[%s611 + $0x80] sm:$0xf]
                  %646 = vst [vmem:[%s612 + $0x40] sm:$0xf] %v645
                  %v647 = vld [vmem:[%s611 + $0x84] sm:$0xf]
                  %648 = vst [vmem:[%s612 + $0x44] sm:$0xf] %v647
                  %v649 = vld [vmem:[%s611 + $0x88] sm:$0xf]
                  %650 = vst [vmem:[%s612 + $0x48] sm:$0xf] %v649
                  %v651 = vld [vmem:[%s611 + $0x8c] sm:$0xf]
                  %652 = vst [vmem:[%s612 + $0x4c] sm:$0xf] %v651
                  %v653 = vld [vmem:[%s611 + $0x90] sm:$0xf]
                  %654 = vst [vmem:[%s612 + $0x50] sm:$0xf] %v653
                  %v655 = vld [vmem:[%s611 + $0x94] sm:$0xf]
                  %656 = vst [vmem:[%s612 + $0x54] sm:$0xf] %v655
                  %v657 = vld [vmem:[%s611 + $0x98] sm:$0xf]
                  %658 = vst [vmem:[%s612 + $0x58] sm:$0xf] %v657
                  %v659 = vld [vmem:[%s611 + $0x9c] sm:$0xf]
                  %660 = vst [vmem:[%s612 + $0x5c] sm:$0xf] %v659
                  %v661 = vld [vmem:[%s611 + $0xa0] sm:$0xf]
                  %662 = vst [vmem:[%s612 + $0x60] sm:$0xf] %v661
                  %v663 = vld [vmem:[%s611 + $0xa4] sm:$0xf]
                  %664 = vst [vmem:[%s612 + $0x64] sm:$0xf] %v663
                  %v665 = vld [vmem:[%s611 + $0xa8] sm:$0xf]
                  %666 = vst [vmem:[%s612 + $0x68] sm:$0xf] %v665
                  %v667 = vld [vmem:[%s611 + $0xac] sm:$0xf]
                  %668 = vst [vmem:[%s612 + $0x6c] sm:$0xf] %v667
                  %v669 = vld [vmem:[%s611 + $0xb0] sm:$0xf]
                  %670 = vst [vmem:[%s612 + $0x70] sm:$0xf] %v669
                  %v671 = vld [vmem:[%s611 + $0xb4] sm:$0xf]
                  %672 = vst [vmem:[%s612 + $0x74] sm:$0xf] %v671
                  %v673 = vld [vmem:[%s611 + $0xb8] sm:$0xf]
                  %674 = vst [vmem:[%s612 + $0x78] sm:$0xf] %v673
                  %v675 = vld [vmem:[%s611 + $0xbc] sm:$0xf]
                  %676 = vst [vmem:[%s612 + $0x7c] sm:$0xf] %v675
                  %v677 = vld [vmem:[%s611 + $0x100] sm:$0xf]
                  %678 = vst [vmem:[%s612 + $0x80] sm:$0xf] %v677
                  %v679 = vld [vmem:[%s611 + $0x104] sm:$0xf]
                  %680 = vst [vmem:[%s612 + $0x84] sm:$0xf] %v679
                  %v681 = vld [vmem:[%s611 + $0x108] sm:$0xf]
                  %682 = vst [vmem:[%s612 + $0x88] sm:$0xf] %v681
                  %v683 = vld [vmem:[%s611 + $0x10c] sm:$0xf]
                  %684 = vst [vmem:[%s612 + $0x8c] sm:$0xf] %v683
                  %v685 = vld [vmem:[%s611 + $0x110] sm:$0xf]
                  %686 = vst [vmem:[%s612 + $0x90] sm:$0xf] %v685
                  %v687 = vld [vmem:[%s611 + $0x114] sm:$0xf]
                  %688 = vst [vmem:[%s612 + $0x94] sm:$0xf] %v687
                  %v689 = vld [vmem:[%s611 + $0x118] sm:$0xf]
                  %690 = vst [vmem:[%s612 + $0x98] sm:$0xf] %v689
                  %v691 = vld [vmem:[%s611 + $0x11c] sm:$0xf]
                  %692 = vst [vmem:[%s612 + $0x9c] sm:$0xf] %v691
                  %v693 = vld [vmem:[%s611 + $0x120] sm:$0xf]
                  %694 = vst [vmem:[%s612 + $0xa0] sm:$0xf] %v693
                  %v695 = vld [vmem:[%s611 + $0x124] sm:$0xf]
                  %696 = vst [vmem:[%s612 + $0xa4] sm:$0xf] %v695
                  %v697 = vld [vmem:[%s611 + $0x128] sm:$0xf]
                  %698 = vst [vmem:[%s612 + $0xa8] sm:$0xf] %v697
                  %v699 = vld [vmem:[%s611 + $0x12c] sm:$0xf]
                  %700 = vst [vmem:[%s612 + $0xac] sm:$0xf] %v699
                  %v701 = vld [vmem:[%s611 + $0x130] sm:$0xf]
                  %702 = vst [vmem:[%s612 + $0xb0] sm:$0xf] %v701
                  %v703 = vld [vmem:[%s611 + $0x134] sm:$0xf]
                  %704 = vst [vmem:[%s612 + $0xb4] sm:$0xf] %v703
                  %v705 = vld [vmem:[%s611 + $0x138] sm:$0xf]
                  %706 = vst [vmem:[%s612 + $0xb8] sm:$0xf] %v705
                  %v707 = vld [vmem:[%s611 + $0x13c] sm:$0xf]
                  %708 = vst [vmem:[%s612 + $0xbc] sm:$0xf] %v707
                  %v709 = vld [vmem:[%s611 + $0x180] sm:$0xf]
                  %710 = vst [vmem:[%s612 + $0xc0] sm:$0xf] %v709
                  %v711 = vld [vmem:[%s611 + $0x184] sm:$0xf]
                  %712 = vst [vmem:[%s612 + $0xc4] sm:$0xf] %v711
                  %v713 = vld [vmem:[%s611 + $0x188] sm:$0xf]
                  %714 = vst [vmem:[%s612 + $0xc8] sm:$0xf] %v713
                  %v715 = vld [vmem:[%s611 + $0x18c] sm:$0xf]
                  %716 = vst [vmem:[%s612 + $0xcc] sm:$0xf] %v715
                  %v717 = vld [vmem:[%s611 + $0x190] sm:$0xf]
                  %718 = vst [vmem:[%s612 + $0xd0] sm:$0xf] %v717
                  %v719 = vld [vmem:[%s611 + $0x194] sm:$0xf]
                  %720 = vst [vmem:[%s612 + $0xd4] sm:$0xf] %v719
                  %v721 = vld [vmem:[%s611 + $0x198] sm:$0xf]
                  %722 = vst [vmem:[%s612 + $0xd8] sm:$0xf] %v721
                  %v723 = vld [vmem:[%s611 + $0x19c] sm:$0xf]
                  %724 = vst [vmem:[%s612 + $0xdc] sm:$0xf] %v723
                  %v725 = vld [vmem:[%s611 + $0x1a0] sm:$0xf]
                  %726 = vst [vmem:[%s612 + $0xe0] sm:$0xf] %v725
                  %v727 = vld [vmem:[%s611 + $0x1a4] sm:$0xf]
                  %728 = vst [vmem:[%s612 + $0xe4] sm:$0xf] %v727
                  %v729 = vld [vmem:[%s611 + $0x1a8] sm:$0xf]
                  %730 = vst [vmem:[%s612 + $0xe8] sm:$0xf] %v729
                  %v731 = vld [vmem:[%s611 + $0x1ac] sm:$0xf]
                  %732 = vst [vmem:[%s612 + $0xec] sm:$0xf] %v731
                  %v733 = vld [vmem:[%s611 + $0x1b0] sm:$0xf]
                  %734 = vst [vmem:[%s612 + $0xf0] sm:$0xf] %v733
                  %v735 = vld [vmem:[%s611 + $0x1b4] sm:$0xf]
                  %736 = vst [vmem:[%s612 + $0xf4] sm:$0xf] %v735
                  %v737 = vld [vmem:[%s611 + $0x1b8] sm:$0xf]
                  %738 = vst [vmem:[%s612 + $0xf8] sm:$0xf] %v737
                  %v739 = vld [vmem:[%s611 + $0x1bc] sm:$0xf]
                  %740 = vst [vmem:[%s612 + $0xfc] sm:$0xf] %v739
                $region75: #{tpu_custom_call.1} parent=62 // loop_footer
                  %s610 = sadd.s32 1, %s606
                $region76: #{tpu_custom_call.1} parent=62 // loop_footer_branch
                  %605 = sbr.rel target = $region72
                $region77: #{tpu_custom_call.1} parent=62 // loop_exit
                  _
              $region63: #{tpu_custom_call.1} parent=47 // pred_fallthru
                _
            $region48: #{tpu_custom_call.1} parent=43 // pred_fallthru
              _
            // Predicated region
            $region49: #{tpu_custom_call.1} parent=43 // pred_check
              _
            $region50: #{tpu_custom_call.1} parent=43 // pred_check_branch
              %456 = sbr.rel (0) target = $region52
            $region51: #{tpu_custom_call.1} parent=43 // pred_region
              loop: start=0, step=1, limit=1
              $region53: #{tpu_custom_call.1} parent=51 // loop_pre_header
                _
              $region54: #{tpu_custom_call.1} parent=51 // loop_header
                %s459 = sphi 0, %s463
                %p460 = scmp.ge.s32.totalorder %s459, 1
                %s464 = sphi %s450, %s450
                %s465 = sphi %s434, %s434
              $region55: #{tpu_custom_call.1} parent=51 // loop_header_branch
                %462 = sbr.rel (%p460) target = $region59
              $region56: #{tpu_custom_call.1} parent=51 // loop_body
                %v466 = vld [vmem:[%s464] sm:$0xf]
                %467 = vst [vmem:[%s465] sm:$0xf] %v466
                %v468 = vld [vmem:[%s464 + $0x4] sm:$0xf]
                %469 = vst [vmem:[%s465 + $0x4] sm:$0xf] %v468
                %v470 = vld [vmem:[%s464 + $0x8] sm:$0xf]
                %471 = vst [vmem:[%s465 + $0x8] sm:$0xf] %v470
                %v472 = vld [vmem:[%s464 + $0xc] sm:$0xf]
                %473 = vst [vmem:[%s465 + $0xc] sm:$0xf] %v472
                %v474 = vld [vmem:[%s464 + $0x10] sm:$0xf]
                %475 = vst [vmem:[%s465 + $0x10] sm:$0xf] %v474
                %v476 = vld [vmem:[%s464 + $0x14] sm:$0xf]
                %477 = vst [vmem:[%s465 + $0x14] sm:$0xf] %v476
                %v478 = vld [vmem:[%s464 + $0x18] sm:$0xf]
                %479 = vst [vmem:[%s465 + $0x18] sm:$0xf] %v478
                %v480 = vld [vmem:[%s464 + $0x1c] sm:$0xf]
                %481 = vst [vmem:[%s465 + $0x1c] sm:$0xf] %v480
                %v482 = vld [vmem:[%s464 + $0x20] sm:$0xf]
                %483 = vst [vmem:[%s465 + $0x20] sm:$0xf] %v482
                %v484 = vld [vmem:[%s464 + $0x24] sm:$0xf]
                %485 = vst [vmem:[%s465 + $0x24] sm:$0xf] %v484
                %v486 = vld [vmem:[%s464 + $0x28] sm:$0xf]
                %487 = vst [vmem:[%s465 + $0x28] sm:$0xf] %v486
                %v488 = vld [vmem:[%s464 + $0x2c] sm:$0xf]
                %489 = vst [vmem:[%s465 + $0x2c] sm:$0xf] %v488
                %v490 = vld [vmem:[%s464 + $0x30] sm:$0xf]
                %491 = vst [vmem:[%s465 + $0x30] sm:$0xf] %v490
                %v492 = vld [vmem:[%s464 + $0x34] sm:$0xf]
                %493 = vst [vmem:[%s465 + $0x34] sm:$0xf] %v492
                %v494 = vld [vmem:[%s464 + $0x38] sm:$0xf]
                %495 = vst [vmem:[%s465 + $0x38] sm:$0xf] %v494
                %v496 = vld [vmem:[%s464 + $0x3c] sm:$0xf]
                %497 = vst [vmem:[%s465 + $0x3c] sm:$0xf] %v496
                %v498 = vld [vmem:[%s464 + $0x80] sm:$0xf]
                %499 = vst [vmem:[%s465 + $0x40] sm:$0xf] %v498
                %v500 = vld [vmem:[%s464 + $0x84] sm:$0xf]
                %501 = vst [vmem:[%s465 + $0x44] sm:$0xf] %v500
                %v502 = vld [vmem:[%s464 + $0x88] sm:$0xf]
                %503 = vst [vmem:[%s465 + $0x48] sm:$0xf] %v502
                %v504 = vld [vmem:[%s464 + $0x8c] sm:$0xf]
                %505 = vst [vmem:[%s465 + $0x4c] sm:$0xf] %v504
                %v506 = vld [vmem:[%s464 + $0x90] sm:$0xf]
                %507 = vst [vmem:[%s465 + $0x50] sm:$0xf] %v506
                %v508 = vld [vmem:[%s464 + $0x94] sm:$0xf]
                %509 = vst [vmem:[%s465 + $0x54] sm:$0xf] %v508
                %v510 = vld [vmem:[%s464 + $0x98] sm:$0xf]
                %511 = vst [vmem:[%s465 + $0x58] sm:$0xf] %v510
                %v512 = vld [vmem:[%s464 + $0x9c] sm:$0xf]
                %513 = vst [vmem:[%s465 + $0x5c] sm:$0xf] %v512
                %v514 = vld [vmem:[%s464 + $0xa0] sm:$0xf]
                %515 = vst [vmem:[%s465 + $0x60] sm:$0xf] %v514
                %v516 = vld [vmem:[%s464 + $0xa4] sm:$0xf]
                %517 = vst [vmem:[%s465 + $0x64] sm:$0xf] %v516
                %v518 = vld [vmem:[%s464 + $0xa8] sm:$0xf]
                %519 = vst [vmem:[%s465 + $0x68] sm:$0xf] %v518
                %v520 = vld [vmem:[%s464 + $0xac] sm:$0xf]
                %521 = vst [vmem:[%s465 + $0x6c] sm:$0xf] %v520
                %v522 = vld [vmem:[%s464 + $0xb0] sm:$0xf]
                %523 = vst [vmem:[%s465 + $0x70] sm:$0xf] %v522
                %v524 = vld [vmem:[%s464 + $0xb4] sm:$0xf]
                %525 = vst [vmem:[%s465 + $0x74] sm:$0xf] %v524
                %v526 = vld [vmem:[%s464 + $0xb8] sm:$0xf]
                %527 = vst [vmem:[%s465 + $0x78] sm:$0xf] %v526
                %v528 = vld [vmem:[%s464 + $0xbc] sm:$0xf]
                %529 = vst [vmem:[%s465 + $0x7c] sm:$0xf] %v528
                %v530 = vld [vmem:[%s464 + $0x100] sm:$0xf]
                %531 = vst [vmem:[%s465 + $0x80] sm:$0xf] %v530
                %v532 = vld [vmem:[%s464 + $0x104] sm:$0xf]
                %533 = vst [vmem:[%s465 + $0x84] sm:$0xf] %v532
                %v534 = vld [vmem:[%s464 + $0x108] sm:$0xf]
                %535 = vst [vmem:[%s465 + $0x88] sm:$0xf] %v534
                %v536 = vld [vmem:[%s464 + $0x10c] sm:$0xf]
                %537 = vst [vmem:[%s465 + $0x8c] sm:$0xf] %v536
                %v538 = vld [vmem:[%s464 + $0x110] sm:$0xf]
                %539 = vst [vmem:[%s465 + $0x90] sm:$0xf] %v538
                %v540 = vld [vmem:[%s464 + $0x114] sm:$0xf]
                %541 = vst [vmem:[%s465 + $0x94] sm:$0xf] %v540
                %v542 = vld [vmem:[%s464 + $0x118] sm:$0xf]
                %543 = vst [vmem:[%s465 + $0x98] sm:$0xf] %v542
                %v544 = vld [vmem:[%s464 + $0x11c] sm:$0xf]
                %545 = vst [vmem:[%s465 + $0x9c] sm:$0xf] %v544
                %v546 = vld [vmem:[%s464 + $0x120] sm:$0xf]
                %547 = vst [vmem:[%s465 + $0xa0] sm:$0xf] %v546
                %v548 = vld [vmem:[%s464 + $0x124] sm:$0xf]
                %549 = vst [vmem:[%s465 + $0xa4] sm:$0xf] %v548
                %v550 = vld [vmem:[%s464 + $0x128] sm:$0xf]
                %551 = vst [vmem:[%s465 + $0xa8] sm:$0xf] %v550
                %v552 = vld [vmem:[%s464 + $0x12c] sm:$0xf]
                %553 = vst [vmem:[%s465 + $0xac] sm:$0xf] %v552
                %v554 = vld [vmem:[%s464 + $0x130] sm:$0xf]
                %555 = vst [vmem:[%s465 + $0xb0] sm:$0xf] %v554
                %v556 = vld [vmem:[%s464 + $0x134] sm:$0xf]
                %557 = vst [vmem:[%s465 + $0xb4] sm:$0xf] %v556
                %v558 = vld [vmem:[%s464 + $0x138] sm:$0xf]
                %559 = vst [vmem:[%s465 + $0xb8] sm:$0xf] %v558
                %v560 = vld [vmem:[%s464 + $0x13c] sm:$0xf]
                %561 = vst [vmem:[%s465 + $0xbc] sm:$0xf] %v560
                %v562 = vld [vmem:[%s464 + $0x180] sm:$0xf]
                %563 = vst [vmem:[%s465 + $0xc0] sm:$0xf] %v562
                %v564 = vld [vmem:[%s464 + $0x184] sm:$0xf]
                %565 = vst [vmem:[%s465 + $0xc4] sm:$0xf] %v564
                %v566 = vld [vmem:[%s464 + $0x188] sm:$0xf]
                %567 = vst [vmem:[%s465 + $0xc8] sm:$0xf] %v566
                %v568 = vld [vmem:[%s464 + $0x18c] sm:$0xf]
                %569 = vst [vmem:[%s465 + $0xcc] sm:$0xf] %v568
                %v570 = vld [vmem:[%s464 + $0x190] sm:$0xf]
                %571 = vst [vmem:[%s465 + $0xd0] sm:$0xf] %v570
                %v572 = vld [vmem:[%s464 + $0x194] sm:$0xf]
                %573 = vst [vmem:[%s465 + $0xd4] sm:$0xf] %v572
                %v574 = vld [vmem:[%s464 + $0x198] sm:$0xf]
                %575 = vst [vmem:[%s465 + $0xd8] sm:$0xf] %v574
                %v576 = vld [vmem:[%s464 + $0x19c] sm:$0xf]
                %577 = vst [vmem:[%s465 + $0xdc] sm:$0xf] %v576
                %v578 = vld [vmem:[%s464 + $0x1a0] sm:$0xf]
                %579 = vst [vmem:[%s465 + $0xe0] sm:$0xf] %v578
                %v580 = vld [vmem:[%s464 + $0x1a4] sm:$0xf]
                %581 = vst [vmem:[%s465 + $0xe4] sm:$0xf] %v580
                %v582 = vld [vmem:[%s464 + $0x1a8] sm:$0xf]
                %583 = vst [vmem:[%s465 + $0xe8] sm:$0xf] %v582
                %v584 = vld [vmem:[%s464 + $0x1ac] sm:$0xf]
                %585 = vst [vmem:[%s465 + $0xec] sm:$0xf] %v584
                %v586 = vld [vmem:[%s464 + $0x1b0] sm:$0xf]
                %587 = vst [vmem:[%s465 + $0xf0] sm:$0xf] %v586
                %v588 = vld [vmem:[%s464 + $0x1b4] sm:$0xf]
                %589 = vst [vmem:[%s465 + $0xf4] sm:$0xf] %v588
                %v590 = vld [vmem:[%s464 + $0x1b8] sm:$0xf]
                %591 = vst [vmem:[%s465 + $0xf8] sm:$0xf] %v590
                %v592 = vld [vmem:[%s464 + $0x1bc] sm:$0xf]
                %593 = vst [vmem:[%s465 + $0xfc] sm:$0xf] %v592
              $region57: #{tpu_custom_call.1} parent=51 // loop_footer
                %s463 = sadd.s32 1, %s459
              $region58: #{tpu_custom_call.1} parent=51 // loop_footer_branch
                %458 = sbr.rel target = $region54
              $region59: #{tpu_custom_call.1} parent=51 // loop_exit
                _
            $region52: #{tpu_custom_call.1} parent=43 // pred_fallthru
              _
          $region44: #{tpu_custom_call.1} parent=39 // pred_fallthru
            _
          %741 = vnop
        $region40: #{tpu_custom_call.1} parent=31 // pred_fallthru
          _
        // Predicated region
        $region78: #{tpu_custom_call.1} parent=31 // pred_check
          %p742 = pneg %p166
        $region79: #{tpu_custom_call.1} parent=31 // pred_check_branch
          %744 = sbr.rel (%p742) target = $region81
        $region80: #{tpu_custom_call.1} parent=31 // pred_region
          %s745 = sand.u32 %s156, 1
          %s746 = sand.u32 %s156, 1
          %s747 = smul.addr %s746, 256
          %s748 = scalar_lea.vmem [#allocation9], %s747
          %s749 = sshra.s32 %s33, 7
          %s750 = sand.u32 %s33, 127
          %s751 = sadd.s32 %s749, %s32
          %s752 = smul.u32 %s751, 128
          %s753 = sshra.s32 %s33, 7
          %s754 = sand.u32 %s33, 127
          %s755 = sadd.s32 %s752, %s754
          %s756 = sld [smem:[#allocation7 + %s755]]
          %s757 = ssub.s32 %s756, 1
          %p758 = scmp.lt.s32.totalorder %s34, %s757
          %s759 = scalar_select %p758, %s34, %s757
          %s760 = smul.u32 16, %s759
          %s761 = smul.addr %s32, 128
          %s762 = sadd.s32 %s760, %s761
          %s763 = smul.addr %s762, 4
          %s764 = scalar_lea.vmem %s3, %s763
          // Predicated region
          $region82: #{tpu_custom_call.1} parent=80 // pred_check
            _
          $region83: #{tpu_custom_call.1} parent=80 // pred_check_branch
            %766 = sbr.rel (0) target = $region85
          $region84: #{tpu_custom_call.1} parent=80 // pred_region
            // Predicated region
            $region86: #{tpu_custom_call.1} parent=84 // pred_check
              _
            $region87: #{tpu_custom_call.1} parent=84 // pred_check_branch
              %768 = sbr.rel target = $region89
            $region88: #{tpu_custom_call.1} parent=84 // pred_region
              // Predicated region
              $region101: #{tpu_custom_call.1} parent=88 // pred_check
                _
              $region102: #{tpu_custom_call.1} parent=88 // pred_check_branch
                %909 = sbr.rel (0) target = $region104
              $region103: #{tpu_custom_call.1} parent=88 // pred_region
                loop: start=0, step=1, limit=1
                $region105: #{tpu_custom_call.1} parent=103 // loop_pre_header
                  _
                $region106: #{tpu_custom_call.1} parent=103 // loop_header
                  %s911 = sphi 0, %s915
                  %p912 = scmp.ge.s32.totalorder %s911, 1
                  %s916 = sphi %s764, %s764
                  %s917 = sphi %s748, %s748
                $region107: #{tpu_custom_call.1} parent=103 // loop_header_branch
                  %914 = sbr.rel (%p912) target = $region111
                $region108: #{tpu_custom_call.1} parent=103 // loop_body
                  _
                $region109: #{tpu_custom_call.1} parent=103 // loop_footer
                  %s915 = sadd.s32 1, %s911
                $region110: #{tpu_custom_call.1} parent=103 // loop_footer_branch
                  %910 = sbr.rel target = $region106
                $region111: #{tpu_custom_call.1} parent=103 // loop_exit
                  _
                loop: start=0, step=1, limit=1
                $region112: #{tpu_custom_call.1} parent=103 // loop_pre_header
                  _
                $region113: #{tpu_custom_call.1} parent=103 // loop_header
                  %s920 = sphi 0, %s924
                  %p921 = scmp.ge.s32.totalorder %s920, 1
                  %s925 = sphi %s764, %s764
                  %s926 = sphi %s748, %s748
                $region114: #{tpu_custom_call.1} parent=103 // loop_header_branch
                  %923 = sbr.rel (%p921) target = $region118
                $region115: #{tpu_custom_call.1} parent=103 // loop_body
                  %v927 = vld [vmem:[%s925] sm:$0xf]
                  %928 = vst [vmem:[%s926] sm:$0xf] %v927
                  %v929 = vld [vmem:[%s925 + $0x4] sm:$0xf]
                  %930 = vst [vmem:[%s926 + $0x4] sm:$0xf] %v929
                  %v931 = vld [vmem:[%s925 + $0x8] sm:$0xf]
                  %932 = vst [vmem:[%s926 + $0x8] sm:$0xf] %v931
                  %v933 = vld [vmem:[%s925 + $0xc] sm:$0xf]
                  %934 = vst [vmem:[%s926 + $0xc] sm:$0xf] %v933
                  %v935 = vld [vmem:[%s925 + $0x10] sm:$0xf]
                  %936 = vst [vmem:[%s926 + $0x10] sm:$0xf] %v935
                  %v937 = vld [vmem:[%s925 + $0x14] sm:$0xf]
                  %938 = vst [vmem:[%s926 + $0x14] sm:$0xf] %v937
                  %v939 = vld [vmem:[%s925 + $0x18] sm:$0xf]
                  %940 = vst [vmem:[%s926 + $0x18] sm:$0xf] %v939
                  %v941 = vld [vmem:[%s925 + $0x1c] sm:$0xf]
                  %942 = vst [vmem:[%s926 + $0x1c] sm:$0xf] %v941
                  %v943 = vld [vmem:[%s925 + $0x20] sm:$0xf]
                  %944 = vst [vmem:[%s926 + $0x20] sm:$0xf] %v943
                  %v945 = vld [vmem:[%s925 + $0x24] sm:$0xf]
                  %946 = vst [vmem:[%s926 + $0x24] sm:$0xf] %v945
                  %v947 = vld [vmem:[%s925 + $0x28] sm:$0xf]
                  %948 = vst [vmem:[%s926 + $0x28] sm:$0xf] %v947
                  %v949 = vld [vmem:[%s925 + $0x2c] sm:$0xf]
                  %950 = vst [vmem:[%s926 + $0x2c] sm:$0xf] %v949
                  %v951 = vld [vmem:[%s925 + $0x30] sm:$0xf]
                  %952 = vst [vmem:[%s926 + $0x30] sm:$0xf] %v951
                  %v953 = vld [vmem:[%s925 + $0x34] sm:$0xf]
                  %954 = vst [vmem:[%s926 + $0x34] sm:$0xf] %v953
                  %v955 = vld [vmem:[%s925 + $0x38] sm:$0xf]
                  %956 = vst [vmem:[%s926 + $0x38] sm:$0xf] %v955
                  %v957 = vld [vmem:[%s925 + $0x3c] sm:$0xf]
                  %958 = vst [vmem:[%s926 + $0x3c] sm:$0xf] %v957
                  %v959 = vld [vmem:[%s925 + $0x80] sm:$0xf]
                  %960 = vst [vmem:[%s926 + $0x40] sm:$0xf] %v959
                  %v961 = vld [vmem:[%s925 + $0x84] sm:$0xf]
                  %962 = vst [vmem:[%s926 + $0x44] sm:$0xf] %v961
                  %v963 = vld [vmem:[%s925 + $0x88] sm:$0xf]
                  %964 = vst [vmem:[%s926 + $0x48] sm:$0xf] %v963
                  %v965 = vld [vmem:[%s925 + $0x8c] sm:$0xf]
                  %966 = vst [vmem:[%s926 + $0x4c] sm:$0xf] %v965
                  %v967 = vld [vmem:[%s925 + $0x90] sm:$0xf]
                  %968 = vst [vmem:[%s926 + $0x50] sm:$0xf] %v967
                  %v969 = vld [vmem:[%s925 + $0x94] sm:$0xf]
                  %970 = vst [vmem:[%s926 + $0x54] sm:$0xf] %v969
                  %v971 = vld [vmem:[%s925 + $0x98] sm:$0xf]
                  %972 = vst [vmem:[%s926 + $0x58] sm:$0xf] %v971
                  %v973 = vld [vmem:[%s925 + $0x9c] sm:$0xf]
                  %974 = vst [vmem:[%s926 + $0x5c] sm:$0xf] %v973
                  %v975 = vld [vmem:[%s925 + $0xa0] sm:$0xf]
                  %976 = vst [vmem:[%s926 + $0x60] sm:$0xf] %v975
                  %v977 = vld [vmem:[%s925 + $0xa4] sm:$0xf]
                  %978 = vst [vmem:[%s926 + $0x64] sm:$0xf] %v977
                  %v979 = vld [vmem:[%s925 + $0xa8] sm:$0xf]
                  %980 = vst [vmem:[%s926 + $0x68] sm:$0xf] %v979
                  %v981 = vld [vmem:[%s925 + $0xac] sm:$0xf]
                  %982 = vst [vmem:[%s926 + $0x6c] sm:$0xf] %v981
                  %v983 = vld [vmem:[%s925 + $0xb0] sm:$0xf]
                  %984 = vst [vmem:[%s926 + $0x70] sm:$0xf] %v983
                  %v985 = vld [vmem:[%s925 + $0xb4] sm:$0xf]
                  %986 = vst [vmem:[%s926 + $0x74] sm:$0xf] %v985
                  %v987 = vld [vmem:[%s925 + $0xb8] sm:$0xf]
                  %988 = vst [vmem:[%s926 + $0x78] sm:$0xf] %v987
                  %v989 = vld [vmem:[%s925 + $0xbc] sm:$0xf]
                  %990 = vst [vmem:[%s926 + $0x7c] sm:$0xf] %v989
                  %v991 = vld [vmem:[%s925 + $0x100] sm:$0xf]
                  %992 = vst [vmem:[%s926 + $0x80] sm:$0xf] %v991
                  %v993 = vld [vmem:[%s925 + $0x104] sm:$0xf]
                  %994 = vst [vmem:[%s926 + $0x84] sm:$0xf] %v993
                  %v995 = vld [vmem:[%s925 + $0x108] sm:$0xf]
                  %996 = vst [vmem:[%s926 + $0x88] sm:$0xf] %v995
                  %v997 = vld [vmem:[%s925 + $0x10c] sm:$0xf]
                  %998 = vst [vmem:[%s926 + $0x8c] sm:$0xf] %v997
                  %v999 = vld [vmem:[%s925 + $0x110] sm:$0xf]
                  %1000 = vst [vmem:[%s926 + $0x90] sm:$0xf] %v999
                  %v1001 = vld [vmem:[%s925 + $0x114] sm:$0xf]
                  %1002 = vst [vmem:[%s926 + $0x94] sm:$0xf] %v1001
                  %v1003 = vld [vmem:[%s925 + $0x118] sm:$0xf]
                  %1004 = vst [vmem:[%s926 + $0x98] sm:$0xf] %v1003
                  %v1005 = vld [vmem:[%s925 + $0x11c] sm:$0xf]
                  %1006 = vst [vmem:[%s926 + $0x9c] sm:$0xf] %v1005
                  %v1007 = vld [vmem:[%s925 + $0x120] sm:$0xf]
                  %1008 = vst [vmem:[%s926 + $0xa0] sm:$0xf] %v1007
                  %v1009 = vld [vmem:[%s925 + $0x124] sm:$0xf]
                  %1010 = vst [vmem:[%s926 + $0xa4] sm:$0xf] %v1009
                  %v1011 = vld [vmem:[%s925 + $0x128] sm:$0xf]
                  %1012 = vst [vmem:[%s926 + $0xa8] sm:$0xf] %v1011
                  %v1013 = vld [vmem:[%s925 + $0x12c] sm:$0xf]
                  %1014 = vst [vmem:[%s926 + $0xac] sm:$0xf] %v1013
                  %v1015 = vld [vmem:[%s925 + $0x130] sm:$0xf]
                  %1016 = vst [vmem:[%s926 + $0xb0] sm:$0xf] %v1015
                  %v1017 = vld [vmem:[%s925 + $0x134] sm:$0xf]
                  %1018 = vst [vmem:[%s926 + $0xb4] sm:$0xf] %v1017
                  %v1019 = vld [vmem:[%s925 + $0x138] sm:$0xf]
                  %1020 = vst [vmem:[%s926 + $0xb8] sm:$0xf] %v1019
                  %v1021 = vld [vmem:[%s925 + $0x13c] sm:$0xf]
                  %1022 = vst [vmem:[%s926 + $0xbc] sm:$0xf] %v1021
                  %v1023 = vld [vmem:[%s925 + $0x180] sm:$0xf]
                  %1024 = vst [vmem:[%s926 + $0xc0] sm:$0xf] %v1023
                  %v1025 = vld [vmem:[%s925 + $0x184] sm:$0xf]
                  %1026 = vst [vmem:[%s926 + $0xc4] sm:$0xf] %v1025
                  %v1027 = vld [vmem:[%s925 + $0x188] sm:$0xf]
                  %1028 = vst [vmem:[%s926 + $0xc8] sm:$0xf] %v1027
                  %v1029 = vld [vmem:[%s925 + $0x18c] sm:$0xf]
                  %1030 = vst [vmem:[%s926 + $0xcc] sm:$0xf] %v1029
                  %v1031 = vld [vmem:[%s925 + $0x190] sm:$0xf]
                  %1032 = vst [vmem:[%s926 + $0xd0] sm:$0xf] %v1031
                  %v1033 = vld [vmem:[%s925 + $0x194] sm:$0xf]
                  %1034 = vst [vmem:[%s926 + $0xd4] sm:$0xf] %v1033
                  %v1035 = vld [vmem:[%s925 + $0x198] sm:$0xf]
                  %1036 = vst [vmem:[%s926 + $0xd8] sm:$0xf] %v1035
                  %v1037 = vld [vmem:[%s925 + $0x19c] sm:$0xf]
                  %1038 = vst [vmem:[%s926 + $0xdc] sm:$0xf] %v1037
                  %v1039 = vld [vmem:[%s925 + $0x1a0] sm:$0xf]
                  %1040 = vst [vmem:[%s926 + $0xe0] sm:$0xf] %v1039
                  %v1041 = vld [vmem:[%s925 + $0x1a4] sm:$0xf]
                  %1042 = vst [vmem:[%s926 + $0xe4] sm:$0xf] %v1041
                  %v1043 = vld [vmem:[%s925 + $0x1a8] sm:$0xf]
                  %1044 = vst [vmem:[%s926 + $0xe8] sm:$0xf] %v1043
                  %v1045 = vld [vmem:[%s925 + $0x1ac] sm:$0xf]
                  %1046 = vst [vmem:[%s926 + $0xec] sm:$0xf] %v1045
                  %v1047 = vld [vmem:[%s925 + $0x1b0] sm:$0xf]
                  %1048 = vst [vmem:[%s926 + $0xf0] sm:$0xf] %v1047
                  %v1049 = vld [vmem:[%s925 + $0x1b4] sm:$0xf]
                  %1050 = vst [vmem:[%s926 + $0xf4] sm:$0xf] %v1049
                  %v1051 = vld [vmem:[%s925 + $0x1b8] sm:$0xf]
                  %1052 = vst [vmem:[%s926 + $0xf8] sm:$0xf] %v1051
                  %v1053 = vld [vmem:[%s925 + $0x1bc] sm:$0xf]
                  %1054 = vst [vmem:[%s926 + $0xfc] sm:$0xf] %v1053
                $region116: #{tpu_custom_call.1} parent=103 // loop_footer
                  %s924 = sadd.s32 1, %s920
                $region117: #{tpu_custom_call.1} parent=103 // loop_footer_branch
                  %919 = sbr.rel target = $region113
                $region118: #{tpu_custom_call.1} parent=103 // loop_exit
                  _
              $region104: #{tpu_custom_call.1} parent=88 // pred_fallthru
                _
            $region89: #{tpu_custom_call.1} parent=84 // pred_fallthru
              _
            // Predicated region
            $region90: #{tpu_custom_call.1} parent=84 // pred_check
              _
            $region91: #{tpu_custom_call.1} parent=84 // pred_check_branch
              %770 = sbr.rel (0) target = $region93
            $region92: #{tpu_custom_call.1} parent=84 // pred_region
              loop: start=0, step=1, limit=1
              $region94: #{tpu_custom_call.1} parent=92 // loop_pre_header
                _
              $region95: #{tpu_custom_call.1} parent=92 // loop_header
                %s773 = sphi 0, %s777
                %p774 = scmp.ge.s32.totalorder %s773, 1
                %s778 = sphi %s764, %s764
                %s779 = sphi %s748, %s748
              $region96: #{tpu_custom_call.1} parent=92 // loop_header_branch
                %776 = sbr.rel (%p774) target = $region100
              $region97: #{tpu_custom_call.1} parent=92 // loop_body
                %v780 = vld [vmem:[%s778] sm:$0xf]
                %781 = vst [vmem:[%s779] sm:$0xf] %v780
                %v782 = vld [vmem:[%s778 + $0x4] sm:$0xf]
                %783 = vst [vmem:[%s779 + $0x4] sm:$0xf] %v782
                %v784 = vld [vmem:[%s778 + $0x8] sm:$0xf]
                %785 = vst [vmem:[%s779 + $0x8] sm:$0xf] %v784
                %v786 = vld [vmem:[%s778 + $0xc] sm:$0xf]
                %787 = vst [vmem:[%s779 + $0xc] sm:$0xf] %v786
                %v788 = vld [vmem:[%s778 + $0x10] sm:$0xf]
                %789 = vst [vmem:[%s779 + $0x10] sm:$0xf] %v788
                %v790 = vld [vmem:[%s778 + $0x14] sm:$0xf]
                %791 = vst [vmem:[%s779 + $0x14] sm:$0xf] %v790
                %v792 = vld [vmem:[%s778 + $0x18] sm:$0xf]
                %793 = vst [vmem:[%s779 + $0x18] sm:$0xf] %v792
                %v794 = vld [vmem:[%s778 + $0x1c] sm:$0xf]
                %795 = vst [vmem:[%s779 + $0x1c] sm:$0xf] %v794
                %v796 = vld [vmem:[%s778 + $0x20] sm:$0xf]
                %797 = vst [vmem:[%s779 + $0x20] sm:$0xf] %v796
                %v798 = vld [vmem:[%s778 + $0x24] sm:$0xf]
                %799 = vst [vmem:[%s779 + $0x24] sm:$0xf] %v798
                %v800 = vld [vmem:[%s778 + $0x28] sm:$0xf]
                %801 = vst [vmem:[%s779 + $0x28] sm:$0xf] %v800
                %v802 = vld [vmem:[%s778 + $0x2c] sm:$0xf]
                %803 = vst [vmem:[%s779 + $0x2c] sm:$0xf] %v802
                %v804 = vld [vmem:[%s778 + $0x30] sm:$0xf]
                %805 = vst [vmem:[%s779 + $0x30] sm:$0xf] %v804
                %v806 = vld [vmem:[%s778 + $0x34] sm:$0xf]
                %807 = vst [vmem:[%s779 + $0x34] sm:$0xf] %v806
                %v808 = vld [vmem:[%s778 + $0x38] sm:$0xf]
                %809 = vst [vmem:[%s779 + $0x38] sm:$0xf] %v808
                %v810 = vld [vmem:[%s778 + $0x3c] sm:$0xf]
                %811 = vst [vmem:[%s779 + $0x3c] sm:$0xf] %v810
                %v812 = vld [vmem:[%s778 + $0x80] sm:$0xf]
                %813 = vst [vmem:[%s779 + $0x40] sm:$0xf] %v812
                %v814 = vld [vmem:[%s778 + $0x84] sm:$0xf]
                %815 = vst [vmem:[%s779 + $0x44] sm:$0xf] %v814
                %v816 = vld [vmem:[%s778 + $0x88] sm:$0xf]
                %817 = vst [vmem:[%s779 + $0x48] sm:$0xf] %v816
                %v818 = vld [vmem:[%s778 + $0x8c] sm:$0xf]
                %819 = vst [vmem:[%s779 + $0x4c] sm:$0xf] %v818
                %v820 = vld [vmem:[%s778 + $0x90] sm:$0xf]
                %821 = vst [vmem:[%s779 + $0x50] sm:$0xf] %v820
                %v822 = vld [vmem:[%s778 + $0x94] sm:$0xf]
                %823 = vst [vmem:[%s779 + $0x54] sm:$0xf] %v822
                %v824 = vld [vmem:[%s778 + $0x98] sm:$0xf]
                %825 = vst [vmem:[%s779 + $0x58] sm:$0xf] %v824
                %v826 = vld [vmem:[%s778 + $0x9c] sm:$0xf]
                %827 = vst [vmem:[%s779 + $0x5c] sm:$0xf] %v826
                %v828 = vld [vmem:[%s778 + $0xa0] sm:$0xf]
                %829 = vst [vmem:[%s779 + $0x60] sm:$0xf] %v828
                %v830 = vld [vmem:[%s778 + $0xa4] sm:$0xf]
                %831 = vst [vmem:[%s779 + $0x64] sm:$0xf] %v830
                %v832 = vld [vmem:[%s778 + $0xa8] sm:$0xf]
                %833 = vst [vmem:[%s779 + $0x68] sm:$0xf] %v832
                %v834 = vld [vmem:[%s778 + $0xac] sm:$0xf]
                %835 = vst [vmem:[%s779 + $0x6c] sm:$0xf] %v834
                %v836 = vld [vmem:[%s778 + $0xb0] sm:$0xf]
                %837 = vst [vmem:[%s779 + $0x70] sm:$0xf] %v836
                %v838 = vld [vmem:[%s778 + $0xb4] sm:$0xf]
                %839 = vst [vmem:[%s779 + $0x74] sm:$0xf] %v838
                %v840 = vld [vmem:[%s778 + $0xb8] sm:$0xf]
                %841 = vst [vmem:[%s779 + $0x78] sm:$0xf] %v840
                %v842 = vld [vmem:[%s778 + $0xbc] sm:$0xf]
                %843 = vst [vmem:[%s779 + $0x7c] sm:$0xf] %v842
                %v844 = vld [vmem:[%s778 + $0x100] sm:$0xf]
                %845 = vst [vmem:[%s779 + $0x80] sm:$0xf] %v844
                %v846 = vld [vmem:[%s778 + $0x104] sm:$0xf]
                %847 = vst [vmem:[%s779 + $0x84] sm:$0xf] %v846
                %v848 = vld [vmem:[%s778 + $0x108] sm:$0xf]
                %849 = vst [vmem:[%s779 + $0x88] sm:$0xf] %v848
                %v850 = vld [vmem:[%s778 + $0x10c] sm:$0xf]
                %851 = vst [vmem:[%s779 + $0x8c] sm:$0xf] %v850
                %v852 = vld [vmem:[%s778 + $0x110] sm:$0xf]
                %853 = vst [vmem:[%s779 + $0x90] sm:$0xf] %v852
                %v854 = vld [vmem:[%s778 + $0x114] sm:$0xf]
                %855 = vst [vmem:[%s779 + $0x94] sm:$0xf] %v854
                %v856 = vld [vmem:[%s778 + $0x118] sm:$0xf]
                %857 = vst [vmem:[%s779 + $0x98] sm:$0xf] %v856
                %v858 = vld [vmem:[%s778 + $0x11c] sm:$0xf]
                %859 = vst [vmem:[%s779 + $0x9c] sm:$0xf] %v858
                %v860 = vld [vmem:[%s778 + $0x120] sm:$0xf]
                %861 = vst [vmem:[%s779 + $0xa0] sm:$0xf] %v860
                %v862 = vld [vmem:[%s778 + $0x124] sm:$0xf]
                %863 = vst [vmem:[%s779 + $0xa4] sm:$0xf] %v862
                %v864 = vld [vmem:[%s778 + $0x128] sm:$0xf]
                %865 = vst [vmem:[%s779 + $0xa8] sm:$0xf] %v864
                %v866 = vld [vmem:[%s778 + $0x12c] sm:$0xf]
                %867 = vst [vmem:[%s779 + $0xac] sm:$0xf] %v866
                %v868 = vld [vmem:[%s778 + $0x130] sm:$0xf]
                %869 = vst [vmem:[%s779 + $0xb0] sm:$0xf] %v868
                %v870 = vld [vmem:[%s778 + $0x134] sm:$0xf]
                %871 = vst [vmem:[%s779 + $0xb4] sm:$0xf] %v870
                %v872 = vld [vmem:[%s778 + $0x138] sm:$0xf]
                %873 = vst [vmem:[%s779 + $0xb8] sm:$0xf] %v872
                %v874 = vld [vmem:[%s778 + $0x13c] sm:$0xf]
                %875 = vst [vmem:[%s779 + $0xbc] sm:$0xf] %v874
                %v876 = vld [vmem:[%s778 + $0x180] sm:$0xf]
                %877 = vst [vmem:[%s779 + $0xc0] sm:$0xf] %v876
                %v878 = vld [vmem:[%s778 + $0x184] sm:$0xf]
                %879 = vst [vmem:[%s779 + $0xc4] sm:$0xf] %v878
                %v880 = vld [vmem:[%s778 + $0x188] sm:$0xf]
                %881 = vst [vmem:[%s779 + $0xc8] sm:$0xf] %v880
                %v882 = vld [vmem:[%s778 + $0x18c] sm:$0xf]
                %883 = vst [vmem:[%s779 + $0xcc] sm:$0xf] %v882
                %v884 = vld [vmem:[%s778 + $0x190] sm:$0xf]
                %885 = vst [vmem:[%s779 + $0xd0] sm:$0xf] %v884
                %v886 = vld [vmem:[%s778 + $0x194] sm:$0xf]
                %887 = vst [vmem:[%s779 + $0xd4] sm:$0xf] %v886
                %v888 = vld [vmem:[%s778 + $0x198] sm:$0xf]
                %889 = vst [vmem:[%s779 + $0xd8] sm:$0xf] %v888
                %v890 = vld [vmem:[%s778 + $0x19c] sm:$0xf]
                %891 = vst [vmem:[%s779 + $0xdc] sm:$0xf] %v890
                %v892 = vld [vmem:[%s778 + $0x1a0] sm:$0xf]
                %893 = vst [vmem:[%s779 + $0xe0] sm:$0xf] %v892
                %v894 = vld [vmem:[%s778 + $0x1a4] sm:$0xf]
                %895 = vst [vmem:[%s779 + $0xe4] sm:$0xf] %v894
                %v896 = vld [vmem:[%s778 + $0x1a8] sm:$0xf]
                %897 = vst [vmem:[%s779 + $0xe8] sm:$0xf] %v896
                %v898 = vld [vmem:[%s778 + $0x1ac] sm:$0xf]
                %899 = vst [vmem:[%s779 + $0xec] sm:$0xf] %v898
                %v900 = vld [vmem:[%s778 + $0x1b0] sm:$0xf]
                %901 = vst [vmem:[%s779 + $0xf0] sm:$0xf] %v900
                %v902 = vld [vmem:[%s778 + $0x1b4] sm:$0xf]
                %903 = vst [vmem:[%s779 + $0xf4] sm:$0xf] %v902
                %v904 = vld [vmem:[%s778 + $0x1b8] sm:$0xf]
                %905 = vst [vmem:[%s779 + $0xf8] sm:$0xf] %v904
                %v906 = vld [vmem:[%s778 + $0x1bc] sm:$0xf]
                %907 = vst [vmem:[%s779 + $0xfc] sm:$0xf] %v906
              $region98: #{tpu_custom_call.1} parent=92 // loop_footer
                %s777 = sadd.s32 1, %s773
              $region99: #{tpu_custom_call.1} parent=92 // loop_footer_branch
                %772 = sbr.rel target = $region95
              $region100: #{tpu_custom_call.1} parent=92 // loop_exit
                _
            $region93: #{tpu_custom_call.1} parent=84 // pred_fallthru
              _
          $region85: #{tpu_custom_call.1} parent=80 // pred_fallthru
            _
          %1055 = vnop
        $region81: #{tpu_custom_call.1} parent=31 // pred_fallthru
          _
        // Predicated region
        $region119: #{tpu_custom_call.1} parent=31 // pred_check
          %p1056 = pneg %p300
        $region120: #{tpu_custom_call.1} parent=31 // pred_check_branch
          %1058 = sbr.rel (%p1056) target = $region122
        $region121: #{tpu_custom_call.1} parent=31 // pred_region
          %s1059 = sand.u32 %s290, 1
          %s1060 = sand.u32 %s290, 1
          %s1061 = smul.addr %s1060, 128
          %s1062 = scalar_lea.vmem [#allocation10], %s1061
          %s1063 = sshra.s32 %s33, 7
          %s1064 = sand.u32 %s33, 127
          %s1065 = sadd.s32 %s1063, %s32
          %s1066 = smul.u32 %s1065, 128
          %s1067 = sshra.s32 %s33, 7
          %s1068 = sand.u32 %s33, 127
          %s1069 = sadd.s32 %s1066, %s1068
          %s1070 = sld [smem:[#allocation7 + %s1069]]
          %s1071 = ssub.s32 %s1070, 1
          %p1072 = scmp.lt.s32.totalorder %s34, %s1071
          %s1073 = scalar_select %p1072, %s34, %s1071
          %s1074 = smul.u32 16, %s33
          %s1075 = smul.addr %s1074, 2
          %s1076 = sadd.s32 %s1073, %s1075
          %s1077 = smul.addr %s1076, 8
          %s1078 = scalar_lea.vmem %s8, %s1077
          // Predicated region
          $region123: #{tpu_custom_call.1} parent=121 // pred_check
            _
          $region124: #{tpu_custom_call.1} parent=121 // pred_check_branch
            %1080 = sbr.rel (0) target = $region126
          $region125: #{tpu_custom_call.1} parent=121 // pred_region
            // Predicated region
            $region127: #{tpu_custom_call.1} parent=125 // pred_check
              _
            $region128: #{tpu_custom_call.1} parent=125 // pred_check_branch
              %1082 = sbr.rel (0) target = $region130
            $region129: #{tpu_custom_call.1} parent=125 // pred_region
              // Predicated region
              $region142: #{tpu_custom_call.1} parent=129 // pred_check
                _
              $region143: #{tpu_custom_call.1} parent=129 // pred_check_branch
                %1127 = sbr.rel (0) target = $region145
              $region144: #{tpu_custom_call.1} parent=129 // pred_region
                loop: start=0, step=1, limit=1
                $region146: #{tpu_custom_call.1} parent=144 // loop_pre_header
                  _
                $region147: #{tpu_custom_call.1} parent=144 // loop_header
                  %s1129 = sphi 0, %s1133
                  %p1130 = scmp.ge.s32.totalorder %s1129, 1
                  %s1134 = sphi %s1078, %s1078
                  %s1135 = sphi %s1062, %s1062
                $region148: #{tpu_custom_call.1} parent=144 // loop_header_branch
                  %1132 = sbr.rel (%p1130) target = $region152
                $region149: #{tpu_custom_call.1} parent=144 // loop_body
                  %v1136 = vld [vmem:[%s1134] sm:$0xff]
                  %1137 = vst [vmem:[%s1135] sm:$0xff] %v1136
                  %v1138 = vld [vmem:[%s1134 + $0x10] sm:$0xff]
                  %1139 = vst [vmem:[%s1135 + $0x8] sm:$0xff] %v1138
                  %v1140 = vld [vmem:[%s1134 + $0x20] sm:$0xff]
                  %1141 = vst [vmem:[%s1135 + $0x10] sm:$0xff] %v1140
                  %v1142 = vld [vmem:[%s1134 + $0x30] sm:$0xff]
                  %1143 = vst [vmem:[%s1135 + $0x18] sm:$0xff] %v1142
                  %v1144 = vld [vmem:[%s1134 + $0x40] sm:$0xff]
                  %1145 = vst [vmem:[%s1135 + $0x20] sm:$0xff] %v1144
                  %v1146 = vld [vmem:[%s1134 + $0x50] sm:$0xff]
                  %1147 = vst [vmem:[%s1135 + $0x28] sm:$0xff] %v1146
                  %v1148 = vld [vmem:[%s1134 + $0x60] sm:$0xff]
                  %1149 = vst [vmem:[%s1135 + $0x30] sm:$0xff] %v1148
                  %v1150 = vld [vmem:[%s1134 + $0x70] sm:$0xff]
                  %1151 = vst [vmem:[%s1135 + $0x38] sm:$0xff] %v1150
                  %v1152 = vld [vmem:[%s1134 + $0x80] sm:$0xff]
                  %1153 = vst [vmem:[%s1135 + $0x40] sm:$0xff] %v1152
                  %v1154 = vld [vmem:[%s1134 + $0x90] sm:$0xff]
                  %1155 = vst [vmem:[%s1135 + $0x48] sm:$0xff] %v1154
                  %v1156 = vld [vmem:[%s1134 + $0xa0] sm:$0xff]
                  %1157 = vst [vmem:[%s1135 + $0x50] sm:$0xff] %v1156
                  %v1158 = vld [vmem:[%s1134 + $0xb0] sm:$0xff]
                  %1159 = vst [vmem:[%s1135 + $0x58] sm:$0xff] %v1158
                  %v1160 = vld [vmem:[%s1134 + $0xc0] sm:$0xff]
                  %1161 = vst [vmem:[%s1135 + $0x60] sm:$0xff] %v1160
                  %v1162 = vld [vmem:[%s1134 + $0xd0] sm:$0xff]
                  %1163 = vst [vmem:[%s1135 + $0x68] sm:$0xff] %v1162
                  %v1164 = vld [vmem:[%s1134 + $0xe0] sm:$0xff]
                  %1165 = vst [vmem:[%s1135 + $0x70] sm:$0xff] %v1164
                  %v1166 = vld [vmem:[%s1134 + $0xf0] sm:$0xff]
                  %1167 = vst [vmem:[%s1135 + $0x78] sm:$0xff] %v1166
                $region150: #{tpu_custom_call.1} parent=144 // loop_footer
                  %s1133 = sadd.s32 1, %s1129
                $region151: #{tpu_custom_call.1} parent=144 // loop_footer_branch
                  %1128 = sbr.rel target = $region147
                $region152: #{tpu_custom_call.1} parent=144 // loop_exit
                  _
              $region145: #{tpu_custom_call.1} parent=129 // pred_fallthru
                _
              // Predicated region
              $region153: #{tpu_custom_call.1} parent=129 // pred_check
                _
              $region154: #{tpu_custom_call.1} parent=129 // pred_check_branch
                %1169 = sbr.rel target = $region156
              $region155: #{tpu_custom_call.1} parent=129 // pred_region
                _
              $region156: #{tpu_custom_call.1} parent=129 // pred_fallthru
                _
            $region130: #{tpu_custom_call.1} parent=125 // pred_fallthru
              _
            // Predicated region
            $region131: #{tpu_custom_call.1} parent=125 // pred_check
              _
            $region132: #{tpu_custom_call.1} parent=125 // pred_check_branch
              %1084 = sbr.rel target = $region134
            $region133: #{tpu_custom_call.1} parent=125 // pred_region
              loop: start=0, step=1, limit=1
              $region135: #{tpu_custom_call.1} parent=133 // loop_pre_header
                _
              $region136: #{tpu_custom_call.1} parent=133 // loop_header
                %s1087 = sphi 0, %s1091
                %p1088 = scmp.ge.s32.totalorder %s1087, 1
                %s1092 = sphi %s1078, %s1078
                %s1093 = sphi %s1062, %s1062
              $region137: #{tpu_custom_call.1} parent=133 // loop_header_branch
                %1090 = sbr.rel (%p1088) target = $region141
              $region138: #{tpu_custom_call.1} parent=133 // loop_body
                %v1094 = vld [vmem:[%s1092] sm:$0xff]
                %1095 = vst [vmem:[%s1093] sm:$0xff] %v1094
                %v1096 = vld [vmem:[%s1092 + $0x10] sm:$0xff]
                %1097 = vst [vmem:[%s1093 + $0x8] sm:$0xff] %v1096
                %v1098 = vld [vmem:[%s1092 + $0x20] sm:$0xff]
                %1099 = vst [vmem:[%s1093 + $0x10] sm:$0xff] %v1098
                %v1100 = vld [vmem:[%s1092 + $0x30] sm:$0xff]
                %1101 = vst [vmem:[%s1093 + $0x18] sm:$0xff] %v1100
                %v1102 = vld [vmem:[%s1092 + $0x40] sm:$0xff]
                %1103 = vst [vmem:[%s1093 + $0x20] sm:$0xff] %v1102
                %v1104 = vld [vmem:[%s1092 + $0x50] sm:$0xff]
                %1105 = vst [vmem:[%s1093 + $0x28] sm:$0xff] %v1104
                %v1106 = vld [vmem:[%s1092 + $0x60] sm:$0xff]
                %1107 = vst [vmem:[%s1093 + $0x30] sm:$0xff] %v1106
                %v1108 = vld [vmem:[%s1092 + $0x70] sm:$0xff]
                %1109 = vst [vmem:[%s1093 + $0x38] sm:$0xff] %v1108
                %v1110 = vld [vmem:[%s1092 + $0x80] sm:$0xff]
                %1111 = vst [vmem:[%s1093 + $0x40] sm:$0xff] %v1110
                %v1112 = vld [vmem:[%s1092 + $0x90] sm:$0xff]
                %1113 = vst [vmem:[%s1093 + $0x48] sm:$0xff] %v1112
                %v1114 = vld [vmem:[%s1092 + $0xa0] sm:$0xff]
                %1115 = vst [vmem:[%s1093 + $0x50] sm:$0xff] %v1114
                %v1116 = vld [vmem:[%s1092 + $0xb0] sm:$0xff]
                %1117 = vst [vmem:[%s1093 + $0x58] sm:$0xff] %v1116
                %v1118 = vld [vmem:[%s1092 + $0xc0] sm:$0xff]
                %1119 = vst [vmem:[%s1093 + $0x60] sm:$0xff] %v1118
                %v1120 = vld [vmem:[%s1092 + $0xd0] sm:$0xff]
                %1121 = vst [vmem:[%s1093 + $0x68] sm:$0xff] %v1120
                %v1122 = vld [vmem:[%s1092 + $0xe0] sm:$0xff]
                %1123 = vst [vmem:[%s1093 + $0x70] sm:$0xff] %v1122
                %v1124 = vld [vmem:[%s1092 + $0xf0] sm:$0xff]
                %1125 = vst [vmem:[%s1093 + $0x78] sm:$0xff] %v1124
              $region139: #{tpu_custom_call.1} parent=133 // loop_footer
                %s1091 = sadd.s32 1, %s1087
              $region140: #{tpu_custom_call.1} parent=133 // loop_footer_branch
                %1086 = sbr.rel target = $region136
              $region141: #{tpu_custom_call.1} parent=133 // loop_exit
                _
            $region134: #{tpu_custom_call.1} parent=125 // pred_fallthru
              _
          $region126: #{tpu_custom_call.1} parent=121 // pred_fallthru
            _
          %1170 = vnop
        $region122: #{tpu_custom_call.1} parent=31 // pred_fallthru
          _
        // Predicated region
        $region157: #{tpu_custom_call.1} parent=31 // pred_check
          %p1171 = pneg %p350
        $region158: #{tpu_custom_call.1} parent=31 // pred_check_branch
          %1173 = sbr.rel (%p1171) target = $region160
        $region159: #{tpu_custom_call.1} parent=31 // pred_region
          %s1174 = sshra.s32 %s33, 7
          %s1175 = sand.u32 %s33, 127
          %s1176 = sadd.s32 %s1174, %s32
          %s1177 = smul.u32 %s1176, 128
          %s1178 = sshra.s32 %s33, 7
          %s1179 = sand.u32 %s33, 127
          %s1180 = sadd.s32 %s1177, %s1179
          %s1181 = sld [smem:[#allocation7 + %s1180]]
          %s1182 = ssub.s32 %s1181, 1
          %p1183 = scmp.lt.s32.totalorder %s34, %s1182
          %s1184 = scalar_select %p1183, %s34, %s1182
          %p1185 = scmp.lt.s32.totalorder %s32, 1
          %s1186 = scalar_select %p1185, %s32, 1
          %p1187 = scmp.lt.s32.totalorder %s1184, 1
          %s1188 = scalar_select %p1187, %s1184, 1
          %s1189 = smul.addr %s1186, 2
          %s1190 = sadd.s32 %s1188, %s1189
          %s1191 = scalar_lea.vmem %s9, %s1190
          %s1192 = sshra.s32 %s33, 7
          %s1193 = sand.u32 %s33, 127
          %s1194 = sadd.s32 %s1192, %s32
          %s1195 = smul.u32 %s1194, 128
          %s1196 = sshra.s32 %s33, 7
          %s1197 = sand.u32 %s33, 127
          %s1198 = sadd.s32 %s1195, %s1197
          %s1199 = sld [smem:[#allocation7 + %s1198]]
          %s1200 = ssub.s32 %s1199, 1
          %p1201 = scmp.lt.s32.totalorder %s34, %s1200
          %s1202 = scalar_select %p1201, %s34, %s1200
        $region160: #{tpu_custom_call.1} parent=31 // pred_fallthru
          _
      $region32: #{tpu_custom_call.1} parent=5 // pred_fallthru
        _
      %p1203 = scmp.le.s32.totalorder 1, %s25
      %p1204 = scmp.lt.s32.totalorder %s25, 9
      %p1205 = pnand %p1203, %p1204
      %p1206 = pneg %p1205
      // Predicated region
      $region161: #{tpu_custom_call.1} parent=5 // pred_check
        _
      $region162: #{tpu_custom_call.1} parent=5 // pred_check_branch
        %1208 = sbr.rel (%p1205) target = $region164
      $region163: #{tpu_custom_call.1} parent=5 // pred_region
        %s1209 = ssub.s32 %s25, 1
        %s1210 = sand.u32 %s109, 1
        %s1211 = sand.u32 %s109, 1
        %s1212 = smul.addr %s1211, 256
        %s1213 = scalar_lea.vmem [#allocation8], %s1212
        // Predicated region
        $region165: #{tpu_custom_call.1} parent=163 // pred_check
          %p1214 = pneg %p122
        $region166: #{tpu_custom_call.1} parent=163 // pred_check_branch
          %1216 = sbr.rel (%p1214) target = $region168
        $region167: #{tpu_custom_call.1} parent=163 // pred_region
          _
        $region168: #{tpu_custom_call.1} parent=163 // pred_fallthru
          _
        %s1217 = sand.u32 %s159, 1
        %s1218 = sand.u32 %s159, 1
        %s1219 = smul.addr %s1218, 256
        %s1220 = scalar_lea.vmem [#allocation9], %s1219
        // Predicated region
        $region169: #{tpu_custom_call.1} parent=163 // pred_check
          %p1221 = pneg %p172
        $region170: #{tpu_custom_call.1} parent=163 // pred_check_branch
          %1223 = sbr.rel (%p1221) target = $region172
        $region171: #{tpu_custom_call.1} parent=163 // pred_region
          _
        $region172: #{tpu_custom_call.1} parent=163 // pred_fallthru
          _
        %s1224 = sand.u32 %s293, 1
        %s1225 = sand.u32 %s293, 1
        %s1226 = smul.addr %s1225, 128
        %s1227 = scalar_lea.vmem [#allocation10], %s1226
        // Predicated region
        $region173: #{tpu_custom_call.1} parent=163 // pred_check
          %p1228 = pneg %p306
        $region174: #{tpu_custom_call.1} parent=163 // pred_check_branch
          %1230 = sbr.rel (%p1228) target = $region176
        $region175: #{tpu_custom_call.1} parent=163 // pred_region
          _
        $region176: #{tpu_custom_call.1} parent=163 // pred_fallthru
          _
        %s1231 = smul.u32 16, %s36
        %p1232 = scmp.lt.s32.totalorder %s35, 1
        %s1233 = scalar_select %p1232, %s35, 1
        %p1234 = scmp.lt.s32.totalorder %s1231, 31
        %s1235 = scalar_select %p1234, %s1231, 31
        %s1236 = smul.addr %s1233, 32
        %s1237 = sadd.s32 %s1235, %s1236
        %s1238 = smul.addr %s1237, 4
        %s1239 = scalar_lea.vmem %s1, %s1238
        %p1240 = pneg %p72
        %p1241 = pneg %p69
        %s1242 = sand.u32 %s109, 1
        %s1243 = sand.u32 %s109, 1
        %s1244 = smul.addr %s1243, 256
        %s1245 = scalar_lea.vmem [#allocation8], %s1244
        %p1246 = pneg %p122
        %p1247 = pneg %p119
        %s1248 = sand.u32 %s159, 1
        %s1249 = sand.u32 %s159, 1
        %s1250 = smul.addr %s1249, 256
        %s1251 = scalar_lea.vmem [#allocation9], %s1250
        %p1252 = pneg %p172
        %p1253 = pneg %p169
        %p1254 = pneg %p193
        %p1255 = pneg %p190
        %p1256 = pneg %p214
        %p1257 = pneg %p211
        %p1258 = pneg %p235
        %p1259 = pneg %p232
        %p1260 = pneg %p256
        %p1261 = pneg %p253
        %s1262 = sand.u32 %s293, 1
        %s1263 = sand.u32 %s293, 1
        %s1264 = smul.addr %s1263, 128
        %s1265 = scalar_lea.vmem [#allocation10], %s1264
        %p1266 = pneg %p306
        %p1267 = pneg %p303
        %s1268 = sshra.s32 %s36, 7
        %s1269 = sand.u32 %s36, 127
        %s1270 = sadd.s32 %s1268, %s35
        %s1271 = smul.u32 %s1270, 128
        %s1272 = sshra.s32 %s36, 7
        %s1273 = sand.u32 %s36, 127
        %s1274 = sadd.s32 %s1271, %s1273
        %s1275 = sld [smem:[#allocation7 + %s1274]]
        %s1276 = ssub.s32 %s1275, 1
        %p1277 = scmp.lt.s32.totalorder %s37, %s1276
        %s1278 = scalar_select %p1277, %s37, %s1276
        %p1279 = scmp.lt.s32.totalorder %s35, 1
        %s1280 = scalar_select %p1279, %s35, 1
        %p1281 = scmp.lt.s32.totalorder %s1278, 1
        %s1282 = scalar_select %p1281, %s1278, 1
        %s1283 = smul.addr %s1280, 2
        %s1284 = sadd.s32 %s1282, %s1283
        %s1285 = scalar_lea.vmem %s9, %s1284
        %p1286 = pneg %p356
        %p1287 = pneg %p353
        %p1288 = pneg %p384
        %p1289 = pneg %p381
        %s1290 = sand.u32 %s371, 1
        %s1291 = scalar_lea.sflag [#allocation12], %s1290
        %s1292 = sand.u32 %s371, 1
        %s1293 = smul.addr %s1292, 128
        %s1294 = scalar_lea.vmem [#allocation11], %s1293
        %s1295 = smul.u32 16, %s36
        %p1296 = scmp.lt.s32.totalorder %s35, 1
        %s1297 = scalar_select %p1296, %s35, 1
        %p1298 = scmp.lt.s32.totalorder %s1295, 31
        %s1299 = scalar_select %p1298, %s1295, 31
        %s1300 = smul.addr %s1297, 32
        %s1301 = sadd.s32 %s1299, %s1300
        %s1302 = smul.addr %s1301, 4
        %s1303 = scalar_lea.vmem %s1, %s1302
        %s1304 = smul.u32 16, %s36
        %s1305 = sshra.s32 %s36, 7
        %s1306 = sand.u32 %s36, 127
        %s1307 = sadd.s32 %s1305, %s35
        %s1308 = smul.u32 %s1307, 128
        %s1309 = sshra.s32 %s36, 7
        %s1310 = sand.u32 %s36, 127
        %s1311 = sadd.s32 %s1308, %s1310
        %s1312 = sld [smem:[#allocation7 + %s1311]]
        %s1313 = ssub.s32 %s1312, 1
        %p1314 = scmp.lt.s32.totalorder %s37, %s1313
        %s1315 = scalar_select %p1314, %s37, %s1313
        %s1316 = smul.u32 16, %s1315
        %s1317 = sshra.s32 %s36, 7
        %s1318 = sand.u32 %s36, 127
        %s1319 = sadd.s32 %s1317, %s35
        %s1320 = smul.u32 %s1319, 128
        %s1321 = sshra.s32 %s36, 7
        %s1322 = sand.u32 %s36, 127
        %s1323 = sadd.s32 %s1320, %s1322
        %s1324 = sld [smem:[#allocation7 + %s1323]]
        %s1325 = ssub.s32 %s1324, 1
        %p1326 = scmp.lt.s32.totalorder %s37, %s1325
        %s1327 = scalar_select %p1326, %s37, %s1325
        %s1328 = smul.u32 16, %s1327
        %s1329 = sshra.s32 %s36, 7
        %s1330 = sand.u32 %s36, 127
        %s1331 = sadd.s32 %s1329, %s35
        %s1332 = smul.u32 %s1331, 128
        %s1333 = sshra.s32 %s36, 7
        %s1334 = sand.u32 %s36, 127
        %s1335 = sadd.s32 %s1332, %s1334
        %s1336 = sld [smem:[#allocation7 + %s1335]]
        %s1337 = ssub.s32 %s1336, 1
        %p1338 = scmp.lt.s32.totalorder %s37, %s1337
        %s1339 = scalar_select %p1338, %s37, %s1337
        %s1340 = smul.u32 16, %s36
        %s1341 = sshra.s32 %s36, 7
        %s1342 = sand.u32 %s36, 127
        %s1343 = sadd.s32 %s1341, %s35
        %s1344 = smul.u32 %s1343, 128
        %s1345 = sshra.s32 %s36, 7
        %s1346 = sand.u32 %s36, 127
        %s1347 = sadd.s32 %s1344, %s1346
        %s1348 = sld [smem:[#allocation7 + %s1347]]
        %s1349 = ssub.s32 %s1348, 1
        %p1350 = scmp.lt.s32.totalorder %s37, %s1349
        %s1351 = scalar_select %p1350, %s37, %s1349
        %p1352 = scmp.lt.s32.totalorder %s35, 1
        %s1353 = scalar_select %p1352, %s35, 1
        %p1354 = scmp.lt.s32.totalorder %s1351, 1
        %s1355 = scalar_select %p1354, %s1351, 1
        %s1356 = smul.addr %s1353, 2
        %s1357 = sadd.s32 %s1355, %s1356
        %s1358 = scalar_lea.vmem %s9, %s1357
        %s1359 = sshra.s32 %s36, 7
        %s1360 = sand.u32 %s36, 127
        %s1361 = sadd.s32 %s1359, %s35
        %s1362 = smul.u32 %s1361, 128
        %s1363 = sshra.s32 %s36, 7
        %s1364 = sand.u32 %s36, 127
        %s1365 = sadd.s32 %s1362, %s1364
        %s1366 = sld [smem:[#allocation7 + %s1365]]
        %s1367 = ssub.s32 %s1366, 1
        %p1368 = scmp.lt.s32.totalorder %s37, %s1367
        %s1369 = scalar_select %p1368, %s37, %s1367
        %s1370 = smul.u32 16, %s36
        %s1372 = sshra.s32 %s36, 7
        %s1373 = sand.u32 %s36, 127
        %s1374 = sadd.s32 %s1372, %s35
        %s1375 = smul.u32 %s1374, 128
        %s1376 = sshra.s32 %s36, 7
        %s1377 = sand.u32 %s36, 127
        %s1378 = sadd.s32 %s1375, %s1377
        %s1379 = sld [smem:[#allocation7 + %s1378]]
        %p1380 = scmp.eq.s32.totalorder %s37, 0
        // Predicated region
        $region177: #{tpu_custom_call.1} parent=163 // pred_check
          %p1381 = pneg %p1380
        $region178: #{tpu_custom_call.1} parent=163 // pred_check_branch
          %1383 = sbr.rel (%p1381) target = $region180
        $region179: #{tpu_custom_call.1} parent=163 // pred_region
          %v1384 = vld [vmem:[%s1303] sm:$0xf]
          %v1385 = vld [vmem:[%s1303 + $0x4] sm:$0xf]
          %v1386 = vld [vmem:[%s1303 + $0x8] sm:$0xf]
          %v1387 = vld [vmem:[%s1303 + $0xc] sm:$0xf]
          %v1388 = vld [vmem:[%s1303 + $0x10] sm:$0xf]
          %v1389 = vld [vmem:[%s1303 + $0x14] sm:$0xf]
          %v1390 = vld [vmem:[%s1303 + $0x18] sm:$0xf]
          %v1391 = vld [vmem:[%s1303 + $0x1c] sm:$0xf]
          %v1392 = vld [vmem:[%s1303 + $0x20] sm:$0xf]
          %v1393 = vld [vmem:[%s1303 + $0x24] sm:$0xf]
          %v1394 = vld [vmem:[%s1303 + $0x28] sm:$0xf]
          %v1395 = vld [vmem:[%s1303 + $0x2c] sm:$0xf]
          %v1396 = vld [vmem:[%s1303 + $0x30] sm:$0xf]
          %v1397 = vld [vmem:[%s1303 + $0x34] sm:$0xf]
          %v1398 = vld [vmem:[%s1303 + $0x38] sm:$0xf]
          %v1399 = vld [vmem:[%s1303 + $0x3c] sm:$0xf]
          %v1400 = vld [vmem:[%s4] sm:$0xf]
          %v1401 = vld [vmem:[%s4 + $0x4] sm:$0xf]
          %v1402 = vld [vmem:[%s4 + $0x8] sm:$0xf]
          %v1403 = vld [vmem:[%s4 + $0xc] sm:$0xf]
          %v1404 = vld [vmem:[%s4 + $0x10] sm:$0xf]
          %v1405 = vld [vmem:[%s4 + $0x14] sm:$0xf]
          %v1406 = vld [vmem:[%s4 + $0x18] sm:$0xf]
          %v1407 = vld [vmem:[%s4 + $0x1c] sm:$0xf]
          %v1408 = vld [vmem:[%s4 + $0x20] sm:$0xf]
          %v1409 = vld [vmem:[%s4 + $0x24] sm:$0xf]
          %v1410 = vld [vmem:[%s4 + $0x28] sm:$0xf]
          %v1411 = vld [vmem:[%s4 + $0x2c] sm:$0xf]
          %v1412 = vld [vmem:[%s4 + $0x30] sm:$0xf]
          %v1413 = vld [vmem:[%s4 + $0x34] sm:$0xf]
          %v1414 = vld [vmem:[%s4 + $0x38] sm:$0xf]
          %v1415 = vld [vmem:[%s4 + $0x3c] sm:$0xf]
          %v1416 = vld [vmem:[%s5] sm:$0x1]
          %v1418 = vlaneseq
          %v1419 = vshrl.u32 %v1418, 7
          %v1420 = vsub.s32 0, %v1419
          %v1421 = vrot.slane %v1416, %v1420
          %v1439 = vunpack.c.l.b16 %v1384
          %v1440 = vunpack.c.l.b16 %v1385
          %v1441 = vunpack.c.l.b16 %v1386
          %v1442 = vunpack.c.l.b16 %v1387
          %v1443 = vunpack.c.l.b16 %v1388
          %v1444 = vunpack.c.l.b16 %v1389
          %v1445 = vunpack.c.l.b16 %v1390
          %v1446 = vunpack.c.l.b16 %v1391
          %v1447 = vunpack.c.l.b16 %v1392
          %v1448 = vunpack.c.l.b16 %v1393
          %v1449 = vunpack.c.l.b16 %v1394
          %v1450 = vunpack.c.l.b16 %v1395
          %v1451 = vunpack.c.l.b16 %v1396
          %v1452 = vunpack.c.l.b16 %v1397
          %v1453 = vunpack.c.l.b16 %v1398
          %v1454 = vunpack.c.l.b16 %v1399
          %v1455 = vpack.c.b16 %v1440, %v1439
          %v1456 = vpack.c.b16 %v1442, %v1441
          %v1457 = vpack.c.b16 %v1444, %v1443
          %v1458 = vpack.c.b16 %v1446, %v1445
          %v1459 = vpack.c.b16 %v1448, %v1447
          %v1460 = vpack.c.b16 %v1450, %v1449
          %v1461 = vpack.c.b16 %v1452, %v1451
          %v1462 = vpack.c.b16 %v1454, %v1453
          %v1487 = vunpack.c.l.b16 %v1400
          %v1488 = vunpack.c.l.b16 %v1401
          %v1489 = vunpack.c.l.b16 %v1402
          %v1490 = vunpack.c.l.b16 %v1403
          %v1491 = vunpack.c.l.b16 %v1404
          %v1492 = vunpack.c.l.b16 %v1405
          %v1493 = vunpack.c.l.b16 %v1406
          %v1494 = vunpack.c.l.b16 %v1407
          %v1495 = vunpack.c.l.b16 %v1408
          %v1496 = vunpack.c.l.b16 %v1409
          %v1497 = vunpack.c.l.b16 %v1410
          %v1498 = vunpack.c.l.b16 %v1411
          %v1499 = vunpack.c.l.b16 %v1412
          %v1500 = vunpack.c.l.b16 %v1413
          %v1501 = vunpack.c.l.b16 %v1414
          %v1502 = vunpack.c.l.b16 %v1415
          %v1503 = vpack.c.b16 %v1488, %v1487
          %v1504 = vpack.c.b16 %v1490, %v1489
          %v1505 = vpack.c.b16 %v1492, %v1491
          %v1506 = vpack.c.b16 %v1494, %v1493
          %v1507 = vpack.c.b16 %v1496, %v1495
          %v1508 = vpack.c.b16 %v1498, %v1497
          %v1509 = vpack.c.b16 %v1500, %v1499
          %v1510 = vpack.c.b16 %v1502, %v1501
          %1519 = vmatprep.subr.bf16.mxu0 0
          %1520 = vmatpush1.bf16.msra.mxu0 %v1503
          %1521 = vmatprep.subr.bf16.mxu0 0
          %1522 = vmatpush1.bf16.msra.mxu0 %v1504
          %1523 = vmatprep.subr.bf16.mxu0 0
          %1524 = vmatpush1.bf16.msra.mxu0 %v1505
          %1525 = vmatprep.subr.bf16.mxu0 0
          %1526 = vmatpush1.bf16.msra.mxu0 %v1506
          %1527 = vmatprep.subr.bf16.mxu0 0
          %1528 = vmatpush1.bf16.msra.mxu0 %v1507
          %1529 = vmatprep.subr.bf16.mxu0 0
          %1530 = vmatpush1.bf16.msra.mxu0 %v1508
          %1531 = vmatprep.subr.bf16.mxu0 0
          %1532 = vmatpush1.bf16.msra.mxu0 %v1509
          %1533 = vmatprep.subr.bf16.mxu0 0
          %1534 = vmatpush1.bf16.msra.mxu0 %v1510
          %1535 = vmatprep.subr.bf16.mxu0 0
          %1536 = vmatpush1.bf16.msra.mxu0 0
          %1537 = vmatprep.subr.bf16.mxu0 0
          %1538 = vmatpush1.bf16.msra.mxu0 0
          %1539 = vmatprep.subr.bf16.mxu0 0
          %1540 = vmatpush1.bf16.msra.mxu0 0
          %1541 = vmatprep.subr.bf16.mxu0 0
          %1542 = vmatpush1.bf16.msra.mxu0 0
          %1543 = vmatprep.subr.bf16.mxu0 0
          %1544 = vmatpush1.bf16.msra.mxu0 0
          %1545 = vmatprep.subr.bf16.mxu0 0
          %1546 = vmatpush1.bf16.msra.mxu0 0
          %1547 = vmatprep.subr.bf16.mxu0 0
          %1548 = vmatpush1.bf16.msra.mxu0 0
          %1549 = vmatprep.subr.bf16.mxu0 0
          %1550 = vmatpush1.bf16.msra.mxu0 0
          %1551 = vmatprep.mubr.bf16.mxu0 0
          %1552 = vmatmul.mubr.bf16.gmra.mrb[0].mxu0 %v1455
          %v1553 = vpop.f32.mrb[0].mxu0
          %v1554 = vadd.f32 %v1421, %v1553
          %v1555 = vpop.f32.mrb[0].mxu0
          %v1556 = vpop.f32.mrb[0].mxu0
          %v1557 = vadd.f32 %v1421, %v1556
          %v1558 = vpop.f32.mrb[0].mxu0
          %1559 = vmatprep.mubr.bf16.mxu0 0
          %1560 = vmatmul.mubr.bf16.gmra.mrb[0].mxu0 %v1456
          %v1561 = vpop.f32.mrb[0].mxu0
          %v1562 = vadd.f32 %v1421, %v1561
          %v1563 = vpop.f32.mrb[0].mxu0
          %v1564 = vpop.f32.mrb[0].mxu0
          %v1565 = vadd.f32 %v1421, %v1564
          %v1566 = vpop.f32.mrb[0].mxu0
          %1567 = vmatprep.mubr.bf16.mxu0 0
          %1568 = vmatmul.mubr.bf16.gmra.mrb[0].mxu0 %v1457
          %v1569 = vpop.f32.mrb[0].mxu0
          %v1570 = vadd.f32 %v1421, %v1569
          %v1571 = vpop.f32.mrb[0].mxu0
          %v1572 = vpop.f32.mrb[0].mxu0
          %v1573 = vadd.f32 %v1421, %v1572
          %v1574 = vpop.f32.mrb[0].mxu0
          %1575 = vmatprep.mubr.bf16.mxu0 0
          %1576 = vmatmul.mubr.bf16.gmra.mrb[0].mxu0 %v1458
          %v1577 = vpop.f32.mrb[0].mxu0
          %v1578 = vadd.f32 %v1421, %v1577
          %v1579 = vpop.f32.mrb[0].mxu0
          %v1580 = vpop.f32.mrb[0].mxu0
          %v1581 = vadd.f32 %v1421, %v1580
          %v1582 = vpop.f32.mrb[0].mxu0
          %1583 = vmatprep.mubr.bf16.mxu0 0
          %1584 = vmatmul.mubr.bf16.gmra.mrb[0].mxu0 %v1459
          %v1585 = vpop.f32.mrb[0].mxu0
          %v1586 = vadd.f32 %v1421, %v1585
          %v1587 = vpop.f32.mrb[0].mxu0
          %v1588 = vpop.f32.mrb[0].mxu0
          %v1589 = vadd.f32 %v1421, %v1588
          %v1590 = vpop.f32.mrb[0].mxu0
          %1591 = vmatprep.mubr.bf16.mxu0 0
          %1592 = vmatmul.mubr.bf16.gmra.mrb[0].mxu0 %v1460
          %v1593 = vpop.f32.mrb[0].mxu0
          %v1594 = vadd.f32 %v1421, %v1593
          %v1595 = vpop.f32.mrb[0].mxu0
          %v1596 = vpop.f32.mrb[0].mxu0
          %v1597 = vadd.f32 %v1421, %v1596
          %v1598 = vpop.f32.mrb[0].mxu0
          %1599 = vmatprep.mubr.bf16.mxu0 0
          %1600 = vmatmul.mubr.bf16.gmra.mrb[0].mxu0 %v1461
          %v1601 = vpop.f32.mrb[0].mxu0
          %v1602 = vadd.f32 %v1421, %v1601
          %v1603 = vpop.f32.mrb[0].mxu0
          %v1604 = vpop.f32.mrb[0].mxu0
          %v1605 = vadd.f32 %v1421, %v1604
          %v1606 = vpop.f32.mrb[0].mxu0
          %1607 = vmatprep.mubr.bf16.mxu0 0
          %1608 = vmatmul.mubr.bf16.gmra.mrb[0].mxu0 %v1462
          %v1609 = vpop.f32.mrb[0].mxu0
          %v1610 = vadd.f32 %v1421, %v1609
          %v1611 = vpop.f32.mrb[0].mxu0
          %v1612 = vpop.f32.mrb[0].mxu0
          %v1613 = vadd.f32 %v1421, %v1612
          %v1614 = vpop.f32.mrb[0].mxu0
          %1615 = vdwg.mxu0
          %v1616 = vmul.f32 %v1554, 0.17677669
          %v1617 = vmul.f32 %v1557, 0.17677669
          %v1618 = vmul.f32 %v1562, 0.17677669
          %v1619 = vmul.f32 %v1565, 0.17677669
          %v1620 = vmul.f32 %v1570, 0.17677669
          %v1621 = vmul.f32 %v1573, 0.17677669
          %v1622 = vmul.f32 %v1578, 0.17677669
          %v1623 = vmul.f32 %v1581, 0.17677669
          %v1624 = vmul.f32 %v1586, 0.17677669
          %v1625 = vmul.f32 %v1589, 0.17677669
          %v1626 = vmul.f32 %v1594, 0.17677669
          %v1627 = vmul.f32 %v1597, 0.17677669
          %v1628 = vmul.f32 %v1602, 0.17677669
          %v1629 = vmul.f32 %v1605, 0.17677669
          %v1630 = vmul.f32 %v1610, 0.17677669
          %v1631 = vmul.f32 %v1613, 0.17677669
          %1648 = vrot.lane.b32.xlu0 %v1616, 96
          %v1649 = vpop.permute.xlu0 %1648
          %1650 = vrot.lane.b32.xlu0 %v1617, 96
          %v1651 = vpop.permute.xlu0 %1650
          %1652 = vrot.lane.b32.xlu0 %v1618, 96
          %v1653 = vpop.permute.xlu0 %1652
          %1654 = vrot.lane.b32.xlu0 %v1619, 96
          %v1655 = vpop.permute.xlu0 %1654
          %1656 = vrot.lane.b32.xlu0 %v1620, 96
          %v1657 = vpop.permute.xlu0 %1656
          %1658 = vrot.lane.b32.xlu0 %v1621, 96
          %v1659 = vpop.permute.xlu0 %1658
          %1660 = vrot.lane.b32.xlu0 %v1622, 96
          %v1661 = vpop.permute.xlu0 %1660
          %1662 = vrot.lane.b32.xlu0 %v1623, 96
          %v1663 = vpop.permute.xlu0 %1662
          %1664 = vrot.lane.b32.xlu0 %v1624, 96
          %v1665 = vpop.permute.xlu0 %1664
          %1666 = vrot.lane.b32.xlu0 %v1625, 96
          %v1667 = vpop.permute.xlu0 %1666
          %1668 = vrot.lane.b32.xlu0 %v1626, 96
          %v1669 = vpop.permute.xlu0 %1668
          %1670 = vrot.lane.b32.xlu0 %v1627, 96
          %v1671 = vpop.permute.xlu0 %1670
          %1672 = vrot.lane.b32.xlu0 %v1628, 96
          %v1673 = vpop.permute.xlu0 %1672
          %1674 = vrot.lane.b32.xlu0 %v1629, 96
          %v1675 = vpop.permute.xlu0 %1674
          %1676 = vrot.lane.b32.xlu0 %v1630, 96
          %v1677 = vpop.permute.xlu0 %1676
          %1678 = vrot.lane.b32.xlu0 %v1631, 96
          %v1679 = vpop.permute.xlu0 %1678
          %1696 = vrot.lane.b32.xlu0 %v1616, 64
          %v1697 = vpop.permute.xlu0 %1696
          %1698 = vrot.lane.b32.xlu0 %v1617, 64
          %v1699 = vpop.permute.xlu0 %1698
          %1700 = vrot.lane.b32.xlu0 %v1618, 64
          %v1701 = vpop.permute.xlu0 %1700
          %1702 = vrot.lane.b32.xlu0 %v1619, 64
          %v1703 = vpop.permute.xlu0 %1702
          %1704 = vrot.lane.b32.xlu0 %v1620, 64
          %v1705 = vpop.permute.xlu0 %1704
          %1706 = vrot.lane.b32.xlu0 %v1621, 64
          %v1707 = vpop.permute.xlu0 %1706
          %1708 = vrot.lane.b32.xlu0 %v1622, 64
          %v1709 = vpop.permute.xlu0 %1708
          %1710 = vrot.lane.b32.xlu0 %v1623, 64
          %v1711 = vpop.permute.xlu0 %1710
          %1712 = vrot.lane.b32.xlu0 %v1624, 64
          %v1713 = vpop.permute.xlu0 %1712
          %1714 = vrot.lane.b32.xlu0 %v1625, 64
          %v1715 = vpop.permute.xlu0 %1714
          %1716 = vrot.lane.b32.xlu0 %v1626, 64
          %v1717 = vpop.permute.xlu0 %1716
          %1718 = vrot.lane.b32.xlu0 %v1627, 64
          %v1719 = vpop.permute.xlu0 %1718
          %1720 = vrot.lane.b32.xlu0 %v1628, 64
          %v1721 = vpop.permute.xlu0 %1720
          %1722 = vrot.lane.b32.xlu0 %v1629, 64
          %v1723 = vpop.permute.xlu0 %1722
          %1724 = vrot.lane.b32.xlu0 %v1630, 64
          %v1725 = vpop.permute.xlu0 %1724
          %1726 = vrot.lane.b32.xlu0 %v1631, 64
          %v1727 = vpop.permute.xlu0 %1726
          %1744 = vrot.lane.b32.xlu0 %v1616, 32
          %v1745 = vpop.permute.xlu0 %1744
          %1746 = vrot.lane.b32.xlu0 %v1617, 32
          %v1747 = vpop.permute.xlu0 %1746
          %1748 = vrot.lane.b32.xlu0 %v1618, 32
          %v1749 = vpop.permute.xlu0 %1748
          %1750 = vrot.lane.b32.xlu0 %v1619, 32
          %v1751 = vpop.permute.xlu0 %1750
          %1752 = vrot.lane.b32.xlu0 %v1620, 32
          %v1753 = vpop.permute.xlu0 %1752
          %1754 = vrot.lane.b32.xlu0 %v1621, 32
          %v1755 = vpop.permute.xlu0 %1754
          %1756 = vrot.lane.b32.xlu0 %v1622, 32
          %v1757 = vpop.permute.xlu0 %1756
          %1758 = vrot.lane.b32.xlu0 %v1623, 32
          %v1759 = vpop.permute.xlu0 %1758
          %1760 = vrot.lane.b32.xlu0 %v1624, 32
          %v1761 = vpop.permute.xlu0 %1760
          %1762 = vrot.lane.b32.xlu0 %v1625, 32
          %v1763 = vpop.permute.xlu0 %1762
          %1764 = vrot.lane.b32.xlu0 %v1626, 32
          %v1765 = vpop.permute.xlu0 %1764
          %1766 = vrot.lane.b32.xlu0 %v1627, 32
          %v1767 = vpop.permute.xlu0 %1766
          %1768 = vrot.lane.b32.xlu0 %v1628, 32
          %v1769 = vpop.permute.xlu0 %1768
          %1770 = vrot.lane.b32.xlu0 %v1629, 32
          %v1771 = vpop.permute.xlu0 %1770
          %1772 = vrot.lane.b32.xlu0 %v1630, 32
          %v1773 = vpop.permute.xlu0 %1772
          %1774 = vrot.lane.b32.xlu0 %v1631, 32
          %v1775 = vpop.permute.xlu0 %1774
          %v1792 = vpack.c.bf16 %v1617, %v1616
          %v1793 = vpack.c.bf16 %v1619, %v1618
          %v1794 = vpack.c.bf16 %v1621, %v1620
          %v1795 = vpack.c.bf16 %v1623, %v1622
          %v1796 = vpack.c.bf16 %v1625, %v1624
          %v1797 = vpack.c.bf16 %v1627, %v1626
          %v1798 = vpack.c.bf16 %v1629, %v1628
          %v1799 = vpack.c.bf16 %v1631, %v1630
          %v1800 = vpack.c.bf16 %v1651, %v1649
          %v1801 = vpack.c.bf16 %v1655, %v1653
          %v1802 = vpack.c.bf16 %v1659, %v1657
          %v1803 = vpack.c.bf16 %v1663, %v1661
          %v1804 = vpack.c.bf16 %v1667, %v1665
          %v1805 = vpack.c.bf16 %v1671, %v1669
          %v1806 = vpack.c.bf16 %v1675, %v1673
          %v1807 = vpack.c.bf16 %v1679, %v1677
          %v1808 = vpack.c.bf16 %v1699, %v1697
          %v1809 = vpack.c.bf16 %v1703, %v1701
          %v1810 = vpack.c.bf16 %v1707, %v1705
          %v1811 = vpack.c.bf16 %v1711, %v1709
          %v1812 = vpack.c.bf16 %v1715, %v1713
          %v1813 = vpack.c.bf16 %v1719, %v1717
          %v1814 = vpack.c.bf16 %v1723, %v1721
          %v1815 = vpack.c.bf16 %v1727, %v1725
          %v1816 = vpack.c.bf16 %v1747, %v1745
          %v1817 = vpack.c.bf16 %v1751, %v1749
          %v1818 = vpack.c.bf16 %v1755, %v1753
          %v1819 = vpack.c.bf16 %v1759, %v1757
          %v1820 = vpack.c.bf16 %v1763, %v1761
          %v1821 = vpack.c.bf16 %v1767, %v1765
          %v1822 = vpack.c.bf16 %v1771, %v1769
          %v1823 = vpack.c.bf16 %v1775, %v1773
          %vm1824 = vcmask 261120
          %1825 = vst.msk [vmem:[#allocation2] sm:$0xff] %vm1824, %v1792
          %1826 = vst.msk [vmem:[#allocation2 + $0x8] sm:$0xff] %vm1824, %v1793
          %1827 = vst.msk [vmem:[#allocation2 + $0x10] sm:$0xff] %vm1824, %v1794
          %1828 = vst.msk [vmem:[#allocation2 + $0x18] sm:$0xff] %vm1824, %v1795
          %1829 = vst.msk [vmem:[#allocation2 + $0x20] sm:$0xff] %vm1824, %v1796
          %1830 = vst.msk [vmem:[#allocation2 + $0x28] sm:$0xff] %vm1824, %v1797
          %1831 = vst.msk [vmem:[#allocation2 + $0x30] sm:$0xff] %vm1824, %v1798
          %1832 = vst.msk [vmem:[#allocation2 + $0x38] sm:$0xff] %vm1824, %v1799
          %1833 = vst.msk [vmem:[#allocation2 + $0x40] sm:$0xff] %vm1824, %v1800
          %1834 = vst.msk [vmem:[#allocation2 + $0x48] sm:$0xff] %vm1824, %v1801
          %1835 = vst.msk [vmem:[#allocation2 + $0x50] sm:$0xff] %vm1824, %v1802
          %1836 = vst.msk [vmem:[#allocation2 + $0x58] sm:$0xff] %vm1824, %v1803
          %1837 = vst.msk [vmem:[#allocation2 + $0x60] sm:$0xff] %vm1824, %v1804
          %1838 = vst.msk [vmem:[#allocation2 + $0x68] sm:$0xff] %vm1824, %v1805
          %1839 = vst.msk [vmem:[#allocation2 + $0x70] sm:$0xff] %vm1824, %v1806
          %1840 = vst.msk [vmem:[#allocation2 + $0x78] sm:$0xff] %vm1824, %v1807
          %1841 = vst.msk [vmem:[#allocation2 + $0x80] sm:$0xff] %vm1824, %v1808
          %1842 = vst.msk [vmem:[#allocation2 + $0x88] sm:$0xff] %vm1824, %v1809
          %1843 = vst.msk [vmem:[#allocation2 + $0x90] sm:$0xff] %vm1824, %v1810
          %1844 = vst.msk [vmem:[#allocation2 + $0x98] sm:$0xff] %vm1824, %v1811
          %1845 = vst.msk [vmem:[#allocation2 + $0xa0] sm:$0xff] %vm1824, %v1812
          %1846 = vst.msk [vmem:[#allocation2 + $0xa8] sm:$0xff] %vm1824, %v1813
          %1847 = vst.msk [vmem:[#allocation2 + $0xb0] sm:$0xff] %vm1824, %v1814
          %1848 = vst.msk [vmem:[#allocation2 + $0xb8] sm:$0xff] %vm1824, %v1815
          %1849 = vst.msk [vmem:[#allocation2 + $0xc0] sm:$0xff] %vm1824, %v1816
          %1850 = vst.msk [vmem:[#allocation2 + $0xc8] sm:$0xff] %vm1824, %v1817
          %1851 = vst.msk [vmem:[#allocation2 + $0xd0] sm:$0xff] %vm1824, %v1818
          %1852 = vst.msk [vmem:[#allocation2 + $0xd8] sm:$0xff] %vm1824, %v1819
          %1853 = vst.msk [vmem:[#allocation2 + $0xe0] sm:$0xff] %vm1824, %v1820
          %1854 = vst.msk [vmem:[#allocation2 + $0xe8] sm:$0xff] %vm1824, %v1821
          %1855 = vst.msk [vmem:[#allocation2 + $0xf0] sm:$0xff] %vm1824, %v1822
          %1856 = vst.msk [vmem:[#allocation2 + $0xf8] sm:$0xff] %vm1824, %v1823
          %vm1857 = vcmask 7168
          %1858 = vst.msk [vmem:[#allocation3] sm:$0xff] %vm1857, -inf
          %1859 = vst.msk [vmem:[#allocation3 + $0x8] sm:$0xff] %vm1857, -inf
          %1860 = vst.msk [vmem:[#allocation3 + $0x10] sm:$0xff] %vm1857, -inf
          %1861 = vst.msk [vmem:[#allocation3 + $0x18] sm:$0xff] %vm1857, -inf
          %1862 = vst.msk [vmem:[#allocation3 + $0x20] sm:$0xff] %vm1857, -inf
          %1863 = vst.msk [vmem:[#allocation3 + $0x28] sm:$0xff] %vm1857, -inf
          %1864 = vst.msk [vmem:[#allocation3 + $0x30] sm:$0xff] %vm1857, -inf
          %1865 = vst.msk [vmem:[#allocation3 + $0x38] sm:$0xff] %vm1857, -inf
          %1866 = vst.msk [vmem:[#allocation3 + $0x40] sm:$0xff] %vm1857, -inf
          %1867 = vst.msk [vmem:[#allocation3 + $0x48] sm:$0xff] %vm1857, -inf
          %1868 = vst.msk [vmem:[#allocation3 + $0x50] sm:$0xff] %vm1857, -inf
          %1869 = vst.msk [vmem:[#allocation3 + $0x58] sm:$0xff] %vm1857, -inf
          %1870 = vst.msk [vmem:[#allocation3 + $0x60] sm:$0xff] %vm1857, -inf
          %1871 = vst.msk [vmem:[#allocation3 + $0x68] sm:$0xff] %vm1857, -inf
          %1872 = vst.msk [vmem:[#allocation3 + $0x70] sm:$0xff] %vm1857, -inf
          %1873 = vst.msk [vmem:[#allocation3 + $0x78] sm:$0xff] %vm1857, -inf
          %1874 = vst.msk [vmem:[#allocation3 + $0x80] sm:$0xff] %vm1857, -inf
          %1875 = vst.msk [vmem:[#allocation3 + $0x88] sm:$0xff] %vm1857, -inf
          %1876 = vst.msk [vmem:[#allocation3 + $0x90] sm:$0xff] %vm1857, -inf
          %1877 = vst.msk [vmem:[#allocation3 + $0x98] sm:$0xff] %vm1857, -inf
          %1878 = vst.msk [vmem:[#allocation3 + $0xa0] sm:$0xff] %vm1857, -inf
          %1879 = vst.msk [vmem:[#allocation3 + $0xa8] sm:$0xff] %vm1857, -inf
          %1880 = vst.msk [vmem:[#allocation3 + $0xb0] sm:$0xff] %vm1857, -inf
          %1881 = vst.msk [vmem:[#allocation3 + $0xb8] sm:$0xff] %vm1857, -inf
          %1882 = vst.msk [vmem:[#allocation3 + $0xc0] sm:$0xff] %vm1857, -inf
          %1883 = vst.msk [vmem:[#allocation3 + $0xc8] sm:$0xff] %vm1857, -inf
          %1884 = vst.msk [vmem:[#allocation3 + $0xd0] sm:$0xff] %vm1857, -inf
          %1885 = vst.msk [vmem:[#allocation3 + $0xd8] sm:$0xff] %vm1857, -inf
          %1886 = vst.msk [vmem:[#allocation3 + $0xe0] sm:$0xff] %vm1857, -inf
          %1887 = vst.msk [vmem:[#allocation3 + $0xe8] sm:$0xff] %vm1857, -inf
          %1888 = vst.msk [vmem:[#allocation3 + $0xf0] sm:$0xff] %vm1857, -inf
          %1889 = vst.msk [vmem:[#allocation3 + $0xf8] sm:$0xff] %vm1857, -inf
          %1890 = vst.msk [vmem:[#allocation3 + $0x100] sm:$0xff] %vm1857, -inf
          %1891 = vst.msk [vmem:[#allocation3 + $0x108] sm:$0xff] %vm1857, -inf
          %1892 = vst.msk [vmem:[#allocation3 + $0x110] sm:$0xff] %vm1857, -inf
          %1893 = vst.msk [vmem:[#allocation3 + $0x118] sm:$0xff] %vm1857, -inf
          %1894 = vst.msk [vmem:[#allocation3 + $0x120] sm:$0xff] %vm1857, -inf
          %1895 = vst.msk [vmem:[#allocation3 + $0x128] sm:$0xff] %vm1857, -inf
          %1896 = vst.msk [vmem:[#allocation3 + $0x130] sm:$0xff] %vm1857, -inf
          %1897 = vst.msk [vmem:[#allocation3 + $0x138] sm:$0xff] %vm1857, -inf
          %1898 = vst.msk [vmem:[#allocation3 + $0x140] sm:$0xff] %vm1857, -inf
          %1899 = vst.msk [vmem:[#allocation3 + $0x148] sm:$0xff] %vm1857, -inf
          %1900 = vst.msk [vmem:[#allocation3 + $0x150] sm:$0xff] %vm1857, -inf
          %1901 = vst.msk [vmem:[#allocation3 + $0x158] sm:$0xff] %vm1857, -inf
          %1902 = vst.msk [vmem:[#allocation3 + $0x160] sm:$0xff] %vm1857, -inf
          %1903 = vst.msk [vmem:[#allocation3 + $0x168] sm:$0xff] %vm1857, -inf
          %1904 = vst.msk [vmem:[#allocation3 + $0x170] sm:$0xff] %vm1857, -inf
          %1905 = vst.msk [vmem:[#allocation3 + $0x178] sm:$0xff] %vm1857, -inf
          %1906 = vst.msk [vmem:[#allocation3 + $0x180] sm:$0xff] %vm1857, -inf
          %1907 = vst.msk [vmem:[#allocation3 + $0x188] sm:$0xff] %vm1857, -inf
          %1908 = vst.msk [vmem:[#allocation3 + $0x190] sm:$0xff] %vm1857, -inf
          %1909 = vst.msk [vmem:[#allocation3 + $0x198] sm:$0xff] %vm1857, -inf
          %1910 = vst.msk [vmem:[#allocation3 + $0x1a0] sm:$0xff] %vm1857, -inf
          %1911 = vst.msk [vmem:[#allocation3 + $0x1a8] sm:$0xff] %vm1857, -inf
          %1912 = vst.msk [vmem:[#allocation3 + $0x1b0] sm:$0xff] %vm1857, -inf
          %1913 = vst.msk [vmem:[#allocation3 + $0x1b8] sm:$0xff] %vm1857, -inf
          %1914 = vst.msk [vmem:[#allocation3 + $0x1c0] sm:$0xff] %vm1857, -inf
          %1915 = vst.msk [vmem:[#allocation3 + $0x1c8] sm:$0xff] %vm1857, -inf
          %1916 = vst.msk [vmem:[#allocation3 + $0x1d0] sm:$0xff] %vm1857, -inf
          %1917 = vst.msk [vmem:[#allocation3 + $0x1d8] sm:$0xff] %vm1857, -inf
          %1918 = vst.msk [vmem:[#allocation3 + $0x1e0] sm:$0xff] %vm1857, -inf
          %1919 = vst.msk [vmem:[#allocation3 + $0x1e8] sm:$0xff] %vm1857, -inf
          %1920 = vst.msk [vmem:[#allocation3 + $0x1f0] sm:$0xff] %vm1857, -inf
          %1921 = vst.msk [vmem:[#allocation3 + $0x1f8] sm:$0xff] %vm1857, -inf
          %1922 = vst.msk [vmem:[#allocation4] sm:$0xff] %vm1857, 0.0
          %1923 = vst.msk [vmem:[#allocation4 + $0x8] sm:$0xff] %vm1857, 0.0
          %1924 = vst.msk [vmem:[#allocation4 + $0x10] sm:$0xff] %vm1857, 0.0
          %1925 = vst.msk [vmem:[#allocation4 + $0x18] sm:$0xff] %vm1857, 0.0
          %1926 = vst.msk [vmem:[#allocation4 + $0x20] sm:$0xff] %vm1857, 0.0
          %1927 = vst.msk [vmem:[#allocation4 + $0x28] sm:$0xff] %vm1857, 0.0
          %1928 = vst.msk [vmem:[#allocation4 + $0x30] sm:$0xff] %vm1857, 0.0
          %1929 = vst.msk [vmem:[#allocation4 + $0x38] sm:$0xff] %vm1857, 0.0
          %1930 = vst.msk [vmem:[#allocation4 + $0x40] sm:$0xff] %vm1857, 0.0
          %1931 = vst.msk [vmem:[#allocation4 + $0x48] sm:$0xff] %vm1857, 0.0
          %1932 = vst.msk [vmem:[#allocation4 + $0x50] sm:$0xff] %vm1857, 0.0
          %1933 = vst.msk [vmem:[#allocation4 + $0x58] sm:$0xff] %vm1857, 0.0
          %1934 = vst.msk [vmem:[#allocation4 + $0x60] sm:$0xff] %vm1857, 0.0
          %1935 = vst.msk [vmem:[#allocation4 + $0x68] sm:$0xff] %vm1857, 0.0
          %1936 = vst.msk [vmem:[#allocation4 + $0x70] sm:$0xff] %vm1857, 0.0
          %1937 = vst.msk [vmem:[#allocation4 + $0x78] sm:$0xff] %vm1857, 0.0
          %1938 = vst.msk [vmem:[#allocation4 + $0x80] sm:$0xff] %vm1857, 0.0
          %1939 = vst.msk [vmem:[#allocation4 + $0x88] sm:$0xff] %vm1857, 0.0
          %1940 = vst.msk [vmem:[#allocation4 + $0x90] sm:$0xff] %vm1857, 0.0
          %1941 = vst.msk [vmem:[#allocation4 + $0x98] sm:$0xff] %vm1857, 0.0
          %1942 = vst.msk [vmem:[#allocation4 + $0xa0] sm:$0xff] %vm1857, 0.0
          %1943 = vst.msk [vmem:[#allocation4 + $0xa8] sm:$0xff] %vm1857, 0.0
          %1944 = vst.msk [vmem:[#allocation4 + $0xb0] sm:$0xff] %vm1857, 0.0
          %1945 = vst.msk [vmem:[#allocation4 + $0xb8] sm:$0xff] %vm1857, 0.0
          %1946 = vst.msk [vmem:[#allocation4 + $0xc0] sm:$0xff] %vm1857, 0.0
          %1947 = vst.msk [vmem:[#allocation4 + $0xc8] sm:$0xff] %vm1857, 0.0
          %1948 = vst.msk [vmem:[#allocation4 + $0xd0] sm:$0xff] %vm1857, 0.0
          %1949 = vst.msk [vmem:[#allocation4 + $0xd8] sm:$0xff] %vm1857, 0.0
          %1950 = vst.msk [vmem:[#allocation4 + $0xe0] sm:$0xff] %vm1857, 0.0
          %1951 = vst.msk [vmem:[#allocation4 + $0xe8] sm:$0xff] %vm1857, 0.0
          %1952 = vst.msk [vmem:[#allocation4 + $0xf0] sm:$0xff] %vm1857, 0.0
          %1953 = vst.msk [vmem:[#allocation4 + $0xf8] sm:$0xff] %vm1857, 0.0
          %1954 = vst.msk [vmem:[#allocation4 + $0x100] sm:$0xff] %vm1857, 0.0
          %1955 = vst.msk [vmem:[#allocation4 + $0x108] sm:$0xff] %vm1857, 0.0
          %1956 = vst.msk [vmem:[#allocation4 + $0x110] sm:$0xff] %vm1857, 0.0
          %1957 = vst.msk [vmem:[#allocation4 + $0x118] sm:$0xff] %vm1857, 0.0
          %1958 = vst.msk [vmem:[#allocation4 + $0x120] sm:$0xff] %vm1857, 0.0
          %1959 = vst.msk [vmem:[#allocation4 + $0x128] sm:$0xff] %vm1857, 0.0
          %1960 = vst.msk [vmem:[#allocation4 + $0x130] sm:$0xff] %vm1857, 0.0
          %1961 = vst.msk [vmem:[#allocation4 + $0x138] sm:$0xff] %vm1857, 0.0
          %1962 = vst.msk [vmem:[#allocation4 + $0x140] sm:$0xff] %vm1857, 0.0
          %1963 = vst.msk [vmem:[#allocation4 + $0x148] sm:$0xff] %vm1857, 0.0
          %1964 = vst.msk [vmem:[#allocation4 + $0x150] sm:$0xff] %vm1857, 0.0
          %1965 = vst.msk [vmem:[#allocation4 + $0x158] sm:$0xff] %vm1857, 0.0
          %1966 = vst.msk [vmem:[#allocation4 + $0x160] sm:$0xff] %vm1857, 0.0
          %1967 = vst.msk [vmem:[#allocation4 + $0x168] sm:$0xff] %vm1857, 0.0
          %1968 = vst.msk [vmem:[#allocation4 + $0x170] sm:$0xff] %vm1857, 0.0
          %1969 = vst.msk [vmem:[#allocation4 + $0x178] sm:$0xff] %vm1857, 0.0
          %1970 = vst.msk [vmem:[#allocation4 + $0x180] sm:$0xff] %vm1857, 0.0
          %1971 = vst.msk [vmem:[#allocation4 + $0x188] sm:$0xff] %vm1857, 0.0
          %1972 = vst.msk [vmem:[#allocation4 + $0x190] sm:$0xff] %vm1857, 0.0
          %1973 = vst.msk [vmem:[#allocation4 + $0x198] sm:$0xff] %vm1857, 0.0
          %1974 = vst.msk [vmem:[#allocation4 + $0x1a0] sm:$0xff] %vm1857, 0.0
          %1975 = vst.msk [vmem:[#allocation4 + $0x1a8] sm:$0xff] %vm1857, 0.0
          %1976 = vst.msk [vmem:[#allocation4 + $0x1b0] sm:$0xff] %vm1857, 0.0
          %1977 = vst.msk [vmem:[#allocation4 + $0x1b8] sm:$0xff] %vm1857, 0.0
          %1978 = vst.msk [vmem:[#allocation4 + $0x1c0] sm:$0xff] %vm1857, 0.0
          %1979 = vst.msk [vmem:[#allocation4 + $0x1c8] sm:$0xff] %vm1857, 0.0
          %1980 = vst.msk [vmem:[#allocation4 + $0x1d0] sm:$0xff] %vm1857, 0.0
          %1981 = vst.msk [vmem:[#allocation4 + $0x1d8] sm:$0xff] %vm1857, 0.0
          %1982 = vst.msk [vmem:[#allocation4 + $0x1e0] sm:$0xff] %vm1857, 0.0
          %1983 = vst.msk [vmem:[#allocation4 + $0x1e8] sm:$0xff] %vm1857, 0.0
          %1984 = vst.msk [vmem:[#allocation4 + $0x1f0] sm:$0xff] %vm1857, 0.0
          %1985 = vst.msk [vmem:[#allocation4 + $0x1f8] sm:$0xff] %vm1857, 0.0
          %1986 = vst.msk [vmem:[#allocation5] sm:$0xff] %vm1824, 0.0
          %1987 = vst.msk [vmem:[#allocation5 + $0x8] sm:$0xff] %vm1824, 0.0
          %1988 = vst.msk [vmem:[#allocation5 + $0x10] sm:$0xff] %vm1824, 0.0
          %1989 = vst.msk [vmem:[#allocation5 + $0x18] sm:$0xff] %vm1824, 0.0
          %1990 = vst.msk [vmem:[#allocation5 + $0x20] sm:$0xff] %vm1824, 0.0
          %1991 = vst.msk [vmem:[#allocation5 + $0x28] sm:$0xff] %vm1824, 0.0
          %1992 = vst.msk [vmem:[#allocation5 + $0x30] sm:$0xff] %vm1824, 0.0
          %1993 = vst.msk [vmem:[#allocation5 + $0x38] sm:$0xff] %vm1824, 0.0
          %1994 = vst.msk [vmem:[#allocation5 + $0x40] sm:$0xff] %vm1824, 0.0
          %1995 = vst.msk [vmem:[#allocation5 + $0x48] sm:$0xff] %vm1824, 0.0
          %1996 = vst.msk [vmem:[#allocation5 + $0x50] sm:$0xff] %vm1824, 0.0
          %1997 = vst.msk [vmem:[#allocation5 + $0x58] sm:$0xff] %vm1824, 0.0
          %1998 = vst.msk [vmem:[#allocation5 + $0x60] sm:$0xff] %vm1824, 0.0
          %1999 = vst.msk [vmem:[#allocation5 + $0x68] sm:$0xff] %vm1824, 0.0
          %2000 = vst.msk [vmem:[#allocation5 + $0x70] sm:$0xff] %vm1824, 0.0
          %2001 = vst.msk [vmem:[#allocation5 + $0x78] sm:$0xff] %vm1824, 0.0
          %2002 = vst.msk [vmem:[#allocation5 + $0x80] sm:$0xff] %vm1824, 0.0
          %2003 = vst.msk [vmem:[#allocation5 + $0x88] sm:$0xff] %vm1824, 0.0
          %2004 = vst.msk [vmem:[#allocation5 + $0x90] sm:$0xff] %vm1824, 0.0
          %2005 = vst.msk [vmem:[#allocation5 + $0x98] sm:$0xff] %vm1824, 0.0
          %2006 = vst.msk [vmem:[#allocation5 + $0xa0] sm:$0xff] %vm1824, 0.0
          %2007 = vst.msk [vmem:[#allocation5 + $0xa8] sm:$0xff] %vm1824, 0.0
          %2008 = vst.msk [vmem:[#allocation5 + $0xb0] sm:$0xff] %vm1824, 0.0
          %2009 = vst.msk [vmem:[#allocation5 + $0xb8] sm:$0xff] %vm1824, 0.0
          %2010 = vst.msk [vmem:[#allocation5 + $0xc0] sm:$0xff] %vm1824, 0.0
          %2011 = vst.msk [vmem:[#allocation5 + $0xc8] sm:$0xff] %vm1824, 0.0
          %2012 = vst.msk [vmem:[#allocation5 + $0xd0] sm:$0xff] %vm1824, 0.0
          %2013 = vst.msk [vmem:[#allocation5 + $0xd8] sm:$0xff] %vm1824, 0.0
          %2014 = vst.msk [vmem:[#allocation5 + $0xe0] sm:$0xff] %vm1824, 0.0
          %2015 = vst.msk [vmem:[#allocation5 + $0xe8] sm:$0xff] %vm1824, 0.0
          %2016 = vst.msk [vmem:[#allocation5 + $0xf0] sm:$0xff] %vm1824, 0.0
          %2017 = vst.msk [vmem:[#allocation5 + $0xf8] sm:$0xff] %vm1824, 0.0
          %2018 = vst.msk [vmem:[#allocation5 + $0x100] sm:$0xff] %vm1824, 0.0
          %2019 = vst.msk [vmem:[#allocation5 + $0x108] sm:$0xff] %vm1824, 0.0
          %2020 = vst.msk [vmem:[#allocation5 + $0x110] sm:$0xff] %vm1824, 0.0
          %2021 = vst.msk [vmem:[#allocation5 + $0x118] sm:$0xff] %vm1824, 0.0
          %2022 = vst.msk [vmem:[#allocation5 + $0x120] sm:$0xff] %vm1824, 0.0
          %2023 = vst.msk [vmem:[#allocation5 + $0x128] sm:$0xff] %vm1824, 0.0
          %2024 = vst.msk [vmem:[#allocation5 + $0x130] sm:$0xff] %vm1824, 0.0
          %2025 = vst.msk [vmem:[#allocation5 + $0x138] sm:$0xff] %vm1824, 0.0
          %2026 = vst.msk [vmem:[#allocation5 + $0x140] sm:$0xff] %vm1824, 0.0
          %2027 = vst.msk [vmem:[#allocation5 + $0x148] sm:$0xff] %vm1824, 0.0
          %2028 = vst.msk [vmem:[#allocation5 + $0x150] sm:$0xff] %vm1824, 0.0
          %2029 = vst.msk [vmem:[#allocation5 + $0x158] sm:$0xff] %vm1824, 0.0
          %2030 = vst.msk [vmem:[#allocation5 + $0x160] sm:$0xff] %vm1824, 0.0
          %2031 = vst.msk [vmem:[#allocation5 + $0x168] sm:$0xff] %vm1824, 0.0
          %2032 = vst.msk [vmem:[#allocation5 + $0x170] sm:$0xff] %vm1824, 0.0
          %2033 = vst.msk [vmem:[#allocation5 + $0x178] sm:$0xff] %vm1824, 0.0
          %2034 = vst.msk [vmem:[#allocation5 + $0x180] sm:$0xff] %vm1824, 0.0
          %2035 = vst.msk [vmem:[#allocation5 + $0x188] sm:$0xff] %vm1824, 0.0
          %2036 = vst.msk [vmem:[#allocation5 + $0x190] sm:$0xff] %vm1824, 0.0
          %2037 = vst.msk [vmem:[#allocation5 + $0x198] sm:$0xff] %vm1824, 0.0
          %2038 = vst.msk [vmem:[#allocation5 + $0x1a0] sm:$0xff] %vm1824, 0.0
          %2039 = vst.msk [vmem:[#allocation5 + $0x1a8] sm:$0xff] %vm1824, 0.0
          %2040 = vst.msk [vmem:[#allocation5 + $0x1b0] sm:$0xff] %vm1824, 0.0
          %2041 = vst.msk [vmem:[#allocation5 + $0x1b8] sm:$0xff] %vm1824, 0.0
          %2042 = vst.msk [vmem:[#allocation5 + $0x1c0] sm:$0xff] %vm1824, 0.0
          %2043 = vst.msk [vmem:[#allocation5 + $0x1c8] sm:$0xff] %vm1824, 0.0
          %2044 = vst.msk [vmem:[#allocation5 + $0x1d0] sm:$0xff] %vm1824, 0.0
          %2045 = vst.msk [vmem:[#allocation5 + $0x1d8] sm:$0xff] %vm1824, 0.0
          %2046 = vst.msk [vmem:[#allocation5 + $0x1e0] sm:$0xff] %vm1824, 0.0
          %2047 = vst.msk [vmem:[#allocation5 + $0x1e8] sm:$0xff] %vm1824, 0.0
          %2048 = vst.msk [vmem:[#allocation5 + $0x1f0] sm:$0xff] %vm1824, 0.0
          %2049 = vst.msk [vmem:[#allocation5 + $0x1f8] sm:$0xff] %vm1824, 0.0
        $region180: #{tpu_custom_call.1} parent=163 // pred_fallthru
          _
        %p2050 = scmp.lt.s32.totalorder %s37, %s1379
        // Predicated region
        $region181: #{tpu_custom_call.1} parent=163 // pred_check
          %p2051 = pneg %p2050
        $region182: #{tpu_custom_call.1} parent=163 // pred_check_branch
          %2053 = sbr.rel (%p2051) target = $region184
        $region183: #{tpu_custom_call.1} parent=163 // pred_region
          %v2054 = vld [vmem:[%s1213] sm:$0xf]
          %v2055 = vld [vmem:[%s1213 + $0x4] sm:$0xf]
          %v2056 = vld [vmem:[%s1213 + $0x8] sm:$0xf]
          %v2057 = vld [vmem:[%s1213 + $0xc] sm:$0xf]
          %v2058 = vld [vmem:[%s1213 + $0x10] sm:$0xf]
          %v2059 = vld [vmem:[%s1213 + $0x14] sm:$0xf]
          %v2060 = vld [vmem:[%s1213 + $0x18] sm:$0xf]
          %v2061 = vld [vmem:[%s1213 + $0x1c] sm:$0xf]
          %v2062 = vld [vmem:[%s1213 + $0x20] sm:$0xf]
          %v2063 = vld [vmem:[%s1213 + $0x24] sm:$0xf]
          %v2064 = vld [vmem:[%s1213 + $0x28] sm:$0xf]
          %v2065 = vld [vmem:[%s1213 + $0x2c] sm:$0xf]
          %v2066 = vld [vmem:[%s1213 + $0x30] sm:$0xf]
          %v2067 = vld [vmem:[%s1213 + $0x34] sm:$0xf]
          %v2068 = vld [vmem:[%s1213 + $0x38] sm:$0xf]
          %v2069 = vld [vmem:[%s1213 + $0x3c] sm:$0xf]
          %v2070 = vld [vmem:[%s1213 + $0x40] sm:$0xf]
          %v2071 = vld [vmem:[%s1213 + $0x44] sm:$0xf]
          %v2072 = vld [vmem:[%s1213 + $0x48] sm:$0xf]
          %v2073 = vld [vmem:[%s1213 + $0x4c] sm:$0xf]
          %v2074 = vld [vmem:[%s1213 + $0x50] sm:$0xf]
          %v2075 = vld [vmem:[%s1213 + $0x54] sm:$0xf]
          %v2076 = vld [vmem:[%s1213 + $0x58] sm:$0xf]
          %v2077 = vld [vmem:[%s1213 + $0x5c] sm:$0xf]
          %v2078 = vld [vmem:[%s1213 + $0x60] sm:$0xf]
          %v2079 = vld [vmem:[%s1213 + $0x64] sm:$0xf]
          %v2080 = vld [vmem:[%s1213 + $0x68] sm:$0xf]
          %v2081 = vld [vmem:[%s1213 + $0x6c] sm:$0xf]
          %v2082 = vld [vmem:[%s1213 + $0x70] sm:$0xf]
          %v2083 = vld [vmem:[%s1213 + $0x74] sm:$0xf]
          %v2084 = vld [vmem:[%s1213 + $0x78] sm:$0xf]
          %v2085 = vld [vmem:[%s1213 + $0x7c] sm:$0xf]
          %v2086 = vld [vmem:[%s1213 + $0x80] sm:$0xf]
          %v2087 = vld [vmem:[%s1213 + $0x84] sm:$0xf]
          %v2088 = vld [vmem:[%s1213 + $0x88] sm:$0xf]
          %v2089 = vld [vmem:[%s1213 + $0x8c] sm:$0xf]
          %v2090 = vld [vmem:[%s1213 + $0x90] sm:$0xf]
          %v2091 = vld [vmem:[%s1213 + $0x94] sm:$0xf]
          %v2092 = vld [vmem:[%s1213 + $0x98] sm:$0xf]
          %v2093 = vld [vmem:[%s1213 + $0x9c] sm:$0xf]
          %v2094 = vld [vmem:[%s1213 + $0xa0] sm:$0xf]
          %v2095 = vld [vmem:[%s1213 + $0xa4] sm:$0xf]
          %v2096 = vld [vmem:[%s1213 + $0xa8] sm:$0xf]
          %v2097 = vld [vmem:[%s1213 + $0xac] sm:$0xf]
          %v2098 = vld [vmem:[%s1213 + $0xb0] sm:$0xf]
          %v2099 = vld [vmem:[%s1213 + $0xb4] sm:$0xf]
          %v2100 = vld [vmem:[%s1213 + $0xb8] sm:$0xf]
          %v2101 = vld [vmem:[%s1213 + $0xbc] sm:$0xf]
          %v2102 = vld [vmem:[%s1213 + $0xc0] sm:$0xf]
          %v2103 = vld [vmem:[%s1213 + $0xc4] sm:$0xf]
          %v2104 = vld [vmem:[%s1213 + $0xc8] sm:$0xf]
          %v2105 = vld [vmem:[%s1213 + $0xcc] sm:$0xf]
          %v2106 = vld [vmem:[%s1213 + $0xd0] sm:$0xf]
          %v2107 = vld [vmem:[%s1213 + $0xd4] sm:$0xf]
          %v2108 = vld [vmem:[%s1213 + $0xd8] sm:$0xf]
          %v2109 = vld [vmem:[%s1213 + $0xdc] sm:$0xf]
          %v2110 = vld [vmem:[%s1213 + $0xe0] sm:$0xf]
          %v2111 = vld [vmem:[%s1213 + $0xe4] sm:$0xf]
          %v2112 = vld [vmem:[%s1213 + $0xe8] sm:$0xf]
          %v2113 = vld [vmem:[%s1213 + $0xec] sm:$0xf]
          %v2114 = vld [vmem:[%s1213 + $0xf0] sm:$0xf]
          %v2115 = vld [vmem:[%s1213 + $0xf4] sm:$0xf]
          %v2116 = vld [vmem:[%s1213 + $0xf8] sm:$0xf]
          %v2117 = vld [vmem:[%s1213 + $0xfc] sm:$0xf]
          %v2118 = vld [vmem:[%s1220] sm:$0xf]
          %v2119 = vld [vmem:[%s1220 + $0x4] sm:$0xf]
          %v2120 = vld [vmem:[%s1220 + $0x8] sm:$0xf]
          %v2121 = vld [vmem:[%s1220 + $0xc] sm:$0xf]
          %v2122 = vld [vmem:[%s1220 + $0x10] sm:$0xf]
          %v2123 = vld [vmem:[%s1220 + $0x14] sm:$0xf]
          %v2124 = vld [vmem:[%s1220 + $0x18] sm:$0xf]
          %v2125 = vld [vmem:[%s1220 + $0x1c] sm:$0xf]
          %v2126 = vld [vmem:[%s1220 + $0x20] sm:$0xf]
          %v2127 = vld [vmem:[%s1220 + $0x24] sm:$0xf]
          %v2128 = vld [vmem:[%s1220 + $0x28] sm:$0xf]
          %v2129 = vld [vmem:[%s1220 + $0x2c] sm:$0xf]
          %v2130 = vld [vmem:[%s1220 + $0x30] sm:$0xf]
          %v2131 = vld [vmem:[%s1220 + $0x34] sm:$0xf]
          %v2132 = vld [vmem:[%s1220 + $0x38] sm:$0xf]
          %v2133 = vld [vmem:[%s1220 + $0x3c] sm:$0xf]
          %v2134 = vld [vmem:[%s1220 + $0x40] sm:$0xf]
          %v2135 = vld [vmem:[%s1220 + $0x44] sm:$0xf]
          %v2136 = vld [vmem:[%s1220 + $0x48] sm:$0xf]
          %v2137 = vld [vmem:[%s1220 + $0x4c] sm:$0xf]
          %v2138 = vld [vmem:[%s1220 + $0x50] sm:$0xf]
          %v2139 = vld [vmem:[%s1220 + $0x54] sm:$0xf]
          %v2140 = vld [vmem:[%s1220 + $0x58] sm:$0xf]
          %v2141 = vld [vmem:[%s1220 + $0x5c] sm:$0xf]
          %v2142 = vld [vmem:[%s1220 + $0x60] sm:$0xf]
          %v2143 = vld [vmem:[%s1220 + $0x64] sm:$0xf]
          %v2144 = vld [vmem:[%s1220 + $0x68] sm:$0xf]
          %v2145 = vld [vmem:[%s1220 + $0x6c] sm:$0xf]
          %v2146 = vld [vmem:[%s1220 + $0x70] sm:$0xf]
          %v2147 = vld [vmem:[%s1220 + $0x74] sm:$0xf]
          %v2148 = vld [vmem:[%s1220 + $0x78] sm:$0xf]
          %v2149 = vld [vmem:[%s1220 + $0x7c] sm:$0xf]
          %v2150 = vld [vmem:[%s1220 + $0x80] sm:$0xf]
          %v2151 = vld [vmem:[%s1220 + $0x84] sm:$0xf]
          %v2152 = vld [vmem:[%s1220 + $0x88] sm:$0xf]
          %v2153 = vld [vmem:[%s1220 + $0x8c] sm:$0xf]
          %v2154 = vld [vmem:[%s1220 + $0x90] sm:$0xf]
          %v2155 = vld [vmem:[%s1220 + $0x94] sm:$0xf]
          %v2156 = vld [vmem:[%s1220 + $0x98] sm:$0xf]
          %v2157 = vld [vmem:[%s1220 + $0x9c] sm:$0xf]
          %v2158 = vld [vmem:[%s1220 + $0xa0] sm:$0xf]
          %v2159 = vld [vmem:[%s1220 + $0xa4] sm:$0xf]
          %v2160 = vld [vmem:[%s1220 + $0xa8] sm:$0xf]
          %v2161 = vld [vmem:[%s1220 + $0xac] sm:$0xf]
          %v2162 = vld [vmem:[%s1220 + $0xb0] sm:$0xf]
          %v2163 = vld [vmem:[%s1220 + $0xb4] sm:$0xf]
          %v2164 = vld [vmem:[%s1220 + $0xb8] sm:$0xf]
          %v2165 = vld [vmem:[%s1220 + $0xbc] sm:$0xf]
          %v2166 = vld [vmem:[%s1220 + $0xc0] sm:$0xf]
          %v2167 = vld [vmem:[%s1220 + $0xc4] sm:$0xf]
          %v2168 = vld [vmem:[%s1220 + $0xc8] sm:$0xf]
          %v2169 = vld [vmem:[%s1220 + $0xcc] sm:$0xf]
          %v2170 = vld [vmem:[%s1220 + $0xd0] sm:$0xf]
          %v2171 = vld [vmem:[%s1220 + $0xd4] sm:$0xf]
          %v2172 = vld [vmem:[%s1220 + $0xd8] sm:$0xf]
          %v2173 = vld [vmem:[%s1220 + $0xdc] sm:$0xf]
          %v2174 = vld [vmem:[%s1220 + $0xe0] sm:$0xf]
          %v2175 = vld [vmem:[%s1220 + $0xe4] sm:$0xf]
          %v2176 = vld [vmem:[%s1220 + $0xe8] sm:$0xf]
          %v2177 = vld [vmem:[%s1220 + $0xec] sm:$0xf]
          %v2178 = vld [vmem:[%s1220 + $0xf0] sm:$0xf]
          %v2179 = vld [vmem:[%s1220 + $0xf4] sm:$0xf]
          %v2180 = vld [vmem:[%s1220 + $0xf8] sm:$0xf]
          %v2181 = vld [vmem:[%s1220 + $0xfc] sm:$0xf]
          %v2182 = vld [vmem:[#allocation2] sm:$0xff]
          %v2183 = vld [vmem:[#allocation2 + $0x8] sm:$0xff]
          %v2184 = vld [vmem:[#allocation2 + $0x10] sm:$0xff]
          %v2185 = vld [vmem:[#allocation2 + $0x18] sm:$0xff]
          %v2186 = vld [vmem:[#allocation2 + $0x20] sm:$0xff]
          %v2187 = vld [vmem:[#allocation2 + $0x28] sm:$0xff]
          %v2188 = vld [vmem:[#allocation2 + $0x30] sm:$0xff]
          %v2189 = vld [vmem:[#allocation2 + $0x38] sm:$0xff]
          %v2190 = vld [vmem:[#allocation2 + $0x40] sm:$0xff]
          %v2191 = vld [vmem:[#allocation2 + $0x48] sm:$0xff]
          %v2192 = vld [vmem:[#allocation2 + $0x50] sm:$0xff]
          %v2193 = vld [vmem:[#allocation2 + $0x58] sm:$0xff]
          %v2194 = vld [vmem:[#allocation2 + $0x60] sm:$0xff]
          %v2195 = vld [vmem:[#allocation2 + $0x68] sm:$0xff]
          %v2196 = vld [vmem:[#allocation2 + $0x70] sm:$0xff]
          %v2197 = vld [vmem:[#allocation2 + $0x78] sm:$0xff]
          %v2198 = vld [vmem:[#allocation2 + $0x80] sm:$0xff]
          %v2199 = vld [vmem:[#allocation2 + $0x88] sm:$0xff]
          %v2200 = vld [vmem:[#allocation2 + $0x90] sm:$0xff]
          %v2201 = vld [vmem:[#allocation2 + $0x98] sm:$0xff]
          %v2202 = vld [vmem:[#allocation2 + $0xa0] sm:$0xff]
          %v2203 = vld [vmem:[#allocation2 + $0xa8] sm:$0xff]
          %v2204 = vld [vmem:[#allocation2 + $0xb0] sm:$0xff]
          %v2205 = vld [vmem:[#allocation2 + $0xb8] sm:$0xff]
          %v2206 = vld [vmem:[#allocation2 + $0xc0] sm:$0xff]
          %v2207 = vld [vmem:[#allocation2 + $0xc8] sm:$0xff]
          %v2208 = vld [vmem:[#allocation2 + $0xd0] sm:$0xff]
          %v2209 = vld [vmem:[#allocation2 + $0xd8] sm:$0xff]
          %v2210 = vld [vmem:[#allocation2 + $0xe0] sm:$0xff]
          %v2211 = vld [vmem:[#allocation2 + $0xe8] sm:$0xff]
          %v2212 = vld [vmem:[#allocation2 + $0xf0] sm:$0xff]
          %v2213 = vld [vmem:[#allocation2 + $0xf8] sm:$0xff]
          %v2214 = vld [vmem:[%s1227] sm:$0xff]
          %v2215 = vld [vmem:[%s1227 + $0x8] sm:$0xff]
          %v2216 = vld [vmem:[%s1227 + $0x10] sm:$0xff]
          %v2217 = vld [vmem:[%s1227 + $0x18] sm:$0xff]
          %v2218 = vld [vmem:[%s1227 + $0x20] sm:$0xff]
          %v2219 = vld [vmem:[%s1227 + $0x28] sm:$0xff]
          %v2220 = vld [vmem:[%s1227 + $0x30] sm:$0xff]
          %v2221 = vld [vmem:[%s1227 + $0x38] sm:$0xff]
          %v2222 = vld [vmem:[%s1227 + $0x40] sm:$0xff]
          %v2223 = vld [vmem:[%s1227 + $0x48] sm:$0xff]
          %v2224 = vld [vmem:[%s1227 + $0x50] sm:$0xff]
          %v2225 = vld [vmem:[%s1227 + $0x58] sm:$0xff]
          %v2226 = vld [vmem:[%s1227 + $0x60] sm:$0xff]
          %v2227 = vld [vmem:[%s1227 + $0x68] sm:$0xff]
          %v2228 = vld [vmem:[%s1227 + $0x70] sm:$0xff]
          %v2229 = vld [vmem:[%s1227 + $0x78] sm:$0xff]
          %v2230 = vld [vmem:[%s1358] sm:$0x1]
          %v2232 = vlaneseq
          %v2233 = vshrl.u32 %v2232, 7
          %v2234 = vsub.s32 0, %v2233
          %v2235 = vrot.slane %v2230, %v2234
          %v2237 = vadd.f32 %v2214, %v2235
          %v2238 = vadd.f32 %v2215, %v2235
          %v2239 = vadd.f32 %v2216, %v2235
          %v2240 = vadd.f32 %v2217, %v2235
          %v2241 = vadd.f32 %v2218, %v2235
          %v2242 = vadd.f32 %v2219, %v2235
          %v2243 = vadd.f32 %v2220, %v2235
          %v2244 = vadd.f32 %v2221, %v2235
          %v2245 = vadd.f32 %v2222, %v2235
          %v2246 = vadd.f32 %v2223, %v2235
          %v2247 = vadd.f32 %v2224, %v2235
          %v2248 = vadd.f32 %v2225, %v2235
          %v2249 = vadd.f32 %v2226, %v2235
          %v2250 = vadd.f32 %v2227, %v2235
          %v2251 = vadd.f32 %v2228, %v2235
          %v2252 = vadd.f32 %v2229, %v2235
          %v2269 = vunpack.c.l.b16 %v2054
          %v2270 = vunpack.c.l.b16 %v2055
          %v2271 = vunpack.c.l.b16 %v2056
          %v2272 = vunpack.c.l.b16 %v2057
          %v2273 = vunpack.c.l.b16 %v2058
          %v2274 = vunpack.c.l.b16 %v2059
          %v2275 = vunpack.c.l.b16 %v2060
          %v2276 = vunpack.c.l.b16 %v2061
          %v2277 = vunpack.c.l.b16 %v2062
          %v2278 = vunpack.c.l.b16 %v2063
          %v2279 = vunpack.c.l.b16 %v2064
          %v2280 = vunpack.c.l.b16 %v2065
          %v2281 = vunpack.c.l.b16 %v2066
          %v2282 = vunpack.c.l.b16 %v2067
          %v2283 = vunpack.c.l.b16 %v2068
          %v2284 = vunpack.c.l.b16 %v2069
          %v2285 = vpack.c.b16 %v2270, %v2269
          %v2286 = vpack.c.b16 %v2272, %v2271
          %v2287 = vpack.c.b16 %v2274, %v2273
          %v2288 = vpack.c.b16 %v2276, %v2275
          %v2289 = vpack.c.b16 %v2278, %v2277
          %v2290 = vpack.c.b16 %v2280, %v2279
          %v2291 = vpack.c.b16 %v2282, %v2281
          %v2292 = vpack.c.b16 %v2284, %v2283
          %vm2293 = vcmask 261120
          %v2295 = vsel %vm2293, %v2182, 0
          %v2298 = vsel %vm2293, %v2183, 0
          %v2301 = vsel %vm2293, %v2184, 0
          %v2304 = vsel %vm2293, %v2185, 0
          %v2307 = vsel %vm2293, %v2186, 0
          %v2310 = vsel %vm2293, %v2187, 0
          %v2313 = vsel %vm2293, %v2188, 0
          %v2316 = vsel %vm2293, %v2189, 0
          %v2319 = vsel %vm2293, %v2285, 0
          %v2322 = vsel %vm2293, %v2286, 0
          %v2325 = vsel %vm2293, %v2287, 0
          %v2328 = vsel %vm2293, %v2288, 0
          %v2331 = vsel %vm2293, %v2289, 0
          %v2334 = vsel %vm2293, %v2290, 0
          %v2337 = vsel %vm2293, %v2291, 0
          %v2340 = vsel %vm2293, %v2292, 0
          %2342 = vmatprep.subr.bf16.mxu0 0
          %2343 = vmatpush1.bf16.xpose.msra.mxu0 %v2319
          %2344 = vmatprep.subr.bf16.mxu0 0
          %2345 = vmatpush1.bf16.xpose.msra.mxu0 %v2322
          %2346 = vmatprep.subr.bf16.mxu0 0
          %2347 = vmatpush1.bf16.xpose.msra.mxu0 %v2325
          %2348 = vmatprep.subr.bf16.mxu0 0
          %2349 = vmatpush1.bf16.xpose.msra.mxu0 %v2328
          %2350 = vmatprep.subr.bf16.mxu0 0
          %2351 = vmatpush1.bf16.xpose.msra.mxu0 %v2331
          %2352 = vmatprep.subr.bf16.mxu0 0
          %2353 = vmatpush1.bf16.xpose.msra.mxu0 %v2334
          %2354 = vmatprep.subr.bf16.mxu0 0
          %2355 = vmatpush1.bf16.xpose.msra.mxu0 %v2337
          %2356 = vmatprep.subr.bf16.mxu0 0
          %2357 = vmatpush1.bf16.xpose.msra.mxu0 %v2340
          %2358 = vmatprep.subr.bf16.mxu0 0
          %2359 = vmatpush1.bf16.xpose.msra.mxu0 0
          %2360 = vmatprep.subr.bf16.mxu0 0
          %2361 = vmatpush1.bf16.xpose.msra.mxu0 0
          %2362 = vmatprep.subr.bf16.mxu0 0
          %2363 = vmatpush1.bf16.xpose.msra.mxu0 0
          %2364 = vmatprep.subr.bf16.mxu0 0
          %2365 = vmatpush1.bf16.xpose.msra.mxu0 0
          %2366 = vmatprep.subr.bf16.mxu0 0
          %2367 = vmatpush1.bf16.xpose.msra.mxu0 0
          %2368 = vmatprep.subr.bf16.mxu0 0
          %2369 = vmatpush1.bf16.xpose.msra.mxu0 0
          %2370 = vmatprep.subr.bf16.mxu0 0
          %2371 = vmatpush1.bf16.xpose.msra.mxu0 0
          %2372 = vmatprep.subr.bf16.mxu0 0
          %2373 = vmatpush1.bf16.xpose.msra.mxu0 0
          %2374 = vmatprep.mubr.bf16.mxu0 0
          %2375 = vmatmul.mubr.bf16.gmra.mrb[0].mxu0 %v2295
          %v2376 = vpop.f32.mrb[0].mxu0
          %v2377 = vadd.f32 %v2237, %v2376
          %v2378 = vpop.f32.mrb[0].mxu0
          %v2379 = vpop.f32.mrb[0].mxu0
          %v2380 = vadd.f32 %v2238, %v2379
          %v2381 = vpop.f32.mrb[0].mxu0
          %2382 = vmatprep.mubr.bf16.mxu0 0
          %2383 = vmatmul.mubr.bf16.gmra.mrb[0].mxu0 %v2298
          %v2384 = vpop.f32.mrb[0].mxu0
          %v2385 = vadd.f32 %v2239, %v2384
          %v2386 = vpop.f32.mrb[0].mxu0
          %v2387 = vpop.f32.mrb[0].mxu0
          %v2388 = vadd.f32 %v2240, %v2387
          %v2389 = vpop.f32.mrb[0].mxu0
          %2390 = vmatprep.mubr.bf16.mxu0 0
          %2391 = vmatmul.mubr.bf16.gmra.mrb[0].mxu0 %v2301
          %v2392 = vpop.f32.mrb[0].mxu0
          %v2393 = vadd.f32 %v2241, %v2392
          %v2394 = vpop.f32.mrb[0].mxu0
          %v2395 = vpop.f32.mrb[0].mxu0
          %v2396 = vadd.f32 %v2242, %v2395
          %v2397 = vpop.f32.mrb[0].mxu0
          %2398 = vmatprep.mubr.bf16.mxu0 0
          %2399 = vmatmul.mubr.bf16.gmra.mrb[0].mxu0 %v2304
          %v2400 = vpop.f32.mrb[0].mxu0
          %v2401 = vadd.f32 %v2243, %v2400
          %v2402 = vpop.f32.mrb[0].mxu0
          %v2403 = vpop.f32.mrb[0].mxu0
          %v2404 = vadd.f32 %v2244, %v2403
          %v2405 = vpop.f32.mrb[0].mxu0
          %2406 = vmatprep.mubr.bf16.mxu0 0
          %2407 = vmatmul.mubr.bf16.gmra.mrb[0].mxu0 %v2307
          %v2408 = vpop.f32.mrb[0].mxu0
          %v2409 = vadd.f32 %v2245, %v2408
          %v2410 = vpop.f32.mrb[0].mxu0
          %v2411 = vpop.f32.mrb[0].mxu0
          %v2412 = vadd.f32 %v2246, %v2411
          %v2413 = vpop.f32.mrb[0].mxu0
          %2414 = vmatprep.mubr.bf16.mxu0 0
          %2415 = vmatmul.mubr.bf16.gmra.mrb[0].mxu0 %v2310
          %v2416 = vpop.f32.mrb[0].mxu0
          %v2417 = vadd.f32 %v2247, %v2416
          %v2418 = vpop.f32.mrb[0].mxu0
          %v2419 = vpop.f32.mrb[0].mxu0
          %v2420 = vadd.f32 %v2248, %v2419
          %v2421 = vpop.f32.mrb[0].mxu0
          %2422 = vmatprep.mubr.bf16.mxu0 0
          %2423 = vmatmul.mubr.bf16.gmra.mrb[0].mxu0 %v2313
          %v2424 = vpop.f32.mrb[0].mxu0
          %v2425 = vadd.f32 %v2249, %v2424
          %v2426 = vpop.f32.mrb[0].mxu0
          %v2427 = vpop.f32.mrb[0].mxu0
          %v2428 = vadd.f32 %v2250, %v2427
          %v2429 = vpop.f32.mrb[0].mxu0
          %2430 = vmatprep.mubr.bf16.mxu0 0
          %2431 = vmatmul.mubr.bf16.gmra.mrb[0].mxu0 %v2316
          %v2432 = vpop.f32.mrb[0].mxu0
          %v2433 = vadd.f32 %v2251, %v2432
          %v2434 = vpop.f32.mrb[0].mxu0
          %v2435 = vpop.f32.mrb[0].mxu0
          %v2436 = vadd.f32 %v2252, %v2435
          %v2437 = vpop.f32.mrb[0].mxu0
          %2438 = vdwg.mxu0
          %v2455 = vunpack.c.l.b16 %v2070
          %v2456 = vunpack.c.l.b16 %v2071
          %v2457 = vunpack.c.l.b16 %v2072
          %v2458 = vunpack.c.l.b16 %v2073
          %v2459 = vunpack.c.l.b16 %v2074
          %v2460 = vunpack.c.l.b16 %v2075
          %v2461 = vunpack.c.l.b16 %v2076
          %v2462 = vunpack.c.l.b16 %v2077
          %v2463 = vunpack.c.l.b16 %v2078
          %v2464 = vunpack.c.l.b16 %v2079
          %v2465 = vunpack.c.l.b16 %v2080
          %v2466 = vunpack.c.l.b16 %v2081
          %v2467 = vunpack.c.l.b16 %v2082
          %v2468 = vunpack.c.l.b16 %v2083
          %v2469 = vunpack.c.l.b16 %v2084
          %v2470 = vunpack.c.l.b16 %v2085
          %v2471 = vpack.c.b16 %v2456, %v2455
          %v2472 = vpack.c.b16 %v2458, %v2457
          %v2473 = vpack.c.b16 %v2460, %v2459
          %v2474 = vpack.c.b16 %v2462, %v2461
          %v2475 = vpack.c.b16 %v2464, %v2463
          %v2476 = vpack.c.b16 %v2466, %v2465
          %v2477 = vpack.c.b16 %v2468, %v2467
          %v2478 = vpack.c.b16 %v2470, %v2469
          %v2480 = vsel %vm2293, %v2190, 0
          %v2483 = vsel %vm2293, %v2191, 0
          %v2486 = vsel %vm2293, %v2192, 0
          %v2489 = vsel %vm2293, %v2193, 0
          %v2492 = vsel %vm2293, %v2194, 0
          %v2495 = vsel %vm2293, %v2195, 0
          %v2498 = vsel %vm2293, %v2196, 0
          %v2501 = vsel %vm2293, %v2197, 0
          %v2504 = vsel %vm2293, %v2471, 0
          %v2507 = vsel %vm2293, %v2472, 0
          %v2510 = vsel %vm2293, %v2473, 0
          %v2513 = vsel %vm2293, %v2474, 0
          %v2516 = vsel %vm2293, %v2475, 0
          %v2519 = vsel %vm2293, %v2476, 0
          %v2522 = vsel %vm2293, %v2477, 0
          %v2525 = vsel %vm2293, %v2478, 0
          %2527 = vmatprep.subr.bf16.mxu0 0
          %2528 = vmatpush1.bf16.xpose.msra.mxu0 %v2504
          %2529 = vmatprep.subr.bf16.mxu0 0
          %2530 = vmatpush1.bf16.xpose.msra.mxu0 %v2507
          %2531 = vmatprep.subr.bf16.mxu0 0
          %2532 = vmatpush1.bf16.xpose.msra.mxu0 %v2510
          %2533 = vmatprep.subr.bf16.mxu0 0
          %2534 = vmatpush1.bf16.xpose.msra.mxu0 %v2513
          %2535 = vmatprep.subr.bf16.mxu0 0
          %2536 = vmatpush1.bf16.xpose.msra.mxu0 %v2516
          %2537 = vmatprep.subr.bf16.mxu0 0
          %2538 = vmatpush1.bf16.xpose.msra.mxu0 %v2519
          %2539 = vmatprep.subr.bf16.mxu0 0
          %2540 = vmatpush1.bf16.xpose.msra.mxu0 %v2522
          %2541 = vmatprep.subr.bf16.mxu0 0
          %2542 = vmatpush1.bf16.xpose.msra.mxu0 %v2525
          %2543 = vmatprep.subr.bf16.mxu0 0
          %2544 = vmatpush1.bf16.xpose.msra.mxu0 0
          %2545 = vmatprep.subr.bf16.mxu0 0
          %2546 = vmatpush1.bf16.xpose.msra.mxu0 0
          %2547 = vmatprep.subr.bf16.mxu0 0
          %2548 = vmatpush1.bf16.xpose.msra.mxu0 0
          %2549 = vmatprep.subr.bf16.mxu0 0
          %2550 = vmatpush1.bf16.xpose.msra.mxu0 0
          %2551 = vmatprep.subr.bf16.mxu0 0
          %2552 = vmatpush1.bf16.xpose.msra.mxu0 0
          %2553 = vmatprep.subr.bf16.mxu0 0
          %2554 = vmatpush1.bf16.xpose.msra.mxu0 0
          %2555 = vmatprep.subr.bf16.mxu0 0
          %2556 = vmatpush1.bf16.xpose.msra.mxu0 0
          %2557 = vmatprep.subr.bf16.mxu0 0
          %2558 = vmatpush1.bf16.xpose.msra.mxu0 0
          %2559 = vmatprep.mubr.bf16.mxu0 0
          %2560 = vmatmul.mubr.bf16.gmra.mrb[0].mxu0 %v2480
          %v2561 = vpop.f32.mrb[0].mxu0
          %v2562 = vadd.f32 %v2237, %v2561
          %v2563 = vpop.f32.mrb[0].mxu0
          %v2564 = vpop.f32.mrb[0].mxu0
          %v2565 = vadd.f32 %v2238, %v2564
          %v2566 = vpop.f32.mrb[0].mxu0
          %2567 = vmatprep.mubr.bf16.mxu0 0
          %2568 = vmatmul.mubr.bf16.gmra.mrb[0].mxu0 %v2483
          %v2569 = vpop.f32.mrb[0].mxu0
          %v2570 = vadd.f32 %v2239, %v2569
          %v2571 = vpop.f32.mrb[0].mxu0
          %v2572 = vpop.f32.mrb[0].mxu0
          %v2573 = vadd.f32 %v2240, %v2572
          %v2574 = vpop.f32.mrb[0].mxu0
          %2575 = vmatprep.mubr.bf16.mxu0 0
          %2576 = vmatmul.mubr.bf16.gmra.mrb[0].mxu0 %v2486
          %v2577 = vpop.f32.mrb[0].mxu0
          %v2578 = vadd.f32 %v2241, %v2577
          %v2579 = vpop.f32.mrb[0].mxu0
          %v2580 = vpop.f32.mrb[0].mxu0
          %v2581 = vadd.f32 %v2242, %v2580
          %v2582 = vpop.f32.mrb[0].mxu0
          %2583 = vmatprep.mubr.bf16.mxu0 0
          %2584 = vmatmul.mubr.bf16.gmra.mrb[0].mxu0 %v2489
          %v2585 = vpop.f32.mrb[0].mxu0
          %v2586 = vadd.f32 %v2243, %v2585
          %v2587 = vpop.f32.mrb[0].mxu0
          %v2588 = vpop.f32.mrb[0].mxu0
          %v2589 = vadd.f32 %v2244, %v2588
          %v2590 = vpop.f32.mrb[0].mxu0
          %2591 = vmatprep.mubr.bf16.mxu0 0
          %2592 = vmatmul.mubr.bf16.gmra.mrb[0].mxu0 %v2492
          %v2593 = vpop.f32.mrb[0].mxu0
          %v2594 = vadd.f32 %v2245, %v2593
          %v2595 = vpop.f32.mrb[0].mxu0
          %v2596 = vpop.f32.mrb[0].mxu0
          %v2597 = vadd.f32 %v2246, %v2596
          %v2598 = vpop.f32.mrb[0].mxu0
          %2599 = vmatprep.mubr.bf16.mxu0 0
          %2600 = vmatmul.mubr.bf16.gmra.mrb[0].mxu0 %v2495
          %v2601 = vpop.f32.mrb[0].mxu0
          %v2602 = vadd.f32 %v2247, %v2601
          %v2603 = vpop.f32.mrb[0].mxu0
          %v2604 = vpop.f32.mrb[0].mxu0
          %v2605 = vadd.f32 %v2248, %v2604
          %v2606 = vpop.f32.mrb[0].mxu0
          %2607 = vmatprep.mubr.bf16.mxu0 0
          %2608 = vmatmul.mubr.bf16.gmra.mrb[0].mxu0 %v2498
          %v2609 = vpop.f32.mrb[0].mxu0
          %v2610 = vadd.f32 %v2249, %v2609
          %v2611 = vpop.f32.mrb[0].mxu0
          %v2612 = vpop.f32.mrb[0].mxu0
          %v2613 = vadd.f32 %v2250, %v2612
          %v2614 = vpop.f32.mrb[0].mxu0
          %2615 = vmatprep.mubr.bf16.mxu0 0
          %2616 = vmatmul.mubr.bf16.gmra.mrb[0].mxu0 %v2501
          %v2617 = vpop.f32.mrb[0].mxu0
          %v2618 = vadd.f32 %v2251, %v2617
          %v2619 = vpop.f32.mrb[0].mxu0
          %v2620 = vpop.f32.mrb[0].mxu0
          %v2621 = vadd.f32 %v2252, %v2620
          %v2622 = vpop.f32.mrb[0].mxu0
          %2623 = vdwg.mxu0
          %v2640 = vunpack.c.l.b16 %v2086
          %v2641 = vunpack.c.l.b16 %v2087
          %v2642 = vunpack.c.l.b16 %v2088
          %v2643 = vunpack.c.l.b16 %v2089
          %v2644 = vunpack.c.l.b16 %v2090
          %v2645 = vunpack.c.l.b16 %v2091
          %v2646 = vunpack.c.l.b16 %v2092
          %v2647 = vunpack.c.l.b16 %v2093
          %v2648 = vunpack.c.l.b16 %v2094
          %v2649 = vunpack.c.l.b16 %v2095
          %v2650 = vunpack.c.l.b16 %v2096
          %v2651 = vunpack.c.l.b16 %v2097
          %v2652 = vunpack.c.l.b16 %v2098
          %v2653 = vunpack.c.l.b16 %v2099
          %v2654 = vunpack.c.l.b16 %v2100
          %v2655 = vunpack.c.l.b16 %v2101
          %v2656 = vpack.c.b16 %v2641, %v2640
          %v2657 = vpack.c.b16 %v2643, %v2642
          %v2658 = vpack.c.b16 %v2645, %v2644
          %v2659 = vpack.c.b16 %v2647, %v2646
          %v2660 = vpack.c.b16 %v2649, %v2648
          %v2661 = vpack.c.b16 %v2651, %v2650
          %v2662 = vpack.c.b16 %v2653, %v2652
          %v2663 = vpack.c.b16 %v2655, %v2654
          %v2665 = vsel %vm2293, %v2198, 0
          %v2668 = vsel %vm2293, %v2199, 0
          %v2671 = vsel %vm2293, %v2200, 0
          %v2674 = vsel %vm2293, %v2201, 0
          %v2677 = vsel %vm2293, %v2202, 0
          %v2680 = vsel %vm2293, %v2203, 0
          %v2683 = vsel %vm2293, %v2204, 0
          %v2686 = vsel %vm2293, %v2205, 0
          %v2689 = vsel %vm2293, %v2656, 0
          %v2692 = vsel %vm2293, %v2657, 0
          %v2695 = vsel %vm2293, %v2658, 0
          %v2698 = vsel %vm2293, %v2659, 0
          %v2701 = vsel %vm2293, %v2660, 0
          %v2704 = vsel %vm2293, %v2661, 0
          %v2707 = vsel %vm2293, %v2662, 0
          %v2710 = vsel %vm2293, %v2663, 0
          %2712 = vmatprep.subr.bf16.mxu0 0
          %2713 = vmatpush1.bf16.xpose.msra.mxu0 %v2689
          %2714 = vmatprep.subr.bf16.mxu0 0
          %2715 = vmatpush1.bf16.xpose.msra.mxu0 %v2692
          %2716 = vmatprep.subr.bf16.mxu0 0
          %2717 = vmatpush1.bf16.xpose.msra.mxu0 %v2695
          %2718 = vmatprep.subr.bf16.mxu0 0
          %2719 = vmatpush1.bf16.xpose.msra.mxu0 %v2698
          %2720 = vmatprep.subr.bf16.mxu0 0
          %2721 = vmatpush1.bf16.xpose.msra.mxu0 %v2701
          %2722 = vmatprep.subr.bf16.mxu0 0
          %2723 = vmatpush1.bf16.xpose.msra.mxu0 %v2704
          %2724 = vmatprep.subr.bf16.mxu0 0
          %2725 = vmatpush1.bf16.xpose.msra.mxu0 %v2707
          %2726 = vmatprep.subr.bf16.mxu0 0
          %2727 = vmatpush1.bf16.xpose.msra.mxu0 %v2710
          %2728 = vmatprep.subr.bf16.mxu0 0
          %2729 = vmatpush1.bf16.xpose.msra.mxu0 0
          %2730 = vmatprep.subr.bf16.mxu0 0
          %2731 = vmatpush1.bf16.xpose.msra.mxu0 0
          %2732 = vmatprep.subr.bf16.mxu0 0
          %2733 = vmatpush1.bf16.xpose.msra.mxu0 0
          %2734 = vmatprep.subr.bf16.mxu0 0
          %2735 = vmatpush1.bf16.xpose.msra.mxu0 0
          %2736 = vmatprep.subr.bf16.mxu0 0
          %2737 = vmatpush1.bf16.xpose.msra.mxu0 0
          %2738 = vmatprep.subr.bf16.mxu0 0
          %2739 = vmatpush1.bf16.xpose.msra.mxu0 0
          %2740 = vmatprep.subr.bf16.mxu0 0
          %2741 = vmatpush1.bf16.xpose.msra.mxu0 0
          %2742 = vmatprep.subr.bf16.mxu0 0
          %2743 = vmatpush1.bf16.xpose.msra.mxu0 0
          %2744 = vmatprep.mubr.bf16.mxu0 0
          %2745 = vmatmul.mubr.bf16.gmra.mrb[0].mxu0 %v2665
          %v2746 = vpop.f32.mrb[0].mxu0
          %v2747 = vadd.f32 %v2237, %v2746
          %v2748 = vpop.f32.mrb[0].mxu0
          %v2749 = vpop.f32.mrb[0].mxu0
          %v2750 = vadd.f32 %v2238, %v2749
          %v2751 = vpop.f32.mrb[0].mxu0
          %2752 = vmatprep.mubr.bf16.mxu0 0
          %2753 = vmatmul.mubr.bf16.gmra.mrb[0].mxu0 %v2668
          %v2754 = vpop.f32.mrb[0].mxu0
          %v2755 = vadd.f32 %v2239, %v2754
          %v2756 = vpop.f32.mrb[0].mxu0
          %v2757 = vpop.f32.mrb[0].mxu0
          %v2758 = vadd.f32 %v2240, %v2757
          %v2759 = vpop.f32.mrb[0].mxu0
          %2760 = vmatprep.mubr.bf16.mxu0 0
          %2761 = vmatmul.mubr.bf16.gmra.mrb[0].mxu0 %v2671
          %v2762 = vpop.f32.mrb[0].mxu0
          %v2763 = vadd.f32 %v2241, %v2762
          %v2764 = vpop.f32.mrb[0].mxu0
          %v2765 = vpop.f32.mrb[0].mxu0
          %v2766 = vadd.f32 %v2242, %v2765
          %v2767 = vpop.f32.mrb[0].mxu0
          %2768 = vmatprep.mubr.bf16.mxu0 0
          %2769 = vmatmul.mubr.bf16.gmra.mrb[0].mxu0 %v2674
          %v2770 = vpop.f32.mrb[0].mxu0
          %v2771 = vadd.f32 %v2243, %v2770
          %v2772 = vpop.f32.mrb[0].mxu0
          %v2773 = vpop.f32.mrb[0].mxu0
          %v2774 = vadd.f32 %v2244, %v2773
          %v2775 = vpop.f32.mrb[0].mxu0
          %2776 = vmatprep.mubr.bf16.mxu0 0
          %2777 = vmatmul.mubr.bf16.gmra.mrb[0].mxu0 %v2677
          %v2778 = vpop.f32.mrb[0].mxu0
          %v2779 = vadd.f32 %v2245, %v2778
          %v2780 = vpop.f32.mrb[0].mxu0
          %v2781 = vpop.f32.mrb[0].mxu0
          %v2782 = vadd.f32 %v2246, %v2781
          %v2783 = vpop.f32.mrb[0].mxu0
          %2784 = vmatprep.mubr.bf16.mxu0 0
          %2785 = vmatmul.mubr.bf16.gmra.mrb[0].mxu0 %v2680
          %v2786 = vpop.f32.mrb[0].mxu0
          %v2787 = vadd.f32 %v2247, %v2786
          %v2788 = vpop.f32.mrb[0].mxu0
          %v2789 = vpop.f32.mrb[0].mxu0
          %v2790 = vadd.f32 %v2248, %v2789
          %v2791 = vpop.f32.mrb[0].mxu0
          %2792 = vmatprep.mubr.bf16.mxu0 0
          %2793 = vmatmul.mubr.bf16.gmra.mrb[0].mxu0 %v2683
          %v2794 = vpop.f32.mrb[0].mxu0
          %v2795 = vadd.f32 %v2249, %v2794
          %v2796 = vpop.f32.mrb[0].mxu0
          %v2797 = vpop.f32.mrb[0].mxu0
          %v2798 = vadd.f32 %v2250, %v2797
          %v2799 = vpop.f32.mrb[0].mxu0
          %2800 = vmatprep.mubr.bf16.mxu0 0
          %2801 = vmatmul.mubr.bf16.gmra.mrb[0].mxu0 %v2686
          %v2802 = vpop.f32.mrb[0].mxu0
          %v2803 = vadd.f32 %v2251, %v2802
          %v2804 = vpop.f32.mrb[0].mxu0
          %v2805 = vpop.f32.mrb[0].mxu0
          %v2806 = vadd.f32 %v2252, %v2805
          %v2807 = vpop.f32.mrb[0].mxu0
          %2808 = vdwg.mxu0
          %v2825 = vunpack.c.l.b16 %v2102
          %v2826 = vunpack.c.l.b16 %v2103
          %v2827 = vunpack.c.l.b16 %v2104
          %v2828 = vunpack.c.l.b16 %v2105
          %v2829 = vunpack.c.l.b16 %v2106
          %v2830 = vunpack.c.l.b16 %v2107
          %v2831 = vunpack.c.l.b16 %v2108
          %v2832 = vunpack.c.l.b16 %v2109
          %v2833 = vunpack.c.l.b16 %v2110
          %v2834 = vunpack.c.l.b16 %v2111
          %v2835 = vunpack.c.l.b16 %v2112
          %v2836 = vunpack.c.l.b16 %v2113
          %v2837 = vunpack.c.l.b16 %v2114
          %v2838 = vunpack.c.l.b16 %v2115
          %v2839 = vunpack.c.l.b16 %v2116
          %v2840 = vunpack.c.l.b16 %v2117
          %v2841 = vpack.c.b16 %v2826, %v2825
          %v2842 = vpack.c.b16 %v2828, %v2827
          %v2843 = vpack.c.b16 %v2830, %v2829
          %v2844 = vpack.c.b16 %v2832, %v2831
          %v2845 = vpack.c.b16 %v2834, %v2833
          %v2846 = vpack.c.b16 %v2836, %v2835
          %v2847 = vpack.c.b16 %v2838, %v2837
          %v2848 = vpack.c.b16 %v2840, %v2839
          %v2850 = vsel %vm2293, %v2206, 0
          %v2853 = vsel %vm2293, %v2207, 0
          %v2856 = vsel %vm2293, %v2208, 0
          %v2859 = vsel %vm2293, %v2209, 0
          %v2862 = vsel %vm2293, %v2210, 0
          %v2865 = vsel %vm2293, %v2211, 0
          %v2868 = vsel %vm2293, %v2212, 0
          %v2871 = vsel %vm2293, %v2213, 0
          %v2874 = vsel %vm2293, %v2841, 0
          %v2877 = vsel %vm2293, %v2842, 0
          %v2880 = vsel %vm2293, %v2843, 0
          %v2883 = vsel %vm2293, %v2844, 0
          %v2886 = vsel %vm2293, %v2845, 0
          %v2889 = vsel %vm2293, %v2846, 0
          %v2892 = vsel %vm2293, %v2847, 0
          %v2895 = vsel %vm2293, %v2848, 0
          %2897 = vmatprep.subr.bf16.mxu0 0
          %2898 = vmatpush1.bf16.xpose.msra.mxu0 %v2874
          %2899 = vmatprep.subr.bf16.mxu0 0
          %2900 = vmatpush1.bf16.xpose.msra.mxu0 %v2877
          %2901 = vmatprep.subr.bf16.mxu0 0
          %2902 = vmatpush1.bf16.xpose.msra.mxu0 %v2880
          %2903 = vmatprep.subr.bf16.mxu0 0
          %2904 = vmatpush1.bf16.xpose.msra.mxu0 %v2883
          %2905 = vmatprep.subr.bf16.mxu0 0
          %2906 = vmatpush1.bf16.xpose.msra.mxu0 %v2886
          %2907 = vmatprep.subr.bf16.mxu0 0
          %2908 = vmatpush1.bf16.xpose.msra.mxu0 %v2889
          %2909 = vmatprep.subr.bf16.mxu0 0
          %2910 = vmatpush1.bf16.xpose.msra.mxu0 %v2892
          %2911 = vmatprep.subr.bf16.mxu0 0
          %2912 = vmatpush1.bf16.xpose.msra.mxu0 %v2895
          %2913 = vmatprep.subr.bf16.mxu0 0
          %2914 = vmatpush1.bf16.xpose.msra.mxu0 0
          %2915 = vmatprep.subr.bf16.mxu0 0
          %2916 = vmatpush1.bf16.xpose.msra.mxu0 0
          %2917 = vmatprep.subr.bf16.mxu0 0
          %2918 = vmatpush1.bf16.xpose.msra.mxu0 0
          %2919 = vmatprep.subr.bf16.mxu0 0
          %2920 = vmatpush1.bf16.xpose.msra.mxu0 0
          %2921 = vmatprep.subr.bf16.mxu0 0
          %2922 = vmatpush1.bf16.xpose.msra.mxu0 0
          %2923 = vmatprep.subr.bf16.mxu0 0
          %2924 = vmatpush1.bf16.xpose.msra.mxu0 0
          %2925 = vmatprep.subr.bf16.mxu0 0
          %2926 = vmatpush1.bf16.xpose.msra.mxu0 0
          %2927 = vmatprep.subr.bf16.mxu0 0
          %2928 = vmatpush1.bf16.xpose.msra.mxu0 0
          %2929 = vmatprep.mubr.bf16.mxu0 0
          %2930 = vmatmul.mubr.bf16.gmra.mrb[0].mxu0 %v2850
          %v2931 = vpop.f32.mrb[0].mxu0
          %v2932 = vadd.f32 %v2237, %v2931
          %v2933 = vpop.f32.mrb[0].mxu0
          %v2934 = vpop.f32.mrb[0].mxu0
          %v2935 = vadd.f32 %v2238, %v2934
          %v2936 = vpop.f32.mrb[0].mxu0
          %2937 = vmatprep.mubr.bf16.mxu0 0
          %2938 = vmatmul.mubr.bf16.gmra.mrb[0].mxu0 %v2853
          %v2939 = vpop.f32.mrb[0].mxu0
          %v2940 = vadd.f32 %v2239, %v2939
          %v2941 = vpop.f32.mrb[0].mxu0
          %v2942 = vpop.f32.mrb[0].mxu0
          %v2943 = vadd.f32 %v2240, %v2942
          %v2944 = vpop.f32.mrb[0].mxu0
          %2945 = vmatprep.mubr.bf16.mxu0 0
          %2946 = vmatmul.mubr.bf16.gmra.mrb[0].mxu0 %v2856
          %v2947 = vpop.f32.mrb[0].mxu0
          %v2948 = vadd.f32 %v2241, %v2947
          %v2949 = vpop.f32.mrb[0].mxu0
          %v2950 = vpop.f32.mrb[0].mxu0
          %v2951 = vadd.f32 %v2242, %v2950
          %v2952 = vpop.f32.mrb[0].mxu0
          %2953 = vmatprep.mubr.bf16.mxu0 0
          %2954 = vmatmul.mubr.bf16.gmra.mrb[0].mxu0 %v2859
          %v2955 = vpop.f32.mrb[0].mxu0
          %v2956 = vadd.f32 %v2243, %v2955
          %v2957 = vpop.f32.mrb[0].mxu0
          %v2958 = vpop.f32.mrb[0].mxu0
          %v2959 = vadd.f32 %v2244, %v2958
          %v2960 = vpop.f32.mrb[0].mxu0
          %2961 = vmatprep.mubr.bf16.mxu0 0
          %2962 = vmatmul.mubr.bf16.gmra.mrb[0].mxu0 %v2862
          %v2963 = vpop.f32.mrb[0].mxu0
          %v2964 = vadd.f32 %v2245, %v2963
          %v2965 = vpop.f32.mrb[0].mxu0
          %v2966 = vpop.f32.mrb[0].mxu0
          %v2967 = vadd.f32 %v2246, %v2966
          %v2968 = vpop.f32.mrb[0].mxu0
          %2969 = vmatprep.mubr.bf16.mxu0 0
          %2970 = vmatmul.mubr.bf16.gmra.mrb[0].mxu0 %v2865
          %v2971 = vpop.f32.mrb[0].mxu0
          %v2972 = vadd.f32 %v2247, %v2971
          %v2973 = vpop.f32.mrb[0].mxu0
          %v2974 = vpop.f32.mrb[0].mxu0
          %v2975 = vadd.f32 %v2248, %v2974
          %v2976 = vpop.f32.mrb[0].mxu0
          %2977 = vmatprep.mubr.bf16.mxu0 0
          %2978 = vmatmul.mubr.bf16.gmra.mrb[0].mxu0 %v2868
          %v2979 = vpop.f32.mrb[0].mxu0
          %v2980 = vadd.f32 %v2249, %v2979
          %v2981 = vpop.f32.mrb[0].mxu0
          %v2982 = vpop.f32.mrb[0].mxu0
          %v2983 = vadd.f32 %v2250, %v2982
          %v2984 = vpop.f32.mrb[0].mxu0
          %2985 = vmatprep.mubr.bf16.mxu0 0
          %2986 = vmatmul.mubr.bf16.gmra.mrb[0].mxu0 %v2871
          %v2987 = vpop.f32.mrb[0].mxu0
          %v2988 = vadd.f32 %v2251, %v2987
          %v2989 = vpop.f32.mrb[0].mxu0
          %v2990 = vpop.f32.mrb[0].mxu0
          %v2991 = vadd.f32 %v2252, %v2990
          %v2992 = vpop.f32.mrb[0].mxu0
          %2993 = vdwg.mxu0
          %v2994 = vld [vmem:[#allocation3] sm:$0xff]
          %v2995 = vld [vmem:[#allocation3 + $0x8] sm:$0xff]
          %v2996 = vld [vmem:[#allocation3 + $0x10] sm:$0xff]
          %v2997 = vld [vmem:[#allocation3 + $0x18] sm:$0xff]
          %v2998 = vld [vmem:[#allocation3 + $0x20] sm:$0xff]
          %v2999 = vld [vmem:[#allocation3 + $0x28] sm:$0xff]
          %v3000 = vld [vmem:[#allocation3 + $0x30] sm:$0xff]
          %v3001 = vld [vmem:[#allocation3 + $0x38] sm:$0xff]
          %v3002 = vld [vmem:[#allocation3 + $0x40] sm:$0xff]
          %v3003 = vld [vmem:[#allocation3 + $0x48] sm:$0xff]
          %v3004 = vld [vmem:[#allocation3 + $0x50] sm:$0xff]
          %v3005 = vld [vmem:[#allocation3 + $0x58] sm:$0xff]
          %v3006 = vld [vmem:[#allocation3 + $0x60] sm:$0xff]
          %v3007 = vld [vmem:[#allocation3 + $0x68] sm:$0xff]
          %v3008 = vld [vmem:[#allocation3 + $0x70] sm:$0xff]
          %v3009 = vld [vmem:[#allocation3 + $0x78] sm:$0xff]
          %v3010 = vld [vmem:[#allocation3 + $0x80] sm:$0xff]
          %v3011 = vld [vmem:[#allocation3 + $0x88] sm:$0xff]
          %v3012 = vld [vmem:[#allocation3 + $0x90] sm:$0xff]
          %v3013 = vld [vmem:[#allocation3 + $0x98] sm:$0xff]
          %v3014 = vld [vmem:[#allocation3 + $0xa0] sm:$0xff]
          %v3015 = vld [vmem:[#allocation3 + $0xa8] sm:$0xff]
          %v3016 = vld [vmem:[#allocation3 + $0xb0] sm:$0xff]
          %v3017 = vld [vmem:[#allocation3 + $0xb8] sm:$0xff]
          %v3018 = vld [vmem:[#allocation3 + $0xc0] sm:$0xff]
          %v3019 = vld [vmem:[#allocation3 + $0xc8] sm:$0xff]
          %v3020 = vld [vmem:[#allocation3 + $0xd0] sm:$0xff]
          %v3021 = vld [vmem:[#allocation3 + $0xd8] sm:$0xff]
          %v3022 = vld [vmem:[#allocation3 + $0xe0] sm:$0xff]
          %v3023 = vld [vmem:[#allocation3 + $0xe8] sm:$0xff]
          %v3024 = vld [vmem:[#allocation3 + $0xf0] sm:$0xff]
          %v3025 = vld [vmem:[#allocation3 + $0xf8] sm:$0xff]
          %v3026 = vld [vmem:[#allocation3 + $0x100] sm:$0xff]
          %v3027 = vld [vmem:[#allocation3 + $0x108] sm:$0xff]
          %v3028 = vld [vmem:[#allocation3 + $0x110] sm:$0xff]
          %v3029 = vld [vmem:[#allocation3 + $0x118] sm:$0xff]
          %v3030 = vld [vmem:[#allocation3 + $0x120] sm:$0xff]
          %v3031 = vld [vmem:[#allocation3 + $0x128] sm:$0xff]
          %v3032 = vld [vmem:[#allocation3 + $0x130] sm:$0xff]
          %v3033 = vld [vmem:[#allocation3 + $0x138] sm:$0xff]
          %v3034 = vld [vmem:[#allocation3 + $0x140] sm:$0xff]
          %v3035 = vld [vmem:[#allocation3 + $0x148] sm:$0xff]
          %v3036 = vld [vmem:[#allocation3 + $0x150] sm:$0xff]
          %v3037 = vld [vmem:[#allocation3 + $0x158] sm:$0xff]
          %v3038 = vld [vmem:[#allocation3 + $0x160] sm:$0xff]
          %v3039 = vld [vmem:[#allocation3 + $0x168] sm:$0xff]
          %v3040 = vld [vmem:[#allocation3 + $0x170] sm:$0xff]
          %v3041 = vld [vmem:[#allocation3 + $0x178] sm:$0xff]
          %v3042 = vld [vmem:[#allocation3 + $0x180] sm:$0xff]
          %v3043 = vld [vmem:[#allocation3 + $0x188] sm:$0xff]
          %v3044 = vld [vmem:[#allocation3 + $0x190] sm:$0xff]
          %v3045 = vld [vmem:[#allocation3 + $0x198] sm:$0xff]
          %v3046 = vld [vmem:[#allocation3 + $0x1a0] sm:$0xff]
          %v3047 = vld [vmem:[#allocation3 + $0x1a8] sm:$0xff]
          %v3048 = vld [vmem:[#allocation3 + $0x1b0] sm:$0xff]
          %v3049 = vld [vmem:[#allocation3 + $0x1b8] sm:$0xff]
          %v3050 = vld [vmem:[#allocation3 + $0x1c0] sm:$0xff]
          %v3051 = vld [vmem:[#allocation3 + $0x1c8] sm:$0xff]
          %v3052 = vld [vmem:[#allocation3 + $0x1d0] sm:$0xff]
          %v3053 = vld [vmem:[#allocation3 + $0x1d8] sm:$0xff]
          %v3054 = vld [vmem:[#allocation3 + $0x1e0] sm:$0xff]
          %v3055 = vld [vmem:[#allocation3 + $0x1e8] sm:$0xff]
          %v3056 = vld [vmem:[#allocation3 + $0x1f0] sm:$0xff]
          %v3057 = vld [vmem:[#allocation3 + $0x1f8] sm:$0xff]
          %3058 = vmax.xlane.f32.xlu0 %v2377
          %v3059 = vpop.xlane.xlu0 %3058
          %3060 = vmax.xlane.f32.xlu0 %v2380
          %v3061 = vpop.xlane.xlu0 %3060
          %3062 = vmax.xlane.f32.xlu0 %v2385
          %v3063 = vpop.xlane.xlu0 %3062
          %3064 = vmax.xlane.f32.xlu0 %v2388
          %v3065 = vpop.xlane.xlu0 %3064
          %3066 = vmax.xlane.f32.xlu0 %v2393
          %v3067 = vpop.xlane.xlu0 %3066
          %3068 = vmax.xlane.f32.xlu0 %v2396
          %v3069 = vpop.xlane.xlu0 %3068
          %3070 = vmax.xlane.f32.xlu0 %v2401
          %v3071 = vpop.xlane.xlu0 %3070
          %3072 = vmax.xlane.f32.xlu0 %v2404
          %v3073 = vpop.xlane.xlu0 %3072
          %3074 = vmax.xlane.f32.xlu0 %v2409
          %v3075 = vpop.xlane.xlu0 %3074
          %3076 = vmax.xlane.f32.xlu0 %v2412
          %v3077 = vpop.xlane.xlu0 %3076
          %3078 = vmax.xlane.f32.xlu0 %v2417
          %v3079 = vpop.xlane.xlu0 %3078
          %3080 = vmax.xlane.f32.xlu0 %v2420
          %v3081 = vpop.xlane.xlu0 %3080
          %3082 = vmax.xlane.f32.xlu0 %v2425
          %v3083 = vpop.xlane.xlu0 %3082
          %3084 = vmax.xlane.f32.xlu0 %v2428
          %v3085 = vpop.xlane.xlu0 %3084
          %3086 = vmax.xlane.f32.xlu0 %v2433
          %v3087 = vpop.xlane.xlu0 %3086
          %3088 = vmax.xlane.f32.xlu0 %v2436
          %v3089 = vpop.xlane.xlu0 %3088
          %3090 = vmax.xlane.f32.xlu0 %v2562
          %v3091 = vpop.xlane.xlu0 %3090
          %3092 = vmax.xlane.f32.xlu0 %v2565
          %v3093 = vpop.xlane.xlu0 %3092
          %3094 = vmax.xlane.f32.xlu0 %v2570
          %v3095 = vpop.xlane.xlu0 %3094
          %3096 = vmax.xlane.f32.xlu0 %v2573
          %v3097 = vpop.xlane.xlu0 %3096
          %3098 = vmax.xlane.f32.xlu0 %v2578
          %v3099 = vpop.xlane.xlu0 %3098
          %3100 = vmax.xlane.f32.xlu0 %v2581
          %v3101 = vpop.xlane.xlu0 %3100
          %3102 = vmax.xlane.f32.xlu0 %v2586
          %v3103 = vpop.xlane.xlu0 %3102
          %3104 = vmax.xlane.f32.xlu0 %v2589
          %v3105 = vpop.xlane.xlu0 %3104
          %3106 = vmax.xlane.f32.xlu0 %v2594
          %v3107 = vpop.xlane.xlu0 %3106
          %3108 = vmax.xlane.f32.xlu0 %v2597
          %v3109 = vpop.xlane.xlu0 %3108
          %3110 = vmax.xlane.f32.xlu0 %v2602
          %v3111 = vpop.xlane.xlu0 %3110
          %3112 = vmax.xlane.f32.xlu0 %v2605
          %v3113 = vpop.xlane.xlu0 %3112
          %3114 = vmax.xlane.f32.xlu0 %v2610
          %v3115 = vpop.xlane.xlu0 %3114
          %3116 = vmax.xlane.f32.xlu0 %v2613
          %v3117 = vpop.xlane.xlu0 %3116
          %3118 = vmax.xlane.f32.xlu0 %v2618
          %v3119 = vpop.xlane.xlu0 %3118
          %3120 = vmax.xlane.f32.xlu0 %v2621
          %v3121 = vpop.xlane.xlu0 %3120
          %3122 = vmax.xlane.f32.xlu0 %v2747
          %v3123 = vpop.xlane.xlu0 %3122
          %3124 = vmax.xlane.f32.xlu0 %v2750
          %v3125 = vpop.xlane.xlu0 %3124
          %3126 = vmax.xlane.f32.xlu0 %v2755
          %v3127 = vpop.xlane.xlu0 %3126
          %3128 = vmax.xlane.f32.xlu0 %v2758
          %v3129 = vpop.xlane.xlu0 %3128
          %3130 = vmax.xlane.f32.xlu0 %v2763
          %v3131 = vpop.xlane.xlu0 %3130
          %3132 = vmax.xlane.f32.xlu0 %v2766
          %v3133 = vpop.xlane.xlu0 %3132
          %3134 = vmax.xlane.f32.xlu0 %v2771
          %v3135 = vpop.xlane.xlu0 %3134
          %3136 = vmax.xlane.f32.xlu0 %v2774
          %v3137 = vpop.xlane.xlu0 %3136
          %3138 = vmax.xlane.f32.xlu0 %v2779
          %v3139 = vpop.xlane.xlu0 %3138
          %3140 = vmax.xlane.f32.xlu0 %v2782
          %v3141 = vpop.xlane.xlu0 %3140
          %3142 = vmax.xlane.f32.xlu0 %v2787
          %v3143 = vpop.xlane.xlu0 %3142
          %3144 = vmax.xlane.f32.xlu0 %v2790
          %v3145 = vpop.xlane.xlu0 %3144
          %3146 = vmax.xlane.f32.xlu0 %v2795
          %v3147 = vpop.xlane.xlu0 %3146
          %3148 = vmax.xlane.f32.xlu0 %v2798
          %v3149 = vpop.xlane.xlu0 %3148
          %3150 = vmax.xlane.f32.xlu0 %v2803
          %v3151 = vpop.xlane.xlu0 %3150
          %3152 = vmax.xlane.f32.xlu0 %v2806
          %v3153 = vpop.xlane.xlu0 %3152
          %3154 = vmax.xlane.f32.xlu0 %v2932
          %v3155 = vpop.xlane.xlu0 %3154
          %3156 = vmax.xlane.f32.xlu0 %v2935
          %v3157 = vpop.xlane.xlu0 %3156
          %3158 = vmax.xlane.f32.xlu0 %v2940
          %v3159 = vpop.xlane.xlu0 %3158
          %3160 = vmax.xlane.f32.xlu0 %v2943
          %v3161 = vpop.xlane.xlu0 %3160
          %3162 = vmax.xlane.f32.xlu0 %v2948
          %v3163 = vpop.xlane.xlu0 %3162
          %3164 = vmax.xlane.f32.xlu0 %v2951
          %v3165 = vpop.xlane.xlu0 %3164
          %3166 = vmax.xlane.f32.xlu0 %v2956
          %v3167 = vpop.xlane.xlu0 %3166
          %3168 = vmax.xlane.f32.xlu0 %v2959
          %v3169 = vpop.xlane.xlu0 %3168
          %3170 = vmax.xlane.f32.xlu0 %v2964
          %v3171 = vpop.xlane.xlu0 %3170
          %3172 = vmax.xlane.f32.xlu0 %v2967
          %v3173 = vpop.xlane.xlu0 %3172
          %3174 = vmax.xlane.f32.xlu0 %v2972
          %v3175 = vpop.xlane.xlu0 %3174
          %3176 = vmax.xlane.f32.xlu0 %v2975
          %v3177 = vpop.xlane.xlu0 %3176
          %3178 = vmax.xlane.f32.xlu0 %v2980
          %v3179 = vpop.xlane.xlu0 %3178
          %3180 = vmax.xlane.f32.xlu0 %v2983
          %v3181 = vpop.xlane.xlu0 %3180
          %3182 = vmax.xlane.f32.xlu0 %v2988
          %v3183 = vpop.xlane.xlu0 %3182
          %3184 = vmax.xlane.f32.xlu0 %v2991
          %v3185 = vpop.xlane.xlu0 %3184
          %v3186 = vmax.f32 %v2994, %v3059
          %v3187 = vmax.f32 %v2995, %v3061
          %v3188 = vmax.f32 %v2996, %v3063
          %v3189 = vmax.f32 %v2997, %v3065
          %v3190 = vmax.f32 %v2998, %v3067
          %v3191 = vmax.f32 %v2999, %v3069
          %v3192 = vmax.f32 %v3000, %v3071
          %v3193 = vmax.f32 %v3001, %v3073
          %v3194 = vmax.f32 %v3002, %v3075
          %v3195 = vmax.f32 %v3003, %v3077
          %v3196 = vmax.f32 %v3004, %v3079
          %v3197 = vmax.f32 %v3005, %v3081
          %v3198 = vmax.f32 %v3006, %v3083
          %v3199 = vmax.f32 %v3007, %v3085
          %v3200 = vmax.f32 %v3008, %v3087
          %v3201 = vmax.f32 %v3009, %v3089
          %v3202 = vmax.f32 %v3010, %v3091
          %v3203 = vmax.f32 %v3011, %v3093
          %v3204 = vmax.f32 %v3012, %v3095
          %v3205 = vmax.f32 %v3013, %v3097
          %v3206 = vmax.f32 %v3014, %v3099
          %v3207 = vmax.f32 %v3015, %v3101
          %v3208 = vmax.f32 %v3016, %v3103
          %v3209 = vmax.f32 %v3017, %v3105
          %v3210 = vmax.f32 %v3018, %v3107
          %v3211 = vmax.f32 %v3019, %v3109
          %v3212 = vmax.f32 %v3020, %v3111
          %v3213 = vmax.f32 %v3021, %v3113
          %v3214 = vmax.f32 %v3022, %v3115
          %v3215 = vmax.f32 %v3023, %v3117
          %v3216 = vmax.f32 %v3024, %v3119
          %v3217 = vmax.f32 %v3025, %v3121
          %v3218 = vmax.f32 %v3026, %v3123
          %v3219 = vmax.f32 %v3027, %v3125
          %v3220 = vmax.f32 %v3028, %v3127
          %v3221 = vmax.f32 %v3029, %v3129
          %v3222 = vmax.f32 %v3030, %v3131
          %v3223 = vmax.f32 %v3031, %v3133
          %v3224 = vmax.f32 %v3032, %v3135
          %v3225 = vmax.f32 %v3033, %v3137
          %v3226 = vmax.f32 %v3034, %v3139
          %v3227 = vmax.f32 %v3035, %v3141
          %v3228 = vmax.f32 %v3036, %v3143
          %v3229 = vmax.f32 %v3037, %v3145
          %v3230 = vmax.f32 %v3038, %v3147
          %v3231 = vmax.f32 %v3039, %v3149
          %v3232 = vmax.f32 %v3040, %v3151
          %v3233 = vmax.f32 %v3041, %v3153
          %v3234 = vmax.f32 %v3042, %v3155
          %v3235 = vmax.f32 %v3043, %v3157
          %v3236 = vmax.f32 %v3044, %v3159
          %v3237 = vmax.f32 %v3045, %v3161
          %v3238 = vmax.f32 %v3046, %v3163
          %v3239 = vmax.f32 %v3047, %v3165
          %v3240 = vmax.f32 %v3048, %v3167
          %v3241 = vmax.f32 %v3049, %v3169
          %v3242 = vmax.f32 %v3050, %v3171
          %v3243 = vmax.f32 %v3051, %v3173
          %v3244 = vmax.f32 %v3052, %v3175
          %v3245 = vmax.f32 %v3053, %v3177
          %v3246 = vmax.f32 %v3054, %v3179
          %v3247 = vmax.f32 %v3055, %v3181
          %v3248 = vmax.f32 %v3056, %v3183
          %v3249 = vmax.f32 %v3057, %v3185
          %v3250 = vsub.f32 %v2994, %v3186
          %v3251 = vsub.f32 %v2995, %v3187
          %v3252 = vsub.f32 %v2996, %v3188
          %v3253 = vsub.f32 %v2997, %v3189
          %v3254 = vsub.f32 %v2998, %v3190
          %v3255 = vsub.f32 %v2999, %v3191
          %v3256 = vsub.f32 %v3000, %v3192
          %v3257 = vsub.f32 %v3001, %v3193
          %v3258 = vsub.f32 %v3002, %v3194
          %v3259 = vsub.f32 %v3003, %v3195
          %v3260 = vsub.f32 %v3004, %v3196
          %v3261 = vsub.f32 %v3005, %v3197
          %v3262 = vsub.f32 %v3006, %v3198
          %v3263 = vsub.f32 %v3007, %v3199
          %v3264 = vsub.f32 %v3008, %v3200
          %v3265 = vsub.f32 %v3009, %v3201
          %v3266 = vsub.f32 %v3010, %v3202
          %v3267 = vsub.f32 %v3011, %v3203
          %v3268 = vsub.f32 %v3012, %v3204
          %v3269 = vsub.f32 %v3013, %v3205
          %v3270 = vsub.f32 %v3014, %v3206
          %v3271 = vsub.f32 %v3015, %v3207
          %v3272 = vsub.f32 %v3016, %v3208
          %v3273 = vsub.f32 %v3017, %v3209
          %v3274 = vsub.f32 %v3018, %v3210
          %v3275 = vsub.f32 %v3019, %v3211
          %v3276 = vsub.f32 %v3020, %v3212
          %v3277 = vsub.f32 %v3021, %v3213
          %v3278 = vsub.f32 %v3022, %v3214
          %v3279 = vsub.f32 %v3023, %v3215
          %v3280 = vsub.f32 %v3024, %v3216
          %v3281 = vsub.f32 %v3025, %v3217
          %v3282 = vsub.f32 %v3026, %v3218
          %v3283 = vsub.f32 %v3027, %v3219
          %v3284 = vsub.f32 %v3028, %v3220
          %v3285 = vsub.f32 %v3029, %v3221
          %v3286 = vsub.f32 %v3030, %v3222
          %v3287 = vsub.f32 %v3031, %v3223
          %v3288 = vsub.f32 %v3032, %v3224
          %v3289 = vsub.f32 %v3033, %v3225
          %v3290 = vsub.f32 %v3034, %v3226
          %v3291 = vsub.f32 %v3035, %v3227
          %v3292 = vsub.f32 %v3036, %v3228
          %v3293 = vsub.f32 %v3037, %v3229
          %v3294 = vsub.f32 %v3038, %v3230
          %v3295 = vsub.f32 %v3039, %v3231
          %v3296 = vsub.f32 %v3040, %v3232
          %v3297 = vsub.f32 %v3041, %v3233
          %v3298 = vsub.f32 %v3042, %v3234
          %v3299 = vsub.f32 %v3043, %v3235
          %v3300 = vsub.f32 %v3044, %v3236
          %v3301 = vsub.f32 %v3045, %v3237
          %v3302 = vsub.f32 %v3046, %v3238
          %v3303 = vsub.f32 %v3047, %v3239
          %v3304 = vsub.f32 %v3048, %v3240
          %v3305 = vsub.f32 %v3049, %v3241
          %v3306 = vsub.f32 %v3050, %v3242
          %v3307 = vsub.f32 %v3051, %v3243
          %v3308 = vsub.f32 %v3052, %v3244
          %v3309 = vsub.f32 %v3053, %v3245
          %v3310 = vsub.f32 %v3054, %v3246
          %v3311 = vsub.f32 %v3055, %v3247
          %v3312 = vsub.f32 %v3056, %v3248
          %v3313 = vsub.f32 %v3057, %v3249
          %v3314 = vmul.f32 %v3250, 1.442695
          %v3315 = vpow.pop %v3314
          %v3316 = vmul.f32 %v3251, 1.442695
          %v3317 = vpow.pop %v3316
          %v3318 = vmul.f32 %v3252, 1.442695
          %v3319 = vpow.pop %v3318
          %v3320 = vmul.f32 %v3253, 1.442695
          %v3321 = vpow.pop %v3320
          %v3322 = vmul.f32 %v3254, 1.442695
          %v3323 = vpow.pop %v3322
          %v3324 = vmul.f32 %v3255, 1.442695
          %v3325 = vpow.pop %v3324
          %v3326 = vmul.f32 %v3256, 1.442695
          %v3327 = vpow.pop %v3326
          %v3328 = vmul.f32 %v3257, 1.442695
          %v3329 = vpow.pop %v3328
          %v3330 = vmul.f32 %v3258, 1.442695
          %v3331 = vpow.pop %v3330
          %v3332 = vmul.f32 %v3259, 1.442695
          %v3333 = vpow.pop %v3332
          %v3334 = vmul.f32 %v3260, 1.442695
          %v3335 = vpow.pop %v3334
          %v3336 = vmul.f32 %v3261, 1.442695
          %v3337 = vpow.pop %v3336
          %v3338 = vmul.f32 %v3262, 1.442695
          %v3339 = vpow.pop %v3338
          %v3340 = vmul.f32 %v3263, 1.442695
          %v3341 = vpow.pop %v3340
          %v3342 = vmul.f32 %v3264, 1.442695
          %v3343 = vpow.pop %v3342
          %v3344 = vmul.f32 %v3265, 1.442695
          %v3345 = vpow.pop %v3344
          %v3346 = vmul.f32 %v3266, 1.442695
          %v3347 = vpow.pop %v3346
          %v3348 = vmul.f32 %v3267, 1.442695
          %v3349 = vpow.pop %v3348
          %v3350 = vmul.f32 %v3268, 1.442695
          %v3351 = vpow.pop %v3350
          %v3352 = vmul.f32 %v3269, 1.442695
          %v3353 = vpow.pop %v3352
          %v3354 = vmul.f32 %v3270, 1.442695
          %v3355 = vpow.pop %v3354
          %v3356 = vmul.f32 %v3271, 1.442695
          %v3357 = vpow.pop %v3356
          %v3358 = vmul.f32 %v3272, 1.442695
          %v3359 = vpow.pop %v3358
          %v3360 = vmul.f32 %v3273, 1.442695
          %v3361 = vpow.pop %v3360
          %v3362 = vmul.f32 %v3274, 1.442695
          %v3363 = vpow.pop %v3362
          %v3364 = vmul.f32 %v3275, 1.442695
          %v3365 = vpow.pop %v3364
          %v3366 = vmul.f32 %v3276, 1.442695
          %v3367 = vpow.pop %v3366
          %v3368 = vmul.f32 %v3277, 1.442695
          %v3369 = vpow.pop %v3368
          %v3370 = vmul.f32 %v3278, 1.442695
          %v3371 = vpow.pop %v3370
          %v3372 = vmul.f32 %v3279, 1.442695
          %v3373 = vpow.pop %v3372
          %v3374 = vmul.f32 %v3280, 1.442695
          %v3375 = vpow.pop %v3374
          %v3376 = vmul.f32 %v3281, 1.442695
          %v3377 = vpow.pop %v3376
          %v3378 = vmul.f32 %v3282, 1.442695
          %v3379 = vpow.pop %v3378
          %v3380 = vmul.f32 %v3283, 1.442695
          %v3381 = vpow.pop %v3380
          %v3382 = vmul.f32 %v3284, 1.442695
          %v3383 = vpow.pop %v3382
          %v3384 = vmul.f32 %v3285, 1.442695
          %v3385 = vpow.pop %v3384
          %v3386 = vmul.f32 %v3286, 1.442695
          %v3387 = vpow.pop %v3386
          %v3388 = vmul.f32 %v3287, 1.442695
          %v3389 = vpow.pop %v3388
          %v3390 = vmul.f32 %v3288, 1.442695
          %v3391 = vpow.pop %v3390
          %v3392 = vmul.f32 %v3289, 1.442695
          %v3393 = vpow.pop %v3392
          %v3394 = vmul.f32 %v3290, 1.442695
          %v3395 = vpow.pop %v3394
          %v3396 = vmul.f32 %v3291, 1.442695
          %v3397 = vpow.pop %v3396
          %v3398 = vmul.f32 %v3292, 1.442695
          %v3399 = vpow.pop %v3398
          %v3400 = vmul.f32 %v3293, 1.442695
          %v3401 = vpow.pop %v3400
          %v3402 = vmul.f32 %v3294, 1.442695
          %v3403 = vpow.pop %v3402
          %v3404 = vmul.f32 %v3295, 1.442695
          %v3405 = vpow.pop %v3404
          %v3406 = vmul.f32 %v3296, 1.442695
          %v3407 = vpow.pop %v3406
          %v3408 = vmul.f32 %v3297, 1.442695
          %v3409 = vpow.pop %v3408
          %v3410 = vmul.f32 %v3298, 1.442695
          %v3411 = vpow.pop %v3410
          %v3412 = vmul.f32 %v3299, 1.442695
          %v3413 = vpow.pop %v3412
          %v3414 = vmul.f32 %v3300, 1.442695
          %v3415 = vpow.pop %v3414
          %v3416 = vmul.f32 %v3301, 1.442695
          %v3417 = vpow.pop %v3416
          %v3418 = vmul.f32 %v3302, 1.442695
          %v3419 = vpow.pop %v3418
          %v3420 = vmul.f32 %v3303, 1.442695
          %v3421 = vpow.pop %v3420
          %v3422 = vmul.f32 %v3304, 1.442695
          %v3423 = vpow.pop %v3422
          %v3424 = vmul.f32 %v3305, 1.442695
          %v3425 = vpow.pop %v3424
          %v3426 = vmul.f32 %v3306, 1.442695
          %v3427 = vpow.pop %v3426
          %v3428 = vmul.f32 %v3307, 1.442695
          %v3429 = vpow.pop %v3428
          %v3430 = vmul.f32 %v3308, 1.442695
          %v3431 = vpow.pop %v3430
          %v3432 = vmul.f32 %v3309, 1.442695
          %v3433 = vpow.pop %v3432
          %v3434 = vmul.f32 %v3310, 1.442695
          %v3435 = vpow.pop %v3434
          %v3436 = vmul.f32 %v3311, 1.442695
          %v3437 = vpow.pop %v3436
          %v3438 = vmul.f32 %v3312, 1.442695
          %v3439 = vpow.pop %v3438
          %v3440 = vmul.f32 %v3313, 1.442695
          %v3441 = vpow.pop %v3440
          %3443 = vset.pattern.permute.xlu0 0
          %3444 = vperm.xlu0 %3443, %v3186
          %v3445 = vpop.permute.xlu0 %3444
          %3448 = vset.pattern.permute.xlu0 0
          %3449 = vperm.xlu0 %3448, %v3187
          %v3450 = vpop.permute.xlu0 %3449
          %3453 = vset.pattern.permute.xlu0 0
          %3454 = vperm.xlu0 %3453, %v3188
          %v3455 = vpop.permute.xlu0 %3454
          %3458 = vset.pattern.permute.xlu0 0
          %3459 = vperm.xlu0 %3458, %v3189
          %v3460 = vpop.permute.xlu0 %3459
          %3463 = vset.pattern.permute.xlu0 0
          %3464 = vperm.xlu0 %3463, %v3190
          %v3465 = vpop.permute.xlu0 %3464
          %3468 = vset.pattern.permute.xlu0 0
          %3469 = vperm.xlu0 %3468, %v3191
          %v3470 = vpop.permute.xlu0 %3469
          %3473 = vset.pattern.permute.xlu0 0
          %3474 = vperm.xlu0 %3473, %v3192
          %v3475 = vpop.permute.xlu0 %3474
          %3478 = vset.pattern.permute.xlu0 0
          %3479 = vperm.xlu0 %3478, %v3193
          %v3480 = vpop.permute.xlu0 %3479
          %3483 = vset.pattern.permute.xlu0 0
          %3484 = vperm.xlu0 %3483, %v3194
          %v3485 = vpop.permute.xlu0 %3484
          %3488 = vset.pattern.permute.xlu0 0
          %3489 = vperm.xlu0 %3488, %v3195
          %v3490 = vpop.permute.xlu0 %3489
          %3493 = vset.pattern.permute.xlu0 0
          %3494 = vperm.xlu0 %3493, %v3196
          %v3495 = vpop.permute.xlu0 %3494
          %3498 = vset.pattern.permute.xlu0 0
          %3499 = vperm.xlu0 %3498, %v3197
          %v3500 = vpop.permute.xlu0 %3499
          %3503 = vset.pattern.permute.xlu0 0
          %3504 = vperm.xlu0 %3503, %v3198
          %v3505 = vpop.permute.xlu0 %3504
          %3508 = vset.pattern.permute.xlu0 0
          %3509 = vperm.xlu0 %3508, %v3199
          %v3510 = vpop.permute.xlu0 %3509
          %3513 = vset.pattern.permute.xlu0 0
          %3514 = vperm.xlu0 %3513, %v3200
          %v3515 = vpop.permute.xlu0 %3514
          %3518 = vset.pattern.permute.xlu0 0
          %3519 = vperm.xlu0 %3518, %v3201
          %v3520 = vpop.permute.xlu0 %3519
          %3523 = vset.pattern.permute.xlu0 0
          %3524 = vperm.xlu0 %3523, %v3202
          %v3525 = vpop.permute.xlu0 %3524
          %3528 = vset.pattern.permute.xlu0 0
          %3529 = vperm.xlu0 %3528, %v3203
          %v3530 = vpop.permute.xlu0 %3529
          %3533 = vset.pattern.permute.xlu0 0
          %3534 = vperm.xlu0 %3533, %v3204
          %v3535 = vpop.permute.xlu0 %3534
          %3538 = vset.pattern.permute.xlu0 0
          %3539 = vperm.xlu0 %3538, %v3205
          %v3540 = vpop.permute.xlu0 %3539
          %3543 = vset.pattern.permute.xlu0 0
          %3544 = vperm.xlu0 %3543, %v3206
          %v3545 = vpop.permute.xlu0 %3544
          %3548 = vset.pattern.permute.xlu0 0
          %3549 = vperm.xlu0 %3548, %v3207
          %v3550 = vpop.permute.xlu0 %3549
          %3553 = vset.pattern.permute.xlu0 0
          %3554 = vperm.xlu0 %3553, %v3208
          %v3555 = vpop.permute.xlu0 %3554
          %3558 = vset.pattern.permute.xlu0 0
          %3559 = vperm.xlu0 %3558, %v3209
          %v3560 = vpop.permute.xlu0 %3559
          %3563 = vset.pattern.permute.xlu0 0
          %3564 = vperm.xlu0 %3563, %v3210
          %v3565 = vpop.permute.xlu0 %3564
          %3568 = vset.pattern.permute.xlu0 0
          %3569 = vperm.xlu0 %3568, %v3211
          %v3570 = vpop.permute.xlu0 %3569
          %3573 = vset.pattern.permute.xlu0 0
          %3574 = vperm.xlu0 %3573, %v3212
          %v3575 = vpop.permute.xlu0 %3574
          %3578 = vset.pattern.permute.xlu0 0
          %3579 = vperm.xlu0 %3578, %v3213
          %v3580 = vpop.permute.xlu0 %3579
          %3583 = vset.pattern.permute.xlu0 0
          %3584 = vperm.xlu0 %3583, %v3214
          %v3585 = vpop.permute.xlu0 %3584
          %3588 = vset.pattern.permute.xlu0 0
          %3589 = vperm.xlu0 %3588, %v3215
          %v3590 = vpop.permute.xlu0 %3589
          %3593 = vset.pattern.permute.xlu0 0
          %3594 = vperm.xlu0 %3593, %v3216
          %v3595 = vpop.permute.xlu0 %3594
          %3598 = vset.pattern.permute.xlu0 0
          %3599 = vperm.xlu0 %3598, %v3217
          %v3600 = vpop.permute.xlu0 %3599
          %3603 = vset.pattern.permute.xlu0 0
          %3604 = vperm.xlu0 %3603, %v3218
          %v3605 = vpop.permute.xlu0 %3604
          %3608 = vset.pattern.permute.xlu0 0
          %3609 = vperm.xlu0 %3608, %v3219
          %v3610 = vpop.permute.xlu0 %3609
          %3613 = vset.pattern.permute.xlu0 0
          %3614 = vperm.xlu0 %3613, %v3220
          %v3615 = vpop.permute.xlu0 %3614
          %3618 = vset.pattern.permute.xlu0 0
          %3619 = vperm.xlu0 %3618, %v3221
          %v3620 = vpop.permute.xlu0 %3619
          %3623 = vset.pattern.permute.xlu0 0
          %3624 = vperm.xlu0 %3623, %v3222
          %v3625 = vpop.permute.xlu0 %3624
          %3628 = vset.pattern.permute.xlu0 0
          %3629 = vperm.xlu0 %3628, %v3223
          %v3630 = vpop.permute.xlu0 %3629
          %3633 = vset.pattern.permute.xlu0 0
          %3634 = vperm.xlu0 %3633, %v3224
          %v3635 = vpop.permute.xlu0 %3634
          %3638 = vset.pattern.permute.xlu0 0
          %3639 = vperm.xlu0 %3638, %v3225
          %v3640 = vpop.permute.xlu0 %3639
          %3643 = vset.pattern.permute.xlu0 0
          %3644 = vperm.xlu0 %3643, %v3226
          %v3645 = vpop.permute.xlu0 %3644
          %3648 = vset.pattern.permute.xlu0 0
          %3649 = vperm.xlu0 %3648, %v3227
          %v3650 = vpop.permute.xlu0 %3649
          %3653 = vset.pattern.permute.xlu0 0
          %3654 = vperm.xlu0 %3653, %v3228
          %v3655 = vpop.permute.xlu0 %3654
          %3658 = vset.pattern.permute.xlu0 0
          %3659 = vperm.xlu0 %3658, %v3229
          %v3660 = vpop.permute.xlu0 %3659
          %3663 = vset.pattern.permute.xlu0 0
          %3664 = vperm.xlu0 %3663, %v3230
          %v3665 = vpop.permute.xlu0 %3664
          %3668 = vset.pattern.permute.xlu0 0
          %3669 = vperm.xlu0 %3668, %v3231
          %v3670 = vpop.permute.xlu0 %3669
          %3673 = vset.pattern.permute.xlu0 0
          %3674 = vperm.xlu0 %3673, %v3232
          %v3675 = vpop.permute.xlu0 %3674
          %3678 = vset.pattern.permute.xlu0 0
          %3679 = vperm.xlu0 %3678, %v3233
          %v3680 = vpop.permute.xlu0 %3679
          %3683 = vset.pattern.permute.xlu0 0
          %3684 = vperm.xlu0 %3683, %v3234
          %v3685 = vpop.permute.xlu0 %3684
          %3688 = vset.pattern.permute.xlu0 0
          %3689 = vperm.xlu0 %3688, %v3235
          %v3690 = vpop.permute.xlu0 %3689
          %3693 = vset.pattern.permute.xlu0 0
          %3694 = vperm.xlu0 %3693, %v3236
          %v3695 = vpop.permute.xlu0 %3694
          %3698 = vset.pattern.permute.xlu0 0
          %3699 = vperm.xlu0 %3698, %v3237
          %v3700 = vpop.permute.xlu0 %3699
          %3703 = vset.pattern.permute.xlu0 0
          %3704 = vperm.xlu0 %3703, %v3238
          %v3705 = vpop.permute.xlu0 %3704
          %3708 = vset.pattern.permute.xlu0 0
          %3709 = vperm.xlu0 %3708, %v3239
          %v3710 = vpop.permute.xlu0 %3709
          %3713 = vset.pattern.permute.xlu0 0
          %3714 = vperm.xlu0 %3713, %v3240
          %v3715 = vpop.permute.xlu0 %3714
          %3718 = vset.pattern.permute.xlu0 0
          %3719 = vperm.xlu0 %3718, %v3241
          %v3720 = vpop.permute.xlu0 %3719
          %3723 = vset.pattern.permute.xlu0 0
          %3724 = vperm.xlu0 %3723, %v3242
          %v3725 = vpop.permute.xlu0 %3724
          %3728 = vset.pattern.permute.xlu0 0
          %3729 = vperm.xlu0 %3728, %v3243
          %v3730 = vpop.permute.xlu0 %3729
          %3733 = vset.pattern.permute.xlu0 0
          %3734 = vperm.xlu0 %3733, %v3244
          %v3735 = vpop.permute.xlu0 %3734
          %3738 = vset.pattern.permute.xlu0 0
          %3739 = vperm.xlu0 %3738, %v3245
          %v3740 = vpop.permute.xlu0 %3739
          %3743 = vset.pattern.permute.xlu0 0
          %3744 = vperm.xlu0 %3743, %v3246
          %v3745 = vpop.permute.xlu0 %3744
          %3748 = vset.pattern.permute.xlu0 0
          %3749 = vperm.xlu0 %3748, %v3247
          %v3750 = vpop.permute.xlu0 %3749
          %3753 = vset.pattern.permute.xlu0 0
          %3754 = vperm.xlu0 %3753, %v3248
          %v3755 = vpop.permute.xlu0 %3754
          %3758 = vset.pattern.permute.xlu0 0
          %3759 = vperm.xlu0 %3758, %v3249
          %v3760 = vpop.permute.xlu0 %3759
          %v3762 = vsub.f32 %v2377, %v3445
          %v3763 = vsub.f32 %v2380, %v3450
          %v3764 = vsub.f32 %v2385, %v3455
          %v3765 = vsub.f32 %v2388, %v3460
          %v3766 = vsub.f32 %v2393, %v3465
          %v3767 = vsub.f32 %v2396, %v3470
          %v3768 = vsub.f32 %v2401, %v3475
          %v3769 = vsub.f32 %v2404, %v3480
          %v3770 = vsub.f32 %v2409, %v3485
          %v3771 = vsub.f32 %v2412, %v3490
          %v3772 = vsub.f32 %v2417, %v3495
          %v3773 = vsub.f32 %v2420, %v3500
          %v3774 = vsub.f32 %v2425, %v3505
          %v3775 = vsub.f32 %v2428, %v3510
          %v3776 = vsub.f32 %v2433, %v3515
          %v3777 = vsub.f32 %v2436, %v3520
          %v3778 = vsub.f32 %v2562, %v3525
          %v3779 = vsub.f32 %v2565, %v3530
          %v3780 = vsub.f32 %v2570, %v3535
          %v3781 = vsub.f32 %v2573, %v3540
          %v3782 = vsub.f32 %v2578, %v3545
          %v3783 = vsub.f32 %v2581, %v3550
          %v3784 = vsub.f32 %v2586, %v3555
          %v3785 = vsub.f32 %v2589, %v3560
          %v3786 = vsub.f32 %v2594, %v3565
          %v3787 = vsub.f32 %v2597, %v3570
          %v3788 = vsub.f32 %v2602, %v3575
          %v3789 = vsub.f32 %v2605, %v3580
          %v3790 = vsub.f32 %v2610, %v3585
          %v3791 = vsub.f32 %v2613, %v3590
          %v3792 = vsub.f32 %v2618, %v3595
          %v3793 = vsub.f32 %v2621, %v3600
          %v3794 = vsub.f32 %v2747, %v3605
          %v3795 = vsub.f32 %v2750, %v3610
          %v3796 = vsub.f32 %v2755, %v3615
          %v3797 = vsub.f32 %v2758, %v3620
          %v3798 = vsub.f32 %v2763, %v3625
          %v3799 = vsub.f32 %v2766, %v3630
          %v3800 = vsub.f32 %v2771, %v3635
          %v3801 = vsub.f32 %v2774, %v3640
          %v3802 = vsub.f32 %v2779, %v3645
          %v3803 = vsub.f32 %v2782, %v3650
          %v3804 = vsub.f32 %v2787, %v3655
          %v3805 = vsub.f32 %v2790, %v3660
          %v3806 = vsub.f32 %v2795, %v3665
          %v3807 = vsub.f32 %v2798, %v3670
          %v3808 = vsub.f32 %v2803, %v3675
          %v3809 = vsub.f32 %v2806, %v3680
          %v3810 = vsub.f32 %v2932, %v3685
          %v3811 = vsub.f32 %v2935, %v3690
          %v3812 = vsub.f32 %v2940, %v3695
          %v3813 = vsub.f32 %v2943, %v3700
          %v3814 = vsub.f32 %v2948, %v3705
          %v3815 = vsub.f32 %v2951, %v3710
          %v3816 = vsub.f32 %v2956, %v3715
          %v3817 = vsub.f32 %v2959, %v3720
          %v3818 = vsub.f32 %v2964, %v3725
          %v3819 = vsub.f32 %v2967, %v3730
          %v3820 = vsub.f32 %v2972, %v3735
          %v3821 = vsub.f32 %v2975, %v3740
          %v3822 = vsub.f32 %v2980, %v3745
          %v3823 = vsub.f32 %v2983, %v3750
          %v3824 = vsub.f32 %v2988, %v3755
          %v3825 = vsub.f32 %v2991, %v3760
          %v3826 = vmul.f32 %v3762, 1.442695
          %v3827 = vpow.pop %v3826
          %v3828 = vmul.f32 %v3763, 1.442695
          %v3829 = vpow.pop %v3828
          %v3830 = vmul.f32 %v3764, 1.442695
          %v3831 = vpow.pop %v3830
          %v3832 = vmul.f32 %v3765, 1.442695
          %v3833 = vpow.pop %v3832
          %v3834 = vmul.f32 %v3766, 1.442695
          %v3835 = vpow.pop %v3834
          %v3836 = vmul.f32 %v3767, 1.442695
          %v3837 = vpow.pop %v3836
          %v3838 = vmul.f32 %v3768, 1.442695
          %v3839 = vpow.pop %v3838
          %v3840 = vmul.f32 %v3769, 1.442695
          %v3841 = vpow.pop %v3840
          %v3842 = vmul.f32 %v3770, 1.442695
          %v3843 = vpow.pop %v3842
          %v3844 = vmul.f32 %v3771, 1.442695
          %v3845 = vpow.pop %v3844
          %v3846 = vmul.f32 %v3772, 1.442695
          %v3847 = vpow.pop %v3846
          %v3848 = vmul.f32 %v3773, 1.442695
          %v3849 = vpow.pop %v3848
          %v3850 = vmul.f32 %v3774, 1.442695
          %v3851 = vpow.pop %v3850
          %v3852 = vmul.f32 %v3775, 1.442695
          %v3853 = vpow.pop %v3852
          %v3854 = vmul.f32 %v3776, 1.442695
          %v3855 = vpow.pop %v3854
          %v3856 = vmul.f32 %v3777, 1.442695
          %v3857 = vpow.pop %v3856
          %v3858 = vmul.f32 %v3778, 1.442695
          %v3859 = vpow.pop %v3858
          %v3860 = vmul.f32 %v3779, 1.442695
          %v3861 = vpow.pop %v3860
          %v3862 = vmul.f32 %v3780, 1.442695
          %v3863 = vpow.pop %v3862
          %v3864 = vmul.f32 %v3781, 1.442695
          %v3865 = vpow.pop %v3864
          %v3866 = vmul.f32 %v3782, 1.442695
          %v3867 = vpow.pop %v3866
          %v3868 = vmul.f32 %v3783, 1.442695
          %v3869 = vpow.pop %v3868
          %v3870 = vmul.f32 %v3784, 1.442695
          %v3871 = vpow.pop %v3870
          %v3872 = vmul.f32 %v3785, 1.442695
          %v3873 = vpow.pop %v3872
          %v3874 = vmul.f32 %v3786, 1.442695
          %v3875 = vpow.pop %v3874
          %v3876 = vmul.f32 %v3787, 1.442695
          %v3877 = vpow.pop %v3876
          %v3878 = vmul.f32 %v3788, 1.442695
          %v3879 = vpow.pop %v3878
          %v3880 = vmul.f32 %v3789, 1.442695
          %v3881 = vpow.pop %v3880
          %v3882 = vmul.f32 %v3790, 1.442695
          %v3883 = vpow.pop %v3882
          %v3884 = vmul.f32 %v3791, 1.442695
          %v3885 = vpow.pop %v3884
          %v3886 = vmul.f32 %v3792, 1.442695
          %v3887 = vpow.pop %v3886
          %v3888 = vmul.f32 %v3793, 1.442695
          %v3889 = vpow.pop %v3888
          %v3890 = vmul.f32 %v3794, 1.442695
          %v3891 = vpow.pop %v3890
          %v3892 = vmul.f32 %v3795, 1.442695
          %v3893 = vpow.pop %v3892
          %v3894 = vmul.f32 %v3796, 1.442695
          %v3895 = vpow.pop %v3894
          %v3896 = vmul.f32 %v3797, 1.442695
          %v3897 = vpow.pop %v3896
          %v3898 = vmul.f32 %v3798, 1.442695
          %v3899 = vpow.pop %v3898
          %v3900 = vmul.f32 %v3799, 1.442695
          %v3901 = vpow.pop %v3900
          %v3902 = vmul.f32 %v3800, 1.442695
          %v3903 = vpow.pop %v3902
          %v3904 = vmul.f32 %v3801, 1.442695
          %v3905 = vpow.pop %v3904
          %v3906 = vmul.f32 %v3802, 1.442695
          %v3907 = vpow.pop %v3906
          %v3908 = vmul.f32 %v3803, 1.442695
          %v3909 = vpow.pop %v3908
          %v3910 = vmul.f32 %v3804, 1.442695
          %v3911 = vpow.pop %v3910
          %v3912 = vmul.f32 %v3805, 1.442695
          %v3913 = vpow.pop %v3912
          %v3914 = vmul.f32 %v3806, 1.442695
          %v3915 = vpow.pop %v3914
          %v3916 = vmul.f32 %v3807, 1.442695
          %v3917 = vpow.pop %v3916
          %v3918 = vmul.f32 %v3808, 1.442695
          %v3919 = vpow.pop %v3918
          %v3920 = vmul.f32 %v3809, 1.442695
          %v3921 = vpow.pop %v3920
          %v3922 = vmul.f32 %v3810, 1.442695
          %v3923 = vpow.pop %v3922
          %v3924 = vmul.f32 %v3811, 1.442695
          %v3925 = vpow.pop %v3924
          %v3926 = vmul.f32 %v3812, 1.442695
          %v3927 = vpow.pop %v3926
          %v3928 = vmul.f32 %v3813, 1.442695
          %v3929 = vpow.pop %v3928
          %v3930 = vmul.f32 %v3814, 1.442695
          %v3931 = vpow.pop %v3930
          %v3932 = vmul.f32 %v3815, 1.442695
          %v3933 = vpow.pop %v3932
          %v3934 = vmul.f32 %v3816, 1.442695
          %v3935 = vpow.pop %v3934
          %v3936 = vmul.f32 %v3817, 1.442695
          %v3937 = vpow.pop %v3936
          %v3938 = vmul.f32 %v3818, 1.442695
          %v3939 = vpow.pop %v3938
          %v3940 = vmul.f32 %v3819, 1.442695
          %v3941 = vpow.pop %v3940
          %v3942 = vmul.f32 %v3820, 1.442695
          %v3943 = vpow.pop %v3942
          %v3944 = vmul.f32 %v3821, 1.442695
          %v3945 = vpow.pop %v3944
          %v3946 = vmul.f32 %v3822, 1.442695
          %v3947 = vpow.pop %v3946
          %v3948 = vmul.f32 %v3823, 1.442695
          %v3949 = vpow.pop %v3948
          %v3950 = vmul.f32 %v3824, 1.442695
          %v3951 = vpow.pop %v3950
          %v3952 = vmul.f32 %v3825, 1.442695
          %v3953 = vpow.pop %v3952
          %v3954 = vld [vmem:[#allocation4] sm:$0xff]
          %v3955 = vld [vmem:[#allocation4 + $0x8] sm:$0xff]
          %v3956 = vld [vmem:[#allocation4 + $0x10] sm:$0xff]
          %v3957 = vld [vmem:[#allocation4 + $0x18] sm:$0xff]
          %v3958 = vld [vmem:[#allocation4 + $0x20] sm:$0xff]
          %v3959 = vld [vmem:[#allocation4 + $0x28] sm:$0xff]
          %v3960 = vld [vmem:[#allocation4 + $0x30] sm:$0xff]
          %v3961 = vld [vmem:[#allocation4 + $0x38] sm:$0xff]
          %v3962 = vld [vmem:[#allocation4 + $0x40] sm:$0xff]
          %v3963 = vld [vmem:[#allocation4 + $0x48] sm:$0xff]
          %v3964 = vld [vmem:[#allocation4 + $0x50] sm:$0xff]
          %v3965 = vld [vmem:[#allocation4 + $0x58] sm:$0xff]
          %v3966 = vld [vmem:[#allocation4 + $0x60] sm:$0xff]
          %v3967 = vld [vmem:[#allocation4 + $0x68] sm:$0xff]
          %v3968 = vld [vmem:[#allocation4 + $0x70] sm:$0xff]
          %v3969 = vld [vmem:[#allocation4 + $0x78] sm:$0xff]
          %v3970 = vld [vmem:[#allocation4 + $0x80] sm:$0xff]
          %v3971 = vld [vmem:[#allocation4 + $0x88] sm:$0xff]
          %v3972 = vld [vmem:[#allocation4 + $0x90] sm:$0xff]
          %v3973 = vld [vmem:[#allocation4 + $0x98] sm:$0xff]
          %v3974 = vld [vmem:[#allocation4 + $0xa0] sm:$0xff]
          %v3975 = vld [vmem:[#allocation4 + $0xa8] sm:$0xff]
          %v3976 = vld [vmem:[#allocation4 + $0xb0] sm:$0xff]
          %v3977 = vld [vmem:[#allocation4 + $0xb8] sm:$0xff]
          %v3978 = vld [vmem:[#allocation4 + $0xc0] sm:$0xff]
          %v3979 = vld [vmem:[#allocation4 + $0xc8] sm:$0xff]
          %v3980 = vld [vmem:[#allocation4 + $0xd0] sm:$0xff]
          %v3981 = vld [vmem:[#allocation4 + $0xd8] sm:$0xff]
          %v3982 = vld [vmem:[#allocation4 + $0xe0] sm:$0xff]
          %v3983 = vld [vmem:[#allocation4 + $0xe8] sm:$0xff]
          %v3984 = vld [vmem:[#allocation4 + $0xf0] sm:$0xff]
          %v3985 = vld [vmem:[#allocation4 + $0xf8] sm:$0xff]
          %v3986 = vld [vmem:[#allocation4 + $0x100] sm:$0xff]
          %v3987 = vld [vmem:[#allocation4 + $0x108] sm:$0xff]
          %v3988 = vld [vmem:[#allocation4 + $0x110] sm:$0xff]
          %v3989 = vld [vmem:[#allocation4 + $0x118] sm:$0xff]
          %v3990 = vld [vmem:[#allocation4 + $0x120] sm:$0xff]
          %v3991 = vld [vmem:[#allocation4 + $0x128] sm:$0xff]
          %v3992 = vld [vmem:[#allocation4 + $0x130] sm:$0xff]
          %v3993 = vld [vmem:[#allocation4 + $0x138] sm:$0xff]
          %v3994 = vld [vmem:[#allocation4 + $0x140] sm:$0xff]
          %v3995 = vld [vmem:[#allocation4 + $0x148] sm:$0xff]
          %v3996 = vld [vmem:[#allocation4 + $0x150] sm:$0xff]
          %v3997 = vld [vmem:[#allocation4 + $0x158] sm:$0xff]
          %v3998 = vld [vmem:[#allocation4 + $0x160] sm:$0xff]
          %v3999 = vld [vmem:[#allocation4 + $0x168] sm:$0xff]
          %v4000 = vld [vmem:[#allocation4 + $0x170] sm:$0xff]
          %v4001 = vld [vmem:[#allocation4 + $0x178] sm:$0xff]
          %v4002 = vld [vmem:[#allocation4 + $0x180] sm:$0xff]
          %v4003 = vld [vmem:[#allocation4 + $0x188] sm:$0xff]
          %v4004 = vld [vmem:[#allocation4 + $0x190] sm:$0xff]
          %v4005 = vld [vmem:[#allocation4 + $0x198] sm:$0xff]
          %v4006 = vld [vmem:[#allocation4 + $0x1a0] sm:$0xff]
          %v4007 = vld [vmem:[#allocation4 + $0x1a8] sm:$0xff]
          %v4008 = vld [vmem:[#allocation4 + $0x1b0] sm:$0xff]
          %v4009 = vld [vmem:[#allocation4 + $0x1b8] sm:$0xff]
          %v4010 = vld [vmem:[#allocation4 + $0x1c0] sm:$0xff]
          %v4011 = vld [vmem:[#allocation4 + $0x1c8] sm:$0xff]
          %v4012 = vld [vmem:[#allocation4 + $0x1d0] sm:$0xff]
          %v4013 = vld [vmem:[#allocation4 + $0x1d8] sm:$0xff]
          %v4014 = vld [vmem:[#allocation4 + $0x1e0] sm:$0xff]
          %v4015 = vld [vmem:[#allocation4 + $0x1e8] sm:$0xff]
          %v4016 = vld [vmem:[#allocation4 + $0x1f0] sm:$0xff]
          %v4017 = vld [vmem:[#allocation4 + $0x1f8] sm:$0xff]
          %v4018 = vmul.f32 %v3315, %v3954
          %v4019 = vmul.f32 %v3317, %v3955
          %v4020 = vmul.f32 %v3319, %v3956
          %v4021 = vmul.f32 %v3321, %v3957
          %v4022 = vmul.f32 %v3323, %v3958
          %v4023 = vmul.f32 %v3325, %v3959
          %v4024 = vmul.f32 %v3327, %v3960
          %v4025 = vmul.f32 %v3329, %v3961
          %v4026 = vmul.f32 %v3331, %v3962
          %v4027 = vmul.f32 %v3333, %v3963
          %v4028 = vmul.f32 %v3335, %v3964
          %v4029 = vmul.f32 %v3337, %v3965
          %v4030 = vmul.f32 %v3339, %v3966
          %v4031 = vmul.f32 %v3341, %v3967
          %v4032 = vmul.f32 %v3343, %v3968
          %v4033 = vmul.f32 %v3345, %v3969
          %v4034 = vmul.f32 %v3347, %v3970
          %v4035 = vmul.f32 %v3349, %v3971
          %v4036 = vmul.f32 %v3351, %v3972
          %v4037 = vmul.f32 %v3353, %v3973
          %v4038 = vmul.f32 %v3355, %v3974
          %v4039 = vmul.f32 %v3357, %v3975
          %v4040 = vmul.f32 %v3359, %v3976
          %v4041 = vmul.f32 %v3361, %v3977
          %v4042 = vmul.f32 %v3363, %v3978
          %v4043 = vmul.f32 %v3365, %v3979
          %v4044 = vmul.f32 %v3367, %v3980
          %v4045 = vmul.f32 %v3369, %v3981
          %v4046 = vmul.f32 %v3371, %v3982
          %v4047 = vmul.f32 %v3373, %v3983
          %v4048 = vmul.f32 %v3375, %v3984
          %v4049 = vmul.f32 %v3377, %v3985
          %v4050 = vmul.f32 %v3379, %v3986
          %v4051 = vmul.f32 %v3381, %v3987
          %v4052 = vmul.f32 %v3383, %v3988
          %v4053 = vmul.f32 %v3385, %v3989
          %v4054 = vmul.f32 %v3387, %v3990
          %v4055 = vmul.f32 %v3389, %v3991
          %v4056 = vmul.f32 %v3391, %v3992
          %v4057 = vmul.f32 %v3393, %v3993
          %v4058 = vmul.f32 %v3395, %v3994
          %v4059 = vmul.f32 %v3397, %v3995
          %v4060 = vmul.f32 %v3399, %v3996
          %v4061 = vmul.f32 %v3401, %v3997
          %v4062 = vmul.f32 %v3403, %v3998
          %v4063 = vmul.f32 %v3405, %v3999
          %v4064 = vmul.f32 %v3407, %v4000
          %v4065 = vmul.f32 %v3409, %v4001
          %v4066 = vmul.f32 %v3411, %v4002
          %v4067 = vmul.f32 %v3413, %v4003
          %v4068 = vmul.f32 %v3415, %v4004
          %v4069 = vmul.f32 %v3417, %v4005
          %v4070 = vmul.f32 %v3419, %v4006
          %v4071 = vmul.f32 %v3421, %v4007
          %v4072 = vmul.f32 %v3423, %v4008
          %v4073 = vmul.f32 %v3425, %v4009
          %v4074 = vmul.f32 %v3427, %v4010
          %v4075 = vmul.f32 %v3429, %v4011
          %v4076 = vmul.f32 %v3431, %v4012
          %v4077 = vmul.f32 %v3433, %v4013
          %v4078 = vmul.f32 %v3435, %v4014
          %v4079 = vmul.f32 %v3437, %v4015
          %v4080 = vmul.f32 %v3439, %v4016
          %v4081 = vmul.f32 %v3441, %v4017
          %4082 = vadd.xlane.f32.xlu0 %v3827
          %v4083 = vpop.xlane.xlu0 %4082
          %4084 = vadd.xlane.f32.xlu0 %v3829
          %v4085 = vpop.xlane.xlu0 %4084
          %4086 = vadd.xlane.f32.xlu0 %v3831
          %v4087 = vpop.xlane.xlu0 %4086
          %4088 = vadd.xlane.f32.xlu0 %v3833
          %v4089 = vpop.xlane.xlu0 %4088
          %4090 = vadd.xlane.f32.xlu0 %v3835
          %v4091 = vpop.xlane.xlu0 %4090
          %4092 = vadd.xlane.f32.xlu0 %v3837
          %v4093 = vpop.xlane.xlu0 %4092
          %4094 = vadd.xlane.f32.xlu0 %v3839
          %v4095 = vpop.xlane.xlu0 %4094
          %4096 = vadd.xlane.f32.xlu0 %v3841
          %v4097 = vpop.xlane.xlu0 %4096
          %4098 = vadd.xlane.f32.xlu0 %v3843
          %v4099 = vpop.xlane.xlu0 %4098
          %4100 = vadd.xlane.f32.xlu0 %v3845
          %v4101 = vpop.xlane.xlu0 %4100
          %4102 = vadd.xlane.f32.xlu0 %v3847
          %v4103 = vpop.xlane.xlu0 %4102
          %4104 = vadd.xlane.f32.xlu0 %v3849
          %v4105 = vpop.xlane.xlu0 %4104
          %4106 = vadd.xlane.f32.xlu0 %v3851
          %v4107 = vpop.xlane.xlu0 %4106
          %4108 = vadd.xlane.f32.xlu0 %v3853
          %v4109 = vpop.xlane.xlu0 %4108
          %4110 = vadd.xlane.f32.xlu0 %v3855
          %v4111 = vpop.xlane.xlu0 %4110
          %4112 = vadd.xlane.f32.xlu0 %v3857
          %v4113 = vpop.xlane.xlu0 %4112
          %4114 = vadd.xlane.f32.xlu0 %v3859
          %v4115 = vpop.xlane.xlu0 %4114
          %4116 = vadd.xlane.f32.xlu0 %v3861
          %v4117 = vpop.xlane.xlu0 %4116
          %4118 = vadd.xlane.f32.xlu0 %v3863
          %v4119 = vpop.xlane.xlu0 %4118
          %4120 = vadd.xlane.f32.xlu0 %v3865
          %v4121 = vpop.xlane.xlu0 %4120
          %4122 = vadd.xlane.f32.xlu0 %v3867
          %v4123 = vpop.xlane.xlu0 %4122
          %4124 = vadd.xlane.f32.xlu0 %v3869
          %v4125 = vpop.xlane.xlu0 %4124
          %4126 = vadd.xlane.f32.xlu0 %v3871
          %v4127 = vpop.xlane.xlu0 %4126
          %4128 = vadd.xlane.f32.xlu0 %v3873
          %v4129 = vpop.xlane.xlu0 %4128
          %4130 = vadd.xlane.f32.xlu0 %v3875
          %v4131 = vpop.xlane.xlu0 %4130
          %4132 = vadd.xlane.f32.xlu0 %v3877
          %v4133 = vpop.xlane.xlu0 %4132
          %4134 = vadd.xlane.f32.xlu0 %v3879
          %v4135 = vpop.xlane.xlu0 %4134
          %4136 = vadd.xlane.f32.xlu0 %v3881
          %v4137 = vpop.xlane.xlu0 %4136
          %4138 = vadd.xlane.f32.xlu0 %v3883
          %v4139 = vpop.xlane.xlu0 %4138
          %4140 = vadd.xlane.f32.xlu0 %v3885
          %v4141 = vpop.xlane.xlu0 %4140
          %4142 = vadd.xlane.f32.xlu0 %v3887
          %v4143 = vpop.xlane.xlu0 %4142
          %4144 = vadd.xlane.f32.xlu0 %v3889
          %v4145 = vpop.xlane.xlu0 %4144
          %4146 = vadd.xlane.f32.xlu0 %v3891
          %v4147 = vpop.xlane.xlu0 %4146
          %4148 = vadd.xlane.f32.xlu0 %v3893
          %v4149 = vpop.xlane.xlu0 %4148
          %4150 = vadd.xlane.f32.xlu0 %v3895
          %v4151 = vpop.xlane.xlu0 %4150
          %4152 = vadd.xlane.f32.xlu0 %v3897
          %v4153 = vpop.xlane.xlu0 %4152
          %4154 = vadd.xlane.f32.xlu0 %v3899
          %v4155 = vpop.xlane.xlu0 %4154
          %4156 = vadd.xlane.f32.xlu0 %v3901
          %v4157 = vpop.xlane.xlu0 %4156
          %4158 = vadd.xlane.f32.xlu0 %v3903
          %v4159 = vpop.xlane.xlu0 %4158
          %4160 = vadd.xlane.f32.xlu0 %v3905
          %v4161 = vpop.xlane.xlu0 %4160
          %4162 = vadd.xlane.f32.xlu0 %v3907
          %v4163 = vpop.xlane.xlu0 %4162
          %4164 = vadd.xlane.f32.xlu0 %v3909
          %v4165 = vpop.xlane.xlu0 %4164
          %4166 = vadd.xlane.f32.xlu0 %v3911
          %v4167 = vpop.xlane.xlu0 %4166
          %4168 = vadd.xlane.f32.xlu0 %v3913
          %v4169 = vpop.xlane.xlu0 %4168
          %4170 = vadd.xlane.f32.xlu0 %v3915
          %v4171 = vpop.xlane.xlu0 %4170
          %4172 = vadd.xlane.f32.xlu0 %v3917
          %v4173 = vpop.xlane.xlu0 %4172
          %4174 = vadd.xlane.f32.xlu0 %v3919
          %v4175 = vpop.xlane.xlu0 %4174
          %4176 = vadd.xlane.f32.xlu0 %v3921
          %v4177 = vpop.xlane.xlu0 %4176
          %4178 = vadd.xlane.f32.xlu0 %v3923
          %v4179 = vpop.xlane.xlu0 %4178
          %4180 = vadd.xlane.f32.xlu0 %v3925
          %v4181 = vpop.xlane.xlu0 %4180
          %4182 = vadd.xlane.f32.xlu0 %v3927
          %v4183 = vpop.xlane.xlu0 %4182
          %4184 = vadd.xlane.f32.xlu0 %v3929
          %v4185 = vpop.xlane.xlu0 %4184
          %4186 = vadd.xlane.f32.xlu0 %v3931
          %v4187 = vpop.xlane.xlu0 %4186
          %4188 = vadd.xlane.f32.xlu0 %v3933
          %v4189 = vpop.xlane.xlu0 %4188
          %4190 = vadd.xlane.f32.xlu0 %v3935
          %v4191 = vpop.xlane.xlu0 %4190
          %4192 = vadd.xlane.f32.xlu0 %v3937
          %v4193 = vpop.xlane.xlu0 %4192
          %4194 = vadd.xlane.f32.xlu0 %v3939
          %v4195 = vpop.xlane.xlu0 %4194
          %4196 = vadd.xlane.f32.xlu0 %v3941
          %v4197 = vpop.xlane.xlu0 %4196
          %4198 = vadd.xlane.f32.xlu0 %v3943
          %v4199 = vpop.xlane.xlu0 %4198
          %4200 = vadd.xlane.f32.xlu0 %v3945
          %v4201 = vpop.xlane.xlu0 %4200
          %4202 = vadd.xlane.f32.xlu0 %v3947
          %v4203 = vpop.xlane.xlu0 %4202
          %4204 = vadd.xlane.f32.xlu0 %v3949
          %v4205 = vpop.xlane.xlu0 %4204
          %4206 = vadd.xlane.f32.xlu0 %v3951
          %v4207 = vpop.xlane.xlu0 %4206
          %4208 = vadd.xlane.f32.xlu0 %v3953
          %v4209 = vpop.xlane.xlu0 %4208
          %v4210 = vadd.f32 %v4018, %v4083
          %v4211 = vadd.f32 %v4019, %v4085
          %v4212 = vadd.f32 %v4020, %v4087
          %v4213 = vadd.f32 %v4021, %v4089
          %v4214 = vadd.f32 %v4022, %v4091
          %v4215 = vadd.f32 %v4023, %v4093
          %v4216 = vadd.f32 %v4024, %v4095
          %v4217 = vadd.f32 %v4025, %v4097
          %v4218 = vadd.f32 %v4026, %v4099
          %v4219 = vadd.f32 %v4027, %v4101
          %v4220 = vadd.f32 %v4028, %v4103
          %v4221 = vadd.f32 %v4029, %v4105
          %v4222 = vadd.f32 %v4030, %v4107
          %v4223 = vadd.f32 %v4031, %v4109
          %v4224 = vadd.f32 %v4032, %v4111
          %v4225 = vadd.f32 %v4033, %v4113
          %v4226 = vadd.f32 %v4034, %v4115
          %v4227 = vadd.f32 %v4035, %v4117
          %v4228 = vadd.f32 %v4036, %v4119
          %v4229 = vadd.f32 %v4037, %v4121
          %v4230 = vadd.f32 %v4038, %v4123
          %v4231 = vadd.f32 %v4039, %v4125
          %v4232 = vadd.f32 %v4040, %v4127
          %v4233 = vadd.f32 %v4041, %v4129
          %v4234 = vadd.f32 %v4042, %v4131
          %v4235 = vadd.f32 %v4043, %v4133
          %v4236 = vadd.f32 %v4044, %v4135
          %v4237 = vadd.f32 %v4045, %v4137
          %v4238 = vadd.f32 %v4046, %v4139
          %v4239 = vadd.f32 %v4047, %v4141
          %v4240 = vadd.f32 %v4048, %v4143
          %v4241 = vadd.f32 %v4049, %v4145
          %v4242 = vadd.f32 %v4050, %v4147
          %v4243 = vadd.f32 %v4051, %v4149
          %v4244 = vadd.f32 %v4052, %v4151
          %v4245 = vadd.f32 %v4053, %v4153
          %v4246 = vadd.f32 %v4054, %v4155
          %v4247 = vadd.f32 %v4055, %v4157
          %v4248 = vadd.f32 %v4056, %v4159
          %v4249 = vadd.f32 %v4057, %v4161
          %v4250 = vadd.f32 %v4058, %v4163
          %v4251 = vadd.f32 %v4059, %v4165
          %v4252 = vadd.f32 %v4060, %v4167
          %v4253 = vadd.f32 %v4061, %v4169
          %v4254 = vadd.f32 %v4062, %v4171
          %v4255 = vadd.f32 %v4063, %v4173
          %v4256 = vadd.f32 %v4064, %v4175
          %v4257 = vadd.f32 %v4065, %v4177
          %v4258 = vadd.f32 %v4066, %v4179
          %v4259 = vadd.f32 %v4067, %v4181
          %v4260 = vadd.f32 %v4068, %v4183
          %v4261 = vadd.f32 %v4069, %v4185
          %v4262 = vadd.f32 %v4070, %v4187
          %v4263 = vadd.f32 %v4071, %v4189
          %v4264 = vadd.f32 %v4072, %v4191
          %v4265 = vadd.f32 %v4073, %v4193
          %v4266 = vadd.f32 %v4074, %v4195
          %v4267 = vadd.f32 %v4075, %v4197
          %v4268 = vadd.f32 %v4076, %v4199
          %v4269 = vadd.f32 %v4077, %v4201
          %v4270 = vadd.f32 %v4078, %v4203
          %v4271 = vadd.f32 %v4079, %v4205
          %v4272 = vadd.f32 %v4080, %v4207
          %v4273 = vadd.f32 %v4081, %v4209
          %vm4274 = vcmask 7168
          %4275 = vst.msk [vmem:[#allocation4] sm:$0xff] %vm4274, %v4210
          %4276 = vst.msk [vmem:[#allocation4 + $0x8] sm:$0xff] %vm4274, %v4211
          %4277 = vst.msk [vmem:[#allocation4 + $0x10] sm:$0xff] %vm4274, %v4212
          %4278 = vst.msk [vmem:[#allocation4 + $0x18] sm:$0xff] %vm4274, %v4213
          %4279 = vst.msk [vmem:[#allocation4 + $0x20] sm:$0xff] %vm4274, %v4214
          %4280 = vst.msk [vmem:[#allocation4 + $0x28] sm:$0xff] %vm4274, %v4215
          %4281 = vst.msk [vmem:[#allocation4 + $0x30] sm:$0xff] %vm4274, %v4216
          %4282 = vst.msk [vmem:[#allocation4 + $0x38] sm:$0xff] %vm4274, %v4217
          %4283 = vst.msk [vmem:[#allocation4 + $0x40] sm:$0xff] %vm4274, %v4218
          %4284 = vst.msk [vmem:[#allocation4 + $0x48] sm:$0xff] %vm4274, %v4219
          %4285 = vst.msk [vmem:[#allocation4 + $0x50] sm:$0xff] %vm4274, %v4220
          %4286 = vst.msk [vmem:[#allocation4 + $0x58] sm:$0xff] %vm4274, %v4221
          %4287 = vst.msk [vmem:[#allocation4 + $0x60] sm:$0xff] %vm4274, %v4222
          %4288 = vst.msk [vmem:[#allocation4 + $0x68] sm:$0xff] %vm4274, %v4223
          %4289 = vst.msk [vmem:[#allocation4 + $0x70] sm:$0xff] %vm4274, %v4224
          %4290 = vst.msk [vmem:[#allocation4 + $0x78] sm:$0xff] %vm4274, %v4225
          %4291 = vst.msk [vmem:[#allocation4 + $0x80] sm:$0xff] %vm4274, %v4226
          %4292 = vst.msk [vmem:[#allocation4 + $0x88] sm:$0xff] %vm4274, %v4227
          %4293 = vst.msk [vmem:[#allocation4 + $0x90] sm:$0xff] %vm4274, %v4228
          %4294 = vst.msk [vmem:[#allocation4 + $0x98] sm:$0xff] %vm4274, %v4229
          %4295 = vst.msk [vmem:[#allocation4 + $0xa0] sm:$0xff] %vm4274, %v4230
          %4296 = vst.msk [vmem:[#allocation4 + $0xa8] sm:$0xff] %vm4274, %v4231
          %4297 = vst.msk [vmem:[#allocation4 + $0xb0] sm:$0xff] %vm4274, %v4232
          %4298 = vst.msk [vmem:[#allocation4 + $0xb8] sm:$0xff] %vm4274, %v4233
          %4299 = vst.msk [vmem:[#allocation4 + $0xc0] sm:$0xff] %vm4274, %v4234
          %4300 = vst.msk [vmem:[#allocation4 + $0xc8] sm:$0xff] %vm4274, %v4235
          %4301 = vst.msk [vmem:[#allocation4 + $0xd0] sm:$0xff] %vm4274, %v4236
          %4302 = vst.msk [vmem:[#allocation4 + $0xd8] sm:$0xff] %vm4274, %v4237
          %4303 = vst.msk [vmem:[#allocation4 + $0xe0] sm:$0xff] %vm4274, %v4238
          %4304 = vst.msk [vmem:[#allocation4 + $0xe8] sm:$0xff] %vm4274, %v4239
          %4305 = vst.msk [vmem:[#allocation4 + $0xf0] sm:$0xff] %vm4274, %v4240
          %4306 = vst.msk [vmem:[#allocation4 + $0xf8] sm:$0xff] %vm4274, %v4241
          %4307 = vst.msk [vmem:[#allocation4 + $0x100] sm:$0xff] %vm4274, %v4242
          %4308 = vst.msk [vmem:[#allocation4 + $0x108] sm:$0xff] %vm4274, %v4243
          %4309 = vst.msk [vmem:[#allocation4 + $0x110] sm:$0xff] %vm4274, %v4244
          %4310 = vst.msk [vmem:[#allocation4 + $0x118] sm:$0xff] %vm4274, %v4245
          %4311 = vst.msk [vmem:[#allocation4 + $0x120] sm:$0xff] %vm4274, %v4246
          %4312 = vst.msk [vmem:[#allocation4 + $0x128] sm:$0xff] %vm4274, %v4247
          %4313 = vst.msk [vmem:[#allocation4 + $0x130] sm:$0xff] %vm4274, %v4248
          %4314 = vst.msk [vmem:[#allocation4 + $0x138] sm:$0xff] %vm4274, %v4249
          %4315 = vst.msk [vmem:[#allocation4 + $0x140] sm:$0xff] %vm4274, %v4250
          %4316 = vst.msk [vmem:[#allocation4 + $0x148] sm:$0xff] %vm4274, %v4251
          %4317 = vst.msk [vmem:[#allocation4 + $0x150] sm:$0xff] %vm4274, %v4252
          %4318 = vst.msk [vmem:[#allocation4 + $0x158] sm:$0xff] %vm4274, %v4253
          %4319 = vst.msk [vmem:[#allocation4 + $0x160] sm:$0xff] %vm4274, %v4254
          %4320 = vst.msk [vmem:[#allocation4 + $0x168] sm:$0xff] %vm4274, %v4255
          %4321 = vst.msk [vmem:[#allocation4 + $0x170] sm:$0xff] %vm4274, %v4256
          %4322 = vst.msk [vmem:[#allocation4 + $0x178] sm:$0xff] %vm4274, %v4257
          %4323 = vst.msk [vmem:[#allocation4 + $0x180] sm:$0xff] %vm4274, %v4258
          %4324 = vst.msk [vmem:[#allocation4 + $0x188] sm:$0xff] %vm4274, %v4259
          %4325 = vst.msk [vmem:[#allocation4 + $0x190] sm:$0xff] %vm4274, %v4260
          %4326 = vst.msk [vmem:[#allocation4 + $0x198] sm:$0xff] %vm4274, %v4261
          %4327 = vst.msk [vmem:[#allocation4 + $0x1a0] sm:$0xff] %vm4274, %v4262
          %4328 = vst.msk [vmem:[#allocation4 + $0x1a8] sm:$0xff] %vm4274, %v4263
          %4329 = vst.msk [vmem:[#allocation4 + $0x1b0] sm:$0xff] %vm4274, %v4264
          %4330 = vst.msk [vmem:[#allocation4 + $0x1b8] sm:$0xff] %vm4274, %v4265
          %4331 = vst.msk [vmem:[#allocation4 + $0x1c0] sm:$0xff] %vm4274, %v4266
          %4332 = vst.msk [vmem:[#allocation4 + $0x1c8] sm:$0xff] %vm4274, %v4267
          %4333 = vst.msk [vmem:[#allocation4 + $0x1d0] sm:$0xff] %vm4274, %v4268
          %4334 = vst.msk [vmem:[#allocation4 + $0x1d8] sm:$0xff] %vm4274, %v4269
          %4335 = vst.msk [vmem:[#allocation4 + $0x1e0] sm:$0xff] %vm4274, %v4270
          %4336 = vst.msk [vmem:[#allocation4 + $0x1e8] sm:$0xff] %vm4274, %v4271
          %4337 = vst.msk [vmem:[#allocation4 + $0x1f0] sm:$0xff] %vm4274, %v4272
          %4338 = vst.msk [vmem:[#allocation4 + $0x1f8] sm:$0xff] %vm4274, %v4273
          %v4339 = vpack.c.bf16 %v3829, %v3827
          %v4340 = vpack.c.bf16 %v3833, %v3831
          %v4341 = vpack.c.bf16 %v3837, %v3835
          %v4342 = vpack.c.bf16 %v3841, %v3839
          %v4343 = vpack.c.bf16 %v3845, %v3843
          %v4344 = vpack.c.bf16 %v3849, %v3847
          %v4345 = vpack.c.bf16 %v3853, %v3851
          %v4346 = vpack.c.bf16 %v3857, %v3855
          %v4347 = vpack.c.bf16 %v3861, %v3859
          %v4348 = vpack.c.bf16 %v3865, %v3863
          %v4349 = vpack.c.bf16 %v3869, %v3867
          %v4350 = vpack.c.bf16 %v3873, %v3871
          %v4351 = vpack.c.bf16 %v3877, %v3875
          %v4352 = vpack.c.bf16 %v3881, %v3879
          %v4353 = vpack.c.bf16 %v3885, %v3883
          %v4354 = vpack.c.bf16 %v3889, %v3887
          %v4355 = vpack.c.bf16 %v3893, %v3891
          %v4356 = vpack.c.bf16 %v3897, %v3895
          %v4357 = vpack.c.bf16 %v3901, %v3899
          %v4358 = vpack.c.bf16 %v3905, %v3903
          %v4359 = vpack.c.bf16 %v3909, %v3907
          %v4360 = vpack.c.bf16 %v3913, %v3911
          %v4361 = vpack.c.bf16 %v3917, %v3915
          %v4362 = vpack.c.bf16 %v3921, %v3919
          %v4363 = vpack.c.bf16 %v3925, %v3923
          %v4364 = vpack.c.bf16 %v3929, %v3927
          %v4365 = vpack.c.bf16 %v3933, %v3931
          %v4366 = vpack.c.bf16 %v3937, %v3935
          %v4367 = vpack.c.bf16 %v3941, %v3939
          %v4368 = vpack.c.bf16 %v3945, %v3943
          %v4369 = vpack.c.bf16 %v3949, %v3947
          %v4370 = vpack.c.bf16 %v3953, %v3951
          %v4387 = vunpack.c.l.b16 %v2118
          %v4388 = vunpack.c.l.b16 %v2119
          %v4389 = vunpack.c.l.b16 %v2120
          %v4390 = vunpack.c.l.b16 %v2121
          %v4391 = vunpack.c.l.b16 %v2122
          %v4392 = vunpack.c.l.b16 %v2123
          %v4393 = vunpack.c.l.b16 %v2124
          %v4394 = vunpack.c.l.b16 %v2125
          %v4395 = vunpack.c.l.b16 %v2126
          %v4396 = vunpack.c.l.b16 %v2127
          %v4397 = vunpack.c.l.b16 %v2128
          %v4398 = vunpack.c.l.b16 %v2129
          %v4399 = vunpack.c.l.b16 %v2130
          %v4400 = vunpack.c.l.b16 %v2131
          %v4401 = vunpack.c.l.b16 %v2132
          %v4402 = vunpack.c.l.b16 %v2133
          %v4403 = vpack.c.b16 %v4388, %v4387
          %v4404 = vpack.c.b16 %v4390, %v4389
          %v4405 = vpack.c.b16 %v4392, %v4391
          %v4406 = vpack.c.b16 %v4394, %v4393
          %v4407 = vpack.c.b16 %v4396, %v4395
          %v4408 = vpack.c.b16 %v4398, %v4397
          %v4409 = vpack.c.b16 %v4400, %v4399
          %v4410 = vpack.c.b16 %v4402, %v4401
          %4419 = vmatprep.subr.bf16.mxu0 0
          %4420 = vmatpush1.bf16.msra.mxu0 %v4403
          %4421 = vmatprep.subr.bf16.mxu0 0
          %4422 = vmatpush1.bf16.msra.mxu0 %v4404
          %4423 = vmatprep.subr.bf16.mxu0 0
          %4424 = vmatpush1.bf16.msra.mxu0 %v4405
          %4425 = vmatprep.subr.bf16.mxu0 0
          %4426 = vmatpush1.bf16.msra.mxu0 %v4406
          %4427 = vmatprep.subr.bf16.mxu0 0
          %4428 = vmatpush1.bf16.msra.mxu0 %v4407
          %4429 = vmatprep.subr.bf16.mxu0 0
          %4430 = vmatpush1.bf16.msra.mxu0 %v4408
          %4431 = vmatprep.subr.bf16.mxu0 0
          %4432 = vmatpush1.bf16.msra.mxu0 %v4409
          %4433 = vmatprep.subr.bf16.mxu0 0
          %4434 = vmatpush1.bf16.msra.mxu0 %v4410
          %4435 = vmatprep.subr.bf16.mxu0 0
          %4436 = vmatpush1.bf16.msra.mxu0 0
          %4437 = vmatprep.subr.bf16.mxu0 0
          %4438 = vmatpush1.bf16.msra.mxu0 0
          %4439 = vmatprep.subr.bf16.mxu0 0
          %4440 = vmatpush1.bf16.msra.mxu0 0
          %4441 = vmatprep.subr.bf16.mxu0 0
          %4442 = vmatpush1.bf16.msra.mxu0 0
          %4443 = vmatprep.subr.bf16.mxu0 0
          %4444 = vmatpush1.bf16.msra.mxu0 0
          %4445 = vmatprep.subr.bf16.mxu0 0
          %4446 = vmatpush1.bf16.msra.mxu0 0
          %4447 = vmatprep.subr.bf16.mxu0 0
          %4448 = vmatpush1.bf16.msra.mxu0 0
          %4449 = vmatprep.subr.bf16.mxu0 0
          %4450 = vmatpush1.bf16.msra.mxu0 0
          %4451 = vmatprep.mubr.bf16.mxu0 0
          %4452 = vmatmul.mubr.bf16.gmra.mrb[0].mxu0 %v4339
          %v4453 = vpop.f32.mrb[0].mxu0
          %v4454 = vadd.f32 0.0, %v4453
          %v4455 = vpop.f32.mrb[0].mxu0
          %v4456 = vpop.f32.mrb[0].mxu0
          %v4457 = vadd.f32 0.0, %v4456
          %v4458 = vpop.f32.mrb[0].mxu0
          %4459 = vmatprep.mubr.bf16.mxu0 0
          %4460 = vmatmul.mubr.bf16.gmra.mrb[0].mxu0 %v4340
          %v4461 = vpop.f32.mrb[0].mxu0
          %v4462 = vadd.f32 0.0, %v4461
          %v4463 = vpop.f32.mrb[0].mxu0
          %v4464 = vpop.f32.mrb[0].mxu0
          %v4465 = vadd.f32 0.0, %v4464
          %v4466 = vpop.f32.mrb[0].mxu0
          %4467 = vmatprep.mubr.bf16.mxu0 0
          %4468 = vmatmul.mubr.bf16.gmra.mrb[0].mxu0 %v4341
          %v4469 = vpop.f32.mrb[0].mxu0
          %v4470 = vadd.f32 0.0, %v4469
          %v4471 = vpop.f32.mrb[0].mxu0
          %v4472 = vpop.f32.mrb[0].mxu0
          %v4473 = vadd.f32 0.0, %v4472
          %v4474 = vpop.f32.mrb[0].mxu0
          %4475 = vmatprep.mubr.bf16.mxu0 0
          %4476 = vmatmul.mubr.bf16.gmra.mrb[0].mxu0 %v4342
          %v4477 = vpop.f32.mrb[0].mxu0
          %v4478 = vadd.f32 0.0, %v4477
          %v4479 = vpop.f32.mrb[0].mxu0
          %v4480 = vpop.f32.mrb[0].mxu0
          %v4481 = vadd.f32 0.0, %v4480
          %v4482 = vpop.f32.mrb[0].mxu0
          %4483 = vmatprep.mubr.bf16.mxu0 0
          %4484 = vmatmul.mubr.bf16.gmra.mrb[0].mxu0 %v4343
          %v4485 = vpop.f32.mrb[0].mxu0
          %v4486 = vadd.f32 0.0, %v4485
          %v4487 = vpop.f32.mrb[0].mxu0
          %v4488 = vpop.f32.mrb[0].mxu0
          %v4489 = vadd.f32 0.0, %v4488
          %v4490 = vpop.f32.mrb[0].mxu0
          %4491 = vmatprep.mubr.bf16.mxu0 0
          %4492 = vmatmul.mubr.bf16.gmra.mrb[0].mxu0 %v4344
          %v4493 = vpop.f32.mrb[0].mxu0
          %v4494 = vadd.f32 0.0, %v4493
          %v4495 = vpop.f32.mrb[0].mxu0
          %v4496 = vpop.f32.mrb[0].mxu0
          %v4497 = vadd.f32 0.0, %v4496
          %v4498 = vpop.f32.mrb[0].mxu0
          %4499 = vmatprep.mubr.bf16.mxu0 0
          %4500 = vmatmul.mubr.bf16.gmra.mrb[0].mxu0 %v4345
          %v4501 = vpop.f32.mrb[0].mxu0
          %v4502 = vadd.f32 0.0, %v4501
          %v4503 = vpop.f32.mrb[0].mxu0
          %v4504 = vpop.f32.mrb[0].mxu0
          %v4505 = vadd.f32 0.0, %v4504
          %v4506 = vpop.f32.mrb[0].mxu0
          %4507 = vmatprep.mubr.bf16.mxu0 0
          %4508 = vmatmul.mubr.bf16.gmra.mrb[0].mxu0 %v4346
          %v4509 = vpop.f32.mrb[0].mxu0
          %v4510 = vadd.f32 0.0, %v4509
          %v4511 = vpop.f32.mrb[0].mxu0
          %v4512 = vpop.f32.mrb[0].mxu0
          %v4513 = vadd.f32 0.0, %v4512
          %v4514 = vpop.f32.mrb[0].mxu0
          %4515 = vdwg.mxu0
          %v4532 = vunpack.c.l.b16 %v2134
          %v4533 = vunpack.c.l.b16 %v2135
          %v4534 = vunpack.c.l.b16 %v2136
          %v4535 = vunpack.c.l.b16 %v2137
          %v4536 = vunpack.c.l.b16 %v2138
          %v4537 = vunpack.c.l.b16 %v2139
          %v4538 = vunpack.c.l.b16 %v2140
          %v4539 = vunpack.c.l.b16 %v2141
          %v4540 = vunpack.c.l.b16 %v2142
          %v4541 = vunpack.c.l.b16 %v2143
          %v4542 = vunpack.c.l.b16 %v2144
          %v4543 = vunpack.c.l.b16 %v2145
          %v4544 = vunpack.c.l.b16 %v2146
          %v4545 = vunpack.c.l.b16 %v2147
          %v4546 = vunpack.c.l.b16 %v2148
          %v4547 = vunpack.c.l.b16 %v2149
          %v4548 = vpack.c.b16 %v4533, %v4532
          %v4549 = vpack.c.b16 %v4535, %v4534
          %v4550 = vpack.c.b16 %v4537, %v4536
          %v4551 = vpack.c.b16 %v4539, %v4538
          %v4552 = vpack.c.b16 %v4541, %v4540
          %v4553 = vpack.c.b16 %v4543, %v4542
          %v4554 = vpack.c.b16 %v4545, %v4544
          %v4555 = vpack.c.b16 %v4547, %v4546
          %4564 = vmatprep.subr.bf16.mxu0 0
          %4565 = vmatpush1.bf16.msra.mxu0 %v4548
          %4566 = vmatprep.subr.bf16.mxu0 0
          %4567 = vmatpush1.bf16.msra.mxu0 %v4549
          %4568 = vmatprep.subr.bf16.mxu0 0
          %4569 = vmatpush1.bf16.msra.mxu0 %v4550
          %4570 = vmatprep.subr.bf16.mxu0 0
          %4571 = vmatpush1.bf16.msra.mxu0 %v4551
          %4572 = vmatprep.subr.bf16.mxu0 0
          %4573 = vmatpush1.bf16.msra.mxu0 %v4552
          %4574 = vmatprep.subr.bf16.mxu0 0
          %4575 = vmatpush1.bf16.msra.mxu0 %v4553
          %4576 = vmatprep.subr.bf16.mxu0 0
          %4577 = vmatpush1.bf16.msra.mxu0 %v4554
          %4578 = vmatprep.subr.bf16.mxu0 0
          %4579 = vmatpush1.bf16.msra.mxu0 %v4555
          %4580 = vmatprep.subr.bf16.mxu0 0
          %4581 = vmatpush1.bf16.msra.mxu0 0
          %4582 = vmatprep.subr.bf16.mxu0 0
          %4583 = vmatpush1.bf16.msra.mxu0 0
          %4584 = vmatprep.subr.bf16.mxu0 0
          %4585 = vmatpush1.bf16.msra.mxu0 0
          %4586 = vmatprep.subr.bf16.mxu0 0
          %4587 = vmatpush1.bf16.msra.mxu0 0
          %4588 = vmatprep.subr.bf16.mxu0 0
          %4589 = vmatpush1.bf16.msra.mxu0 0
          %4590 = vmatprep.subr.bf16.mxu0 0
          %4591 = vmatpush1.bf16.msra.mxu0 0
          %4592 = vmatprep.subr.bf16.mxu0 0
          %4593 = vmatpush1.bf16.msra.mxu0 0
          %4594 = vmatprep.subr.bf16.mxu0 0
          %4595 = vmatpush1.bf16.msra.mxu0 0
          %4596 = vmatprep.mubr.bf16.mxu0 0
          %4597 = vmatmul.mubr.bf16.gmra.mrb[0].mxu0 %v4347
          %v4598 = vpop.f32.mrb[0].mxu0
          %v4599 = vadd.f32 0.0, %v4598
          %v4600 = vpop.f32.mrb[0].mxu0
          %v4601 = vpop.f32.mrb[0].mxu0
          %v4602 = vadd.f32 0.0, %v4601
          %v4603 = vpop.f32.mrb[0].mxu0
          %4604 = vmatprep.mubr.bf16.mxu0 0
          %4605 = vmatmul.mubr.bf16.gmra.mrb[0].mxu0 %v4348
          %v4606 = vpop.f32.mrb[0].mxu0
          %v4607 = vadd.f32 0.0, %v4606
          %v4608 = vpop.f32.mrb[0].mxu0
          %v4609 = vpop.f32.mrb[0].mxu0
          %v4610 = vadd.f32 0.0, %v4609
          %v4611 = vpop.f32.mrb[0].mxu0
          %4612 = vmatprep.mubr.bf16.mxu0 0
          %4613 = vmatmul.mubr.bf16.gmra.mrb[0].mxu0 %v4349
          %v4614 = vpop.f32.mrb[0].mxu0
          %v4615 = vadd.f32 0.0, %v4614
          %v4616 = vpop.f32.mrb[0].mxu0
          %v4617 = vpop.f32.mrb[0].mxu0
          %v4618 = vadd.f32 0.0, %v4617
          %v4619 = vpop.f32.mrb[0].mxu0
          %4620 = vmatprep.mubr.bf16.mxu0 0
          %4621 = vmatmul.mubr.bf16.gmra.mrb[0].mxu0 %v4350
          %v4622 = vpop.f32.mrb[0].mxu0
          %v4623 = vadd.f32 0.0, %v4622
          %v4624 = vpop.f32.mrb[0].mxu0
          %v4625 = vpop.f32.mrb[0].mxu0
          %v4626 = vadd.f32 0.0, %v4625
          %v4627 = vpop.f32.mrb[0].mxu0
          %4628 = vmatprep.mubr.bf16.mxu0 0
          %4629 = vmatmul.mubr.bf16.gmra.mrb[0].mxu0 %v4351
          %v4630 = vpop.f32.mrb[0].mxu0
          %v4631 = vadd.f32 0.0, %v4630
          %v4632 = vpop.f32.mrb[0].mxu0
          %v4633 = vpop.f32.mrb[0].mxu0
          %v4634 = vadd.f32 0.0, %v4633
          %v4635 = vpop.f32.mrb[0].mxu0
          %4636 = vmatprep.mubr.bf16.mxu0 0
          %4637 = vmatmul.mubr.bf16.gmra.mrb[0].mxu0 %v4352
          %v4638 = vpop.f32.mrb[0].mxu0
          %v4639 = vadd.f32 0.0, %v4638
          %v4640 = vpop.f32.mrb[0].mxu0
          %v4641 = vpop.f32.mrb[0].mxu0
          %v4642 = vadd.f32 0.0, %v4641
          %v4643 = vpop.f32.mrb[0].mxu0
          %4644 = vmatprep.mubr.bf16.mxu0 0
          %4645 = vmatmul.mubr.bf16.gmra.mrb[0].mxu0 %v4353
          %v4646 = vpop.f32.mrb[0].mxu0
          %v4647 = vadd.f32 0.0, %v4646
          %v4648 = vpop.f32.mrb[0].mxu0
          %v4649 = vpop.f32.mrb[0].mxu0
          %v4650 = vadd.f32 0.0, %v4649
          %v4651 = vpop.f32.mrb[0].mxu0
          %4652 = vmatprep.mubr.bf16.mxu0 0
          %4653 = vmatmul.mubr.bf16.gmra.mrb[0].mxu0 %v4354
          %v4654 = vpop.f32.mrb[0].mxu0
          %v4655 = vadd.f32 0.0, %v4654
          %v4656 = vpop.f32.mrb[0].mxu0
          %v4657 = vpop.f32.mrb[0].mxu0
          %v4658 = vadd.f32 0.0, %v4657
          %v4659 = vpop.f32.mrb[0].mxu0
          %4660 = vdwg.mxu0
          %v4677 = vunpack.c.l.b16 %v2150
          %v4678 = vunpack.c.l.b16 %v2151
          %v4679 = vunpack.c.l.b16 %v2152
          %v4680 = vunpack.c.l.b16 %v2153
          %v4681 = vunpack.c.l.b16 %v2154
          %v4682 = vunpack.c.l.b16 %v2155
          %v4683 = vunpack.c.l.b16 %v2156
          %v4684 = vunpack.c.l.b16 %v2157
          %v4685 = vunpack.c.l.b16 %v2158
          %v4686 = vunpack.c.l.b16 %v2159
          %v4687 = vunpack.c.l.b16 %v2160
          %v4688 = vunpack.c.l.b16 %v2161
          %v4689 = vunpack.c.l.b16 %v2162
          %v4690 = vunpack.c.l.b16 %v2163
          %v4691 = vunpack.c.l.b16 %v2164
          %v4692 = vunpack.c.l.b16 %v2165
          %v4693 = vpack.c.b16 %v4678, %v4677
          %v4694 = vpack.c.b16 %v4680, %v4679
          %v4695 = vpack.c.b16 %v4682, %v4681
          %v4696 = vpack.c.b16 %v4684, %v4683
          %v4697 = vpack.c.b16 %v4686, %v4685
          %v4698 = vpack.c.b16 %v4688, %v4687
          %v4699 = vpack.c.b16 %v4690, %v4689
          %v4700 = vpack.c.b16 %v4692, %v4691
          %4709 = vmatprep.subr.bf16.mxu0 0
          %4710 = vmatpush1.bf16.msra.mxu0 %v4693
          %4711 = vmatprep.subr.bf16.mxu0 0
          %4712 = vmatpush1.bf16.msra.mxu0 %v4694
          %4713 = vmatprep.subr.bf16.mxu0 0
          %4714 = vmatpush1.bf16.msra.mxu0 %v4695
          %4715 = vmatprep.subr.bf16.mxu0 0
          %4716 = vmatpush1.bf16.msra.mxu0 %v4696
          %4717 = vmatprep.subr.bf16.mxu0 0
          %4718 = vmatpush1.bf16.msra.mxu0 %v4697
          %4719 = vmatprep.subr.bf16.mxu0 0
          %4720 = vmatpush1.bf16.msra.mxu0 %v4698
          %4721 = vmatprep.subr.bf16.mxu0 0
          %4722 = vmatpush1.bf16.msra.mxu0 %v4699
          %4723 = vmatprep.subr.bf16.mxu0 0
          %4724 = vmatpush1.bf16.msra.mxu0 %v4700
          %4725 = vmatprep.subr.bf16.mxu0 0
          %4726 = vmatpush1.bf16.msra.mxu0 0
          %4727 = vmatprep.subr.bf16.mxu0 0
          %4728 = vmatpush1.bf16.msra.mxu0 0
          %4729 = vmatprep.subr.bf16.mxu0 0
          %4730 = vmatpush1.bf16.msra.mxu0 0
          %4731 = vmatprep.subr.bf16.mxu0 0
          %4732 = vmatpush1.bf16.msra.mxu0 0
          %4733 = vmatprep.subr.bf16.mxu0 0
          %4734 = vmatpush1.bf16.msra.mxu0 0
          %4735 = vmatprep.subr.bf16.mxu0 0
          %4736 = vmatpush1.bf16.msra.mxu0 0
          %4737 = vmatprep.subr.bf16.mxu0 0
          %4738 = vmatpush1.bf16.msra.mxu0 0
          %4739 = vmatprep.subr.bf16.mxu0 0
          %4740 = vmatpush1.bf16.msra.mxu0 0
          %4741 = vmatprep.mubr.bf16.mxu0 0
          %4742 = vmatmul.mubr.bf16.gmra.mrb[0].mxu0 %v4355
          %v4743 = vpop.f32.mrb[0].mxu0
          %v4744 = vadd.f32 0.0, %v4743
          %v4745 = vpop.f32.mrb[0].mxu0
          %v4746 = vpop.f32.mrb[0].mxu0
          %v4747 = vadd.f32 0.0, %v4746
          %v4748 = vpop.f32.mrb[0].mxu0
          %4749 = vmatprep.mubr.bf16.mxu0 0
          %4750 = vmatmul.mubr.bf16.gmra.mrb[0].mxu0 %v4356
          %v4751 = vpop.f32.mrb[0].mxu0
          %v4752 = vadd.f32 0.0, %v4751
          %v4753 = vpop.f32.mrb[0].mxu0
          %v4754 = vpop.f32.mrb[0].mxu0
          %v4755 = vadd.f32 0.0, %v4754
          %v4756 = vpop.f32.mrb[0].mxu0
          %4757 = vmatprep.mubr.bf16.mxu0 0
          %4758 = vmatmul.mubr.bf16.gmra.mrb[0].mxu0 %v4357
          %v4759 = vpop.f32.mrb[0].mxu0
          %v4760 = vadd.f32 0.0, %v4759
          %v4761 = vpop.f32.mrb[0].mxu0
          %v4762 = vpop.f32.mrb[0].mxu0
          %v4763 = vadd.f32 0.0, %v4762
          %v4764 = vpop.f32.mrb[0].mxu0
          %4765 = vmatprep.mubr.bf16.mxu0 0
          %4766 = vmatmul.mubr.bf16.gmra.mrb[0].mxu0 %v4358
          %v4767 = vpop.f32.mrb[0].mxu0
          %v4768 = vadd.f32 0.0, %v4767
          %v4769 = vpop.f32.mrb[0].mxu0
          %v4770 = vpop.f32.mrb[0].mxu0
          %v4771 = vadd.f32 0.0, %v4770
          %v4772 = vpop.f32.mrb[0].mxu0
          %4773 = vmatprep.mubr.bf16.mxu0 0
          %4774 = vmatmul.mubr.bf16.gmra.mrb[0].mxu0 %v4359
          %v4775 = vpop.f32.mrb[0].mxu0
          %v4776 = vadd.f32 0.0, %v4775
          %v4777 = vpop.f32.mrb[0].mxu0
          %v4778 = vpop.f32.mrb[0].mxu0
          %v4779 = vadd.f32 0.0, %v4778
          %v4780 = vpop.f32.mrb[0].mxu0
          %4781 = vmatprep.mubr.bf16.mxu0 0
          %4782 = vmatmul.mubr.bf16.gmra.mrb[0].mxu0 %v4360
          %v4783 = vpop.f32.mrb[0].mxu0
          %v4784 = vadd.f32 0.0, %v4783
          %v4785 = vpop.f32.mrb[0].mxu0
          %v4786 = vpop.f32.mrb[0].mxu0
          %v4787 = vadd.f32 0.0, %v4786
          %v4788 = vpop.f32.mrb[0].mxu0
          %4789 = vmatprep.mubr.bf16.mxu0 0
          %4790 = vmatmul.mubr.bf16.gmra.mrb[0].mxu0 %v4361
          %v4791 = vpop.f32.mrb[0].mxu0
          %v4792 = vadd.f32 0.0, %v4791
          %v4793 = vpop.f32.mrb[0].mxu0
          %v4794 = vpop.f32.mrb[0].mxu0
          %v4795 = vadd.f32 0.0, %v4794
          %v4796 = vpop.f32.mrb[0].mxu0
          %4797 = vmatprep.mubr.bf16.mxu0 0
          %4798 = vmatmul.mubr.bf16.gmra.mrb[0].mxu0 %v4362
          %v4799 = vpop.f32.mrb[0].mxu0
          %v4800 = vadd.f32 0.0, %v4799
          %v4801 = vpop.f32.mrb[0].mxu0
          %v4802 = vpop.f32.mrb[0].mxu0
          %v4803 = vadd.f32 0.0, %v4802
          %v4804 = vpop.f32.mrb[0].mxu0
          %4805 = vdwg.mxu0
          %v4822 = vunpack.c.l.b16 %v2166
          %v4823 = vunpack.c.l.b16 %v2167
          %v4824 = vunpack.c.l.b16 %v2168
          %v4825 = vunpack.c.l.b16 %v2169
          %v4826 = vunpack.c.l.b16 %v2170
          %v4827 = vunpack.c.l.b16 %v2171
          %v4828 = vunpack.c.l.b16 %v2172
          %v4829 = vunpack.c.l.b16 %v2173
          %v4830 = vunpack.c.l.b16 %v2174
          %v4831 = vunpack.c.l.b16 %v2175
          %v4832 = vunpack.c.l.b16 %v2176
          %v4833 = vunpack.c.l.b16 %v2177
          %v4834 = vunpack.c.l.b16 %v2178
          %v4835 = vunpack.c.l.b16 %v2179
          %v4836 = vunpack.c.l.b16 %v2180
          %v4837 = vunpack.c.l.b16 %v2181
          %v4838 = vpack.c.b16 %v4823, %v4822
          %v4839 = vpack.c.b16 %v4825, %v4824
          %v4840 = vpack.c.b16 %v4827, %v4826
          %v4841 = vpack.c.b16 %v4829, %v4828
          %v4842 = vpack.c.b16 %v4831, %v4830
          %v4843 = vpack.c.b16 %v4833, %v4832
          %v4844 = vpack.c.b16 %v4835, %v4834
          %v4845 = vpack.c.b16 %v4837, %v4836
          %4854 = vmatprep.subr.bf16.mxu0 0
          %4855 = vmatpush1.bf16.msra.mxu0 %v4838
          %4856 = vmatprep.subr.bf16.mxu0 0
          %4857 = vmatpush1.bf16.msra.mxu0 %v4839
          %4858 = vmatprep.subr.bf16.mxu0 0
          %4859 = vmatpush1.bf16.msra.mxu0 %v4840
          %4860 = vmatprep.subr.bf16.mxu0 0
          %4861 = vmatpush1.bf16.msra.mxu0 %v4841
          %4862 = vmatprep.subr.bf16.mxu0 0
          %4863 = vmatpush1.bf16.msra.mxu0 %v4842
          %4864 = vmatprep.subr.bf16.mxu0 0
          %4865 = vmatpush1.bf16.msra.mxu0 %v4843
          %4866 = vmatprep.subr.bf16.mxu0 0
          %4867 = vmatpush1.bf16.msra.mxu0 %v4844
          %4868 = vmatprep.subr.bf16.mxu0 0
          %4869 = vmatpush1.bf16.msra.mxu0 %v4845
          %4870 = vmatprep.subr.bf16.mxu0 0
          %4871 = vmatpush1.bf16.msra.mxu0 0
          %4872 = vmatprep.subr.bf16.mxu0 0
          %4873 = vmatpush1.bf16.msra.mxu0 0
          %4874 = vmatprep.subr.bf16.mxu0 0
          %4875 = vmatpush1.bf16.msra.mxu0 0
          %4876 = vmatprep.subr.bf16.mxu0 0
          %4877 = vmatpush1.bf16.msra.mxu0 0
          %4878 = vmatprep.subr.bf16.mxu0 0
          %4879 = vmatpush1.bf16.msra.mxu0 0
          %4880 = vmatprep.subr.bf16.mxu0 0
          %4881 = vmatpush1.bf16.msra.mxu0 0
          %4882 = vmatprep.subr.bf16.mxu0 0
          %4883 = vmatpush1.bf16.msra.mxu0 0
          %4884 = vmatprep.subr.bf16.mxu0 0
          %4885 = vmatpush1.bf16.msra.mxu0 0
          %4886 = vmatprep.mubr.bf16.mxu0 0
          %4887 = vmatmul.mubr.bf16.gmra.mrb[0].mxu0 %v4363
          %v4888 = vpop.f32.mrb[0].mxu0
          %v4889 = vadd.f32 0.0, %v4888
          %v4890 = vpop.f32.mrb[0].mxu0
          %v4891 = vpop.f32.mrb[0].mxu0
          %v4892 = vadd.f32 0.0, %v4891
          %v4893 = vpop.f32.mrb[0].mxu0
          %4894 = vmatprep.mubr.bf16.mxu0 0
          %4895 = vmatmul.mubr.bf16.gmra.mrb[0].mxu0 %v4364
          %v4896 = vpop.f32.mrb[0].mxu0
          %v4897 = vadd.f32 0.0, %v4896
          %v4898 = vpop.f32.mrb[0].mxu0
          %v4899 = vpop.f32.mrb[0].mxu0
          %v4900 = vadd.f32 0.0, %v4899
          %v4901 = vpop.f32.mrb[0].mxu0
          %4902 = vmatprep.mubr.bf16.mxu0 0
          %4903 = vmatmul.mubr.bf16.gmra.mrb[0].mxu0 %v4365
          %v4904 = vpop.f32.mrb[0].mxu0
          %v4905 = vadd.f32 0.0, %v4904
          %v4906 = vpop.f32.mrb[0].mxu0
          %v4907 = vpop.f32.mrb[0].mxu0
          %v4908 = vadd.f32 0.0, %v4907
          %v4909 = vpop.f32.mrb[0].mxu0
          %4910 = vmatprep.mubr.bf16.mxu0 0
          %4911 = vmatmul.mubr.bf16.gmra.mrb[0].mxu0 %v4366
          %v4912 = vpop.f32.mrb[0].mxu0
          %v4913 = vadd.f32 0.0, %v4912
          %v4914 = vpop.f32.mrb[0].mxu0
          %v4915 = vpop.f32.mrb[0].mxu0
          %v4916 = vadd.f32 0.0, %v4915
          %v4917 = vpop.f32.mrb[0].mxu0
          %4918 = vmatprep.mubr.bf16.mxu0 0
          %4919 = vmatmul.mubr.bf16.gmra.mrb[0].mxu0 %v4367
          %v4920 = vpop.f32.mrb[0].mxu0
          %v4921 = vadd.f32 0.0, %v4920
          %v4922 = vpop.f32.mrb[0].mxu0
          %v4923 = vpop.f32.mrb[0].mxu0
          %v4924 = vadd.f32 0.0, %v4923
          %v4925 = vpop.f32.mrb[0].mxu0
          %4926 = vmatprep.mubr.bf16.mxu0 0
          %4927 = vmatmul.mubr.bf16.gmra.mrb[0].mxu0 %v4368
          %v4928 = vpop.f32.mrb[0].mxu0
          %v4929 = vadd.f32 0.0, %v4928
          %v4930 = vpop.f32.mrb[0].mxu0
          %v4931 = vpop.f32.mrb[0].mxu0
          %v4932 = vadd.f32 0.0, %v4931
          %v4933 = vpop.f32.mrb[0].mxu0
          %4934 = vmatprep.mubr.bf16.mxu0 0
          %4935 = vmatmul.mubr.bf16.gmra.mrb[0].mxu0 %v4369
          %v4936 = vpop.f32.mrb[0].mxu0
          %v4937 = vadd.f32 0.0, %v4936
          %v4938 = vpop.f32.mrb[0].mxu0
          %v4939 = vpop.f32.mrb[0].mxu0
          %v4940 = vadd.f32 0.0, %v4939
          %v4941 = vpop.f32.mrb[0].mxu0
          %4942 = vmatprep.mubr.bf16.mxu0 0
          %4943 = vmatmul.mubr.bf16.gmra.mrb[0].mxu0 %v4370
          %v4944 = vpop.f32.mrb[0].mxu0
          %v4945 = vadd.f32 0.0, %v4944
          %v4946 = vpop.f32.mrb[0].mxu0
          %v4947 = vpop.f32.mrb[0].mxu0
          %v4948 = vadd.f32 0.0, %v4947
          %v4949 = vpop.f32.mrb[0].mxu0
          %4950 = vdwg.mxu0
          %v4951 = vld [vmem:[#allocation5] sm:$0xff]
          %v4952 = vld [vmem:[#allocation5 + $0x8] sm:$0xff]
          %v4953 = vld [vmem:[#allocation5 + $0x10] sm:$0xff]
          %v4954 = vld [vmem:[#allocation5 + $0x18] sm:$0xff]
          %v4955 = vld [vmem:[#allocation5 + $0x20] sm:$0xff]
          %v4956 = vld [vmem:[#allocation5 + $0x28] sm:$0xff]
          %v4957 = vld [vmem:[#allocation5 + $0x30] sm:$0xff]
          %v4958 = vld [vmem:[#allocation5 + $0x38] sm:$0xff]
          %v4959 = vld [vmem:[#allocation5 + $0x40] sm:$0xff]
          %v4960 = vld [vmem:[#allocation5 + $0x48] sm:$0xff]
          %v4961 = vld [vmem:[#allocation5 + $0x50] sm:$0xff]
          %v4962 = vld [vmem:[#allocation5 + $0x58] sm:$0xff]
          %v4963 = vld [vmem:[#allocation5 + $0x60] sm:$0xff]
          %v4964 = vld [vmem:[#allocation5 + $0x68] sm:$0xff]
          %v4965 = vld [vmem:[#allocation5 + $0x70] sm:$0xff]
          %v4966 = vld [vmem:[#allocation5 + $0x78] sm:$0xff]
          %v4967 = vld [vmem:[#allocation5 + $0x80] sm:$0xff]
          %v4968 = vld [vmem:[#allocation5 + $0x88] sm:$0xff]
          %v4969 = vld [vmem:[#allocation5 + $0x90] sm:$0xff]
          %v4970 = vld [vmem:[#allocation5 + $0x98] sm:$0xff]
          %v4971 = vld [vmem:[#allocation5 + $0xa0] sm:$0xff]
          %v4972 = vld [vmem:[#allocation5 + $0xa8] sm:$0xff]
          %v4973 = vld [vmem:[#allocation5 + $0xb0] sm:$0xff]
          %v4974 = vld [vmem:[#allocation5 + $0xb8] sm:$0xff]
          %v4975 = vld [vmem:[#allocation5 + $0xc0] sm:$0xff]
          %v4976 = vld [vmem:[#allocation5 + $0xc8] sm:$0xff]
          %v4977 = vld [vmem:[#allocation5 + $0xd0] sm:$0xff]
          %v4978 = vld [vmem:[#allocation5 + $0xd8] sm:$0xff]
          %v4979 = vld [vmem:[#allocation5 + $0xe0] sm:$0xff]
          %v4980 = vld [vmem:[#allocation5 + $0xe8] sm:$0xff]
          %v4981 = vld [vmem:[#allocation5 + $0xf0] sm:$0xff]
          %v4982 = vld [vmem:[#allocation5 + $0xf8] sm:$0xff]
          %v4983 = vld [vmem:[#allocation5 + $0x100] sm:$0xff]
          %v4984 = vld [vmem:[#allocation5 + $0x108] sm:$0xff]
          %v4985 = vld [vmem:[#allocation5 + $0x110] sm:$0xff]
          %v4986 = vld [vmem:[#allocation5 + $0x118] sm:$0xff]
          %v4987 = vld [vmem:[#allocation5 + $0x120] sm:$0xff]
          %v4988 = vld [vmem:[#allocation5 + $0x128] sm:$0xff]
          %v4989 = vld [vmem:[#allocation5 + $0x130] sm:$0xff]
          %v4990 = vld [vmem:[#allocation5 + $0x138] sm:$0xff]
          %v4991 = vld [vmem:[#allocation5 + $0x140] sm:$0xff]
          %v4992 = vld [vmem:[#allocation5 + $0x148] sm:$0xff]
          %v4993 = vld [vmem:[#allocation5 + $0x150] sm:$0xff]
          %v4994 = vld [vmem:[#allocation5 + $0x158] sm:$0xff]
          %v4995 = vld [vmem:[#allocation5 + $0x160] sm:$0xff]
          %v4996 = vld [vmem:[#allocation5 + $0x168] sm:$0xff]
          %v4997 = vld [vmem:[#allocation5 + $0x170] sm:$0xff]
          %v4998 = vld [vmem:[#allocation5 + $0x178] sm:$0xff]
          %v4999 = vld [vmem:[#allocation5 + $0x180] sm:$0xff]
          %v5000 = vld [vmem:[#allocation5 + $0x188] sm:$0xff]
          %v5001 = vld [vmem:[#allocation5 + $0x190] sm:$0xff]
          %v5002 = vld [vmem:[#allocation5 + $0x198] sm:$0xff]
          %v5003 = vld [vmem:[#allocation5 + $0x1a0] sm:$0xff]
          %v5004 = vld [vmem:[#allocation5 + $0x1a8] sm:$0xff]
          %v5005 = vld [vmem:[#allocation5 + $0x1b0] sm:$0xff]
          %v5006 = vld [vmem:[#allocation5 + $0x1b8] sm:$0xff]
          %v5007 = vld [vmem:[#allocation5 + $0x1c0] sm:$0xff]
          %v5008 = vld [vmem:[#allocation5 + $0x1c8] sm:$0xff]
          %v5009 = vld [vmem:[#allocation5 + $0x1d0] sm:$0xff]
          %v5010 = vld [vmem:[#allocation5 + $0x1d8] sm:$0xff]
          %v5011 = vld [vmem:[#allocation5 + $0x1e0] sm:$0xff]
          %v5012 = vld [vmem:[#allocation5 + $0x1e8] sm:$0xff]
          %v5013 = vld [vmem:[#allocation5 + $0x1f0] sm:$0xff]
          %v5014 = vld [vmem:[#allocation5 + $0x1f8] sm:$0xff]
          %5016 = vset.pattern.permute.xlu0 0
          %5017 = vperm.xlu0 %5016, %v3315
          %v5018 = vpop.permute.xlu0 %5017
          %5021 = vset.pattern.permute.xlu0 0
          %5022 = vperm.xlu0 %5021, %v3317
          %v5023 = vpop.permute.xlu0 %5022
          %5026 = vset.pattern.permute.xlu0 0
          %5027 = vperm.xlu0 %5026, %v3319
          %v5028 = vpop.permute.xlu0 %5027
          %5031 = vset.pattern.permute.xlu0 0
          %5032 = vperm.xlu0 %5031, %v3321
          %v5033 = vpop.permute.xlu0 %5032
          %5036 = vset.pattern.permute.xlu0 0
          %5037 = vperm.xlu0 %5036, %v3323
          %v5038 = vpop.permute.xlu0 %5037
          %5041 = vset.pattern.permute.xlu0 0
          %5042 = vperm.xlu0 %5041, %v3325
          %v5043 = vpop.permute.xlu0 %5042
          %5046 = vset.pattern.permute.xlu0 0
          %5047 = vperm.xlu0 %5046, %v3327
          %v5048 = vpop.permute.xlu0 %5047
          %5051 = vset.pattern.permute.xlu0 0
          %5052 = vperm.xlu0 %5051, %v3329
          %v5053 = vpop.permute.xlu0 %5052
          %5056 = vset.pattern.permute.xlu0 0
          %5057 = vperm.xlu0 %5056, %v3331
          %v5058 = vpop.permute.xlu0 %5057
          %5061 = vset.pattern.permute.xlu0 0
          %5062 = vperm.xlu0 %5061, %v3333
          %v5063 = vpop.permute.xlu0 %5062
          %5066 = vset.pattern.permute.xlu0 0
          %5067 = vperm.xlu0 %5066, %v3335
          %v5068 = vpop.permute.xlu0 %5067
          %5071 = vset.pattern.permute.xlu0 0
          %5072 = vperm.xlu0 %5071, %v3337
          %v5073 = vpop.permute.xlu0 %5072
          %5076 = vset.pattern.permute.xlu0 0
          %5077 = vperm.xlu0 %5076, %v3339
          %v5078 = vpop.permute.xlu0 %5077
          %5081 = vset.pattern.permute.xlu0 0
          %5082 = vperm.xlu0 %5081, %v3341
          %v5083 = vpop.permute.xlu0 %5082
          %5086 = vset.pattern.permute.xlu0 0
          %5087 = vperm.xlu0 %5086, %v3343
          %v5088 = vpop.permute.xlu0 %5087
          %5091 = vset.pattern.permute.xlu0 0
          %5092 = vperm.xlu0 %5091, %v3345
          %v5093 = vpop.permute.xlu0 %5092
          %5096 = vset.pattern.permute.xlu0 0
          %5097 = vperm.xlu0 %5096, %v3347
          %v5098 = vpop.permute.xlu0 %5097
          %5101 = vset.pattern.permute.xlu0 0
          %5102 = vperm.xlu0 %5101, %v3349
          %v5103 = vpop.permute.xlu0 %5102
          %5106 = vset.pattern.permute.xlu0 0
          %5107 = vperm.xlu0 %5106, %v3351
          %v5108 = vpop.permute.xlu0 %5107
          %5111 = vset.pattern.permute.xlu0 0
          %5112 = vperm.xlu0 %5111, %v3353
          %v5113 = vpop.permute.xlu0 %5112
          %5116 = vset.pattern.permute.xlu0 0
          %5117 = vperm.xlu0 %5116, %v3355
          %v5118 = vpop.permute.xlu0 %5117
          %5121 = vset.pattern.permute.xlu0 0
          %5122 = vperm.xlu0 %5121, %v3357
          %v5123 = vpop.permute.xlu0 %5122
          %5126 = vset.pattern.permute.xlu0 0
          %5127 = vperm.xlu0 %5126, %v3359
          %v5128 = vpop.permute.xlu0 %5127
          %5131 = vset.pattern.permute.xlu0 0
          %5132 = vperm.xlu0 %5131, %v3361
          %v5133 = vpop.permute.xlu0 %5132
          %5136 = vset.pattern.permute.xlu0 0
          %5137 = vperm.xlu0 %5136, %v3363
          %v5138 = vpop.permute.xlu0 %5137
          %5141 = vset.pattern.permute.xlu0 0
          %5142 = vperm.xlu0 %5141, %v3365
          %v5143 = vpop.permute.xlu0 %5142
          %5146 = vset.pattern.permute.xlu0 0
          %5147 = vperm.xlu0 %5146, %v3367
          %v5148 = vpop.permute.xlu0 %5147
          %5151 = vset.pattern.permute.xlu0 0
          %5152 = vperm.xlu0 %5151, %v3369
          %v5153 = vpop.permute.xlu0 %5152
          %5156 = vset.pattern.permute.xlu0 0
          %5157 = vperm.xlu0 %5156, %v3371
          %v5158 = vpop.permute.xlu0 %5157
          %5161 = vset.pattern.permute.xlu0 0
          %5162 = vperm.xlu0 %5161, %v3373
          %v5163 = vpop.permute.xlu0 %5162
          %5166 = vset.pattern.permute.xlu0 0
          %5167 = vperm.xlu0 %5166, %v3375
          %v5168 = vpop.permute.xlu0 %5167
          %5171 = vset.pattern.permute.xlu0 0
          %5172 = vperm.xlu0 %5171, %v3377
          %v5173 = vpop.permute.xlu0 %5172
          %5176 = vset.pattern.permute.xlu0 0
          %5177 = vperm.xlu0 %5176, %v3379
          %v5178 = vpop.permute.xlu0 %5177
          %5181 = vset.pattern.permute.xlu0 0
          %5182 = vperm.xlu0 %5181, %v3381
          %v5183 = vpop.permute.xlu0 %5182
          %5186 = vset.pattern.permute.xlu0 0
          %5187 = vperm.xlu0 %5186, %v3383
          %v5188 = vpop.permute.xlu0 %5187
          %5191 = vset.pattern.permute.xlu0 0
          %5192 = vperm.xlu0 %5191, %v3385
          %v5193 = vpop.permute.xlu0 %5192
          %5196 = vset.pattern.permute.xlu0 0
          %5197 = vperm.xlu0 %5196, %v3387
          %v5198 = vpop.permute.xlu0 %5197
          %5201 = vset.pattern.permute.xlu0 0
          %5202 = vperm.xlu0 %5201, %v3389
          %v5203 = vpop.permute.xlu0 %5202
          %5206 = vset.pattern.permute.xlu0 0
          %5207 = vperm.xlu0 %5206, %v3391
          %v5208 = vpop.permute.xlu0 %5207
          %5211 = vset.pattern.permute.xlu0 0
          %5212 = vperm.xlu0 %5211, %v3393
          %v5213 = vpop.permute.xlu0 %5212
          %5216 = vset.pattern.permute.xlu0 0
          %5217 = vperm.xlu0 %5216, %v3395
          %v5218 = vpop.permute.xlu0 %5217
          %5221 = vset.pattern.permute.xlu0 0
          %5222 = vperm.xlu0 %5221, %v3397
          %v5223 = vpop.permute.xlu0 %5222
          %5226 = vset.pattern.permute.xlu0 0
          %5227 = vperm.xlu0 %5226, %v3399
          %v5228 = vpop.permute.xlu0 %5227
          %5231 = vset.pattern.permute.xlu0 0
          %5232 = vperm.xlu0 %5231, %v3401
          %v5233 = vpop.permute.xlu0 %5232
          %5236 = vset.pattern.permute.xlu0 0
          %5237 = vperm.xlu0 %5236, %v3403
          %v5238 = vpop.permute.xlu0 %5237
          %5241 = vset.pattern.permute.xlu0 0
          %5242 = vperm.xlu0 %5241, %v3405
          %v5243 = vpop.permute.xlu0 %5242
          %5246 = vset.pattern.permute.xlu0 0
          %5247 = vperm.xlu0 %5246, %v3407
          %v5248 = vpop.permute.xlu0 %5247
          %5251 = vset.pattern.permute.xlu0 0
          %5252 = vperm.xlu0 %5251, %v3409
          %v5253 = vpop.permute.xlu0 %5252
          %5256 = vset.pattern.permute.xlu0 0
          %5257 = vperm.xlu0 %5256, %v3411
          %v5258 = vpop.permute.xlu0 %5257
          %5261 = vset.pattern.permute.xlu0 0
          %5262 = vperm.xlu0 %5261, %v3413
          %v5263 = vpop.permute.xlu0 %5262
          %5266 = vset.pattern.permute.xlu0 0
          %5267 = vperm.xlu0 %5266, %v3415
          %v5268 = vpop.permute.xlu0 %5267
          %5271 = vset.pattern.permute.xlu0 0
          %5272 = vperm.xlu0 %5271, %v3417
          %v5273 = vpop.permute.xlu0 %5272
          %5276 = vset.pattern.permute.xlu0 0
          %5277 = vperm.xlu0 %5276, %v3419
          %v5278 = vpop.permute.xlu0 %5277
          %5281 = vset.pattern.permute.xlu0 0
          %5282 = vperm.xlu0 %5281, %v3421
          %v5283 = vpop.permute.xlu0 %5282
          %5286 = vset.pattern.permute.xlu0 0
          %5287 = vperm.xlu0 %5286, %v3423
          %v5288 = vpop.permute.xlu0 %5287
          %5291 = vset.pattern.permute.xlu0 0
          %5292 = vperm.xlu0 %5291, %v3425
          %v5293 = vpop.permute.xlu0 %5292
          %5296 = vset.pattern.permute.xlu0 0
          %5297 = vperm.xlu0 %5296, %v3427
          %v5298 = vpop.permute.xlu0 %5297
          %5301 = vset.pattern.permute.xlu0 0
          %5302 = vperm.xlu0 %5301, %v3429
          %v5303 = vpop.permute.xlu0 %5302
          %5306 = vset.pattern.permute.xlu0 0
          %5307 = vperm.xlu0 %5306, %v3431
          %v5308 = vpop.permute.xlu0 %5307
          %5311 = vset.pattern.permute.xlu0 0
          %5312 = vperm.xlu0 %5311, %v3433
          %v5313 = vpop.permute.xlu0 %5312
          %5316 = vset.pattern.permute.xlu0 0
          %5317 = vperm.xlu0 %5316, %v3435
          %v5318 = vpop.permute.xlu0 %5317
          %5321 = vset.pattern.permute.xlu0 0
          %5322 = vperm.xlu0 %5321, %v3437
          %v5323 = vpop.permute.xlu0 %5322
          %5326 = vset.pattern.permute.xlu0 0
          %5327 = vperm.xlu0 %5326, %v3439
          %v5328 = vpop.permute.xlu0 %5327
          %5331 = vset.pattern.permute.xlu0 0
          %5332 = vperm.xlu0 %5331, %v3441
          %v5333 = vpop.permute.xlu0 %5332
          %v5335 = vmul.f32 %v5018, %v4951
          %v5336 = vmul.f32 %v5023, %v4952
          %v5337 = vmul.f32 %v5028, %v4953
          %v5338 = vmul.f32 %v5033, %v4954
          %v5339 = vmul.f32 %v5038, %v4955
          %v5340 = vmul.f32 %v5043, %v4956
          %v5341 = vmul.f32 %v5048, %v4957
          %v5342 = vmul.f32 %v5053, %v4958
          %v5343 = vmul.f32 %v5058, %v4959
          %v5344 = vmul.f32 %v5063, %v4960
          %v5345 = vmul.f32 %v5068, %v4961
          %v5346 = vmul.f32 %v5073, %v4962
          %v5347 = vmul.f32 %v5078, %v4963
          %v5348 = vmul.f32 %v5083, %v4964
          %v5349 = vmul.f32 %v5088, %v4965
          %v5350 = vmul.f32 %v5093, %v4966
          %v5351 = vmul.f32 %v5098, %v4967
          %v5352 = vmul.f32 %v5103, %v4968
          %v5353 = vmul.f32 %v5108, %v4969
          %v5354 = vmul.f32 %v5113, %v4970
          %v5355 = vmul.f32 %v5118, %v4971
          %v5356 = vmul.f32 %v5123, %v4972
          %v5357 = vmul.f32 %v5128, %v4973
          %v5358 = vmul.f32 %v5133, %v4974
          %v5359 = vmul.f32 %v5138, %v4975
          %v5360 = vmul.f32 %v5143, %v4976
          %v5361 = vmul.f32 %v5148, %v4977
          %v5362 = vmul.f32 %v5153, %v4978
          %v5363 = vmul.f32 %v5158, %v4979
          %v5364 = vmul.f32 %v5163, %v4980
          %v5365 = vmul.f32 %v5168, %v4981
          %v5366 = vmul.f32 %v5173, %v4982
          %v5367 = vmul.f32 %v5178, %v4983
          %v5368 = vmul.f32 %v5183, %v4984
          %v5369 = vmul.f32 %v5188, %v4985
          %v5370 = vmul.f32 %v5193, %v4986
          %v5371 = vmul.f32 %v5198, %v4987
          %v5372 = vmul.f32 %v5203, %v4988
          %v5373 = vmul.f32 %v5208, %v4989
          %v5374 = vmul.f32 %v5213, %v4990
          %v5375 = vmul.f32 %v5218, %v4991
          %v5376 = vmul.f32 %v5223, %v4992
          %v5377 = vmul.f32 %v5228, %v4993
          %v5378 = vmul.f32 %v5233, %v4994
          %v5379 = vmul.f32 %v5238, %v4995
          %v5380 = vmul.f32 %v5243, %v4996
          %v5381 = vmul.f32 %v5248, %v4997
          %v5382 = vmul.f32 %v5253, %v4998
          %v5383 = vmul.f32 %v5258, %v4999
          %v5384 = vmul.f32 %v5263, %v5000
          %v5385 = vmul.f32 %v5268, %v5001
          %v5386 = vmul.f32 %v5273, %v5002
          %v5387 = vmul.f32 %v5278, %v5003
          %v5388 = vmul.f32 %v5283, %v5004
          %v5389 = vmul.f32 %v5288, %v5005
          %v5390 = vmul.f32 %v5293, %v5006
          %v5391 = vmul.f32 %v5298, %v5007
          %v5392 = vmul.f32 %v5303, %v5008
          %v5393 = vmul.f32 %v5308, %v5009
          %v5394 = vmul.f32 %v5313, %v5010
          %v5395 = vmul.f32 %v5318, %v5011
          %v5396 = vmul.f32 %v5323, %v5012
          %v5397 = vmul.f32 %v5328, %v5013
          %v5398 = vmul.f32 %v5333, %v5014
          %v5399 = vadd.f32 %v5335, %v4454
          %v5400 = vadd.f32 %v5336, %v4457
          %v5401 = vadd.f32 %v5337, %v4462
          %v5402 = vadd.f32 %v5338, %v4465
          %v5403 = vadd.f32 %v5339, %v4470
          %v5404 = vadd.f32 %v5340, %v4473
          %v5405 = vadd.f32 %v5341, %v4478
          %v5406 = vadd.f32 %v5342, %v4481
          %v5407 = vadd.f32 %v5343, %v4486
          %v5408 = vadd.f32 %v5344, %v4489
          %v5409 = vadd.f32 %v5345, %v4494
          %v5410 = vadd.f32 %v5346, %v4497
          %v5411 = vadd.f32 %v5347, %v4502
          %v5412 = vadd.f32 %v5348, %v4505
          %v5413 = vadd.f32 %v5349, %v4510
          %v5414 = vadd.f32 %v5350, %v4513
          %v5415 = vadd.f32 %v5351, %v4599
          %v5416 = vadd.f32 %v5352, %v4602
          %v5417 = vadd.f32 %v5353, %v4607
          %v5418 = vadd.f32 %v5354, %v4610
          %v5419 = vadd.f32 %v5355, %v4615
          %v5420 = vadd.f32 %v5356, %v4618
          %v5421 = vadd.f32 %v5357, %v4623
          %v5422 = vadd.f32 %v5358, %v4626
          %v5423 = vadd.f32 %v5359, %v4631
          %v5424 = vadd.f32 %v5360, %v4634
          %v5425 = vadd.f32 %v5361, %v4639
          %v5426 = vadd.f32 %v5362, %v4642
          %v5427 = vadd.f32 %v5363, %v4647
          %v5428 = vadd.f32 %v5364, %v4650
          %v5429 = vadd.f32 %v5365, %v4655
          %v5430 = vadd.f32 %v5366, %v4658
          %v5431 = vadd.f32 %v5367, %v4744
          %v5432 = vadd.f32 %v5368, %v4747
          %v5433 = vadd.f32 %v5369, %v4752
          %v5434 = vadd.f32 %v5370, %v4755
          %v5435 = vadd.f32 %v5371, %v4760
          %v5436 = vadd.f32 %v5372, %v4763
          %v5437 = vadd.f32 %v5373, %v4768
          %v5438 = vadd.f32 %v5374, %v4771
          %v5439 = vadd.f32 %v5375, %v4776
          %v5440 = vadd.f32 %v5376, %v4779
          %v5441 = vadd.f32 %v5377, %v4784
          %v5442 = vadd.f32 %v5378, %v4787
          %v5443 = vadd.f32 %v5379, %v4792
          %v5444 = vadd.f32 %v5380, %v4795
          %v5445 = vadd.f32 %v5381, %v4800
          %v5446 = vadd.f32 %v5382, %v4803
          %v5447 = vadd.f32 %v5383, %v4889
          %v5448 = vadd.f32 %v5384, %v4892
          %v5449 = vadd.f32 %v5385, %v4897
          %v5450 = vadd.f32 %v5386, %v4900
          %v5451 = vadd.f32 %v5387, %v4905
          %v5452 = vadd.f32 %v5388, %v4908
          %v5453 = vadd.f32 %v5389, %v4913
          %v5454 = vadd.f32 %v5390, %v4916
          %v5455 = vadd.f32 %v5391, %v4921
          %v5456 = vadd.f32 %v5392, %v4924
          %v5457 = vadd.f32 %v5393, %v4929
          %v5458 = vadd.f32 %v5394, %v4932
          %v5459 = vadd.f32 %v5395, %v4937
          %v5460 = vadd.f32 %v5396, %v4940
          %v5461 = vadd.f32 %v5397, %v4945
          %v5462 = vadd.f32 %v5398, %v4948
          %5463 = vst.msk [vmem:[#allocation5] sm:$0xff] %vm2293, %v5399
          %5464 = vst.msk [vmem:[#allocation5 + $0x8] sm:$0xff] %vm2293, %v5400
          %5465 = vst.msk [vmem:[#allocation5 + $0x10] sm:$0xff] %vm2293, %v5401
          %5466 = vst.msk [vmem:[#allocation5 + $0x18] sm:$0xff] %vm2293, %v5402
          %5467 = vst.msk [vmem:[#allocation5 + $0x20] sm:$0xff] %vm2293, %v5403
          %5468 = vst.msk [vmem:[#allocation5 + $0x28] sm:$0xff] %vm2293, %v5404
          %5469 = vst.msk [vmem:[#allocation5 + $0x30] sm:$0xff] %vm2293, %v5405
          %5470 = vst.msk [vmem:[#allocation5 + $0x38] sm:$0xff] %vm2293, %v5406
          %5471 = vst.msk [vmem:[#allocation5 + $0x40] sm:$0xff] %vm2293, %v5407
          %5472 = vst.msk [vmem:[#allocation5 + $0x48] sm:$0xff] %vm2293, %v5408
          %5473 = vst.msk [vmem:[#allocation5 + $0x50] sm:$0xff] %vm2293, %v5409
          %5474 = vst.msk [vmem:[#allocation5 + $0x58] sm:$0xff] %vm2293, %v5410
          %5475 = vst.msk [vmem:[#allocation5 + $0x60] sm:$0xff] %vm2293, %v5411
          %5476 = vst.msk [vmem:[#allocation5 + $0x68] sm:$0xff] %vm2293, %v5412
          %5477 = vst.msk [vmem:[#allocation5 + $0x70] sm:$0xff] %vm2293, %v5413
          %5478 = vst.msk [vmem:[#allocation5 + $0x78] sm:$0xff] %vm2293, %v5414
          %5479 = vst.msk [vmem:[#allocation5 + $0x80] sm:$0xff] %vm2293, %v5415
          %5480 = vst.msk [vmem:[#allocation5 + $0x88] sm:$0xff] %vm2293, %v5416
          %5481 = vst.msk [vmem:[#allocation5 + $0x90] sm:$0xff] %vm2293, %v5417
          %5482 = vst.msk [vmem:[#allocation5 + $0x98] sm:$0xff] %vm2293, %v5418
          %5483 = vst.msk [vmem:[#allocation5 + $0xa0] sm:$0xff] %vm2293, %v5419
          %5484 = vst.msk [vmem:[#allocation5 + $0xa8] sm:$0xff] %vm2293, %v5420
          %5485 = vst.msk [vmem:[#allocation5 + $0xb0] sm:$0xff] %vm2293, %v5421
          %5486 = vst.msk [vmem:[#allocation5 + $0xb8] sm:$0xff] %vm2293, %v5422
          %5487 = vst.msk [vmem:[#allocation5 + $0xc0] sm:$0xff] %vm2293, %v5423
          %5488 = vst.msk [vmem:[#allocation5 + $0xc8] sm:$0xff] %vm2293, %v5424
          %5489 = vst.msk [vmem:[#allocation5 + $0xd0] sm:$0xff] %vm2293, %v5425
          %5490 = vst.msk [vmem:[#allocation5 + $0xd8] sm:$0xff] %vm2293, %v5426
          %5491 = vst.msk [vmem:[#allocation5 + $0xe0] sm:$0xff] %vm2293, %v5427
          %5492 = vst.msk [vmem:[#allocation5 + $0xe8] sm:$0xff] %vm2293, %v5428
          %5493 = vst.msk [vmem:[#allocation5 + $0xf0] sm:$0xff] %vm2293, %v5429
          %5494 = vst.msk [vmem:[#allocation5 + $0xf8] sm:$0xff] %vm2293, %v5430
          %5495 = vst.msk [vmem:[#allocation5 + $0x100] sm:$0xff] %vm2293, %v5431
          %5496 = vst.msk [vmem:[#allocation5 + $0x108] sm:$0xff] %vm2293, %v5432
          %5497 = vst.msk [vmem:[#allocation5 + $0x110] sm:$0xff] %vm2293, %v5433
          %5498 = vst.msk [vmem:[#allocation5 + $0x118] sm:$0xff] %vm2293, %v5434
          %5499 = vst.msk [vmem:[#allocation5 + $0x120] sm:$0xff] %vm2293, %v5435
          %5500 = vst.msk [vmem:[#allocation5 + $0x128] sm:$0xff] %vm2293, %v5436
          %5501 = vst.msk [vmem:[#allocation5 + $0x130] sm:$0xff] %vm2293, %v5437
          %5502 = vst.msk [vmem:[#allocation5 + $0x138] sm:$0xff] %vm2293, %v5438
          %5503 = vst.msk [vmem:[#allocation5 + $0x140] sm:$0xff] %vm2293, %v5439
          %5504 = vst.msk [vmem:[#allocation5 + $0x148] sm:$0xff] %vm2293, %v5440
          %5505 = vst.msk [vmem:[#allocation5 + $0x150] sm:$0xff] %vm2293, %v5441
          %5506 = vst.msk [vmem:[#allocation5 + $0x158] sm:$0xff] %vm2293, %v5442
          %5507 = vst.msk [vmem:[#allocation5 + $0x160] sm:$0xff] %vm2293, %v5443
          %5508 = vst.msk [vmem:[#allocation5 + $0x168] sm:$0xff] %vm2293, %v5444
          %5509 = vst.msk [vmem:[#allocation5 + $0x170] sm:$0xff] %vm2293, %v5445
          %5510 = vst.msk [vmem:[#allocation5 + $0x178] sm:$0xff] %vm2293, %v5446
          %5511 = vst.msk [vmem:[#allocation5 + $0x180] sm:$0xff] %vm2293, %v5447
          %5512 = vst.msk [vmem:[#allocation5 + $0x188] sm:$0xff] %vm2293, %v5448
          %5513 = vst.msk [vmem:[#allocation5 + $0x190] sm:$0xff] %vm2293, %v5449
          %5514 = vst.msk [vmem:[#allocation5 + $0x198] sm:$0xff] %vm2293, %v5450
          %5515 = vst.msk [vmem:[#allocation5 + $0x1a0] sm:$0xff] %vm2293, %v5451
          %5516 = vst.msk [vmem:[#allocation5 + $0x1a8] sm:$0xff] %vm2293, %v5452
          %5517 = vst.msk [vmem:[#allocation5 + $0x1b0] sm:$0xff] %vm2293, %v5453
          %5518 = vst.msk [vmem:[#allocation5 + $0x1b8] sm:$0xff] %vm2293, %v5454
          %5519 = vst.msk [vmem:[#allocation5 + $0x1c0] sm:$0xff] %vm2293, %v5455
          %5520 = vst.msk [vmem:[#allocation5 + $0x1c8] sm:$0xff] %vm2293, %v5456
          %5521 = vst.msk [vmem:[#allocation5 + $0x1d0] sm:$0xff] %vm2293, %v5457
          %5522 = vst.msk [vmem:[#allocation5 + $0x1d8] sm:$0xff] %vm2293, %v5458
          %5523 = vst.msk [vmem:[#allocation5 + $0x1e0] sm:$0xff] %vm2293, %v5459
          %5524 = vst.msk [vmem:[#allocation5 + $0x1e8] sm:$0xff] %vm2293, %v5460
          %5525 = vst.msk [vmem:[#allocation5 + $0x1f0] sm:$0xff] %vm2293, %v5461
          %5526 = vst.msk [vmem:[#allocation5 + $0x1f8] sm:$0xff] %vm2293, %v5462
          %5527 = vst.msk [vmem:[#allocation3] sm:$0xff] %vm4274, %v3186
          %5528 = vst.msk [vmem:[#allocation3 + $0x8] sm:$0xff] %vm4274, %v3187
          %5529 = vst.msk [vmem:[#allocation3 + $0x10] sm:$0xff] %vm4274, %v3188
          %5530 = vst.msk [vmem:[#allocation3 + $0x18] sm:$0xff] %vm4274, %v3189
          %5531 = vst.msk [vmem:[#allocation3 + $0x20] sm:$0xff] %vm4274, %v3190
          %5532 = vst.msk [vmem:[#allocation3 + $0x28] sm:$0xff] %vm4274, %v3191
          %5533 = vst.msk [vmem:[#allocation3 + $0x30] sm:$0xff] %vm4274, %v3192
          %5534 = vst.msk [vmem:[#allocation3 + $0x38] sm:$0xff] %vm4274, %v3193
          %5535 = vst.msk [vmem:[#allocation3 + $0x40] sm:$0xff] %vm4274, %v3194
          %5536 = vst.msk [vmem:[#allocation3 + $0x48] sm:$0xff] %vm4274, %v3195
          %5537 = vst.msk [vmem:[#allocation3 + $0x50] sm:$0xff] %vm4274, %v3196
          %5538 = vst.msk [vmem:[#allocation3 + $0x58] sm:$0xff] %vm4274, %v3197
          %5539 = vst.msk [vmem:[#allocation3 + $0x60] sm:$0xff] %vm4274, %v3198
          %5540 = vst.msk [vmem:[#allocation3 + $0x68] sm:$0xff] %vm4274, %v3199
          %5541 = vst.msk [vmem:[#allocation3 + $0x70] sm:$0xff] %vm4274, %v3200
          %5542 = vst.msk [vmem:[#allocation3 + $0x78] sm:$0xff] %vm4274, %v3201
          %5543 = vst.msk [vmem:[#allocation3 + $0x80] sm:$0xff] %vm4274, %v3202
          %5544 = vst.msk [vmem:[#allocation3 + $0x88] sm:$0xff] %vm4274, %v3203
          %5545 = vst.msk [vmem:[#allocation3 + $0x90] sm:$0xff] %vm4274, %v3204
          %5546 = vst.msk [vmem:[#allocation3 + $0x98] sm:$0xff] %vm4274, %v3205
          %5547 = vst.msk [vmem:[#allocation3 + $0xa0] sm:$0xff] %vm4274, %v3206
          %5548 = vst.msk [vmem:[#allocation3 + $0xa8] sm:$0xff] %vm4274, %v3207
          %5549 = vst.msk [vmem:[#allocation3 + $0xb0] sm:$0xff] %vm4274, %v3208
          %5550 = vst.msk [vmem:[#allocation3 + $0xb8] sm:$0xff] %vm4274, %v3209
          %5551 = vst.msk [vmem:[#allocation3 + $0xc0] sm:$0xff] %vm4274, %v3210
          %5552 = vst.msk [vmem:[#allocation3 + $0xc8] sm:$0xff] %vm4274, %v3211
          %5553 = vst.msk [vmem:[#allocation3 + $0xd0] sm:$0xff] %vm4274, %v3212
          %5554 = vst.msk [vmem:[#allocation3 + $0xd8] sm:$0xff] %vm4274, %v3213
          %5555 = vst.msk [vmem:[#allocation3 + $0xe0] sm:$0xff] %vm4274, %v3214
          %5556 = vst.msk [vmem:[#allocation3 + $0xe8] sm:$0xff] %vm4274, %v3215
          %5557 = vst.msk [vmem:[#allocation3 + $0xf0] sm:$0xff] %vm4274, %v3216
          %5558 = vst.msk [vmem:[#allocation3 + $0xf8] sm:$0xff] %vm4274, %v3217
          %5559 = vst.msk [vmem:[#allocation3 + $0x100] sm:$0xff] %vm4274, %v3218
          %5560 = vst.msk [vmem:[#allocation3 + $0x108] sm:$0xff] %vm4274, %v3219
          %5561 = vst.msk [vmem:[#allocation3 + $0x110] sm:$0xff] %vm4274, %v3220
          %5562 = vst.msk [vmem:[#allocation3 + $0x118] sm:$0xff] %vm4274, %v3221
          %5563 = vst.msk [vmem:[#allocation3 + $0x120] sm:$0xff] %vm4274, %v3222
          %5564 = vst.msk [vmem:[#allocation3 + $0x128] sm:$0xff] %vm4274, %v3223
          %5565 = vst.msk [vmem:[#allocation3 + $0x130] sm:$0xff] %vm4274, %v3224
          %5566 = vst.msk [vmem:[#allocation3 + $0x138] sm:$0xff] %vm4274, %v3225
          %5567 = vst.msk [vmem:[#allocation3 + $0x140] sm:$0xff] %vm4274, %v3226
          %5568 = vst.msk [vmem:[#allocation3 + $0x148] sm:$0xff] %vm4274, %v3227
          %5569 = vst.msk [vmem:[#allocation3 + $0x150] sm:$0xff] %vm4274, %v3228
          %5570 = vst.msk [vmem:[#allocation3 + $0x158] sm:$0xff] %vm4274, %v3229
          %5571 = vst.msk [vmem:[#allocation3 + $0x160] sm:$0xff] %vm4274, %v3230
          %5572 = vst.msk [vmem:[#allocation3 + $0x168] sm:$0xff] %vm4274, %v3231
          %5573 = vst.msk [vmem:[#allocation3 + $0x170] sm:$0xff] %vm4274, %v3232
          %5574 = vst.msk [vmem:[#allocation3 + $0x178] sm:$0xff] %vm4274, %v3233
          %5575 = vst.msk [vmem:[#allocation3 + $0x180] sm:$0xff] %vm4274, %v3234
          %5576 = vst.msk [vmem:[#allocation3 + $0x188] sm:$0xff] %vm4274, %v3235
          %5577 = vst.msk [vmem:[#allocation3 + $0x190] sm:$0xff] %vm4274, %v3236
          %5578 = vst.msk [vmem:[#allocation3 + $0x198] sm:$0xff] %vm4274, %v3237
          %5579 = vst.msk [vmem:[#allocation3 + $0x1a0] sm:$0xff] %vm4274, %v3238
          %5580 = vst.msk [vmem:[#allocation3 + $0x1a8] sm:$0xff] %vm4274, %v3239
          %5581 = vst.msk [vmem:[#allocation3 + $0x1b0] sm:$0xff] %vm4274, %v3240
          %5582 = vst.msk [vmem:[#allocation3 + $0x1b8] sm:$0xff] %vm4274, %v3241
          %5583 = vst.msk [vmem:[#allocation3 + $0x1c0] sm:$0xff] %vm4274, %v3242
          %5584 = vst.msk [vmem:[#allocation3 + $0x1c8] sm:$0xff] %vm4274, %v3243
          %5585 = vst.msk [vmem:[#allocation3 + $0x1d0] sm:$0xff] %vm4274, %v3244
          %5586 = vst.msk [vmem:[#allocation3 + $0x1d8] sm:$0xff] %vm4274, %v3245
          %5587 = vst.msk [vmem:[#allocation3 + $0x1e0] sm:$0xff] %vm4274, %v3246
          %5588 = vst.msk [vmem:[#allocation3 + $0x1e8] sm:$0xff] %vm4274, %v3247
          %5589 = vst.msk [vmem:[#allocation3 + $0x1f0] sm:$0xff] %vm4274, %v3248
          %5590 = vst.msk [vmem:[#allocation3 + $0x1f8] sm:$0xff] %vm4274, %v3249
        $region184: #{tpu_custom_call.1} parent=163 // pred_fallthru
          _
        %p5591 = scmp.eq.s32.totalorder %s37, 1
        // Predicated region
        $region185: #{tpu_custom_call.1} parent=163 // pred_check
          %p5592 = pneg %p5591
        $region186: #{tpu_custom_call.1} parent=163 // pred_check_branch
          %5594 = sbr.rel (%p5592) target = $region188
        $region187: #{tpu_custom_call.1} parent=163 // pred_region
          %v5595 = vld [vmem:[#allocation5] sm:$0xff]
          %v5596 = vld [vmem:[#allocation5 + $0x8] sm:$0xff]
          %v5597 = vld [vmem:[#allocation5 + $0x10] sm:$0xff]
          %v5598 = vld [vmem:[#allocation5 + $0x18] sm:$0xff]
          %v5599 = vld [vmem:[#allocation5 + $0x20] sm:$0xff]
          %v5600 = vld [vmem:[#allocation5 + $0x28] sm:$0xff]
          %v5601 = vld [vmem:[#allocation5 + $0x30] sm:$0xff]
          %v5602 = vld [vmem:[#allocation5 + $0x38] sm:$0xff]
          %v5603 = vld [vmem:[#allocation5 + $0x40] sm:$0xff]
          %v5604 = vld [vmem:[#allocation5 + $0x48] sm:$0xff]
          %v5605 = vld [vmem:[#allocation5 + $0x50] sm:$0xff]
          %v5606 = vld [vmem:[#allocation5 + $0x58] sm:$0xff]
          %v5607 = vld [vmem:[#allocation5 + $0x60] sm:$0xff]
          %v5608 = vld [vmem:[#allocation5 + $0x68] sm:$0xff]
          %v5609 = vld [vmem:[#allocation5 + $0x70] sm:$0xff]
          %v5610 = vld [vmem:[#allocation5 + $0x78] sm:$0xff]
          %v5611 = vld [vmem:[#allocation5 + $0x80] sm:$0xff]
          %v5612 = vld [vmem:[#allocation5 + $0x88] sm:$0xff]
          %v5613 = vld [vmem:[#allocation5 + $0x90] sm:$0xff]
          %v5614 = vld [vmem:[#allocation5 + $0x98] sm:$0xff]
          %v5615 = vld [vmem:[#allocation5 + $0xa0] sm:$0xff]
          %v5616 = vld [vmem:[#allocation5 + $0xa8] sm:$0xff]
          %v5617 = vld [vmem:[#allocation5 + $0xb0] sm:$0xff]
          %v5618 = vld [vmem:[#allocation5 + $0xb8] sm:$0xff]
          %v5619 = vld [vmem:[#allocation5 + $0xc0] sm:$0xff]
          %v5620 = vld [vmem:[#allocation5 + $0xc8] sm:$0xff]
          %v5621 = vld [vmem:[#allocation5 + $0xd0] sm:$0xff]
          %v5622 = vld [vmem:[#allocation5 + $0xd8] sm:$0xff]
          %v5623 = vld [vmem:[#allocation5 + $0xe0] sm:$0xff]
          %v5624 = vld [vmem:[#allocation5 + $0xe8] sm:$0xff]
          %v5625 = vld [vmem:[#allocation5 + $0xf0] sm:$0xff]
          %v5626 = vld [vmem:[#allocation5 + $0xf8] sm:$0xff]
          %v5627 = vld [vmem:[#allocation5 + $0x100] sm:$0xff]
          %v5628 = vld [vmem:[#allocation5 + $0x108] sm:$0xff]
          %v5629 = vld [vmem:[#allocation5 + $0x110] sm:$0xff]
          %v5630 = vld [vmem:[#allocation5 + $0x118] sm:$0xff]
          %v5631 = vld [vmem:[#allocation5 + $0x120] sm:$0xff]
          %v5632 = vld [vmem:[#allocation5 + $0x128] sm:$0xff]
          %v5633 = vld [vmem:[#allocation5 + $0x130] sm:$0xff]
          %v5634 = vld [vmem:[#allocation5 + $0x138] sm:$0xff]
          %v5635 = vld [vmem:[#allocation5 + $0x140] sm:$0xff]
          %v5636 = vld [vmem:[#allocation5 + $0x148] sm:$0xff]
          %v5637 = vld [vmem:[#allocation5 + $0x150] sm:$0xff]
          %v5638 = vld [vmem:[#allocation5 + $0x158] sm:$0xff]
          %v5639 = vld [vmem:[#allocation5 + $0x160] sm:$0xff]
          %v5640 = vld [vmem:[#allocation5 + $0x168] sm:$0xff]
          %v5641 = vld [vmem:[#allocation5 + $0x170] sm:$0xff]
          %v5642 = vld [vmem:[#allocation5 + $0x178] sm:$0xff]
          %v5643 = vld [vmem:[#allocation5 + $0x180] sm:$0xff]
          %v5644 = vld [vmem:[#allocation5 + $0x188] sm:$0xff]
          %v5645 = vld [vmem:[#allocation5 + $0x190] sm:$0xff]
          %v5646 = vld [vmem:[#allocation5 + $0x198] sm:$0xff]
          %v5647 = vld [vmem:[#allocation5 + $0x1a0] sm:$0xff]
          %v5648 = vld [vmem:[#allocation5 + $0x1a8] sm:$0xff]
          %v5649 = vld [vmem:[#allocation5 + $0x1b0] sm:$0xff]
          %v5650 = vld [vmem:[#allocation5 + $0x1b8] sm:$0xff]
          %v5651 = vld [vmem:[#allocation5 + $0x1c0] sm:$0xff]
          %v5652 = vld [vmem:[#allocation5 + $0x1c8] sm:$0xff]
          %v5653 = vld [vmem:[#allocation5 + $0x1d0] sm:$0xff]
          %v5654 = vld [vmem:[#allocation5 + $0x1d8] sm:$0xff]
          %v5655 = vld [vmem:[#allocation5 + $0x1e0] sm:$0xff]
          %v5656 = vld [vmem:[#allocation5 + $0x1e8] sm:$0xff]
          %v5657 = vld [vmem:[#allocation5 + $0x1f0] sm:$0xff]
          %v5658 = vld [vmem:[#allocation5 + $0x1f8] sm:$0xff]
          %v5659 = vld [vmem:[#allocation4] sm:$0xff]
          %v5660 = vld [vmem:[#allocation4 + $0x8] sm:$0xff]
          %v5661 = vld [vmem:[#allocation4 + $0x10] sm:$0xff]
          %v5662 = vld [vmem:[#allocation4 + $0x18] sm:$0xff]
          %v5663 = vld [vmem:[#allocation4 + $0x20] sm:$0xff]
          %v5664 = vld [vmem:[#allocation4 + $0x28] sm:$0xff]
          %v5665 = vld [vmem:[#allocation4 + $0x30] sm:$0xff]
          %v5666 = vld [vmem:[#allocation4 + $0x38] sm:$0xff]
          %v5667 = vld [vmem:[#allocation4 + $0x40] sm:$0xff]
          %v5668 = vld [vmem:[#allocation4 + $0x48] sm:$0xff]
          %v5669 = vld [vmem:[#allocation4 + $0x50] sm:$0xff]
          %v5670 = vld [vmem:[#allocation4 + $0x58] sm:$0xff]
          %v5671 = vld [vmem:[#allocation4 + $0x60] sm:$0xff]
          %v5672 = vld [vmem:[#allocation4 + $0x68] sm:$0xff]
          %v5673 = vld [vmem:[#allocation4 + $0x70] sm:$0xff]
          %v5674 = vld [vmem:[#allocation4 + $0x78] sm:$0xff]
          %v5675 = vld [vmem:[#allocation4 + $0x80] sm:$0xff]
          %v5676 = vld [vmem:[#allocation4 + $0x88] sm:$0xff]
          %v5677 = vld [vmem:[#allocation4 + $0x90] sm:$0xff]
          %v5678 = vld [vmem:[#allocation4 + $0x98] sm:$0xff]
          %v5679 = vld [vmem:[#allocation4 + $0xa0] sm:$0xff]
          %v5680 = vld [vmem:[#allocation4 + $0xa8] sm:$0xff]
          %v5681 = vld [vmem:[#allocation4 + $0xb0] sm:$0xff]
          %v5682 = vld [vmem:[#allocation4 + $0xb8] sm:$0xff]
          %v5683 = vld [vmem:[#allocation4 + $0xc0] sm:$0xff]
          %v5684 = vld [vmem:[#allocation4 + $0xc8] sm:$0xff]
          %v5685 = vld [vmem:[#allocation4 + $0xd0] sm:$0xff]
          %v5686 = vld [vmem:[#allocation4 + $0xd8] sm:$0xff]
          %v5687 = vld [vmem:[#allocation4 + $0xe0] sm:$0xff]
          %v5688 = vld [vmem:[#allocation4 + $0xe8] sm:$0xff]
          %v5689 = vld [vmem:[#allocation4 + $0xf0] sm:$0xff]
          %v5690 = vld [vmem:[#allocation4 + $0xf8] sm:$0xff]
          %v5691 = vld [vmem:[#allocation4 + $0x100] sm:$0xff]
          %v5692 = vld [vmem:[#allocation4 + $0x108] sm:$0xff]
          %v5693 = vld [vmem:[#allocation4 + $0x110] sm:$0xff]
          %v5694 = vld [vmem:[#allocation4 + $0x118] sm:$0xff]
          %v5695 = vld [vmem:[#allocation4 + $0x120] sm:$0xff]
          %v5696 = vld [vmem:[#allocation4 + $0x128] sm:$0xff]
          %v5697 = vld [vmem:[#allocation4 + $0x130] sm:$0xff]
          %v5698 = vld [vmem:[#allocation4 + $0x138] sm:$0xff]
          %v5699 = vld [vmem:[#allocation4 + $0x140] sm:$0xff]
          %v5700 = vld [vmem:[#allocation4 + $0x148] sm:$0xff]
          %v5701 = vld [vmem:[#allocation4 + $0x150] sm:$0xff]
          %v5702 = vld [vmem:[#allocation4 + $0x158] sm:$0xff]
          %v5703 = vld [vmem:[#allocation4 + $0x160] sm:$0xff]
          %v5704 = vld [vmem:[#allocation4 + $0x168] sm:$0xff]
          %v5705 = vld [vmem:[#allocation4 + $0x170] sm:$0xff]
          %v5706 = vld [vmem:[#allocation4 + $0x178] sm:$0xff]
          %v5707 = vld [vmem:[#allocation4 + $0x180] sm:$0xff]
          %v5708 = vld [vmem:[#allocation4 + $0x188] sm:$0xff]
          %v5709 = vld [vmem:[#allocation4 + $0x190] sm:$0xff]
          %v5710 = vld [vmem:[#allocation4 + $0x198] sm:$0xff]
          %v5711 = vld [vmem:[#allocation4 + $0x1a0] sm:$0xff]
          %v5712 = vld [vmem:[#allocation4 + $0x1a8] sm:$0xff]
          %v5713 = vld [vmem:[#allocation4 + $0x1b0] sm:$0xff]
          %v5714 = vld [vmem:[#allocation4 + $0x1b8] sm:$0xff]
          %v5715 = vld [vmem:[#allocation4 + $0x1c0] sm:$0xff]
          %v5716 = vld [vmem:[#allocation4 + $0x1c8] sm:$0xff]
          %v5717 = vld [vmem:[#allocation4 + $0x1d0] sm:$0xff]
          %v5718 = vld [vmem:[#allocation4 + $0x1d8] sm:$0xff]
          %v5719 = vld [vmem:[#allocation4 + $0x1e0] sm:$0xff]
          %v5720 = vld [vmem:[#allocation4 + $0x1e8] sm:$0xff]
          %v5721 = vld [vmem:[#allocation4 + $0x1f0] sm:$0xff]
          %v5722 = vld [vmem:[#allocation4 + $0x1f8] sm:$0xff]
          %v5723 = vrcp.pop %v5659
          %v5724 = vrcp.pop %v5660
          %v5725 = vrcp.pop %v5661
          %v5726 = vrcp.pop %v5662
          %v5727 = vrcp.pop %v5663
          %v5728 = vrcp.pop %v5664
          %v5729 = vrcp.pop %v5665
          %v5730 = vrcp.pop %v5666
          %v5731 = vrcp.pop %v5667
          %v5732 = vrcp.pop %v5668
          %v5733 = vrcp.pop %v5669
          %v5734 = vrcp.pop %v5670
          %v5735 = vrcp.pop %v5671
          %v5736 = vrcp.pop %v5672
          %v5737 = vrcp.pop %v5673
          %v5738 = vrcp.pop %v5674
          %v5739 = vrcp.pop %v5675
          %v5740 = vrcp.pop %v5676
          %v5741 = vrcp.pop %v5677
          %v5742 = vrcp.pop %v5678
          %v5743 = vrcp.pop %v5679
          %v5744 = vrcp.pop %v5680
          %v5745 = vrcp.pop %v5681
          %v5746 = vrcp.pop %v5682
          %v5747 = vrcp.pop %v5683
          %v5748 = vrcp.pop %v5684
          %v5749 = vrcp.pop %v5685
          %v5750 = vrcp.pop %v5686
          %v5751 = vrcp.pop %v5687
          %v5752 = vrcp.pop %v5688
          %v5753 = vrcp.pop %v5689
          %v5754 = vrcp.pop %v5690
          %v5755 = vrcp.pop %v5691
          %v5756 = vrcp.pop %v5692
          %v5757 = vrcp.pop %v5693
          %v5758 = vrcp.pop %v5694
          %v5759 = vrcp.pop %v5695
          %v5760 = vrcp.pop %v5696
          %v5761 = vrcp.pop %v5697
          %v5762 = vrcp.pop %v5698
          %v5763 = vrcp.pop %v5699
          %v5764 = vrcp.pop %v5700
          %v5765 = vrcp.pop %v5701
          %v5766 = vrcp.pop %v5702
          %v5767 = vrcp.pop %v5703
          %v5768 = vrcp.pop %v5704
          %v5769 = vrcp.pop %v5705
          %v5770 = vrcp.pop %v5706
          %v5771 = vrcp.pop %v5707
          %v5772 = vrcp.pop %v5708
          %v5773 = vrcp.pop %v5709
          %v5774 = vrcp.pop %v5710
          %v5775 = vrcp.pop %v5711
          %v5776 = vrcp.pop %v5712
          %v5777 = vrcp.pop %v5713
          %v5778 = vrcp.pop %v5714
          %v5779 = vrcp.pop %v5715
          %v5780 = vrcp.pop %v5716
          %v5781 = vrcp.pop %v5717
          %v5782 = vrcp.pop %v5718
          %v5783 = vrcp.pop %v5719
          %v5784 = vrcp.pop %v5720
          %v5785 = vrcp.pop %v5721
          %v5786 = vrcp.pop %v5722
          %5788 = vset.pattern.permute.xlu0 0
          %5789 = vperm.xlu0 %5788, %v5723
          %v5790 = vpop.permute.xlu0 %5789
          %5793 = vset.pattern.permute.xlu0 0
          %5794 = vperm.xlu0 %5793, %v5724
          %v5795 = vpop.permute.xlu0 %5794
          %5798 = vset.pattern.permute.xlu0 0
          %5799 = vperm.xlu0 %5798, %v5725
          %v5800 = vpop.permute.xlu0 %5799
          %5803 = vset.pattern.permute.xlu0 0
          %5804 = vperm.xlu0 %5803, %v5726
          %v5805 = vpop.permute.xlu0 %5804
          %5808 = vset.pattern.permute.xlu0 0
          %5809 = vperm.xlu0 %5808, %v5727
          %v5810 = vpop.permute.xlu0 %5809
          %5813 = vset.pattern.permute.xlu0 0
          %5814 = vperm.xlu0 %5813, %v5728
          %v5815 = vpop.permute.xlu0 %5814
          %5818 = vset.pattern.permute.xlu0 0
          %5819 = vperm.xlu0 %5818, %v5729
          %v5820 = vpop.permute.xlu0 %5819
          %5823 = vset.pattern.permute.xlu0 0
          %5824 = vperm.xlu0 %5823, %v5730
          %v5825 = vpop.permute.xlu0 %5824
          %5828 = vset.pattern.permute.xlu0 0
          %5829 = vperm.xlu0 %5828, %v5731
          %v5830 = vpop.permute.xlu0 %5829
          %5833 = vset.pattern.permute.xlu0 0
          %5834 = vperm.xlu0 %5833, %v5732
          %v5835 = vpop.permute.xlu0 %5834
          %5838 = vset.pattern.permute.xlu0 0
          %5839 = vperm.xlu0 %5838, %v5733
          %v5840 = vpop.permute.xlu0 %5839
          %5843 = vset.pattern.permute.xlu0 0
          %5844 = vperm.xlu0 %5843, %v5734
          %v5845 = vpop.permute.xlu0 %5844
          %5848 = vset.pattern.permute.xlu0 0
          %5849 = vperm.xlu0 %5848, %v5735
          %v5850 = vpop.permute.xlu0 %5849
          %5853 = vset.pattern.permute.xlu0 0
          %5854 = vperm.xlu0 %5853, %v5736
          %v5855 = vpop.permute.xlu0 %5854
          %5858 = vset.pattern.permute.xlu0 0
          %5859 = vperm.xlu0 %5858, %v5737
          %v5860 = vpop.permute.xlu0 %5859
          %5863 = vset.pattern.permute.xlu0 0
          %5864 = vperm.xlu0 %5863, %v5738
          %v5865 = vpop.permute.xlu0 %5864
          %5868 = vset.pattern.permute.xlu0 0
          %5869 = vperm.xlu0 %5868, %v5739
          %v5870 = vpop.permute.xlu0 %5869
          %5873 = vset.pattern.permute.xlu0 0
          %5874 = vperm.xlu0 %5873, %v5740
          %v5875 = vpop.permute.xlu0 %5874
          %5878 = vset.pattern.permute.xlu0 0
          %5879 = vperm.xlu0 %5878, %v5741
          %v5880 = vpop.permute.xlu0 %5879
          %5883 = vset.pattern.permute.xlu0 0
          %5884 = vperm.xlu0 %5883, %v5742
          %v5885 = vpop.permute.xlu0 %5884
          %5888 = vset.pattern.permute.xlu0 0
          %5889 = vperm.xlu0 %5888, %v5743
          %v5890 = vpop.permute.xlu0 %5889
          %5893 = vset.pattern.permute.xlu0 0
          %5894 = vperm.xlu0 %5893, %v5744
          %v5895 = vpop.permute.xlu0 %5894
          %5898 = vset.pattern.permute.xlu0 0
          %5899 = vperm.xlu0 %5898, %v5745
          %v5900 = vpop.permute.xlu0 %5899
          %5903 = vset.pattern.permute.xlu0 0
          %5904 = vperm.xlu0 %5903, %v5746
          %v5905 = vpop.permute.xlu0 %5904
          %5908 = vset.pattern.permute.xlu0 0
          %5909 = vperm.xlu0 %5908, %v5747
          %v5910 = vpop.permute.xlu0 %5909
          %5913 = vset.pattern.permute.xlu0 0
          %5914 = vperm.xlu0 %5913, %v5748
          %v5915 = vpop.permute.xlu0 %5914
          %5918 = vset.pattern.permute.xlu0 0
          %5919 = vperm.xlu0 %5918, %v5749
          %v5920 = vpop.permute.xlu0 %5919
          %5923 = vset.pattern.permute.xlu0 0
          %5924 = vperm.xlu0 %5923, %v5750
          %v5925 = vpop.permute.xlu0 %5924
          %5928 = vset.pattern.permute.xlu0 0
          %5929 = vperm.xlu0 %5928, %v5751
          %v5930 = vpop.permute.xlu0 %5929
          %5933 = vset.pattern.permute.xlu0 0
          %5934 = vperm.xlu0 %5933, %v5752
          %v5935 = vpop.permute.xlu0 %5934
          %5938 = vset.pattern.permute.xlu0 0
          %5939 = vperm.xlu0 %5938, %v5753
          %v5940 = vpop.permute.xlu0 %5939
          %5943 = vset.pattern.permute.xlu0 0
          %5944 = vperm.xlu0 %5943, %v5754
          %v5945 = vpop.permute.xlu0 %5944
          %5948 = vset.pattern.permute.xlu0 0
          %5949 = vperm.xlu0 %5948, %v5755
          %v5950 = vpop.permute.xlu0 %5949
          %5953 = vset.pattern.permute.xlu0 0
          %5954 = vperm.xlu0 %5953, %v5756
          %v5955 = vpop.permute.xlu0 %5954
          %5958 = vset.pattern.permute.xlu0 0
          %5959 = vperm.xlu0 %5958, %v5757
          %v5960 = vpop.permute.xlu0 %5959
          %5963 = vset.pattern.permute.xlu0 0
          %5964 = vperm.xlu0 %5963, %v5758
          %v5965 = vpop.permute.xlu0 %5964
          %5968 = vset.pattern.permute.xlu0 0
          %5969 = vperm.xlu0 %5968, %v5759
          %v5970 = vpop.permute.xlu0 %5969
          %5973 = vset.pattern.permute.xlu0 0
          %5974 = vperm.xlu0 %5973, %v5760
          %v5975 = vpop.permute.xlu0 %5974
          %5978 = vset.pattern.permute.xlu0 0
          %5979 = vperm.xlu0 %5978, %v5761
          %v5980 = vpop.permute.xlu0 %5979
          %5983 = vset.pattern.permute.xlu0 0
          %5984 = vperm.xlu0 %5983, %v5762
          %v5985 = vpop.permute.xlu0 %5984
          %5988 = vset.pattern.permute.xlu0 0
          %5989 = vperm.xlu0 %5988, %v5763
          %v5990 = vpop.permute.xlu0 %5989
          %5993 = vset.pattern.permute.xlu0 0
          %5994 = vperm.xlu0 %5993, %v5764
          %v5995 = vpop.permute.xlu0 %5994
          %5998 = vset.pattern.permute.xlu0 0
          %5999 = vperm.xlu0 %5998, %v5765
          %v6000 = vpop.permute.xlu0 %5999
          %6003 = vset.pattern.permute.xlu0 0
          %6004 = vperm.xlu0 %6003, %v5766
          %v6005 = vpop.permute.xlu0 %6004
          %6008 = vset.pattern.permute.xlu0 0
          %6009 = vperm.xlu0 %6008, %v5767
          %v6010 = vpop.permute.xlu0 %6009
          %6013 = vset.pattern.permute.xlu0 0
          %6014 = vperm.xlu0 %6013, %v5768
          %v6015 = vpop.permute.xlu0 %6014
          %6018 = vset.pattern.permute.xlu0 0
          %6019 = vperm.xlu0 %6018, %v5769
          %v6020 = vpop.permute.xlu0 %6019
          %6023 = vset.pattern.permute.xlu0 0
          %6024 = vperm.xlu0 %6023, %v5770
          %v6025 = vpop.permute.xlu0 %6024
          %6028 = vset.pattern.permute.xlu0 0
          %6029 = vperm.xlu0 %6028, %v5771
          %v6030 = vpop.permute.xlu0 %6029
          %6033 = vset.pattern.permute.xlu0 0
          %6034 = vperm.xlu0 %6033, %v5772
          %v6035 = vpop.permute.xlu0 %6034
          %6038 = vset.pattern.permute.xlu0 0
          %6039 = vperm.xlu0 %6038, %v5773
          %v6040 = vpop.permute.xlu0 %6039
          %6043 = vset.pattern.permute.xlu0 0
          %6044 = vperm.xlu0 %6043, %v5774
          %v6045 = vpop.permute.xlu0 %6044
          %6048 = vset.pattern.permute.xlu0 0
          %6049 = vperm.xlu0 %6048, %v5775
          %v6050 = vpop.permute.xlu0 %6049
          %6053 = vset.pattern.permute.xlu0 0
          %6054 = vperm.xlu0 %6053, %v5776
          %v6055 = vpop.permute.xlu0 %6054
          %6058 = vset.pattern.permute.xlu0 0
          %6059 = vperm.xlu0 %6058, %v5777
          %v6060 = vpop.permute.xlu0 %6059
          %6063 = vset.pattern.permute.xlu0 0
          %6064 = vperm.xlu0 %6063, %v5778
          %v6065 = vpop.permute.xlu0 %6064
          %6068 = vset.pattern.permute.xlu0 0
          %6069 = vperm.xlu0 %6068, %v5779
          %v6070 = vpop.permute.xlu0 %6069
          %6073 = vset.pattern.permute.xlu0 0
          %6074 = vperm.xlu0 %6073, %v5780
          %v6075 = vpop.permute.xlu0 %6074
          %6078 = vset.pattern.permute.xlu0 0
          %6079 = vperm.xlu0 %6078, %v5781
          %v6080 = vpop.permute.xlu0 %6079
          %6083 = vset.pattern.permute.xlu0 0
          %6084 = vperm.xlu0 %6083, %v5782
          %v6085 = vpop.permute.xlu0 %6084
          %6088 = vset.pattern.permute.xlu0 0
          %6089 = vperm.xlu0 %6088, %v5783
          %v6090 = vpop.permute.xlu0 %6089
          %6093 = vset.pattern.permute.xlu0 0
          %6094 = vperm.xlu0 %6093, %v5784
          %v6095 = vpop.permute.xlu0 %6094
          %6098 = vset.pattern.permute.xlu0 0
          %6099 = vperm.xlu0 %6098, %v5785
          %v6100 = vpop.permute.xlu0 %6099
          %6103 = vset.pattern.permute.xlu0 0
          %6104 = vperm.xlu0 %6103, %v5786
          %v6105 = vpop.permute.xlu0 %6104
          %v6107 = vmul.f32 %v5595, %v5790
          %v6108 = vmul.f32 %v5596, %v5795
          %v6109 = vmul.f32 %v5597, %v5800
          %v6110 = vmul.f32 %v5598, %v5805
          %v6111 = vmul.f32 %v5599, %v5810
          %v6112 = vmul.f32 %v5600, %v5815
          %v6113 = vmul.f32 %v5601, %v5820
          %v6114 = vmul.f32 %v5602, %v5825
          %v6115 = vmul.f32 %v5603, %v5830
          %v6116 = vmul.f32 %v5604, %v5835
          %v6117 = vmul.f32 %v5605, %v5840
          %v6118 = vmul.f32 %v5606, %v5845
          %v6119 = vmul.f32 %v5607, %v5850
          %v6120 = vmul.f32 %v5608, %v5855
          %v6121 = vmul.f32 %v5609, %v5860
          %v6122 = vmul.f32 %v5610, %v5865
          %v6123 = vmul.f32 %v5611, %v5870
          %v6124 = vmul.f32 %v5612, %v5875
          %v6125 = vmul.f32 %v5613, %v5880
          %v6126 = vmul.f32 %v5614, %v5885
          %v6127 = vmul.f32 %v5615, %v5890
          %v6128 = vmul.f32 %v5616, %v5895
          %v6129 = vmul.f32 %v5617, %v5900
          %v6130 = vmul.f32 %v5618, %v5905
          %v6131 = vmul.f32 %v5619, %v5910
          %v6132 = vmul.f32 %v5620, %v5915
          %v6133 = vmul.f32 %v5621, %v5920
          %v6134 = vmul.f32 %v5622, %v5925
          %v6135 = vmul.f32 %v5623, %v5930
          %v6136 = vmul.f32 %v5624, %v5935
          %v6137 = vmul.f32 %v5625, %v5940
          %v6138 = vmul.f32 %v5626, %v5945
          %v6139 = vmul.f32 %v5627, %v5950
          %v6140 = vmul.f32 %v5628, %v5955
          %v6141 = vmul.f32 %v5629, %v5960
          %v6142 = vmul.f32 %v5630, %v5965
          %v6143 = vmul.f32 %v5631, %v5970
          %v6144 = vmul.f32 %v5632, %v5975
          %v6145 = vmul.f32 %v5633, %v5980
          %v6146 = vmul.f32 %v5634, %v5985
          %v6147 = vmul.f32 %v5635, %v5990
          %v6148 = vmul.f32 %v5636, %v5995
          %v6149 = vmul.f32 %v5637, %v6000
          %v6150 = vmul.f32 %v5638, %v6005
          %v6151 = vmul.f32 %v5639, %v6010
          %v6152 = vmul.f32 %v5640, %v6015
          %v6153 = vmul.f32 %v5641, %v6020
          %v6154 = vmul.f32 %v5642, %v6025
          %v6155 = vmul.f32 %v5643, %v6030
          %v6156 = vmul.f32 %v5644, %v6035
          %v6157 = vmul.f32 %v5645, %v6040
          %v6158 = vmul.f32 %v5646, %v6045
          %v6159 = vmul.f32 %v5647, %v6050
          %v6160 = vmul.f32 %v5648, %v6055
          %v6161 = vmul.f32 %v5649, %v6060
          %v6162 = vmul.f32 %v5650, %v6065
          %v6163 = vmul.f32 %v5651, %v6070
          %v6164 = vmul.f32 %v5652, %v6075
          %v6165 = vmul.f32 %v5653, %v6080
          %v6166 = vmul.f32 %v5654, %v6085
          %v6167 = vmul.f32 %v5655, %v6090
          %v6168 = vmul.f32 %v5656, %v6095
          %v6169 = vmul.f32 %v5657, %v6100
          %v6170 = vmul.f32 %v5658, %v6105
          %6187 = vrot.lane.b32.xlu0 %v6123, 32
          %v6188 = vpop.permute.xlu0 %6187
          %6189 = vrot.lane.b32.xlu0 %v6124, 32
          %v6190 = vpop.permute.xlu0 %6189
          %6191 = vrot.lane.b32.xlu0 %v6125, 32
          %v6192 = vpop.permute.xlu0 %6191
          %6193 = vrot.lane.b32.xlu0 %v6126, 32
          %v6194 = vpop.permute.xlu0 %6193
          %6195 = vrot.lane.b32.xlu0 %v6127, 32
          %v6196 = vpop.permute.xlu0 %6195
          %6197 = vrot.lane.b32.xlu0 %v6128, 32
          %v6198 = vpop.permute.xlu0 %6197
          %6199 = vrot.lane.b32.xlu0 %v6129, 32
          %v6200 = vpop.permute.xlu0 %6199
          %6201 = vrot.lane.b32.xlu0 %v6130, 32
          %v6202 = vpop.permute.xlu0 %6201
          %6203 = vrot.lane.b32.xlu0 %v6131, 32
          %v6204 = vpop.permute.xlu0 %6203
          %6205 = vrot.lane.b32.xlu0 %v6132, 32
          %v6206 = vpop.permute.xlu0 %6205
          %6207 = vrot.lane.b32.xlu0 %v6133, 32
          %v6208 = vpop.permute.xlu0 %6207
          %6209 = vrot.lane.b32.xlu0 %v6134, 32
          %v6210 = vpop.permute.xlu0 %6209
          %6211 = vrot.lane.b32.xlu0 %v6135, 32
          %v6212 = vpop.permute.xlu0 %6211
          %6213 = vrot.lane.b32.xlu0 %v6136, 32
          %v6214 = vpop.permute.xlu0 %6213
          %6215 = vrot.lane.b32.xlu0 %v6137, 32
          %v6216 = vpop.permute.xlu0 %6215
          %6217 = vrot.lane.b32.xlu0 %v6138, 32
          %v6218 = vpop.permute.xlu0 %6217
          %6251 = vrot.lane.b32.xlu0 %v6139, 64
          %v6252 = vpop.permute.xlu0 %6251
          %6253 = vrot.lane.b32.xlu0 %v6140, 64
          %v6254 = vpop.permute.xlu0 %6253
          %6255 = vrot.lane.b32.xlu0 %v6141, 64
          %v6256 = vpop.permute.xlu0 %6255
          %6257 = vrot.lane.b32.xlu0 %v6142, 64
          %v6258 = vpop.permute.xlu0 %6257
          %6259 = vrot.lane.b32.xlu0 %v6143, 64
          %v6260 = vpop.permute.xlu0 %6259
          %6261 = vrot.lane.b32.xlu0 %v6144, 64
          %v6262 = vpop.permute.xlu0 %6261
          %6263 = vrot.lane.b32.xlu0 %v6145, 64
          %v6264 = vpop.permute.xlu0 %6263
          %6265 = vrot.lane.b32.xlu0 %v6146, 64
          %v6266 = vpop.permute.xlu0 %6265
          %6267 = vrot.lane.b32.xlu0 %v6147, 64
          %v6268 = vpop.permute.xlu0 %6267
          %6269 = vrot.lane.b32.xlu0 %v6148, 64
          %v6270 = vpop.permute.xlu0 %6269
          %6271 = vrot.lane.b32.xlu0 %v6149, 64
          %v6272 = vpop.permute.xlu0 %6271
          %6273 = vrot.lane.b32.xlu0 %v6150, 64
          %v6274 = vpop.permute.xlu0 %6273
          %6275 = vrot.lane.b32.xlu0 %v6151, 64
          %v6276 = vpop.permute.xlu0 %6275
          %6277 = vrot.lane.b32.xlu0 %v6152, 64
          %v6278 = vpop.permute.xlu0 %6277
          %6279 = vrot.lane.b32.xlu0 %v6153, 64
          %v6280 = vpop.permute.xlu0 %6279
          %6281 = vrot.lane.b32.xlu0 %v6154, 64
          %v6282 = vpop.permute.xlu0 %6281
          %6315 = vrot.lane.b32.xlu0 %v6155, 96
          %v6316 = vpop.permute.xlu0 %6315
          %6317 = vrot.lane.b32.xlu0 %v6156, 96
          %v6318 = vpop.permute.xlu0 %6317
          %6319 = vrot.lane.b32.xlu0 %v6157, 96
          %v6320 = vpop.permute.xlu0 %6319
          %6321 = vrot.lane.b32.xlu0 %v6158, 96
          %v6322 = vpop.permute.xlu0 %6321
          %6323 = vrot.lane.b32.xlu0 %v6159, 96
          %v6324 = vpop.permute.xlu0 %6323
          %6325 = vrot.lane.b32.xlu0 %v6160, 96
          %v6326 = vpop.permute.xlu0 %6325
          %6327 = vrot.lane.b32.xlu0 %v6161, 96
          %v6328 = vpop.permute.xlu0 %6327
          %6329 = vrot.lane.b32.xlu0 %v6162, 96
          %v6330 = vpop.permute.xlu0 %6329
          %6331 = vrot.lane.b32.xlu0 %v6163, 96
          %v6332 = vpop.permute.xlu0 %6331
          %6333 = vrot.lane.b32.xlu0 %v6164, 96
          %v6334 = vpop.permute.xlu0 %6333
          %6335 = vrot.lane.b32.xlu0 %v6165, 96
          %v6336 = vpop.permute.xlu0 %6335
          %6337 = vrot.lane.b32.xlu0 %v6166, 96
          %v6338 = vpop.permute.xlu0 %6337
          %6339 = vrot.lane.b32.xlu0 %v6167, 96
          %v6340 = vpop.permute.xlu0 %6339
          %6341 = vrot.lane.b32.xlu0 %v6168, 96
          %v6342 = vpop.permute.xlu0 %6341
          %6343 = vrot.lane.b32.xlu0 %v6169, 96
          %v6344 = vpop.permute.xlu0 %6343
          %6345 = vrot.lane.b32.xlu0 %v6170, 96
          %v6346 = vpop.permute.xlu0 %6345
          %vm6363 = vcmask 261120
          %v6364 = vsel %vm6363, %v6107, %v6188
          %v6365 = vsel %vm6363, %v6108, %v6190
          %v6366 = vsel %vm6363, %v6109, %v6192
          %v6367 = vsel %vm6363, %v6110, %v6194
          %v6368 = vsel %vm6363, %v6111, %v6196
          %v6369 = vsel %vm6363, %v6112, %v6198
          %v6370 = vsel %vm6363, %v6113, %v6200
          %v6371 = vsel %vm6363, %v6114, %v6202
          %v6372 = vsel %vm6363, %v6115, %v6204
          %v6373 = vsel %vm6363, %v6116, %v6206
          %v6374 = vsel %vm6363, %v6117, %v6208
          %v6375 = vsel %vm6363, %v6118, %v6210
          %v6376 = vsel %vm6363, %v6119, %v6212
          %v6377 = vsel %vm6363, %v6120, %v6214
          %v6378 = vsel %vm6363, %v6121, %v6216
          %v6379 = vsel %vm6363, %v6122, %v6218
          %vm6380 = vcmask 523264
          %v6381 = vsel %vm6380, %v6364, %v6252
          %v6382 = vsel %vm6380, %v6365, %v6254
          %v6383 = vsel %vm6380, %v6366, %v6256
          %v6384 = vsel %vm6380, %v6367, %v6258
          %v6385 = vsel %vm6380, %v6368, %v6260
          %v6386 = vsel %vm6380, %v6369, %v6262
          %v6387 = vsel %vm6380, %v6370, %v6264
          %v6388 = vsel %vm6380, %v6371, %v6266
          %v6389 = vsel %vm6380, %v6372, %v6268
          %v6390 = vsel %vm6380, %v6373, %v6270
          %v6391 = vsel %vm6380, %v6374, %v6272
          %v6392 = vsel %vm6380, %v6375, %v6274
          %v6393 = vsel %vm6380, %v6376, %v6276
          %v6394 = vsel %vm6380, %v6377, %v6278
          %v6395 = vsel %vm6380, %v6378, %v6280
          %v6396 = vsel %vm6380, %v6379, %v6282
          %vm6397 = vcmask 785408
          %v6398 = vsel %vm6397, %v6381, %v6316
          %v6399 = vsel %vm6397, %v6382, %v6318
          %v6400 = vsel %vm6397, %v6383, %v6320
          %v6401 = vsel %vm6397, %v6384, %v6322
          %v6402 = vsel %vm6397, %v6385, %v6324
          %v6403 = vsel %vm6397, %v6386, %v6326
          %v6404 = vsel %vm6397, %v6387, %v6328
          %v6405 = vsel %vm6397, %v6388, %v6330
          %v6406 = vsel %vm6397, %v6389, %v6332
          %v6407 = vsel %vm6397, %v6390, %v6334
          %v6408 = vsel %vm6397, %v6391, %v6336
          %v6409 = vsel %vm6397, %v6392, %v6338
          %v6410 = vsel %vm6397, %v6393, %v6340
          %v6411 = vsel %vm6397, %v6394, %v6342
          %v6412 = vsel %vm6397, %v6395, %v6344
          %v6413 = vsel %vm6397, %v6396, %v6346
          %v6414 = vpack.c.bf16 %v6399, %v6398
          %v6415 = vpack.c.bf16 %v6401, %v6400
          %v6416 = vpack.c.bf16 %v6403, %v6402
          %v6417 = vpack.c.bf16 %v6405, %v6404
          %v6418 = vpack.c.bf16 %v6407, %v6406
          %v6419 = vpack.c.bf16 %v6409, %v6408
          %v6420 = vpack.c.bf16 %v6411, %v6410
          %v6421 = vpack.c.bf16 %v6413, %v6412
          %v6422 = vld [vmem:[%s6] sm:$0xf]
          %v6423 = vld [vmem:[%s6 + $0x4] sm:$0xf]
          %v6424 = vld [vmem:[%s6 + $0x8] sm:$0xf]
          %v6425 = vld [vmem:[%s6 + $0xc] sm:$0xf]
          %v6426 = vld [vmem:[%s6 + $0x10] sm:$0xf]
          %v6427 = vld [vmem:[%s6 + $0x14] sm:$0xf]
          %v6428 = vld [vmem:[%s6 + $0x18] sm:$0xf]
          %v6429 = vld [vmem:[%s6 + $0x1c] sm:$0xf]
          %v6430 = vld [vmem:[%s6 + $0x20] sm:$0xf]
          %v6431 = vld [vmem:[%s6 + $0x24] sm:$0xf]
          %v6432 = vld [vmem:[%s6 + $0x28] sm:$0xf]
          %v6433 = vld [vmem:[%s6 + $0x2c] sm:$0xf]
          %v6434 = vld [vmem:[%s6 + $0x30] sm:$0xf]
          %v6435 = vld [vmem:[%s6 + $0x34] sm:$0xf]
          %v6436 = vld [vmem:[%s6 + $0x38] sm:$0xf]
          %v6437 = vld [vmem:[%s6 + $0x3c] sm:$0xf]
          %v6438 = vld [vmem:[%s7] sm:$0x1]
          %v6440 = vlaneseq
          %v6441 = vshrl.u32 %v6440, 7
          %v6442 = vsub.s32 0, %v6441
          %v6443 = vrot.slane %v6438, %v6442
          %v6461 = vunpack.c.l.b16 %v6422
          %v6462 = vunpack.c.l.b16 %v6423
          %v6463 = vunpack.c.l.b16 %v6424
          %v6464 = vunpack.c.l.b16 %v6425
          %v6465 = vunpack.c.l.b16 %v6426
          %v6466 = vunpack.c.l.b16 %v6427
          %v6467 = vunpack.c.l.b16 %v6428
          %v6468 = vunpack.c.l.b16 %v6429
          %v6469 = vunpack.c.l.b16 %v6430
          %v6470 = vunpack.c.l.b16 %v6431
          %v6471 = vunpack.c.l.b16 %v6432
          %v6472 = vunpack.c.l.b16 %v6433
          %v6473 = vunpack.c.l.b16 %v6434
          %v6474 = vunpack.c.l.b16 %v6435
          %v6475 = vunpack.c.l.b16 %v6436
          %v6476 = vunpack.c.l.b16 %v6437
          %v6477 = vpack.c.b16 %v6462, %v6461
          %v6478 = vpack.c.b16 %v6464, %v6463
          %v6479 = vpack.c.b16 %v6466, %v6465
          %v6480 = vpack.c.b16 %v6468, %v6467
          %v6481 = vpack.c.b16 %v6470, %v6469
          %v6482 = vpack.c.b16 %v6472, %v6471
          %v6483 = vpack.c.b16 %v6474, %v6473
          %v6484 = vpack.c.b16 %v6476, %v6475
          %6493 = vmatprep.subr.bf16.mxu0 0
          %6494 = vmatpush1.bf16.msra.mxu0 %v6477
          %6495 = vmatprep.subr.bf16.mxu0 0
          %6496 = vmatpush1.bf16.msra.mxu0 %v6478
          %6497 = vmatprep.subr.bf16.mxu0 0
          %6498 = vmatpush1.bf16.msra.mxu0 %v6479
          %6499 = vmatprep.subr.bf16.mxu0 0
          %6500 = vmatpush1.bf16.msra.mxu0 %v6480
          %6501 = vmatprep.subr.bf16.mxu0 0
          %6502 = vmatpush1.bf16.msra.mxu0 %v6481
          %6503 = vmatprep.subr.bf16.mxu0 0
          %6504 = vmatpush1.bf16.msra.mxu0 %v6482
          %6505 = vmatprep.subr.bf16.mxu0 0
          %6506 = vmatpush1.bf16.msra.mxu0 %v6483
          %6507 = vmatprep.subr.bf16.mxu0 0
          %6508 = vmatpush1.bf16.msra.mxu0 %v6484
          %6509 = vmatprep.subr.bf16.mxu0 0
          %6510 = vmatpush1.bf16.msra.mxu0 0
          %6511 = vmatprep.subr.bf16.mxu0 0
          %6512 = vmatpush1.bf16.msra.mxu0 0
          %6513 = vmatprep.subr.bf16.mxu0 0
          %6514 = vmatpush1.bf16.msra.mxu0 0
          %6515 = vmatprep.subr.bf16.mxu0 0
          %6516 = vmatpush1.bf16.msra.mxu0 0
          %6517 = vmatprep.subr.bf16.mxu0 0
          %6518 = vmatpush1.bf16.msra.mxu0 0
          %6519 = vmatprep.subr.bf16.mxu0 0
          %6520 = vmatpush1.bf16.msra.mxu0 0
          %6521 = vmatprep.subr.bf16.mxu0 0
          %6522 = vmatpush1.bf16.msra.mxu0 0
          %6523 = vmatprep.subr.bf16.mxu0 0
          %6524 = vmatpush1.bf16.msra.mxu0 0
          %6525 = vmatprep.mubr.bf16.mxu0 0
          %6526 = vmatmul.mubr.bf16.gmra.mrb[0].mxu0 %v6414
          %v6527 = vpop.f32.mrb[0].mxu0
          %v6528 = vadd.f32 %v6443, %v6527
          %v6529 = vpop.f32.mrb[0].mxu0
          %v6530 = vpop.f32.mrb[0].mxu0
          %v6531 = vadd.f32 %v6443, %v6530
          %v6532 = vpop.f32.mrb[0].mxu0
          %6533 = vmatprep.mubr.bf16.mxu0 0
          %6534 = vmatmul.mubr.bf16.gmra.mrb[0].mxu0 %v6415
          %v6535 = vpop.f32.mrb[0].mxu0
          %v6536 = vadd.f32 %v6443, %v6535
          %v6537 = vpop.f32.mrb[0].mxu0
          %v6538 = vpop.f32.mrb[0].mxu0
          %v6539 = vadd.f32 %v6443, %v6538
          %v6540 = vpop.f32.mrb[0].mxu0
          %6541 = vmatprep.mubr.bf16.mxu0 0
          %6542 = vmatmul.mubr.bf16.gmra.mrb[0].mxu0 %v6416
          %v6543 = vpop.f32.mrb[0].mxu0
          %v6544 = vadd.f32 %v6443, %v6543
          %v6545 = vpop.f32.mrb[0].mxu0
          %v6546 = vpop.f32.mrb[0].mxu0
          %v6547 = vadd.f32 %v6443, %v6546
          %v6548 = vpop.f32.mrb[0].mxu0
          %6549 = vmatprep.mubr.bf16.mxu0 0
          %6550 = vmatmul.mubr.bf16.gmra.mrb[0].mxu0 %v6417
          %v6551 = vpop.f32.mrb[0].mxu0
          %v6552 = vadd.f32 %v6443, %v6551
          %v6553 = vpop.f32.mrb[0].mxu0
          %v6554 = vpop.f32.mrb[0].mxu0
          %v6555 = vadd.f32 %v6443, %v6554
          %v6556 = vpop.f32.mrb[0].mxu0
          %6557 = vmatprep.mubr.bf16.mxu0 0
          %6558 = vmatmul.mubr.bf16.gmra.mrb[0].mxu0 %v6418
          %v6559 = vpop.f32.mrb[0].mxu0
          %v6560 = vadd.f32 %v6443, %v6559
          %v6561 = vpop.f32.mrb[0].mxu0
          %v6562 = vpop.f32.mrb[0].mxu0
          %v6563 = vadd.f32 %v6443, %v6562
          %v6564 = vpop.f32.mrb[0].mxu0
          %6565 = vmatprep.mubr.bf16.mxu0 0
          %6566 = vmatmul.mubr.bf16.gmra.mrb[0].mxu0 %v6419
          %v6567 = vpop.f32.mrb[0].mxu0
          %v6568 = vadd.f32 %v6443, %v6567
          %v6569 = vpop.f32.mrb[0].mxu0
          %v6570 = vpop.f32.mrb[0].mxu0
          %v6571 = vadd.f32 %v6443, %v6570
          %v6572 = vpop.f32.mrb[0].mxu0
          %6573 = vmatprep.mubr.bf16.mxu0 0
          %6574 = vmatmul.mubr.bf16.gmra.mrb[0].mxu0 %v6420
          %v6575 = vpop.f32.mrb[0].mxu0
          %v6576 = vadd.f32 %v6443, %v6575
          %v6577 = vpop.f32.mrb[0].mxu0
          %v6578 = vpop.f32.mrb[0].mxu0
          %v6579 = vadd.f32 %v6443, %v6578
          %v6580 = vpop.f32.mrb[0].mxu0
          %6581 = vmatprep.mubr.bf16.mxu0 0
          %6582 = vmatmul.mubr.bf16.gmra.mrb[0].mxu0 %v6421
          %v6583 = vpop.f32.mrb[0].mxu0
          %v6584 = vadd.f32 %v6443, %v6583
          %v6585 = vpop.f32.mrb[0].mxu0
          %v6586 = vpop.f32.mrb[0].mxu0
          %v6587 = vadd.f32 %v6443, %v6586
          %v6588 = vpop.f32.mrb[0].mxu0
          %6589 = vdwg.mxu0
          %6590 = vst [vmem:[%s1294] sm:$0xff] %v6528
          %6591 = vst [vmem:[%s1294 + $0x8] sm:$0xff] %v6531
          %6592 = vst [vmem:[%s1294 + $0x10] sm:$0xff] %v6536
          %6593 = vst [vmem:[%s1294 + $0x18] sm:$0xff] %v6539
          %6594 = vst [vmem:[%s1294 + $0x20] sm:$0xff] %v6544
          %6595 = vst [vmem:[%s1294 + $0x28] sm:$0xff] %v6547
          %6596 = vst [vmem:[%s1294 + $0x30] sm:$0xff] %v6552
          %6597 = vst [vmem:[%s1294 + $0x38] sm:$0xff] %v6555
          %6598 = vst [vmem:[%s1294 + $0x40] sm:$0xff] %v6560
          %6599 = vst [vmem:[%s1294 + $0x48] sm:$0xff] %v6563
          %6600 = vst [vmem:[%s1294 + $0x50] sm:$0xff] %v6568
          %6601 = vst [vmem:[%s1294 + $0x58] sm:$0xff] %v6571
          %6602 = vst [vmem:[%s1294 + $0x60] sm:$0xff] %v6576
          %6603 = vst [vmem:[%s1294 + $0x68] sm:$0xff] %v6579
          %6604 = vst [vmem:[%s1294 + $0x70] sm:$0xff] %v6584
          %6605 = vst [vmem:[%s1294 + $0x78] sm:$0xff] %v6587
        $region188: #{tpu_custom_call.1} parent=163 // pred_fallthru
          _
        %s6606 = sand.u32 %s371, 1
        %s6607 = scalar_lea.sflag [#allocation12], %s6606
        %s6608 = sand.u32 %s371, 1
        %s6609 = smul.addr %s6608, 128
        %s6610 = scalar_lea.vmem [#allocation11], %s6609
        // Predicated region
        $region189: #{tpu_custom_call.1} parent=163 // pred_check
          %p6611 = pneg %p381
        $region190: #{tpu_custom_call.1} parent=163 // pred_check_branch
          %6613 = sbr.rel (%p6611) target = $region192
        $region191: #{tpu_custom_call.1} parent=163 // pred_region
          %s6614 = smul.u32 16, %s36
          %s6616 = ssub.s32 2048, 2048
          %6617 = vsyncadd %s6607, %s6616
          %s6618 = smul.addr %s35, 32
          %s6619 = sadd.s32 %s6614, %s6618
          %s6620 = smul.addr %s6619, 128
          %s6621 = scalar_lea.hbm %s10, %s6620
          %s6622 = sshll.u32 %s6610, 4
          %s6623 = int_to_ptr.vmem [resolvable:$true] %s6622
          %6628 = dma.vmem_to_hbm [thread:$0]  %s6623, 2048, %s6621, %s6607, 128, 128, 8
        $region192: #{tpu_custom_call.1} parent=163 // pred_fallthru
          _
      $region164: #{tpu_custom_call.1} parent=5 // pred_fallthru
        _
      %p6629 = scmp.le.s32.totalorder 2, %s25
      // Predicated region
      $region193: #{tpu_custom_call.1} parent=5 // pred_check
        %p6630 = pneg %p6629
      $region194: #{tpu_custom_call.1} parent=5 // pred_check_branch
        %6632 = sbr.rel (%p6630) target = $region196
      $region195: #{tpu_custom_call.1} parent=5 // pred_region
        %s6633 = ssub.s32 %s25, 2
        // Predicated region
        $region197: #{tpu_custom_call.1} parent=195 // pred_check
          %p6634 = pneg %p387
        $region198: #{tpu_custom_call.1} parent=195 // pred_check_branch
          %6636 = sbr.rel (%p6634) target = $region200
        $region199: #{tpu_custom_call.1} parent=195 // pred_region
          %s6637 = sand.u32 %s372, 1
          %s6638 = scalar_lea.sflag [#allocation12], %s6637
          %s6639 = sand.u32 %s372, 1
          %s6640 = smul.addr %s6639, 128
          %s6641 = scalar_lea.vmem [#allocation11], %s6640
          %6642 = dma.done %s6638, 2048
        $region200: #{tpu_custom_call.1} parent=195 // pred_fallthru
          _
      $region196: #{tpu_custom_call.1} parent=5 // pred_fallthru
        _
    $region6: #{tpu_custom_call.1} parent=1 // loop_footer
      %s29 = sadd.s32 1, %s25
    $region7: #{tpu_custom_call.1} parent=1 // loop_footer_branch
      %24 = sbr.rel target = $region3
    $region8: #{tpu_custom_call.1} parent=1 // loop_exit
      _
    %6643 = vsyncpa [#allocation12], 1
    %s6644 = scalar_lea.sflag [#allocation12], 1
    %6645 = vsyncpa %s6644, 1

</llo_original>
